<compile_context>
chip_gen: v7x
topology: tpu7x:2x2x1
jax: 0.10.0
libtpu: 0.0.40
codegen_flags: <defaults>
</compile_context>

<pallas_src>
import functools

import jax
import jax.numpy as jnp
from jax.experimental import pallas as pl
from jax.experimental.pallas import tpu as pltpu


# MXU operand dtype for the conv matmuls (accumulation + epilogue stay f32).
MXU_DTYPE = jnp.bfloat16


# ----------------------------------------------------------------------------
# Pallas kernels
# ----------------------------------------------------------------------------
def _mm_kernel(a_ref, b_ref, o_ref):
    """Bias-less [M, K] @ [K, N] (stdct: analysis window folded into the matrix)."""
    o_ref[...] = jnp.dot(a_ref[...], b_ref[...],
                         preferred_element_type=jnp.float32)


def _conv_bias_kernel(w_ref, p_ref, b_ref, o_ref):
    """Conv as W[Cout,K] @ patches[K,M] + bias -> lane-dense [Cout, M] output."""
    o_ref[...] = (jnp.dot(w_ref[...], p_ref[...],
                          preferred_element_type=jnp.float32) + b_ref[...])


def _conv_bn_prelu_kernel(w_ref, p_ref, b_ref, g_ref, be_ref, a_ref, o_ref):
    """Fused conv + BatchNorm2d (training-mode batch stats, eps=1e-5) + PReLU.

    Rows = output channels, lanes = B*F*T: the per-channel BN reduction is a
    lane-axis reduce and the store is lane-dense (no masked vst on narrow Cout).
    One-pass statistics (E[y^2] - mean^2) and a folded per-channel scale/shift
    keep the number of full [Cout, M] VPU passes to a minimum.
    """
    y = (jnp.dot(w_ref[...], p_ref[...], preferred_element_type=jnp.float32)
         + b_ref[...])
    mean = jnp.mean(y, axis=1, keepdims=True)
    ex2 = jnp.mean(y * y, axis=1, keepdims=True)
    var = ex2 - mean * mean
    inv = jax.lax.rsqrt(var + 1e-5)                  # EUP
    scale = g_ref[...] * inv                         # [Cout, 1]
    shift = be_ref[...] - mean * scale               # [Cout, 1]
    y = y * scale + shift
    alpha = a_ref[0, 0]
    o_ref[...] = jnp.where(y >= 0, y, alpha * y)


def _lstm_linear_kernel(x_ref, wih1_ref, whh1_ref, b1_ref,
                        wih2_ref, whh2_ref, b2_ref,
                        wl_ref, bl_ref, y_ref, hseq_ref, *, hidden, T, B):
    """2-layer LSTM (batch_first=False, h0=c0=0) + Linear, all in one kernel.

    x_ref / y_ref are time-major flattened [T*B, D] so no in-kernel reshapes are
    needed.  Layer-1 pre-gates for the whole sequence are one MXU matmul; the
    recurrence is a fully unrolled static time loop (T is small and static) with
    all weights resident in VMEM; per-step layer-2 hidden states are written to
    a VMEM scratch and the Linear is ONE [T*B,H] @ [H,Dout] matmul with a single
    lane-dense store.  Gate math stays f32 (sigmoid/tanh on the EUP).
    """
    H = hidden
    pg1 = (jnp.dot(x_ref[...], wih1_ref[...],
                   preferred_element_type=jnp.float32) + b1_ref[...])  # [T*B, 4H]
    whh1 = whh1_ref[...]
    wih2 = wih2_ref[...]
    whh2 = whh2_ref[...]
    b2 = b2_ref[...]

    def cell(pre, h, c, whh):
        g = pre + jnp.dot(h, whh, preferred_element_type=jnp.float32)
        i = jax.nn.sigmoid(g[:, 0 * H:1 * H])
        f = jax.nn.sigmoid(g[:, 1 * H:2 * H])
        gc = jnp.tanh(g[:, 2 * H:3 * H])
        o = jax.nn.sigmoid(g[:, 3 * H:4 * H])
        c_new = f * c + i * gc
        return o * jnp.tanh(c_new), c_new

    h1 = jnp.zeros((B, H), jnp.float32)
    c1, h2, c2 = h1, h1, h1
    for t in range(T):                              # static, fully unrolled
        lo = t * B
        h1, c1 = cell(pg1[lo:lo + B, :], h1, c1, whh1)
        pre2 = jnp.dot(h1, wih2, preferred_element_type=jnp.float32) + b2
        h2, c2 = cell(pre2, h2, c2, whh2)
        hseq_ref[lo:lo + B, :] = h2                 # static VMEM slice write

    y_ref[...] = (jnp.dot(hseq_ref[...], wl_ref[...],
                          preferred_element_type=jnp.float32) + bl_ref[...])


def _istdct_kernel(res_tn_ref, dw_ref, invden_ref, wav_ref, acc_ref,
                   *, hop, win, pad, T, B):
    """Inverse DCT matmul + synthesis window (folded) + overlap-add + COLA norm."""
    frames = jnp.dot(res_tn_ref[...], dw_ref[...],
                     preferred_element_type=jnp.float32)     # [T*B, win], t-major
    acc_ref[...] = jnp.zeros_like(acc_ref)
    for t in range(T):                              # static overlap-add in VMEM
        lo = t * hop
        acc_ref[:, lo:lo + win] = (acc_ref[:, lo:lo + win]
                                   + frames[t * B:(t + 1) * B, :])
    L = wav_ref.shape[1]
    wav_ref[...] = acc_ref[:, pad:pad + L] * invden_ref[...]


# ----------------------------------------------------------------------------
# Conv layers (channel-major [C, B, F, T]); thin im2col glue in XLA, matmul +
# bias + BN + PReLU fused in a single Pallas kernel per layer.
# ----------------------------------------------------------------------------
def _im2col_cm(xp, kF, kT, stride_f):
    """xp: padded channel-major [C, B, Fp, Tp] -> patches [C*kF*kT, B*F_out*T_out]."""
    C, B, Fp, Tp = xp.shape
    F_out = (Fp - kF) // stride_f + 1
    T_out = Tp - kT + 1
    cols = []
    for i in range(kF):
        f_end = i + stride_f * (F_out - 1) + 1
        for j in range(kT):
            cols.append(xp[:, :, i:f_end:stride_f, j:j + T_out])
    pat = jnp.stack(cols, axis=1)                   # [C, kF*kT, B, F_out, T_out]
    return pat.reshape(C * kF * kT, B * F_out * T_out), F_out, T_out


def _fused_conv(patches, wmat, bias, bn):
    Cout, _ = wmat.shape
    M = patches.shape[1]
    w = wmat.astype(MXU_DTYPE)
    p = patches.astype(MXU_DTYPE)
    b = bias.reshape(Cout, 1).astype(jnp.float32)
    if bn is None:
        return pl.pallas_call(
            _conv_bias_kernel,
            out_shape=jax.ShapeDtypeStruct((Cout, M), jnp.float32),
        )(w, p, b)
    gamma, beta, alpha = bn
    return pl.pallas_call(
        _conv_bn_prelu_kernel,
        out_shape=jax.ShapeDtypeStruct((Cout, M), jnp.float32),
    )(w, p, b,
      gamma.reshape(Cout, 1).astype(jnp.float32),
      beta.reshape(Cout, 1).astype(jnp.float32),
      jnp.reshape(alpha, (1, 1)).astype(jnp.float32))


def conv2d_causal_cm(x_cm, layer, kF, kT, stride_f):
    """CausalConv2d (+ fused BN + PReLU) on channel-major [C, B, F, T]."""
    B = x_cm.shape[1]
    pad_f = (kF - 1) // 2
    xp = jnp.pad(x_cm, ((0, 0), (0, 0), (pad_f, pad_f), (kT - 1, 0)))
    patches, F_out, T_out = _im2col_cm(xp, kF, kT, stride_f)
    Cout = layer['w'].shape[0]
    bn = ((layer['gamma'], layer['beta'], layer['alpha'])
          if 'gamma' in layer else None)
    out = _fused_conv(patches, layer['w'].reshape(Cout, -1), layer['b'], bn)
    return out.reshape(Cout, B, F_out, T_out)


def conv_transpose2d_causal_cm(x_cm, layer, kT):
    """CausalConvTranspose2d((4,kT), stride=(2,1), freq pad 1) with the trailing
    time-frame chomp folded into left-only time padding, + fused BN + PReLU."""
    C, B, F, T = x_cm.shape
    w = layer['w']                                   # [Cin, Cout, kF, kT]
    _, Cout, kF, _ = w.shape
    stride_f, pad_f = 2, 1
    xd = jnp.zeros((C, B, (F - 1) * stride_f + 1, T), x_cm.dtype)
    xd = xd.at[:, :, ::stride_f, :].set(x_cm)        # frequency dilation
    xp = jnp.pad(xd, ((0, 0), (0, 0),
                      (kF - 1 - pad_f, kF - 1 - pad_f),
                      (kT - 1, 0)))                  # left-only time pad == chomp
    wc = jnp.flip(w, axis=(2, 3)).transpose(1, 0, 2, 3)   # [Cout, Cin, kF, kT]
    patches, F_out, T_out = _im2col_cm(xp, kF, kT, 1)
    bn = ((layer['gamma'], layer['beta'], layer['alpha'])
          if 'gamma' in layer else None)
    out = _fused_conv(patches, wc.reshape(Cout, -1), layer['b'], bn)
    return out.reshape(Cout, B, F_out, T_out)


# ----------------------------------------------------------------------------
# LSTM + Linear
# ----------------------------------------------------------------------------
def lstm_linear(x_tb, lstm_params, lin_params, hidden, T, B):
    """x_tb: [T*B, Din] time-major.  Both LSTM layers + Linear in one kernel."""
    assert len(lstm_params) == 2, "kernel is specialized for rnn_layers=2"
    l1, l2 = lstm_params
    Dout = lin_params['w'].shape[0]
    f32 = lambda a: a.astype(jnp.float32)
    return pl.pallas_call(
        functools.partial(_lstm_linear_kernel, hidden=hidden, T=T, B=B),
        out_shape=jax.ShapeDtypeStruct((T * B, Dout), jnp.float32),
        scratch_shapes=[pltpu.VMEM((T * B, hidden), jnp.float32)],
    )(f32(x_tb),
      f32(l1['w_ih'].T), f32(l1['w_hh'].T),
      f32((l1['b_ih'] + l1['b_hh']).reshape(1, -1)),
      f32(l2['w_ih'].T), f32(l2['w_hh'].T),
      f32((l2['b_ih'] + l2['b_hh']).reshape(1, -1)),
      f32(lin_params['w'].T), f32(lin_params['b'].reshape(1, -1)))


# ----------------------------------------------------------------------------
# STDCT / ISTDCT
# ----------------------------------------------------------------------------
def dct_matrix(N):
    n = jnp.arange(N, dtype=jnp.float32)
    D = jnp.sqrt(2.0 / N) * jnp.cos(jnp.pi * (n[None, :] + 0.5) * n[:, None] / N)
    return D.at[0, :].multiply(1.0 / jnp.sqrt(2.0))          # orthonormal DCT-II


def hann_window(win_size):
    n = jnp.arange(win_size, dtype=jnp.float32)
    return 0.5 * (1.0 - jnp.cos(2.0 * jnp.pi * n / win_size))


def stdct_pair(far, mix, N, hop, win_size, window, D):
    """Windowed framed DCT of far & mix in ONE matmul kernel.
    Returns channel-major [2, B, N, T] (ch0 = far, ch1 = mix)."""
    B, L = far.shape
    pad = N // 2
    x = jnp.stack([far, mix], axis=0)                        # [2, B, L]
    xp = jnp.pad(x, ((0, 0), (0, 0), (pad, pad)))
    T = (L + 2 * pad - win_size) // hop + 1
    idx = jnp.arange(T)[:, None] * hop + jnp.arange(win_size)[None, :]
    frames = xp[:, :, idx].reshape(2 * B * T, win_size)      # [2*B*T, win]
    A = window[:, None] * D.T                                # window folded in
    coeffs = pl.pallas_call(
        _mm_kernel,
        out_shape=jax.ShapeDtypeStruct((2 * B * T, N), jnp.float32),
    )(frames.astype(jnp.float32), A.astype(jnp.float32))
    return coeffs.reshape(2, B, T, N).transpose(0, 1, 3, 2)  # [2, B, N, T]


def istdct_fused(res, N, hop, win_size, window, D, out_len):
    """[B, N, T] spectrogram -> [B, out_len] waveform in one Pallas kernel."""
    B, _, T = res.shape
    pad = N // 2
    Lp = (T - 1) * hop + win_size
    wsq = window * window
    den = jnp.zeros((Lp,), jnp.float32)
    for t in range(T):                         # constants only; folded by XLA
        den = den.at[t * hop:t * hop + win_size].add(wsq)
    inv_den = (1.0 / jnp.maximum(den, 1e-8))[pad:pad + out_len].reshape(1, out_len)
    res_tn = res.transpose(2, 0, 1).reshape(T * B, N)        # t-major rows
    A = D * window[None, :]                                  # window folded in
    return pl.pallas_call(
        functools.partial(_istdct_kernel, hop=hop, win=win_size,
                          pad=pad, T=T, B=B),
        out_shape=jax.ShapeDtypeStruct((B, out_len), jnp.float32),
        scratch_shapes=[pltpu.VMEM((B, Lp), jnp.float32)],
    )(res_tn.astype(jnp.float32), A.astype(jnp.float32),
      inv_den.astype(jnp.float32))


# ----------------------------------------------------------------------------
# Parameter init (deterministic, synthetic)
# ----------------------------------------------------------------------------
def init_dctcrn_params(key, channels, kernel_size, rnn_layers, rnn_channels, N):
    channels = [2] + list(channels)
    n_layers = len(channels) - 1
    hidden_dim = N // (2 ** n_layers)
    kF, kT = kernel_size

    def nrm(k, shape, scale=0.1):
        return scale * jax.random.normal(k, shape, jnp.float32)

    keys = iter(jax.random.split(key, 256))
    params = {'encoder': [], 'dec_speech': [], 'dec_echo': [], 'lstm': []}

    for idx in range(n_layers):
        cin, cout = channels[idx], channels[idx + 1]
        params['encoder'].append(dict(
            w=nrm(next(keys), (cout, cin, kF, kT)),
            b=nrm(next(keys), (cout,)),
            gamma=1.0 + nrm(next(keys), (cout,)),
            beta=nrm(next(keys), (cout,)),
            alpha=jnp.float32(0.25)))

    feat = hidden_dim * channels[-1]
    din = feat
    for _ in range(rnn_layers):
        params['lstm'].append(dict(
            w_ih=nrm(next(keys), (4 * rnn_channels, din)),
            w_hh=nrm(next(keys), (4 * rnn_channels, rnn_channels)),
            b_ih=nrm(next(keys), (4 * rnn_channels,)),
            b_hh=nrm(next(keys), (4 * rnn_channels,))))
        din = rnn_channels

    params['linear'] = dict(w=nrm(next(keys), (feat, rnn_channels)),
                            b=nrm(next(keys), (feat,)))

    for name in ('dec_speech', 'dec_echo'):
        for idx in range(n_layers, 0, -1):
            cin = channels[idx] * 2
            cout = channels[idx - 1] if idx != 1 else 1
            layer = dict(w=nrm(next(keys), (cin, cout, 4, kT)),
                         b=nrm(next(keys), (cout,)))
            if idx != 1:
                layer.update(gamma=1.0 + nrm(next(keys), (cout,)),
                             beta=nrm(next(keys), (cout,)),
                             alpha=jnp.float32(0.25))
            params[name].append(layer)
    return params


# ----------------------------------------------------------------------------
# Forward pass
# ----------------------------------------------------------------------------
def dctcrn_forward(params, far, mix, *, N, hop, win_size, kernel_size,
                   rnn_channels):
    assert win_size == N, "framed DCT here assumes win_size == N"
    D = dct_matrix(N)
    window = hann_window(win_size)
    B, L = far.shape
    kF, kT = kernel_size
    stride_f = (kF - 1) // 2                    # == CausalConv2d stride[0]

    x = stdct_pair(far, mix, N, hop, win_size, window, D)    # [2, B, N, T]
    mix_spec = x[1]                                          # [B, N, T]

    encoder_out = []
    for layer in params['encoder']:
        x = conv2d_causal_cm(x, layer, kF, kT, stride_f)     # [C, B, F', T]
        encoder_out.append(x)

    C, Bsz, dims, lengths = x.shape
    # [C, B, F, T] -> torch's [T, B, C*F] (feature index = c*F + f), time-major.
    xl = x.transpose(3, 1, 0, 2).reshape(lengths * Bsz, C * dims)

    y = lstm_linear(xl, params['lstm'], params['linear'], rnn_channels,
                    T=lengths, B=Bsz)                        # [T*B, C*F]
    x = y.reshape(lengths, Bsz, C, dims).transpose(2, 1, 3, 0)   # [C, B, F, T]

    x_speech = x
    x_echo = x
    for i in range(len(params['dec_speech'])):
        skip = encoder_out[-1 - i]
        x_speech = conv_transpose2d_causal_cm(
            jnp.concatenate([x_speech, skip], axis=0), params['dec_speech'][i], kT)
        x_echo = conv_transpose2d_causal_cm(
            jnp.concatenate([x_echo, skip], axis=0), params['dec_echo'][i], kT)

    assert x_speech.shape[0] == 1 and x_speech.shape[2] == N, x_speech.shape
    # masking_mode='N' (NoMask): res = 0.5*(mix - echo) + 0.5*speech.  Plain jnp:
    # res is a returned output, XLA fuses the combine into one elementwise op.
    res = 0.5 * (mix_spec - x_echo[0]) + 0.5 * x_speech[0]       # [B, N, T]
    wav = istdct_fused(res, N, hop, win_size, window, D, out_len=L)   # [B, L]
    return wav, res


# ----------------------------------------------------------------------------
if __name__ == "__main__":
    key = jax.random.PRNGKey(0)
    k_par, k_far, k_mix = jax.random.split(key, 3)

    # Small config consistent with DCTCRN.__init__
    N, hop, win = 64, 16, 64
    channels = [4, 8, 16]                 # -> [2, 4, 8, 16]; hidden_dim = 64/8 = 8
    rnn_layers, rnn_channels = 2, 16
    kernel_size = (5, 2)
    B, L = 2, 160                         # T = L//hop + 1 = 11 frames

    params = init_dctcrn_params(k_par, channels, kernel_size,
                                rnn_layers, rnn_channels, N)
    far = jax.random.normal(k_far, (B, L), jnp.float32)
    mix = jax.random.normal(k_mix, (B, L), jnp.float32)

    fwd = jax.jit(functools.partial(
        dctcrn_forward, N=N, hop=hop, win_size=win,
        kernel_size=kernel_size, rnn_channels=rnn_channels))
    wav, res = fwd(params, far, mix)
    jax.block_until_ready((wav, res))

    assert wav.shape == (B, L), wav.shape
    assert res.shape == (B, N, L // hop + 1), res.shape
    assert jnp.all(jnp.isfinite(wav)) and jnp.all(jnp.isfinite(res))
    print("KERNEL_OK")
</pallas_src>

<mosaic_0001>
module attributes {stable_mosaic.version = 11 : i64} {
  func.func @_mm_kernel(%arg0: memref<44x64xf32, #tpu.memory_space<vmem>>, %arg1: memref<64x64xf32, #tpu.memory_space<vmem>>, %arg2: memref<44x64xf32, #tpu.memory_space<vmem>>) attributes {dimension_semantics = [], scalar_prefetch = 0 : i64, scratch_operands = 0 : i64, tpu.core_type = #tpu.core_type<tc>} {
    %c0 = arith.constant 0 : index
    %c0_0 = arith.constant 0 : index
    %0 = vector.load %arg0[%c0, %c0_0] : memref<44x64xf32, #tpu.memory_space<vmem>>, vector<44x64xf32>
    %c0_1 = arith.constant 0 : index
    %c0_2 = arith.constant 0 : index
    %1 = vector.load %arg1[%c0_1, %c0_2] : memref<64x64xf32, #tpu.memory_space<vmem>>, vector<64x64xf32>
    %cst = arith.constant dense<0.000000e+00> : vector<44x64xf32>
    %2 = tpu.matmul %0, %1, %cst {dimension_numbers = #tpu.dot_dimension_numbers<[1], [0], [0], [1], [0, 0, 1, 1], [], []>} : vector<44x64xf32>, vector<64x64xf32>, vector<44x64xf32> -> vector<44x64xf32>
    %c0_3 = arith.constant 0 : index
    %c0_4 = arith.constant 0 : index
    %3 = vector.load %arg2[%c0_3, %c0_4] : memref<44x64xf32, #tpu.memory_space<vmem>>, vector<44x64xf32>
    tpu.vector_store %arg2[%c0_3, %c0_4], %2 {strides = array<i32>} : memref<44x64xf32, #tpu.memory_space<vmem>>, vector<44x64xf32>,
    return
  }
}

module attributes {stable_mosaic.version = 11 : i64} {
  func.func @_conv_bn_prelu_kernel(%arg0: memref<4x20xbf16, #tpu.memory_space<vmem>>, %arg1: memref<20x704xbf16, #tpu.memory_space<vmem>>, %arg2: memref<4x1xf32, #tpu.memory_space<vmem>>, %arg3: memref<4x1xf32, #tpu.memory_space<vmem>>, %arg4: memref<4x1xf32, #tpu.memory_space<vmem>>, %arg5: memref<1x1xf32, #tpu.memory_space<vmem>>, %arg6: memref<4x704xf32, #tpu.memory_space<vmem>>) attributes {dimension_semantics = [], scalar_prefetch = 0 : i64, scratch_operands = 0 : i64, tpu.core_type = #tpu.core_type<tc>} {
    %c0 = arith.constant 0 : index
    %c0_0 = arith.constant 0 : index
    %0 = vector.load %arg0[%c0, %c0_0] : memref<4x20xbf16, #tpu.memory_space<vmem>>, vector<4x20xbf16>
    %c0_1 = arith.constant 0 : index
    %c0_2 = arith.constant 0 : index
    %1 = vector.load %arg1[%c0_1, %c0_2] : memref<20x704xbf16, #tpu.memory_space<vmem>>, vector<20x704xbf16>
    %cst = arith.constant dense<0.000000e+00> : vector<4x704xf32>
    %2 = tpu.matmul %0, %1, %cst {dimension_numbers = #tpu.dot_dimension_numbers<[1], [0], [0], [1], [0, 0, 1, 1], [], []>} : vector<4x20xbf16>, vector<20x704xbf16>, vector<4x704xf32> -> vector<4x704xf32>
    %c0_3 = arith.constant 0 : index
    %c0_4 = arith.constant 0 : index
    %3 = vector.load %arg2[%c0_3, %c0_4] : memref<4x1xf32, #tpu.memory_space<vmem>>, vector<4x1xf32>
    %4 = vector.broadcast %3 : vector<4x1xf32> to vector<4x704xf32>
    %5 = arith.addf %2, %4 : vector<4x704xf32>
    %cst_5 = arith.constant dense<0.000000e+00> : vector<4xf32>
    %6 = vector.multi_reduction <add>, %5, %cst_5 [1] : vector<4x704xf32> to vector<4xf32>
    %7 = vector.shape_cast %6 : vector<4xf32> to vector<4x1xf32>
    %cst_6 = arith.constant 7.040000e+02 : f32
    %8 = vector.broadcast %cst_6 : f32 to vector<4x1xf32>
    %9 = arith.divf %7, %8 : vector<4x1xf32>
    %10 = arith.mulf %5, %5 : vector<4x704xf32>
    %cst_7 = arith.constant dense<0.000000e+00> : vector<4xf32>
    %11 = vector.multi_reduction <add>, %10, %cst_7 [1] : vector<4x704xf32> to vector<4xf32>
    %12 = vector.shape_cast %11 : vector<4xf32> to vector<4x1xf32>
    %cst_8 = arith.constant 7.040000e+02 : f32
    %13 = vector.broadcast %cst_8 : f32 to vector<4x1xf32>
    %14 = arith.divf %12, %13 : vector<4x1xf32>
    %15 = arith.mulf %9, %9 : vector<4x1xf32>
    %16 = arith.subf %14, %15 : vector<4x1xf32>
    %cst_9 = arith.constant 9.99999974E-6 : f32
    %17 = vector.broadcast %cst_9 : f32 to vector<4x1xf32>
    %18 = arith.addf %16, %17 : vector<4x1xf32>
    %19 = math.rsqrt %18 : vector<4x1xf32>
    %c0_10 = arith.constant 0 : index
    %c0_11 = arith.constant 0 : index
    %20 = vector.load %arg3[%c0_10, %c0_11] : memref<4x1xf32, #tpu.memory_space<vmem>>, vector<4x1xf32>
    %21 = arith.mulf %20, %19 : vector<4x1xf32>
    %c0_12 = arith.constant 0 : index
    %c0_13 = arith.constant 0 : index
    %22 = vector.load %arg4[%c0_12, %c0_13] : memref<4x1xf32, #tpu.memory_space<vmem>>, vector<4x1xf32>
    %23 = arith.mulf %9, %21 : vector<4x1xf32>
    %24 = arith.subf %22, %23 : vector<4x1xf32>
    %25 = vector.broadcast %21 : vector<4x1xf32> to vector<4x704xf32>
    %26 = arith.mulf %5, %25 : vector<4x704xf32>
    %27 = vector.broadcast %24 : vector<4x1xf32> to vector<4x704xf32>
    %28 = arith.addf %26, %27 : vector<4x704xf32>
    %c0_14 = arith.constant 0 : index
    %c0_15 = arith.constant 0 : index
    %29 = vector.load %arg5[%c0_14, %c0_15] : memref<1x1xf32, #tpu.memory_space<vmem>>, vector<1x1xf32>
    %30 = vector.extract %29[0, 0] : f32 from vector<1x1xf32>
    %cst_16 = arith.constant 0.000000e+00 : f32
    %31 = vector.broadcast %cst_16 : f32 to vector<4x704xf32>
    %32 = arith.cmpf oge, %28, %31 : vector<4x704xf32>
    %33 = vector.broadcast %30 : f32 to vector<4x704xf32>
    %34 = arith.mulf %33, %28 : vector<4x704xf32>
    %35 = arith.select %32, %28, %34 : vector<4x704xi1>, vector<4x704xf32>
    %c0_17 = arith.constant 0 : index
    %c0_18 = arith.constant 0 : index
    %36 = vector.load %arg6[%c0_17, %c0_18] : memref<4x704xf32, #tpu.memory_space<vmem>>, vector<4x704xf32>
    tpu.vector_store %arg6[%c0_17, %c0_18], %35 {strides = array<i32>} : memref<4x704xf32, #tpu.memory_space<vmem>>, vector<4x704xf32>,
    return
  }
}

module attributes {stable_mosaic.version = 11 : i64} {
  func.func @_conv_bn_prelu_kernel(%arg0: memref<8x40xbf16, #tpu.memory_space<vmem>>, %arg1: memref<40x352xbf16, #tpu.memory_space<vmem>>, %arg2: memref<8x1xf32, #tpu.memory_space<vmem>>, %arg3: memref<8x1xf32, #tpu.memory_space<vmem>>, %arg4: memref<8x1xf32, #tpu.memory_space<vmem>>, %arg5: memref<1x1xf32, #tpu.memory_space<vmem>>, %arg6: memref<8x352xf32, #tpu.memory_space<vmem>>) attributes {dimension_semantics = [], scalar_prefetch = 0 : i64, scratch_operands = 0 : i64, tpu.core_type = #tpu.core_type<tc>} {
    %c0 = arith.constant 0 : index
    %c0_0 = arith.constant 0 : index
    %0 = vector.load %arg0[%c0, %c0_0] : memref<8x40xbf16, #tpu.memory_space<vmem>>, vector<8x40xbf16>
    %c0_1 = arith.constant 0 : index
    %c0_2 = arith.constant 0 : index
    %1 = vector.load %arg1[%c0_1, %c0_2] : memref<40x352xbf16, #tpu.memory_space<vmem>>, vector<40x352xbf16>
    %cst = arith.constant dense<0.000000e+00> : vector<8x352xf32>
    %2 = tpu.matmul %0, %1, %cst {dimension_numbers = #tpu.dot_dimension_numbers<[1], [0], [0], [1], [0, 0, 1, 1], [], []>} : vector<8x40xbf16>, vector<40x352xbf16>, vector<8x352xf32> -> vector<8x352xf32>
    %c0_3 = arith.constant 0 : index
    %c0_4 = arith.constant 0 : index
    %3 = vector.load %arg2[%c0_3, %c0_4] : memref<8x1xf32, #tpu.memory_space<vmem>>, vector<8x1xf32>
    %4 = vector.broadcast %3 : vector<8x1xf32> to vector<8x352xf32>
    %5 = arith.addf %2, %4 : vector<8x352xf32>
    %cst_5 = arith.constant dense<0.000000e+00> : vector<8xf32>
    %6 = vector.multi_reduction <add>, %5, %cst_5 [1] : vector<8x352xf32> to vector<8xf32>
    %7 = vector.shape_cast %6 : vector<8xf32> to vector<8x1xf32>
    %cst_6 = arith.constant 3.520000e+02 : f32
    %8 = vector.broadcast %cst_6 : f32 to vector<8x1xf32>
    %9 = arith.divf %7, %8 : vector<8x1xf32>
    %10 = arith.mulf %5, %5 : vector<8x352xf32>
    %cst_7 = arith.constant dense<0.000000e+00> : vector<8xf32>
    %11 = vector.multi_reduction <add>, %10, %cst_7 [1] : vector<8x352xf32> to vector<8xf32>
    %12 = vector.shape_cast %11 : vector<8xf32> to vector<8x1xf32>
    %cst_8 = arith.constant 3.520000e+02 : f32
    %13 = vector.broadcast %cst_8 : f32 to vector<8x1xf32>
    %14 = arith.divf %12, %13 : vector<8x1xf32>
    %15 = arith.mulf %9, %9 : vector<8x1xf32>
    %16 = arith.subf %14, %15 : vector<8x1xf32>
    %cst_9 = arith.constant 9.99999974E-6 : f32
    %17 = vector.broadcast %cst_9 : f32 to vector<8x1xf32>
    %18 = arith.addf %16, %17 : vector<8x1xf32>
    %19 = math.rsqrt %18 : vector<8x1xf32>
    %c0_10 = arith.constant 0 : index
    %c0_11 = arith.constant 0 : index
    %20 = vector.load %arg3[%c0_10, %c0_11] : memref<8x1xf32, #tpu.memory_space<vmem>>, vector<8x1xf32>
    %21 = arith.mulf %20, %19 : vector<8x1xf32>
    %c0_12 = arith.constant 0 : index
    %c0_13 = arith.constant 0 : index
    %22 = vector.load %arg4[%c0_12, %c0_13] : memref<8x1xf32, #tpu.memory_space<vmem>>, vector<8x1xf32>
    %23 = arith.mulf %9, %21 : vector<8x1xf32>
    %24 = arith.subf %22, %23 : vector<8x1xf32>
    %25 = vector.broadcast %21 : vector<8x1xf32> to vector<8x352xf32>
    %26 = arith.mulf %5, %25 : vector<8x352xf32>
    %27 = vector.broadcast %24 : vector<8x1xf32> to vector<8x352xf32>
    %28 = arith.addf %26, %27 : vector<8x352xf32>
    %c0_14 = arith.constant 0 : index
    %c0_15 = arith.constant 0 : index
    %29 = vector.load %arg5[%c0_14, %c0_15] : memref<1x1xf32, #tpu.memory_space<vmem>>, vector<1x1xf32>
    %30 = vector.extract %29[0, 0] : f32 from vector<1x1xf32>
    %cst_16 = arith.constant 0.000000e+00 : f32
    %31 = vector.broadcast %cst_16 : f32 to vector<8x352xf32>
    %32 = arith.cmpf oge, %28, %31 : vector<8x352xf32>
    %33 = vector.broadcast %30 : f32 to vector<8x352xf32>
    %34 = arith.mulf %33, %28 : vector<8x352xf32>
    %35 = arith.select %32, %28, %34 : vector<8x352xi1>, vector<8x352xf32>
    %c0_17 = arith.constant 0 : index
    %c0_18 = arith.constant 0 : index
    %36 = vector.load %arg6[%c0_17, %c0_18] : memref<8x352xf32, #tpu.memory_space<vmem>>, vector<8x352xf32>
    tpu.vector_store %arg6[%c0_17, %c0_18], %35 {strides = array<i32>} : memref<8x352xf32, #tpu.memory_space<vmem>>, vector<8x352xf32>,
    return
  }
}

module attributes {stable_mosaic.version = 11 : i64} {
  func.func @_conv_bn_prelu_kernel(%arg0: memref<16x80xbf16, #tpu.memory_space<vmem>>, %arg1: memref<80x176xbf16, #tpu.memory_space<vmem>>, %arg2: memref<16x1xf32, #tpu.memory_space<vmem>>, %arg3: memref<16x1xf32, #tpu.memory_space<vmem>>, %arg4: memref<16x1xf32, #tpu.memory_space<vmem>>, %arg5: memref<1x1xf32, #tpu.memory_space<vmem>>, %arg6: memref<16x176xf32, #tpu.memory_space<vmem>>) attributes {dimension_semantics = [], scalar_prefetch = 0 : i64, scratch_operands = 0 : i64, tpu.core_type = #tpu.core_type<tc>} {
    %c0 = arith.constant 0 : index
    %c0_0 = arith.constant 0 : index
    %0 = vector.load %arg0[%c0, %c0_0] : memref<16x80xbf16, #tpu.memory_space<vmem>>, vector<16x80xbf16>
    %c0_1 = arith.constant 0 : index
    %c0_2 = arith.constant 0 : index
    %1 = vector.load %arg1[%c0_1, %c0_2] : memref<80x176xbf16, #tpu.memory_space<vmem>>, vector<80x176xbf16>
    %cst = arith.constant dense<0.000000e+00> : vector<16x176xf32>
    %2 = tpu.matmul %0, %1, %cst {dimension_numbers = #tpu.dot_dimension_numbers<[1], [0], [0], [1], [0, 0, 1, 1], [], []>} : vector<16x80xbf16>, vector<80x176xbf16>, vector<16x176xf32> -> vector<16x176xf32>
    %c0_3 = arith.constant 0 : index
    %c0_4 = arith.constant 0 : index
    %3 = vector.load %arg2[%c0_3, %c0_4] : memref<16x1xf32, #tpu.memory_space<vmem>>, vector<16x1xf32>
    %4 = vector.broadcast %3 : vector<16x1xf32> to vector<16x176xf32>
    %5 = arith.addf %2, %4 : vector<16x176xf32>
    %cst_5 = arith.constant dense<0.000000e+00> : vector<16xf32>
    %6 = vector.multi_reduction <add>, %5, %cst_5 [1] : vector<16x176xf32> to vector<16xf32>
    %7 = vector.shape_cast %6 : vector<16xf32> to vector<16x1xf32>
    %cst_6 = arith.constant 1.760000e+02 : f32
    %8 = vector.broadcast %cst_6 : f32 to vector<16x1xf32>
    %9 = arith.divf %7, %8 : vector<16x1xf32>
    %10 = arith.mulf %5, %5 : vector<16x176xf32>
    %cst_7 = arith.constant dense<0.000000e+00> : vector<16xf32>
    %11 = vector.multi_reduction <add>, %10, %cst_7 [1] : vector<16x176xf32> to vector<16xf32>
    %12 = vector.shape_cast %11 : vector<16xf32> to vector<16x1xf32>
    %cst_8 = arith.constant 1.760000e+02 : f32
    %13 = vector.broadcast %cst_8 : f32 to vector<16x1xf32>
    %14 = arith.divf %12, %13 : vector<16x1xf32>
    %15 = arith.mulf %9, %9 : vector<16x1xf32>
    %16 = arith.subf %14, %15 : vector<16x1xf32>
    %cst_9 = arith.constant 9.99999974E-6 : f32
    %17 = vector.broadcast %cst_9 : f32 to vector<16x1xf32>
    %18 = arith.addf %16, %17 : vector<16x1xf32>
    %19 = math.rsqrt %18 : vector<16x1xf32>
    %c0_10 = arith.constant 0 : index
    %c0_11 = arith.constant 0 : index
    %20 = vector.load %arg3[%c0_10, %c0_11] : memref<16x1xf32, #tpu.memory_space<vmem>>, vector<16x1xf32>
    %21 = arith.mulf %20, %19 : vector<16x1xf32>
    %c0_12 = arith.constant 0 : index
    %c0_13 = arith.constant 0 : index
    %22 = vector.load %arg4[%c0_12, %c0_13] : memref<16x1xf32, #tpu.memory_space<vmem>>, vector<16x1xf32>
    %23 = arith.mulf %9, %21 : vector<16x1xf32>
    %24 = arith.subf %22, %23 : vector<16x1xf32>
    %25 = vector.broadcast %21 : vector<16x1xf32> to vector<16x176xf32>
    %26 = arith.mulf %5, %25 : vector<16x176xf32>
    %27 = vector.broadcast %24 : vector<16x1xf32> to vector<16x176xf32>
    %28 = arith.addf %26, %27 : vector<16x176xf32>
    %c0_14 = arith.constant 0 : index
    %c0_15 = arith.constant 0 : index
    %29 = vector.load %arg5[%c0_14, %c0_15] : memref<1x1xf32, #tpu.memory_space<vmem>>, vector<1x1xf32>
    %30 = vector.extract %29[0, 0] : f32 from vector<1x1xf32>
    %cst_16 = arith.constant 0.000000e+00 : f32
    %31 = vector.broadcast %cst_16 : f32 to vector<16x176xf32>
    %32 = arith.cmpf oge, %28, %31 : vector<16x176xf32>
    %33 = vector.broadcast %30 : f32 to vector<16x176xf32>
    %34 = arith.mulf %33, %28 : vector<16x176xf32>
    %35 = arith.select %32, %28, %34 : vector<16x176xi1>, vector<16x176xf32>
    %c0_17 = arith.constant 0 : index
    %c0_18 = arith.constant 0 : index
    %36 = vector.load %arg6[%c0_17, %c0_18] : memref<16x176xf32, #tpu.memory_space<vmem>>, vector<16x176xf32>
    tpu.vector_store %arg6[%c0_17, %c0_18], %35 {strides = array<i32>} : memref<16x176xf32, #tpu.memory_space<vmem>>, vector<16x176xf32>,
    return
  }
}

module attributes {stable_mosaic.version = 11 : i64} {
  func.func @_lstm_linear_kernel(%arg0: memref<22x128xf32, #tpu.memory_space<vmem>>, %arg1: memref<128x64xf32, #tpu.memory_space<vmem>>, %arg2: memref<16x64xf32, #tpu.memory_space<vmem>>, %arg3: memref<1x64xf32, #tpu.memory_space<vmem>>, %arg4: memref<16x64xf32, #tpu.memory_space<vmem>>, %arg5: memref<16x64xf32, #tpu.memory_space<vmem>>, %arg6: memref<1x64xf32, #tpu.memory_space<vmem>>, %arg7: memref<16x128xf32, #tpu.memory_space<vmem>>, %arg8: memref<1x128xf32, #tpu.memory_space<vmem>>, %arg9: memref<22x128xf32, #tpu.memory_space<vmem>>, %arg10: memref<22x16xf32, #tpu.memory_space<vmem>>) attributes {dimension_semantics = [], scalar_prefetch = 0 : i64, scratch_operands = 1 : i64, tpu.core_type = #tpu.core_type<tc>} {
    %c0 = arith.constant 0 : index
    %c0_0 = arith.constant 0 : index
    %0 = vector.load %arg0[%c0, %c0_0] : memref<22x128xf32, #tpu.memory_space<vmem>>, vector<22x128xf32>
    %c0_1 = arith.constant 0 : index
    %c0_2 = arith.constant 0 : index
    %1 = vector.load %arg1[%c0_1, %c0_2] : memref<128x64xf32, #tpu.memory_space<vmem>>, vector<128x64xf32>
    %cst = arith.constant dense<0.000000e+00> : vector<22x64xf32>
    %2 = tpu.matmul %0, %1, %cst {dimension_numbers = #tpu.dot_dimension_numbers<[1], [0], [0], [1], [0, 0, 1, 1], [], []>} : vector<22x128xf32>, vector<128x64xf32>, vector<22x64xf32> -> vector<22x64xf32>
    %c0_3 = arith.constant 0 : index
    %c0_4 = arith.constant 0 : index
    %3 = vector.load %arg3[%c0_3, %c0_4] : memref<1x64xf32, #tpu.memory_space<vmem>>, vector<1x64xf32>
    %4 = vector.broadcast %3 : vector<1x64xf32> to vector<22x64xf32>
    %5 = arith.addf %2, %4 : vector<22x64xf32>
    %c0_5 = arith.constant 0 : index
    %c0_6 = arith.constant 0 : index
    %6 = vector.load %arg2[%c0_5, %c0_6] : memref<16x64xf32, #tpu.memory_space<vmem>>, vector<16x64xf32>
    %c0_7 = arith.constant 0 : index
    %c0_8 = arith.constant 0 : index
    %7 = vector.load %arg4[%c0_7, %c0_8] : memref<16x64xf32, #tpu.memory_space<vmem>>, vector<16x64xf32>
    %c0_9 = arith.constant 0 : index
    %c0_10 = arith.constant 0 : index
    %8 = vector.load %arg5[%c0_9, %c0_10] : memref<16x64xf32, #tpu.memory_space<vmem>>, vector<16x64xf32>
    %c0_11 = arith.constant 0 : index
    %c0_12 = arith.constant 0 : index
    %9 = vector.load %arg6[%c0_11, %c0_12] : memref<1x64xf32, #tpu.memory_space<vmem>>, vector<1x64xf32>
    %cst_13 = arith.constant 0.000000e+00 : f32
    %10 = vector.broadcast %cst_13 : f32 to vector<2x16xf32>
    %11 = vector.extract_strided_slice %5 {offsets = [0, 0], sizes = [2, 64], strides = [1, 1]} : vector<22x64xf32> to vector<2x64xf32>
    %cst_14 = arith.constant dense<0.000000e+00> : vector<2x64xf32>
    %12 = tpu.matmul %10, %6, %cst_14 {dimension_numbers = #tpu.dot_dimension_numbers<[1], [0], [0], [1], [0, 0, 1, 1], [], []>} : vector<2x16xf32>, vector<16x64xf32>, vector<2x64xf32> -> vector<2x64xf32>
    %13 = arith.addf %11, %12 : vector<2x64xf32>
    %14 = vector.extract_strided_slice %13 {offsets = [0, 0], sizes = [2, 16], strides = [1, 1]} : vector<2x64xf32> to vector<2x16xf32>
    %15 = arith.negf %14 : vector<2x16xf32>
    %16 = math.exp %15 : vector<2x16xf32>
    %cst_15 = arith.constant 1.000000e+00 : f32
    %17 = vector.broadcast %cst_15 : f32 to vector<2x16xf32>
    %18 = arith.addf %17, %16 : vector<2x16xf32>
    %19 = arith.divf %17, %18 : vector<2x16xf32>
    %20 = vector.extract_strided_slice %13 {offsets = [0, 16], sizes = [2, 16], strides = [1, 1]} : vector<2x64xf32> to vector<2x16xf32>
    %21 = arith.negf %20 : vector<2x16xf32>
    %22 = math.exp %21 : vector<2x16xf32>
    %cst_16 = arith.constant 1.000000e+00 : f32
    %23 = vector.broadcast %cst_16 : f32 to vector<2x16xf32>
    %24 = arith.addf %23, %22 : vector<2x16xf32>
    %25 = arith.divf %23, %24 : vector<2x16xf32>
    %26 = vector.extract_strided_slice %13 {offsets = [0, 32], sizes = [2, 16], strides = [1, 1]} : vector<2x64xf32> to vector<2x16xf32>
    %27 = math.tanh %26 : vector<2x16xf32>
    %28 = vector.extract_strided_slice %13 {offsets = [0, 48], sizes = [2, 16], strides = [1, 1]} : vector<2x64xf32> to vector<2x16xf32>
    %29 = arith.negf %28 : vector<2x16xf32>
    %30 = math.exp %29 : vector<2x16xf32>
    %cst_17 = arith.constant 1.000000e+00 : f32
    %31 = vector.broadcast %cst_17 : f32 to vector<2x16xf32>
    %32 = arith.addf %31, %30 : vector<2x16xf32>
    %33 = arith.divf %31, %32 : vector<2x16xf32>
    %34 = arith.mulf %25, %10 : vector<2x16xf32>
    %35 = arith.mulf %19, %27 : vector<2x16xf32>
    %36 = arith.addf %34, %35 : vector<2x16xf32>
    %37 = math.tanh %36 : vector<2x16xf32>
    %38 = arith.mulf %33, %37 : vector<2x16xf32>
    %cst_18 = arith.constant dense<0.000000e+00> : vector<2x64xf32>
    %39 = tpu.matmul %38, %7, %cst_18 {dimension_numbers = #tpu.dot_dimension_numbers<[1], [0], [0], [1], [0, 0, 1, 1], [], []>} : vector<2x16xf32>, vector<16x64xf32>, vector<2x64xf32> -> vector<2x64xf32>
    %40 = vector.broadcast %9 : vector<1x64xf32> to vector<2x64xf32>
    %41 = arith.addf %39, %40 : vector<2x64xf32>
    %cst_19 = arith.constant dense<0.000000e+00> : vector<2x64xf32>
    %42 = tpu.matmul %10, %8, %cst_19 {dimension_numbers = #tpu.dot_dimension_numbers<[1], [0], [0], [1], [0, 0, 1, 1], [], []>} : vector<2x16xf32>, vector<16x64xf32>, vector<2x64xf32> -> vector<2x64xf32>
    %43 = arith.addf %41, %42 : vector<2x64xf32>
    %44 = vector.extract_strided_slice %43 {offsets = [0, 0], sizes = [2, 16], strides = [1, 1]} : vector<2x64xf32> to vector<2x16xf32>
    %45 = arith.negf %44 : vector<2x16xf32>
    %46 = math.exp %45 : vector<2x16xf32>
    %cst_20 = arith.constant 1.000000e+00 : f32
    %47 = vector.broadcast %cst_20 : f32 to vector<2x16xf32>
    %48 = arith.addf %47, %46 : vector<2x16xf32>
    %49 = arith.divf %47, %48 : vector<2x16xf32>
    %50 = vector.extract_strided_slice %43 {offsets = [0, 16], sizes = [2, 16], strides = [1, 1]} : vector<2x64xf32> to vector<2x16xf32>
    %51 = arith.negf %50 : vector<2x16xf32>
    %52 = math.exp %51 : vector<2x16xf32>
    %cst_21 = arith.constant 1.000000e+00 : f32
    %53 = vector.broadcast %cst_21 : f32 to vector<2x16xf32>
    %54 = arith.addf %53, %52 : vector<2x16xf32>
    %55 = arith.divf %53, %54 : vector<2x16xf32>
    %56 = vector.extract_strided_slice %43 {offsets = [0, 32], sizes = [2, 16], strides = [1, 1]} : vector<2x64xf32> to vector<2x16xf32>
    %57 = math.tanh %56 : vector<2x16xf32>
    %58 = vector.extract_strided_slice %43 {offsets = [0, 48], sizes = [2, 16], strides = [1, 1]} : vector<2x64xf32> to vector<2x16xf32>
    %59 = arith.negf %58 : vector<2x16xf32>
    %60 = math.exp %59 : vector<2x16xf32>
    %cst_22 = arith.constant 1.000000e+00 : f32
    %61 = vector.broadcast %cst_22 : f32 to vector<2x16xf32>
    %62 = arith.addf %61, %60 : vector<2x16xf32>
    %63 = arith.divf %61, %62 : vector<2x16xf32>
    %64 = arith.mulf %55, %10 : vector<2x16xf32>
    %65 = arith.mulf %49, %57 : vector<2x16xf32>
    %66 = arith.addf %64, %65 : vector<2x16xf32>
    %67 = math.tanh %66 : vector<2x16xf32>
    %68 = arith.mulf %63, %67 : vector<2x16xf32>
    %c0_23 = arith.constant 0 : index
    %c0_24 = arith.constant 0 : index
    %69 = vector.load %arg10[%c0_23, %c0_24] : memref<22x16xf32, #tpu.memory_space<vmem>>, vector<2x16xf32>
    tpu.vector_store %arg10[%c0_23, %c0_24], %68 {strides = array<i32>} : memref<22x16xf32, #tpu.memory_space<vmem>>, vector<2x16xf32>,
    %70 = vector.extract_strided_slice %5 {offsets = [2, 0], sizes = [2, 64], strides = [1, 1]} : vector<22x64xf32> to vector<2x64xf32>
    %cst_25 = arith.constant dense<0.000000e+00> : vector<2x64xf32>
    %71 = tpu.matmul %38, %6, %cst_25 {dimension_numbers = #tpu.dot_dimension_numbers<[1], [0], [0], [1], [0, 0, 1, 1], [], []>} : vector<2x16xf32>, vector<16x64xf32>, vector<2x64xf32> -> vector<2x64xf32>
    %72 = arith.addf %70, %71 : vector<2x64xf32>
    %73 = vector.extract_strided_slice %72 {offsets = [0, 0], sizes = [2, 16], strides = [1, 1]} : vector<2x64xf32> to vector<2x16xf32>
    %74 = arith.negf %73 : vector<2x16xf32>
    %75 = math.exp %74 : vector<2x16xf32>
    %cst_26 = arith.constant 1.000000e+00 : f32
    %76 = vector.broadcast %cst_26 : f32 to vector<2x16xf32>
    %77 = arith.addf %76, %75 : vector<2x16xf32>
    %78 = arith.divf %76, %77 : vector<2x16xf32>
    %79 = vector.extract_strided_slice %72 {offsets = [0, 16], sizes = [2, 16], strides = [1, 1]} : vector<2x64xf32> to vector<2x16xf32>
    %80 = arith.negf %79 : vector<2x16xf32>
    %81 = math.exp %80 : vector<2x16xf32>
    %cst_27 = arith.constant 1.000000e+00 : f32
    %82 = vector.broadcast %cst_27 : f32 to vector<2x16xf32>
    %83 = arith.addf %82, %81 : vector<2x16xf32>
    %84 = arith.divf %82, %83 : vector<2x16xf32>
    %85 = vector.extract_strided_slice %72 {offsets = [0, 32], sizes = [2, 16], strides = [1, 1]} : vector<2x64xf32> to vector<2x16xf32>
    %86 = math.tanh %85 : vector<2x16xf32>
    %87 = vector.extract_strided_slice %72 {offsets = [0, 48], sizes = [2, 16], strides = [1, 1]} : vector<2x64xf32> to vector<2x16xf32>
    %88 = arith.negf %87 : vector<2x16xf32>
    %89 = math.exp %88 : vector<2x16xf32>
    %cst_28 = arith.constant 1.000000e+00 : f32
    %90 = vector.broadcast %cst_28 : f32 to vector<2x16xf32>
    %91 = arith.addf %90, %89 : vector<2x16xf32>
    %92 = arith.divf %90, %91 : vector<2x16xf32>
    %93 = arith.mulf %84, %36 : vector<2x16xf32>
    %94 = arith.mulf %78, %86 : vector<2x16xf32>
    %95 = arith.addf %93, %94 : vector<2x16xf32>
    %96 = math.tanh %95 : vector<2x16xf32>
    %97 = arith.mulf %92, %96 : vector<2x16xf32>
    %cst_29 = arith.constant dense<0.000000e+00> : vector<2x64xf32>
    %98 = tpu.matmul %97, %7, %cst_29 {dimension_numbers = #tpu.dot_dimension_numbers<[1], [0], [0], [1], [0, 0, 1, 1], [], []>} : vector<2x16xf32>, vector<16x64xf32>, vector<2x64xf32> -> vector<2x64xf32>
    %99 = vector.broadcast %9 : vector<1x64xf32> to vector<2x64xf32>
    %100 = arith.addf %98, %99 : vector<2x64xf32>
    %cst_30 = arith.constant dense<0.000000e+00> : vector<2x64xf32>
    %101 = tpu.matmul %68, %8, %cst_30 {dimension_numbers = #tpu.dot_dimension_numbers<[1], [0], [0], [1], [0, 0, 1, 1], [], []>} : vector<2x16xf32>, vector<16x64xf32>, vector<2x64xf32> -> vector<2x64xf32>
    %102 = arith.addf %100, %101 : vector<2x64xf32>
    %103 = vector.extract_strided_slice %102 {offsets = [0, 0], sizes = [2, 16], strides = [1, 1]} : vector<2x64xf32> to vector<2x16xf32>
    %104 = arith.negf %103 : vector<2x16xf32>
    %105 = math.exp %104 : vector<2x16xf32>
    %cst_31 = arith.constant 1.000000e+00 : f32
    %106 = vector.broadcast %cst_31 : f32 to vector<2x16xf32>
    %107 = arith.addf %106, %105 : vector<2x16xf32>
    %108 = arith.divf %106, %107 : vector<2x16xf32>
    %109 = vector.extract_strided_slice %102 {offsets = [0, 16], sizes = [2, 16], strides = [1, 1]} : vector<2x64xf32> to vector<2x16xf32>
    %110 = arith.negf %109 : vector<2x16xf32>
    %111 = math.exp %110 : vector<2x16xf32>
    %cst_32 = arith.constant 1.000000e+00 : f32
    %112 = vector.broadcast %cst_32 : f32 to vector<2x16xf32>
    %113 = arith.addf %112, %111 : vector<2x16xf32>
    %114 = arith.divf %112, %113 : vector<2x16xf32>
    %115 = vector.extract_strided_slice %102 {offsets = [0, 32], sizes = [2, 16], strides = [1, 1]} : vector<2x64xf32> to vector<2x16xf32>
    %116 = math.tanh %115 : vector<2x16xf32>
    %117 = vector.extract_strided_slice %102 {offsets = [0, 48], sizes = [2, 16], strides = [1, 1]} : vector<2x64xf32> to vector<2x16xf32>
    %118 = arith.negf %117 : vector<2x16xf32>
    %119 = math.exp %118 : vector<2x16xf32>
    %cst_33 = arith.constant 1.000000e+00 : f32
    %120 = vector.broadcast %cst_33 : f32 to vector<2x16xf32>
    %121 = arith.addf %120, %119 : vector<2x16xf32>
    %122 = arith.divf %120, %121 : vector<2x16xf32>
    %123 = arith.mulf %114, %66 : vector<2x16xf32>
    %124 = arith.mulf %108, %116 : vector<2x16xf32>
    %125 = arith.addf %123, %124 : vector<2x16xf32>
    %126 = math.tanh %125 : vector<2x16xf32>
    %127 = arith.mulf %122, %126 : vector<2x16xf32>
    %c2 = arith.constant 2 : index
    %c0_34 = arith.constant 0 : index
    %128 = vector.load %arg10[%c2, %c0_34] : memref<22x16xf32, #tpu.memory_space<vmem>>, vector<2x16xf32>
    tpu.vector_store %arg10[%c2, %c0_34], %127 {strides = array<i32>} : memref<22x16xf32, #tpu.memory_space<vmem>>, vector<2x16xf32>,
    %129 = vector.extract_strided_slice %5 {offsets = [4, 0], sizes = [2, 64], strides = [1, 1]} : vector<22x64xf32> to vector<2x64xf32>
    %cst_35 = arith.constant dense<0.000000e+00> : vector<2x64xf32>
    %130 = tpu.matmul %97, %6, %cst_35 {dimension_numbers = #tpu.dot_dimension_numbers<[1], [0], [0], [1], [0, 0, 1, 1], [], []>} : vector<2x16xf32>, vector<16x64xf32>, vector<2x64xf32> -> vector<2x64xf32>
    %131 = arith.addf %129, %130 : vector<2x64xf32>
    %132 = vector.extract_strided_slice %131 {offsets = [0, 0], sizes = [2, 16], strides = [1, 1]} : vector<2x64xf32> to vector<2x16xf32>
    %133 = arith.negf %132 : vector<2x16xf32>
    %134 = math.exp %133 : vector<2x16xf32>
    %cst_36 = arith.constant 1.000000e+00 : f32
    %135 = vector.broadcast %cst_36 : f32 to vector<2x16xf32>
    %136 = arith.addf %135, %134 : vector<2x16xf32>
    %137 = arith.divf %135, %136 : vector<2x16xf32>
    %138 = vector.extract_strided_slice %131 {offsets = [0, 16], sizes = [2, 16], strides = [1, 1]} : vector<2x64xf32> to vector<2x16xf32>
    %139 = arith.negf %138 : vector<2x16xf32>
    %140 = math.exp %139 : vector<2x16xf32>
    %cst_37 = arith.constant 1.000000e+00 : f32
    %141 = vector.broadcast %cst_37 : f32 to vector<2x16xf32>
    %142 = arith.addf %141, %140 : vector<2x16xf32>
    %143 = arith.divf %141, %142 : vector<2x16xf32>
    %144 = vector.extract_strided_slice %131 {offsets = [0, 32], sizes = [2, 16], strides = [1, 1]} : vector<2x64xf32> to vector<2x16xf32>
    %145 = math.tanh %144 : vector<2x16xf32>
    %146 = vector.extract_strided_slice %131 {offsets = [0, 48], sizes = [2, 16], strides = [1, 1]} : vector<2x64xf32> to vector<2x16xf32>
    %147 = arith.negf %146 : vector<2x16xf32>
    %148 = math.exp %147 : vector<2x16xf32>
    %cst_38 = arith.constant 1.000000e+00 : f32
    %149 = vector.broadcast %cst_38 : f32 to vector<2x16xf32>
    %150 = arith.addf %149, %148 : vector<2x16xf32>
    %151 = arith.divf %149, %150 : vector<2x16xf32>
    %152 = arith.mulf %143, %95 : vector<2x16xf32>
    %153 = arith.mulf %137, %145 : vector<2x16xf32>
    %154 = arith.addf %152, %153 : vector<2x16xf32>
    %155 = math.tanh %154 : vector<2x16xf32>
    %156 = arith.mulf %151, %155 : vector<2x16xf32>
    %cst_39 = arith.constant dense<0.000000e+00> : vector<2x64xf32>
    %157 = tpu.matmul %156, %7, %cst_39 {dimension_numbers = #tpu.dot_dimension_numbers<[1], [0], [0], [1], [0, 0, 1, 1], [], []>} : vector<2x16xf32>, vector<16x64xf32>, vector<2x64xf32> -> vector<2x64xf32>
    %158 = vector.broadcast %9 : vector<1x64xf32> to vector<2x64xf32>
    %159 = arith.addf %157, %158 : vector<2x64xf32>
    %cst_40 = arith.constant dense<0.000000e+00> : vector<2x64xf32>
    %160 = tpu.matmul %127, %8, %cst_40 {dimension_numbers = #tpu.dot_dimension_numbers<[1], [0], [0], [1], [0, 0, 1, 1], [], []>} : vector<2x16xf32>, vector<16x64xf32>, vector<2x64xf32> -> vector<2x64xf32>
    %161 = arith.addf %159, %160 : vector<2x64xf32>
    %162 = vector.extract_strided_slice %161 {offsets = [0, 0], sizes = [2, 16], strides = [1, 1]} : vector<2x64xf32> to vector<2x16xf32>
    %163 = arith.negf %162 : vector<2x16xf32>
    %164 = math.exp %163 : vector<2x16xf32>
    %cst_41 = arith.constant 1.000000e+00 : f32
    %165 = vector.broadcast %cst_41 : f32 to vector<2x16xf32>
    %166 = arith.addf %165, %164 : vector<2x16xf32>
    %167 = arith.divf %165, %166 : vector<2x16xf32>
    %168 = vector.extract_strided_slice %161 {offsets = [0, 16], sizes = [2, 16], strides = [1, 1]} : vector<2x64xf32> to vector<2x16xf32>
    %169 = arith.negf %168 : vector<2x16xf32>
    %170 = math.exp %169 : vector<2x16xf32>
    %cst_42 = arith.constant 1.000000e+00 : f32
    %171 = vector.broadcast %cst_42 : f32 to vector<2x16xf32>
    %172 = arith.addf %171, %170 : vector<2x16xf32>
    %173 = arith.divf %171, %172 : vector<2x16xf32>
    %174 = vector.extract_strided_slice %161 {offsets = [0, 32], sizes = [2, 16], strides = [1, 1]} : vector<2x64xf32> to vector<2x16xf32>
    %175 = math.tanh %174 : vector<2x16xf32>
    %176 = vector.extract_strided_slice %161 {offsets = [0, 48], sizes = [2, 16], strides = [1, 1]} : vector<2x64xf32> to vector<2x16xf32>
    %177 = arith.negf %176 : vector<2x16xf32>
    %178 = math.exp %177 : vector<2x16xf32>
    %cst_43 = arith.constant 1.000000e+00 : f32
    %179 = vector.broadcast %cst_43 : f32 to vector<2x16xf32>
    %180 = arith.addf %179, %178 : vector<2x16xf32>
    %181 = arith.divf %179, %180 : vector<2x16xf32>
    %182 = arith.mulf %173, %125 : vector<2x16xf32>
    %183 = arith.mulf %167, %175 : vector<2x16xf32>
    %184 = arith.addf %182, %183 : vector<2x16xf32>
    %185 = math.tanh %184 : vector<2x16xf32>
    %186 = arith.mulf %181, %185 : vector<2x16xf32>
    %c4 = arith.constant 4 : index
    %c0_44 = arith.constant 0 : index
    %187 = vector.load %arg10[%c4, %c0_44] : memref<22x16xf32, #tpu.memory_space<vmem>>, vector<2x16xf32>
    tpu.vector_store %arg10[%c4, %c0_44], %186 {strides = array<i32>} : memref<22x16xf32, #tpu.memory_space<vmem>>, vector<2x16xf32>,
    %188 = vector.extract_strided_slice %5 {offsets = [6, 0], sizes = [2, 64], strides = [1, 1]} : vector<22x64xf32> to vector<2x64xf32>
    %cst_45 = arith.constant dense<0.000000e+00> : vector<2x64xf32>
    %189 = tpu.matmul %156, %6, %cst_45 {dimension_numbers = #tpu.dot_dimension_numbers<[1], [0], [0], [1], [0, 0, 1, 1], [], []>} : vector<2x16xf32>, vector<16x64xf32>, vector<2x64xf32> -> vector<2x64xf32>
    %190 = arith.addf %188, %189 : vector<2x64xf32>
    %191 = vector.extract_strided_slice %190 {offsets = [0, 0], sizes = [2, 16], strides = [1, 1]} : vector<2x64xf32> to vector<2x16xf32>
    %192 = arith.negf %191 : vector<2x16xf32>
    %193 = math.exp %192 : vector<2x16xf32>
    %cst_46 = arith.constant 1.000000e+00 : f32
    %194 = vector.broadcast %cst_46 : f32 to vector<2x16xf32>
    %195 = arith.addf %194, %193 : vector<2x16xf32>
    %196 = arith.divf %194, %195 : vector<2x16xf32>
    %197 = vector.extract_strided_slice %190 {offsets = [0, 16], sizes = [2, 16], strides = [1, 1]} : vector<2x64xf32> to vector<2x16xf32>
    %198 = arith.negf %197 : vector<2x16xf32>
    %199 = math.exp %198 : vector<2x16xf32>
    %cst_47 = arith.constant 1.000000e+00 : f32
    %200 = vector.broadcast %cst_47 : f32 to vector<2x16xf32>
    %201 = arith.addf %200, %199 : vector<2x16xf32>
    %202 = arith.divf %200, %201 : vector<2x16xf32>
    %203 = vector.extract_strided_slice %190 {offsets = [0, 32], sizes = [2, 16], strides = [1, 1]} : vector<2x64xf32> to vector<2x16xf32>
    %204 = math.tanh %203 : vector<2x16xf32>
    %205 = vector.extract_strided_slice %190 {offsets = [0, 48], sizes = [2, 16], strides = [1, 1]} : vector<2x64xf32> to vector<2x16xf32>
    %206 = arith.negf %205 : vector<2x16xf32>
    %207 = math.exp %206 : vector<2x16xf32>
    %cst_48 = arith.constant 1.000000e+00 : f32
    %208 = vector.broadcast %cst_48 : f32 to vector<2x16xf32>
    %209 = arith.addf %208, %207 : vector<2x16xf32>
    %210 = arith.divf %208, %209 : vector<2x16xf32>
    %211 = arith.mulf %202, %154 : vector<2x16xf32>
    %212 = arith.mulf %196, %204 : vector<2x16xf32>
    %213 = arith.addf %211, %212 : vector<2x16xf32>
    %214 = math.tanh %213 : vector<2x16xf32>
    %215 = arith.mulf %210, %214 : vector<2x16xf32>
    %cst_49 = arith.constant dense<0.000000e+00> : vector<2x64xf32>
    %216 = tpu.matmul %215, %7, %cst_49 {dimension_numbers = #tpu.dot_dimension_numbers<[1], [0], [0], [1], [0, 0, 1, 1], [], []>} : vector<2x16xf32>, vector<16x64xf32>, vector<2x64xf32> -> vector<2x64xf32>
    %217 = vector.broadcast %9 : vector<1x64xf32> to vector<2x64xf32>
    %218 = arith.addf %216, %217 : vector<2x64xf32>
    %cst_50 = arith.constant dense<0.000000e+00> : vector<2x64xf32>
    %219 = tpu.matmul %186, %8, %cst_50 {dimension_numbers = #tpu.dot_dimension_numbers<[1], [0], [0], [1], [0, 0, 1, 1], [], []>} : vector<2x16xf32>, vector<16x64xf32>, vector<2x64xf32> -> vector<2x64xf32>
    %220 = arith.addf %218, %219 : vector<2x64xf32>
    %221 = vector.extract_strided_slice %220 {offsets = [0, 0], sizes = [2, 16], strides = [1, 1]} : vector<2x64xf32> to vector<2x16xf32>
    %222 = arith.negf %221 : vector<2x16xf32>
    %223 = math.exp %222 : vector<2x16xf32>
    %cst_51 = arith.constant 1.000000e+00 : f32
    %224 = vector.broadcast %cst_51 : f32 to vector<2x16xf32>
    %225 = arith.addf %224, %223 : vector<2x16xf32>
    %226 = arith.divf %224, %225 : vector<2x16xf32>
    %227 = vector.extract_strided_slice %220 {offsets = [0, 16], sizes = [2, 16], strides = [1, 1]} : vector<2x64xf32> to vector<2x16xf32>
    %228 = arith.negf %227 : vector<2x16xf32>
    %229 = math.exp %228 : vector<2x16xf32>
    %cst_52 = arith.constant 1.000000e+00 : f32
    %230 = vector.broadcast %cst_52 : f32 to vector<2x16xf32>
    %231 = arith.addf %230, %229 : vector<2x16xf32>
    %232 = arith.divf %230, %231 : vector<2x16xf32>
    %233 = vector.extract_strided_slice %220 {offsets = [0, 32], sizes = [2, 16], strides = [1, 1]} : vector<2x64xf32> to vector<2x16xf32>
    %234 = math.tanh %233 : vector<2x16xf32>
    %235 = vector.extract_strided_slice %220 {offsets = [0, 48], sizes = [2, 16], strides = [1, 1]} : vector<2x64xf32> to vector<2x16xf32>
    %236 = arith.negf %235 : vector<2x16xf32>
    %237 = math.exp %236 : vector<2x16xf32>
    %cst_53 = arith.constant 1.000000e+00 : f32
    %238 = vector.broadcast %cst_53 : f32 to vector<2x16xf32>
    %239 = arith.addf %238, %237 : vector<2x16xf32>
    %240 = arith.divf %238, %239 : vector<2x16xf32>
    %241 = arith.mulf %232, %184 : vector<2x16xf32>
    %242 = arith.mulf %226, %234 : vector<2x16xf32>
    %243 = arith.addf %241, %242 : vector<2x16xf32>
    %244 = math.tanh %243 : vector<2x16xf32>
    %245 = arith.mulf %240, %244 : vector<2x16xf32>
    %c6 = arith.constant 6 : index
    %c0_54 = arith.constant 0 : index
    %246 = vector.load %arg10[%c6, %c0_54] : memref<22x16xf32, #tpu.memory_space<vmem>>, vector<2x16xf32>
    tpu.vector_store %arg10[%c6, %c0_54], %245 {strides = array<i32>} : memref<22x16xf32, #tpu.memory_space<vmem>>, vector<2x16xf32>,
    %247 = vector.extract_strided_slice %5 {offsets = [8, 0], sizes = [2, 64], strides = [1, 1]} : vector<22x64xf32> to vector<2x64xf32>
    %cst_55 = arith.constant dense<0.000000e+00> : vector<2x64xf32>
    %248 = tpu.matmul %215, %6, %cst_55 {dimension_numbers = #tpu.dot_dimension_numbers<[1], [0], [0], [1], [0, 0, 1, 1], [], []>} : vector<2x16xf32>, vector<16x64xf32>, vector<2x64xf32> -> vector<2x64xf32>
    %249 = arith.addf %247, %248 : vector<2x64xf32>
    %250 = vector.extract_strided_slice %249 {offsets = [0, 0], sizes = [2, 16], strides = [1, 1]} : vector<2x64xf32> to vector<2x16xf32>
    %251 = arith.negf %250 : vector<2x16xf32>
    %252 = math.exp %251 : vector<2x16xf32>
    %cst_56 = arith.constant 1.000000e+00 : f32
    %253 = vector.broadcast %cst_56 : f32 to vector<2x16xf32>
    %254 = arith.addf %253, %252 : vector<2x16xf32>
    %255 = arith.divf %253, %254 : vector<2x16xf32>
    %256 = vector.extract_strided_slice %249 {offsets = [0, 16], sizes = [2, 16], strides = [1, 1]} : vector<2x64xf32> to vector<2x16xf32>
    %257 = arith.negf %256 : vector<2x16xf32>
    %258 = math.exp %257 : vector<2x16xf32>
    %cst_57 = arith.constant 1.000000e+00 : f32
    %259 = vector.broadcast %cst_57 : f32 to vector<2x16xf32>
    %260 = arith.addf %259, %258 : vector<2x16xf32>
    %261 = arith.divf %259, %260 : vector<2x16xf32>
    %262 = vector.extract_strided_slice %249 {offsets = [0, 32], sizes = [2, 16], strides = [1, 1]} : vector<2x64xf32> to vector<2x16xf32>
    %263 = math.tanh %262 : vector<2x16xf32>
    %264 = vector.extract_strided_slice %249 {offsets = [0, 48], sizes = [2, 16], strides = [1, 1]} : vector<2x64xf32> to vector<2x16xf32>
    %265 = arith.negf %264 : vector<2x16xf32>
    %266 = math.exp %265 : vector<2x16xf32>
    %cst_58 = arith.constant 1.000000e+00 : f32
    %267 = vector.broadcast %cst_58 : f32 to vector<2x16xf32>
    %268 = arith.addf %267, %266 : vector<2x16xf32>
    %269 = arith.divf %267, %268 : vector<2x16xf32>
    %270 = arith.mulf %261, %213 : vector<2x16xf32>
    %271 = arith.mulf %255, %263 : vector<2x16xf32>
    %272 = arith.addf %270, %271 : vector<2x16xf32>
    %273 = math.tanh %272 : vector<2x16xf32>
    %274 = arith.mulf %269, %273 : vector<2x16xf32>
    %cst_59 = arith.constant dense<0.000000e+00> : vector<2x64xf32>
    %275 = tpu.matmul %274, %7, %cst_59 {dimension_numbers = #tpu.dot_dimension_numbers<[1], [0], [0], [1], [0, 0, 1, 1], [], []>} : vector<2x16xf32>, vector<16x64xf32>, vector<2x64xf32> -> vector<2x64xf32>
    %276 = vector.broadcast %9 : vector<1x64xf32> to vector<2x64xf32>
    %277 = arith.addf %275, %276 : vector<2x64xf32>
    %cst_60 = arith.constant dense<0.000000e+00> : vector<2x64xf32>
    %278 = tpu.matmul %245, %8, %cst_60 {dimension_numbers = #tpu.dot_dimension_numbers<[1], [0], [0], [1], [0, 0, 1, 1], [], []>} : vector<2x16xf32>, vector<16x64xf32>, vector<2x64xf32> -> vector<2x64xf32>
    %279 = arith.addf %277, %278 : vector<2x64xf32>
    %280 = vector.extract_strided_slice %279 {offsets = [0, 0], sizes = [2, 16], strides = [1, 1]} : vector<2x64xf32> to vector<2x16xf32>
    %281 = arith.negf %280 : vector<2x16xf32>
    %282 = math.exp %281 : vector<2x16xf32>
    %cst_61 = arith.constant 1.000000e+00 : f32
    %283 = vector.broadcast %cst_61 : f32 to vector<2x16xf32>
    %284 = arith.addf %283, %282 : vector<2x16xf32>
    %285 = arith.divf %283, %284 : vector<2x16xf32>
    %286 = vector.extract_strided_slice %279 {offsets = [0, 16], sizes = [2, 16], strides = [1, 1]} : vector<2x64xf32> to vector<2x16xf32>
    %287 = arith.negf %286 : vector<2x16xf32>
    %288 = math.exp %287 : vector<2x16xf32>
    %cst_62 = arith.constant 1.000000e+00 : f32
    %289 = vector.broadcast %cst_62 : f32 to vector<2x16xf32>
    %290 = arith.addf %289, %288 : vector<2x16xf32>
    %291 = arith.divf %289, %290 : vector<2x16xf32>
    %292 = vector.extract_strided_slice %279 {offsets = [0, 32], sizes = [2, 16], strides = [1, 1]} : vector<2x64xf32> to vector<2x16xf32>
    %293 = math.tanh %292 : vector<2x16xf32>
    %294 = vector.extract_strided_slice %279 {offsets = [0, 48], sizes = [2, 16], strides = [1, 1]} : vector<2x64xf32> to vector<2x16xf32>
    %295 = arith.negf %294 : vector<2x16xf32>
    %296 = math.exp %295 : vector<2x16xf32>
    %cst_63 = arith.constant 1.000000e+00 : f32
    %297 = vector.broadcast %cst_63 : f32 to vector<2x16xf32>
    %298 = arith.addf %297, %296 : vector<2x16xf32>
    %299 = arith.divf %297, %298 : vector<2x16xf32>
    %300 = arith.mulf %291, %243 : vector<2x16xf32>
    %301 = arith.mulf %285, %293 : vector<2x16xf32>
    %302 = arith.addf %300, %301 : vector<2x16xf32>
    %303 = math.tanh %302 : vector<2x16xf32>
    %304 = arith.mulf %299, %303 : vector<2x16xf32>
    %c8 = arith.constant 8 : index
    %c0_64 = arith.constant 0 : index
    %305 = vector.load %arg10[%c8, %c0_64] : memref<22x16xf32, #tpu.memory_space<vmem>>, vector<2x16xf32>
    tpu.vector_store %arg10[%c8, %c0_64], %304 {strides = array<i32>} : memref<22x16xf32, #tpu.memory_space<vmem>>, vector<2x16xf32>,
    %306 = vector.extract_strided_slice %5 {offsets = [10, 0], sizes = [2, 64], strides = [1, 1]} : vector<22x64xf32> to vector<2x64xf32>
    %cst_65 = arith.constant dense<0.000000e+00> : vector<2x64xf32>
    %307 = tpu.matmul %274, %6, %cst_65 {dimension_numbers = #tpu.dot_dimension_numbers<[1], [0], [0], [1], [0, 0, 1, 1], [], []>} : vector<2x16xf32>, vector<16x64xf32>, vector<2x64xf32> -> vector<2x64xf32>
    %308 = arith.addf %306, %307 : vector<2x64xf32>
    %309 = vector.extract_strided_slice %308 {offsets = [0, 0], sizes = [2, 16], strides = [1, 1]} : vector<2x64xf32> to vector<2x16xf32>
    %310 = arith.negf %309 : vector<2x16xf32>
    %311 = math.exp %310 : vector<2x16xf32>
    %cst_66 = arith.constant 1.000000e+00 : f32
    %312 = vector.broadcast %cst_66 : f32 to vector<2x16xf32>
    %313 = arith.addf %312, %311 : vector<2x16xf32>
    %314 = arith.divf %312, %313 : vector<2x16xf32>
    %315 = vector.extract_strided_slice %308 {offsets = [0, 16], sizes = [2, 16], strides = [1, 1]} : vector<2x64xf32> to vector<2x16xf32>
    %316 = arith.negf %315 : vector<2x16xf32>
    %317 = math.exp %316 : vector<2x16xf32>
    %cst_67 = arith.constant 1.000000e+00 : f32
    %318 = vector.broadcast %cst_67 : f32 to vector<2x16xf32>
    %319 = arith.addf %318, %317 : vector<2x16xf32>
    %320 = arith.divf %318, %319 : vector<2x16xf32>
    %321 = vector.extract_strided_slice %308 {offsets = [0, 32], sizes = [2, 16], strides = [1, 1]} : vector<2x64xf32> to vector<2x16xf32>
    %322 = math.tanh %321 : vector<2x16xf32>
    %323 = vector.extract_strided_slice %308 {offsets = [0, 48], sizes = [2, 16], strides = [1, 1]} : vector<2x64xf32> to vector<2x16xf32>
    %324 = arith.negf %323 : vector<2x16xf32>
    %325 = math.exp %324 : vector<2x16xf32>
    %cst_68 = arith.constant 1.000000e+00 : f32
    %326 = vector.broadcast %cst_68 : f32 to vector<2x16xf32>
    %327 = arith.addf %326, %325 : vector<2x16xf32>
    %328 = arith.divf %326, %327 : vector<2x16xf32>
    %329 = arith.mulf %320, %272 : vector<2x16xf32>
    %330 = arith.mulf %314, %322 : vector<2x16xf32>
    %331 = arith.addf %329, %330 : vector<2x16xf32>
    %332 = math.tanh %331 : vector<2x16xf32>
    %333 = arith.mulf %328, %332 : vector<2x16xf32>
    %cst_69 = arith.constant dense<0.000000e+00> : vector<2x64xf32>
    %334 = tpu.matmul %333, %7, %cst_69 {dimension_numbers = #tpu.dot_dimension_numbers<[1], [0], [0], [1], [0, 0, 1, 1], [], []>} : vector<2x16xf32>, vector<16x64xf32>, vector<2x64xf32> -> vector<2x64xf32>
    %335 = vector.broadcast %9 : vector<1x64xf32> to vector<2x64xf32>
    %336 = arith.addf %334, %335 : vector<2x64xf32>
    %cst_70 = arith.constant dense<0.000000e+00> : vector<2x64xf32>
    %337 = tpu.matmul %304, %8, %cst_70 {dimension_numbers = #tpu.dot_dimension_numbers<[1], [0], [0], [1], [0, 0, 1, 1], [], []>} : vector<2x16xf32>, vector<16x64xf32>, vector<2x64xf32> -> vector<2x64xf32>
    %338 = arith.addf %336, %337 : vector<2x64xf32>
    %339 = vector.extract_strided_slice %338 {offsets = [0, 0], sizes = [2, 16], strides = [1, 1]} : vector<2x64xf32> to vector<2x16xf32>
    %340 = arith.negf %339 : vector<2x16xf32>
    %341 = math.exp %340 : vector<2x16xf32>
    %cst_71 = arith.constant 1.000000e+00 : f32
    %342 = vector.broadcast %cst_71 : f32 to vector<2x16xf32>
    %343 = arith.addf %342, %341 : vector<2x16xf32>
    %344 = arith.divf %342, %343 : vector<2x16xf32>
    %345 = vector.extract_strided_slice %338 {offsets = [0, 16], sizes = [2, 16], strides = [1, 1]} : vector<2x64xf32> to vector<2x16xf32>
    %346 = arith.negf %345 : vector<2x16xf32>
    %347 = math.exp %346 : vector<2x16xf32>
    %cst_72 = arith.constant 1.000000e+00 : f32
    %348 = vector.broadcast %cst_72 : f32 to vector<2x16xf32>
    %349 = arith.addf %348, %347 : vector<2x16xf32>
    %350 = arith.divf %348, %349 : vector<2x16xf32>
    %351 = vector.extract_strided_slice %338 {offsets = [0, 32], sizes = [2, 16], strides = [1, 1]} : vector<2x64xf32> to vector<2x16xf32>
    %352 = math.tanh %351 : vector<2x16xf32>
    %353 = vector.extract_strided_slice %338 {offsets = [0, 48], sizes = [2, 16], strides = [1, 1]} : vector<2x64xf32> to vector<2x16xf32>
    %354 = arith.negf %353 : vector<2x16xf32>
    %355 = math.exp %354 : vector<2x16xf32>
    %cst_73 = arith.constant 1.000000e+00 : f32
    %356 = vector.broadcast %cst_73 : f32 to vector<2x16xf32>
    %357 = arith.addf %356, %355 : vector<2x16xf32>
    %358 = arith.divf %356, %357 : vector<2x16xf32>
    %359 = arith.mulf %350, %302 : vector<2x16xf32>
    %360 = arith.mulf %344, %352 : vector<2x16xf32>
    %361 = arith.addf %359, %360 : vector<2x16xf32>
    %362 = math.tanh %361 : vector<2x16xf32>
    %363 = arith.mulf %358, %362 : vector<2x16xf32>
    %c10 = arith.constant 10 : index
    %c0_74 = arith.constant 0 : index
    %364 = vector.load %arg10[%c10, %c0_74] : memref<22x16xf32, #tpu.memory_space<vmem>>, vector<2x16xf32>
    tpu.vector_store %arg10[%c10, %c0_74], %363 {strides = array<i32>} : memref<22x16xf32, #tpu.memory_space<vmem>>, vector<2x16xf32>,
    %365 = vector.extract_strided_slice %5 {offsets = [12, 0], sizes = [2, 64], strides = [1, 1]} : vector<22x64xf32> to vector<2x64xf32>
    %cst_75 = arith.constant dense<0.000000e+00> : vector<2x64xf32>
    %366 = tpu.matmul %333, %6, %cst_75 {dimension_numbers = #tpu.dot_dimension_numbers<[1], [0], [0], [1], [0, 0, 1, 1], [], []>} : vector<2x16xf32>, vector<16x64xf32>, vector<2x64xf32> -> vector<2x64xf32>
    %367 = arith.addf %365, %366 : vector<2x64xf32>
    %368 = vector.extract_strided_slice %367 {offsets = [0, 0], sizes = [2, 16], strides = [1, 1]} : vector<2x64xf32> to vector<2x16xf32>
    %369 = arith.negf %368 : vector<2x16xf32>
    %370 = math.exp %369 : vector<2x16xf32>
    %cst_76 = arith.constant 1.000000e+00 : f32
    %371 = vector.broadcast %cst_76 : f32 to vector<2x16xf32>
    %372 = arith.addf %371, %370 : vector<2x16xf32>
    %373 = arith.divf %371, %372 : vector<2x16xf32>
    %374 = vector.extract_strided_slice %367 {offsets = [0, 16], sizes = [2, 16], strides = [1, 1]} : vector<2x64xf32> to vector<2x16xf32>
    %375 = arith.negf %374 : vector<2x16xf32>
    %376 = math.exp %375 : vector<2x16xf32>
    %cst_77 = arith.constant 1.000000e+00 : f32
    %377 = vector.broadcast %cst_77 : f32 to vector<2x16xf32>
    %378 = arith.addf %377, %376 : vector<2x16xf32>
    %379 = arith.divf %377, %378 : vector<2x16xf32>
    %380 = vector.extract_strided_slice %367 {offsets = [0, 32], sizes = [2, 16], strides = [1, 1]} : vector<2x64xf32> to vector<2x16xf32>
    %381 = math.tanh %380 : vector<2x16xf32>
    %382 = vector.extract_strided_slice %367 {offsets = [0, 48], sizes = [2, 16], strides = [1, 1]} : vector<2x64xf32> to vector<2x16xf32>
    %383 = arith.negf %382 : vector<2x16xf32>
    %384 = math.exp %383 : vector<2x16xf32>
    %cst_78 = arith.constant 1.000000e+00 : f32
    %385 = vector.broadcast %cst_78 : f32 to vector<2x16xf32>
    %386 = arith.addf %385, %384 : vector<2x16xf32>
    %387 = arith.divf %385, %386 : vector<2x16xf32>
    %388 = arith.mulf %379, %331 : vector<2x16xf32>
    %389 = arith.mulf %373, %381 : vector<2x16xf32>
    %390 = arith.addf %388, %389 : vector<2x16xf32>
    %391 = math.tanh %390 : vector<2x16xf32>
    %392 = arith.mulf %387, %391 : vector<2x16xf32>
    %cst_79 = arith.constant dense<0.000000e+00> : vector<2x64xf32>
    %393 = tpu.matmul %392, %7, %cst_79 {dimension_numbers = #tpu.dot_dimension_numbers<[1], [0], [0], [1], [0, 0, 1, 1], [], []>} : vector<2x16xf32>, vector<16x64xf32>, vector<2x64xf32> -> vector<2x64xf32>
    %394 = vector.broadcast %9 : vector<1x64xf32> to vector<2x64xf32>
    %395 = arith.addf %393, %394 : vector<2x64xf32>
    %cst_80 = arith.constant dense<0.000000e+00> : vector<2x64xf32>
    %396 = tpu.matmul %363, %8, %cst_80 {dimension_numbers = #tpu.dot_dimension_numbers<[1], [0], [0], [1], [0, 0, 1, 1], [], []>} : vector<2x16xf32>, vector<16x64xf32>, vector<2x64xf32> -> vector<2x64xf32>
    %397 = arith.addf %395, %396 : vector<2x64xf32>
    %398 = vector.extract_strided_slice %397 {offsets = [0, 0], sizes = [2, 16], strides = [1, 1]} : vector<2x64xf32> to vector<2x16xf32>
    %399 = arith.negf %398 : vector<2x16xf32>
    %400 = math.exp %399 : vector<2x16xf32>
    %cst_81 = arith.constant 1.000000e+00 : f32
    %401 = vector.broadcast %cst_81 : f32 to vector<2x16xf32>
    %402 = arith.addf %401, %400 : vector<2x16xf32>
    %403 = arith.divf %401, %402 : vector<2x16xf32>
    %404 = vector.extract_strided_slice %397 {offsets = [0, 16], sizes = [2, 16], strides = [1, 1]} : vector<2x64xf32> to vector<2x16xf32>
    %405 = arith.negf %404 : vector<2x16xf32>
    %406 = math.exp %405 : vector<2x16xf32>
    %cst_82 = arith.constant 1.000000e+00 : f32
    %407 = vector.broadcast %cst_82 : f32 to vector<2x16xf32>
    %408 = arith.addf %407, %406 : vector<2x16xf32>
    %409 = arith.divf %407, %408 : vector<2x16xf32>
    %410 = vector.extract_strided_slice %397 {offsets = [0, 32], sizes = [2, 16], strides = [1, 1]} : vector<2x64xf32> to vector<2x16xf32>
    %411 = math.tanh %410 : vector<2x16xf32>
    %412 = vector.extract_strided_slice %397 {offsets = [0, 48], sizes = [2, 16], strides = [1, 1]} : vector<2x64xf32> to vector<2x16xf32>
    %413 = arith.negf %412 : vector<2x16xf32>
    %414 = math.exp %413 : vector<2x16xf32>
    %cst_83 = arith.constant 1.000000e+00 : f32
    %415 = vector.broadcast %cst_83 : f32 to vector<2x16xf32>
    %416 = arith.addf %415, %414 : vector<2x16xf32>
    %417 = arith.divf %415, %416 : vector<2x16xf32>
    %418 = arith.mulf %409, %361 : vector<2x16xf32>
    %419 = arith.mulf %403, %411 : vector<2x16xf32>
    %420 = arith.addf %418, %419 : vector<2x16xf32>
    %421 = math.tanh %420 : vector<2x16xf32>
    %422 = arith.mulf %417, %421 : vector<2x16xf32>
    %c12 = arith.constant 12 : index
    %c0_84 = arith.constant 0 : index
    %423 = vector.load %arg10[%c12, %c0_84] : memref<22x16xf32, #tpu.memory_space<vmem>>, vector<2x16xf32>
    tpu.vector_store %arg10[%c12, %c0_84], %422 {strides = array<i32>} : memref<22x16xf32, #tpu.memory_space<vmem>>, vector<2x16xf32>,
    %424 = vector.extract_strided_slice %5 {offsets = [14, 0], sizes = [2, 64], strides = [1, 1]} : vector<22x64xf32> to vector<2x64xf32>
    %cst_85 = arith.constant dense<0.000000e+00> : vector<2x64xf32>
    %425 = tpu.matmul %392, %6, %cst_85 {dimension_numbers = #tpu.dot_dimension_numbers<[1], [0], [0], [1], [0, 0, 1, 1], [], []>} : vector<2x16xf32>, vector<16x64xf32>, vector<2x64xf32> -> vector<2x64xf32>
    %426 = arith.addf %424, %425 : vector<2x64xf32>
    %427 = vector.extract_strided_slice %426 {offsets = [0, 0], sizes = [2, 16], strides = [1, 1]} : vector<2x64xf32> to vector<2x16xf32>
    %428 = arith.negf %427 : vector<2x16xf32>
    %429 = math.exp %428 : vector<2x16xf32>
    %cst_86 = arith.constant 1.000000e+00 : f32
    %430 = vector.broadcast %cst_86 : f32 to vector<2x16xf32>
    %431 = arith.addf %430, %429 : vector<2x16xf32>
    %432 = arith.divf %430, %431 : vector<2x16xf32>
    %433 = vector.extract_strided_slice %426 {offsets = [0, 16], sizes = [2, 16], strides = [1, 1]} : vector<2x64xf32> to vector<2x16xf32>
    %434 = arith.negf %433 : vector<2x16xf32>
    %435 = math.exp %434 : vector<2x16xf32>
    %cst_87 = arith.constant 1.000000e+00 : f32
    %436 = vector.broadcast %cst_87 : f32 to vector<2x16xf32>
    %437 = arith.addf %436, %435 : vector<2x16xf32>
    %438 = arith.divf %436, %437 : vector<2x16xf32>
    %439 = vector.extract_strided_slice %426 {offsets = [0, 32], sizes = [2, 16], strides = [1, 1]} : vector<2x64xf32> to vector<2x16xf32>
    %440 = math.tanh %439 : vector<2x16xf32>
    %441 = vector.extract_strided_slice %426 {offsets = [0, 48], sizes = [2, 16], strides = [1, 1]} : vector<2x64xf32> to vector<2x16xf32>
    %442 = arith.negf %441 : vector<2x16xf32>
    %443 = math.exp %442 : vector<2x16xf32>
    %cst_88 = arith.constant 1.000000e+00 : f32
    %444 = vector.broadcast %cst_88 : f32 to vector<2x16xf32>
    %445 = arith.addf %444, %443 : vector<2x16xf32>
    %446 = arith.divf %444, %445 : vector<2x16xf32>
    %447 = arith.mulf %438, %390 : vector<2x16xf32>
    %448 = arith.mulf %432, %440 : vector<2x16xf32>
    %449 = arith.addf %447, %448 : vector<2x16xf32>
    %450 = math.tanh %449 : vector<2x16xf32>
    %451 = arith.mulf %446, %450 : vector<2x16xf32>
    %cst_89 = arith.constant dense<0.000000e+00> : vector<2x64xf32>
    %452 = tpu.matmul %451, %7, %cst_89 {dimension_numbers = #tpu.dot_dimension_numbers<[1], [0], [0], [1], [0, 0, 1, 1], [], []>} : vector<2x16xf32>, vector<16x64xf32>, vector<2x64xf32> -> vector<2x64xf32>
    %453 = vector.broadcast %9 : vector<1x64xf32> to vector<2x64xf32>
    %454 = arith.addf %452, %453 : vector<2x64xf32>
    %cst_90 = arith.constant dense<0.000000e+00> : vector<2x64xf32>
    %455 = tpu.matmul %422, %8, %cst_90 {dimension_numbers = #tpu.dot_dimension_numbers<[1], [0], [0], [1], [0, 0, 1, 1], [], []>} : vector<2x16xf32>, vector<16x64xf32>, vector<2x64xf32> -> vector<2x64xf32>
    %456 = arith.addf %454, %455 : vector<2x64xf32>
    %457 = vector.extract_strided_slice %456 {offsets = [0, 0], sizes = [2, 16], strides = [1, 1]} : vector<2x64xf32> to vector<2x16xf32>
    %458 = arith.negf %457 : vector<2x16xf32>
    %459 = math.exp %458 : vector<2x16xf32>
    %cst_91 = arith.constant 1.000000e+00 : f32
    %460 = vector.broadcast %cst_91 : f32 to vector<2x16xf32>
    %461 = arith.addf %460, %459 : vector<2x16xf32>
    %462 = arith.divf %460, %461 : vector<2x16xf32>
    %463 = vector.extract_strided_slice %456 {offsets = [0, 16], sizes = [2, 16], strides = [1, 1]} : vector<2x64xf32> to vector<2x16xf32>
    %464 = arith.negf %463 : vector<2x16xf32>
    %465 = math.exp %464 : vector<2x16xf32>
    %cst_92 = arith.constant 1.000000e+00 : f32
    %466 = vector.broadcast %cst_92 : f32 to vector<2x16xf32>
    %467 = arith.addf %466, %465 : vector<2x16xf32>
    %468 = arith.divf %466, %467 : vector<2x16xf32>
    %469 = vector.extract_strided_slice %456 {offsets = [0, 32], sizes = [2, 16], strides = [1, 1]} : vector<2x64xf32> to vector<2x16xf32>
    %470 = math.tanh %469 : vector<2x16xf32>
    %471 = vector.extract_strided_slice %456 {offsets = [0, 48], sizes = [2, 16], strides = [1, 1]} : vector<2x64xf32> to vector<2x16xf32>
    %472 = arith.negf %471 : vector<2x16xf32>
    %473 = math.exp %472 : vector<2x16xf32>
    %cst_93 = arith.constant 1.000000e+00 : f32
    %474 = vector.broadcast %cst_93 : f32 to vector<2x16xf32>
    %475 = arith.addf %474, %473 : vector<2x16xf32>
    %476 = arith.divf %474, %475 : vector<2x16xf32>
    %477 = arith.mulf %468, %420 : vector<2x16xf32>
    %478 = arith.mulf %462, %470 : vector<2x16xf32>
    %479 = arith.addf %477, %478 : vector<2x16xf32>
    %480 = math.tanh %479 : vector<2x16xf32>
    %481 = arith.mulf %476, %480 : vector<2x16xf32>
    %c14 = arith.constant 14 : index
    %c0_94 = arith.constant 0 : index
    %482 = vector.load %arg10[%c14, %c0_94] : memref<22x16xf32, #tpu.memory_space<vmem>>, vector<2x16xf32>
    tpu.vector_store %arg10[%c14, %c0_94], %481 {strides = array<i32>} : memref<22x16xf32, #tpu.memory_space<vmem>>, vector<2x16xf32>,
    %483 = vector.extract_strided_slice %5 {offsets = [16, 0], sizes = [2, 64], strides = [1, 1]} : vector<22x64xf32> to vector<2x64xf32>
    %cst_95 = arith.constant dense<0.000000e+00> : vector<2x64xf32>
    %484 = tpu.matmul %451, %6, %cst_95 {dimension_numbers = #tpu.dot_dimension_numbers<[1], [0], [0], [1], [0, 0, 1, 1], [], []>} : vector<2x16xf32>, vector<16x64xf32>, vector<2x64xf32> -> vector<2x64xf32>
    %485 = arith.addf %483, %484 : vector<2x64xf32>
    %486 = vector.extract_strided_slice %485 {offsets = [0, 0], sizes = [2, 16], strides = [1, 1]} : vector<2x64xf32> to vector<2x16xf32>
    %487 = arith.negf %486 : vector<2x16xf32>
    %488 = math.exp %487 : vector<2x16xf32>
    %cst_96 = arith.constant 1.000000e+00 : f32
    %489 = vector.broadcast %cst_96 : f32 to vector<2x16xf32>
    %490 = arith.addf %489, %488 : vector<2x16xf32>
    %491 = arith.divf %489, %490 : vector<2x16xf32>
    %492 = vector.extract_strided_slice %485 {offsets = [0, 16], sizes = [2, 16], strides = [1, 1]} : vector<2x64xf32> to vector<2x16xf32>
    %493 = arith.negf %492 : vector<2x16xf32>
    %494 = math.exp %493 : vector<2x16xf32>
    %cst_97 = arith.constant 1.000000e+00 : f32
    %495 = vector.broadcast %cst_97 : f32 to vector<2x16xf32>
    %496 = arith.addf %495, %494 : vector<2x16xf32>
    %497 = arith.divf %495, %496 : vector<2x16xf32>
    %498 = vector.extract_strided_slice %485 {offsets = [0, 32], sizes = [2, 16], strides = [1, 1]} : vector<2x64xf32> to vector<2x16xf32>
    %499 = math.tanh %498 : vector<2x16xf32>
    %500 = vector.extract_strided_slice %485 {offsets = [0, 48], sizes = [2, 16], strides = [1, 1]} : vector<2x64xf32> to vector<2x16xf32>
    %501 = arith.negf %500 : vector<2x16xf32>
    %502 = math.exp %501 : vector<2x16xf32>
    %cst_98 = arith.constant 1.000000e+00 : f32
    %503 = vector.broadcast %cst_98 : f32 to vector<2x16xf32>
    %504 = arith.addf %503, %502 : vector<2x16xf32>
    %505 = arith.divf %503, %504 : vector<2x16xf32>
    %506 = arith.mulf %497, %449 : vector<2x16xf32>
    %507 = arith.mulf %491, %499 : vector<2x16xf32>
    %508 = arith.addf %506, %507 : vector<2x16xf32>
    %509 = math.tanh %508 : vector<2x16xf32>
    %510 = arith.mulf %505, %509 : vector<2x16xf32>
    %cst_99 = arith.constant dense<0.000000e+00> : vector<2x64xf32>
    %511 = tpu.matmul %510, %7, %cst_99 {dimension_numbers = #tpu.dot_dimension_numbers<[1], [0], [0], [1], [0, 0, 1, 1], [], []>} : vector<2x16xf32>, vector<16x64xf32>, vector<2x64xf32> -> vector<2x64xf32>
    %512 = vector.broadcast %9 : vector<1x64xf32> to vector<2x64xf32>
    %513 = arith.addf %511, %512 : vector<2x64xf32>
    %cst_100 = arith.constant dense<0.000000e+00> : vector<2x64xf32>
    %514 = tpu.matmul %481, %8, %cst_100 {dimension_numbers = #tpu.dot_dimension_numbers<[1], [0], [0], [1], [0, 0, 1, 1], [], []>} : vector<2x16xf32>, vector<16x64xf32>, vector<2x64xf32> -> vector<2x64xf32>
    %515 = arith.addf %513, %514 : vector<2x64xf32>
    %516 = vector.extract_strided_slice %515 {offsets = [0, 0], sizes = [2, 16], strides = [1, 1]} : vector<2x64xf32> to vector<2x16xf32>
    %517 = arith.negf %516 : vector<2x16xf32>
    %518 = math.exp %517 : vector<2x16xf32>
    %cst_101 = arith.constant 1.000000e+00 : f32
    %519 = vector.broadcast %cst_101 : f32 to vector<2x16xf32>
    %520 = arith.addf %519, %518 : vector<2x16xf32>
    %521 = arith.divf %519, %520 : vector<2x16xf32>
    %522 = vector.extract_strided_slice %515 {offsets = [0, 16], sizes = [2, 16], strides = [1, 1]} : vector<2x64xf32> to vector<2x16xf32>
    %523 = arith.negf %522 : vector<2x16xf32>
    %524 = math.exp %523 : vector<2x16xf32>
    %cst_102 = arith.constant 1.000000e+00 : f32
    %525 = vector.broadcast %cst_102 : f32 to vector<2x16xf32>
    %526 = arith.addf %525, %524 : vector<2x16xf32>
    %527 = arith.divf %525, %526 : vector<2x16xf32>
    %528 = vector.extract_strided_slice %515 {offsets = [0, 32], sizes = [2, 16], strides = [1, 1]} : vector<2x64xf32> to vector<2x16xf32>
    %529 = math.tanh %528 : vector<2x16xf32>
    %530 = vector.extract_strided_slice %515 {offsets = [0, 48], sizes = [2, 16], strides = [1, 1]} : vector<2x64xf32> to vector<2x16xf32>
    %531 = arith.negf %530 : vector<2x16xf32>
    %532 = math.exp %531 : vector<2x16xf32>
    %cst_103 = arith.constant 1.000000e+00 : f32
    %533 = vector.broadcast %cst_103 : f32 to vector<2x16xf32>
    %534 = arith.addf %533, %532 : vector<2x16xf32>
    %535 = arith.divf %533, %534 : vector<2x16xf32>
    %536 = arith.mulf %527, %479 : vector<2x16xf32>
    %537 = arith.mulf %521, %529 : vector<2x16xf32>
    %538 = arith.addf %536, %537 : vector<2x16xf32>
    %539 = math.tanh %538 : vector<2x16xf32>
    %540 = arith.mulf %535, %539 : vector<2x16xf32>
    %c16 = arith.constant 16 : index
    %c0_104 = arith.constant 0 : index
    %541 = vector.load %arg10[%c16, %c0_104] : memref<22x16xf32, #tpu.memory_space<vmem>>, vector<2x16xf32>
    tpu.vector_store %arg10[%c16, %c0_104], %540 {strides = array<i32>} : memref<22x16xf32, #tpu.memory_space<vmem>>, vector<2x16xf32>,
    %542 = vector.extract_strided_slice %5 {offsets = [18, 0], sizes = [2, 64], strides = [1, 1]} : vector<22x64xf32> to vector<2x64xf32>
    %cst_105 = arith.constant dense<0.000000e+00> : vector<2x64xf32>
    %543 = tpu.matmul %510, %6, %cst_105 {dimension_numbers = #tpu.dot_dimension_numbers<[1], [0], [0], [1], [0, 0, 1, 1], [], []>} : vector<2x16xf32>, vector<16x64xf32>, vector<2x64xf32> -> vector<2x64xf32>
    %544 = arith.addf %542, %543 : vector<2x64xf32>
    %545 = vector.extract_strided_slice %544 {offsets = [0, 0], sizes = [2, 16], strides = [1, 1]} : vector<2x64xf32> to vector<2x16xf32>
    %546 = arith.negf %545 : vector<2x16xf32>
    %547 = math.exp %546 : vector<2x16xf32>
    %cst_106 = arith.constant 1.000000e+00 : f32
    %548 = vector.broadcast %cst_106 : f32 to vector<2x16xf32>
    %549 = arith.addf %548, %547 : vector<2x16xf32>
    %550 = arith.divf %548, %549 : vector<2x16xf32>
    %551 = vector.extract_strided_slice %544 {offsets = [0, 16], sizes = [2, 16], strides = [1, 1]} : vector<2x64xf32> to vector<2x16xf32>
    %552 = arith.negf %551 : vector<2x16xf32>
    %553 = math.exp %552 : vector<2x16xf32>
    %cst_107 = arith.constant 1.000000e+00 : f32
    %554 = vector.broadcast %cst_107 : f32 to vector<2x16xf32>
    %555 = arith.addf %554, %553 : vector<2x16xf32>
    %556 = arith.divf %554, %555 : vector<2x16xf32>
    %557 = vector.extract_strided_slice %544 {offsets = [0, 32], sizes = [2, 16], strides = [1, 1]} : vector<2x64xf32> to vector<2x16xf32>
    %558 = math.tanh %557 : vector<2x16xf32>
    %559 = vector.extract_strided_slice %544 {offsets = [0, 48], sizes = [2, 16], strides = [1, 1]} : vector<2x64xf32> to vector<2x16xf32>
    %560 = arith.negf %559 : vector<2x16xf32>
    %561 = math.exp %560 : vector<2x16xf32>
    %cst_108 = arith.constant 1.000000e+00 : f32
    %562 = vector.broadcast %cst_108 : f32 to vector<2x16xf32>
    %563 = arith.addf %562, %561 : vector<2x16xf32>
    %564 = arith.divf %562, %563 : vector<2x16xf32>
    %565 = arith.mulf %556, %508 : vector<2x16xf32>
    %566 = arith.mulf %550, %558 : vector<2x16xf32>
    %567 = arith.addf %565, %566 : vector<2x16xf32>
    %568 = math.tanh %567 : vector<2x16xf32>
    %569 = arith.mulf %564, %568 : vector<2x16xf32>
    %cst_109 = arith.constant dense<0.000000e+00> : vector<2x64xf32>
    %570 = tpu.matmul %569, %7, %cst_109 {dimension_numbers = #tpu.dot_dimension_numbers<[1], [0], [0], [1], [0, 0, 1, 1], [], []>} : vector<2x16xf32>, vector<16x64xf32>, vector<2x64xf32> -> vector<2x64xf32>
    %571 = vector.broadcast %9 : vector<1x64xf32> to vector<2x64xf32>
    %572 = arith.addf %570, %571 : vector<2x64xf32>
    %cst_110 = arith.constant dense<0.000000e+00> : vector<2x64xf32>
    %573 = tpu.matmul %540, %8, %cst_110 {dimension_numbers = #tpu.dot_dimension_numbers<[1], [0], [0], [1], [0, 0, 1, 1], [], []>} : vector<2x16xf32>, vector<16x64xf32>, vector<2x64xf32> -> vector<2x64xf32>
    %574 = arith.addf %572, %573 : vector<2x64xf32>
    %575 = vector.extract_strided_slice %574 {offsets = [0, 0], sizes = [2, 16], strides = [1, 1]} : vector<2x64xf32> to vector<2x16xf32>
    %576 = arith.negf %575 : vector<2x16xf32>
    %577 = math.exp %576 : vector<2x16xf32>
    %cst_111 = arith.constant 1.000000e+00 : f32
    %578 = vector.broadcast %cst_111 : f32 to vector<2x16xf32>
    %579 = arith.addf %578, %577 : vector<2x16xf32>
    %580 = arith.divf %578, %579 : vector<2x16xf32>
    %581 = vector.extract_strided_slice %574 {offsets = [0, 16], sizes = [2, 16], strides = [1, 1]} : vector<2x64xf32> to vector<2x16xf32>
    %582 = arith.negf %581 : vector<2x16xf32>
    %583 = math.exp %582 : vector<2x16xf32>
    %cst_112 = arith.constant 1.000000e+00 : f32
    %584 = vector.broadcast %cst_112 : f32 to vector<2x16xf32>
    %585 = arith.addf %584, %583 : vector<2x16xf32>
    %586 = arith.divf %584, %585 : vector<2x16xf32>
    %587 = vector.extract_strided_slice %574 {offsets = [0, 32], sizes = [2, 16], strides = [1, 1]} : vector<2x64xf32> to vector<2x16xf32>
    %588 = math.tanh %587 : vector<2x16xf32>
    %589 = vector.extract_strided_slice %574 {offsets = [0, 48], sizes = [2, 16], strides = [1, 1]} : vector<2x64xf32> to vector<2x16xf32>
    %590 = arith.negf %589 : vector<2x16xf32>
    %591 = math.exp %590 : vector<2x16xf32>
    %cst_113 = arith.constant 1.000000e+00 : f32
    %592 = vector.broadcast %cst_113 : f32 to vector<2x16xf32>
    %593 = arith.addf %592, %591 : vector<2x16xf32>
    %594 = arith.divf %592, %593 : vector<2x16xf32>
    %595 = arith.mulf %586, %538 : vector<2x16xf32>
    %596 = arith.mulf %580, %588 : vector<2x16xf32>
    %597 = arith.addf %595, %596 : vector<2x16xf32>
    %598 = math.tanh %597 : vector<2x16xf32>
    %599 = arith.mulf %594, %598 : vector<2x16xf32>
    %c18 = arith.constant 18 : index
    %c0_114 = arith.constant 0 : index
    %600 = vector.load %arg10[%c18, %c0_114] : memref<22x16xf32, #tpu.memory_space<vmem>>, vector<2x16xf32>
    tpu.vector_store %arg10[%c18, %c0_114], %599 {strides = array<i32>} : memref<22x16xf32, #tpu.memory_space<vmem>>, vector<2x16xf32>,
    %601 = vector.extract_strided_slice %5 {offsets = [20, 0], sizes = [2, 64], strides = [1, 1]} : vector<22x64xf32> to vector<2x64xf32>
    %cst_115 = arith.constant dense<0.000000e+00> : vector<2x64xf32>
    %602 = tpu.matmul %569, %6, %cst_115 {dimension_numbers = #tpu.dot_dimension_numbers<[1], [0], [0], [1], [0, 0, 1, 1], [], []>} : vector<2x16xf32>, vector<16x64xf32>, vector<2x64xf32> -> vector<2x64xf32>
    %603 = arith.addf %601, %602 : vector<2x64xf32>
    %604 = vector.extract_strided_slice %603 {offsets = [0, 0], sizes = [2, 16], strides = [1, 1]} : vector<2x64xf32> to vector<2x16xf32>
    %605 = arith.negf %604 : vector<2x16xf32>
    %606 = math.exp %605 : vector<2x16xf32>
    %cst_116 = arith.constant 1.000000e+00 : f32
    %607 = vector.broadcast %cst_116 : f32 to vector<2x16xf32>
    %608 = arith.addf %607, %606 : vector<2x16xf32>
    %609 = arith.divf %607, %608 : vector<2x16xf32>
    %610 = vector.extract_strided_slice %603 {offsets = [0, 16], sizes = [2, 16], strides = [1, 1]} : vector<2x64xf32> to vector<2x16xf32>
    %611 = arith.negf %610 : vector<2x16xf32>
    %612 = math.exp %611 : vector<2x16xf32>
    %cst_117 = arith.constant 1.000000e+00 : f32
    %613 = vector.broadcast %cst_117 : f32 to vector<2x16xf32>
    %614 = arith.addf %613, %612 : vector<2x16xf32>
    %615 = arith.divf %613, %614 : vector<2x16xf32>
    %616 = vector.extract_strided_slice %603 {offsets = [0, 32], sizes = [2, 16], strides = [1, 1]} : vector<2x64xf32> to vector<2x16xf32>
    %617 = math.tanh %616 : vector<2x16xf32>
    %618 = vector.extract_strided_slice %603 {offsets = [0, 48], sizes = [2, 16], strides = [1, 1]} : vector<2x64xf32> to vector<2x16xf32>
    %619 = arith.negf %618 : vector<2x16xf32>
    %620 = math.exp %619 : vector<2x16xf32>
    %cst_118 = arith.constant 1.000000e+00 : f32
    %621 = vector.broadcast %cst_118 : f32 to vector<2x16xf32>
    %622 = arith.addf %621, %620 : vector<2x16xf32>
    %623 = arith.divf %621, %622 : vector<2x16xf32>
    %624 = arith.mulf %615, %567 : vector<2x16xf32>
    %625 = arith.mulf %609, %617 : vector<2x16xf32>
    %626 = arith.addf %624, %625 : vector<2x16xf32>
    %627 = math.tanh %626 : vector<2x16xf32>
    %628 = arith.mulf %623, %627 : vector<2x16xf32>
    %cst_119 = arith.constant dense<0.000000e+00> : vector<2x64xf32>
    %629 = tpu.matmul %628, %7, %cst_119 {dimension_numbers = #tpu.dot_dimension_numbers<[1], [0], [0], [1], [0, 0, 1, 1], [], []>} : vector<2x16xf32>, vector<16x64xf32>, vector<2x64xf32> -> vector<2x64xf32>
    %630 = vector.broadcast %9 : vector<1x64xf32> to vector<2x64xf32>
    %631 = arith.addf %629, %630 : vector<2x64xf32>
    %cst_120 = arith.constant dense<0.000000e+00> : vector<2x64xf32>
    %632 = tpu.matmul %599, %8, %cst_120 {dimension_numbers = #tpu.dot_dimension_numbers<[1], [0], [0], [1], [0, 0, 1, 1], [], []>} : vector<2x16xf32>, vector<16x64xf32>, vector<2x64xf32> -> vector<2x64xf32>
    %633 = arith.addf %631, %632 : vector<2x64xf32>
    %634 = vector.extract_strided_slice %633 {offsets = [0, 0], sizes = [2, 16], strides = [1, 1]} : vector<2x64xf32> to vector<2x16xf32>
    %635 = arith.negf %634 : vector<2x16xf32>
    %636 = math.exp %635 : vector<2x16xf32>
    %cst_121 = arith.constant 1.000000e+00 : f32
    %637 = vector.broadcast %cst_121 : f32 to vector<2x16xf32>
    %638 = arith.addf %637, %636 : vector<2x16xf32>
    %639 = arith.divf %637, %638 : vector<2x16xf32>
    %640 = vector.extract_strided_slice %633 {offsets = [0, 16], sizes = [2, 16], strides = [1, 1]} : vector<2x64xf32> to vector<2x16xf32>
    %641 = arith.negf %640 : vector<2x16xf32>
    %642 = math.exp %641 : vector<2x16xf32>
    %cst_122 = arith.constant 1.000000e+00 : f32
    %643 = vector.broadcast %cst_122 : f32 to vector<2x16xf32>
    %644 = arith.addf %643, %642 : vector<2x16xf32>
    %645 = arith.divf %643, %644 : vector<2x16xf32>
    %646 = vector.extract_strided_slice %633 {offsets = [0, 32], sizes = [2, 16], strides = [1, 1]} : vector<2x64xf32> to vector<2x16xf32>
    %647 = math.tanh %646 : vector<2x16xf32>
    %648 = vector.extract_strided_slice %633 {offsets = [0, 48], sizes = [2, 16], strides = [1, 1]} : vector<2x64xf32> to vector<2x16xf32>
    %649 = arith.negf %648 : vector<2x16xf32>
    %650 = math.exp %649 : vector<2x16xf32>
    %cst_123 = arith.constant 1.000000e+00 : f32
    %651 = vector.broadcast %cst_123 : f32 to vector<2x16xf32>
    %652 = arith.addf %651, %650 : vector<2x16xf32>
    %653 = arith.divf %651, %652 : vector<2x16xf32>
    %654 = arith.mulf %645, %597 : vector<2x16xf32>
    %655 = arith.mulf %639, %647 : vector<2x16xf32>
    %656 = arith.addf %654, %655 : vector<2x16xf32>
    %657 = math.tanh %656 : vector<2x16xf32>
    %658 = arith.mulf %653, %657 : vector<2x16xf32>
    %c20 = arith.constant 20 : index
    %c0_124 = arith.constant 0 : index
    %659 = vector.load %arg10[%c20, %c0_124] : memref<22x16xf32, #tpu.memory_space<vmem>>, vector<2x16xf32>
    tpu.vector_store %arg10[%c20, %c0_124], %658 {strides = array<i32>} : memref<22x16xf32, #tpu.memory_space<vmem>>, vector<2x16xf32>,
    %c0_125 = arith.constant 0 : index
    %c0_126 = arith.constant 0 : index
    %660 = vector.load %arg10[%c0_125, %c0_126] : memref<22x16xf32, #tpu.memory_space<vmem>>, vector<22x16xf32>
    %c0_127 = arith.constant 0 : index
    %c0_128 = arith.constant 0 : index
    %661 = vector.load %arg7[%c0_127, %c0_128] : memref<16x128xf32, #tpu.memory_space<vmem>>, vector<16x128xf32>
    %cst_129 = arith.constant dense<0.000000e+00> : vector<22x128xf32>
    %662 = tpu.matmul %660, %661, %cst_129 {dimension_numbers = #tpu.dot_dimension_numbers<[1], [0], [0], [1], [0, 0, 1, 1], [], []>} : vector<22x16xf32>, vector<16x128xf32>, vector<22x128xf32> -> vector<22x128xf32>
    %c0_130 = arith.constant 0 : index
    %c0_131 = arith.constant 0 : index
    %663 = vector.load %arg8[%c0_130, %c0_131] : memref<1x128xf32, #tpu.memory_space<vmem>>, vector<1x128xf32>
    %664 = vector.broadcast %663 : vector<1x128xf32> to vector<22x128xf32>
    %665 = arith.addf %662, %664 : vector<22x128xf32>
    %c0_132 = arith.constant 0 : index
    %c0_133 = arith.constant 0 : index
    %666 = vector.load %arg9[%c0_132, %c0_133] : memref<22x128xf32, #tpu.memory_space<vmem>>, vector<22x128xf32>
    tpu.vector_store %arg9[%c0_132, %c0_133], %665 {strides = array<i32>} : memref<22x128xf32, #tpu.memory_space<vmem>>, vector<22x128xf32>,
    return
  }
}

module attributes {stable_mosaic.version = 11 : i64} {
  func.func @_conv_bn_prelu_kernel(%arg0: memref<8x256xbf16, #tpu.memory_space<vmem>>, %arg1: memref<256x352xbf16, #tpu.memory_space<vmem>>, %arg2: memref<8x1xf32, #tpu.memory_space<vmem>>, %arg3: memref<8x1xf32, #tpu.memory_space<vmem>>, %arg4: memref<8x1xf32, #tpu.memory_space<vmem>>, %arg5: memref<1x1xf32, #tpu.memory_space<vmem>>, %arg6: memref<8x352xf32, #tpu.memory_space<vmem>>) attributes {dimension_semantics = [], scalar_prefetch = 0 : i64, scratch_operands = 0 : i64, tpu.core_type = #tpu.core_type<tc>} {
    %c0 = arith.constant 0 : index
    %c0_0 = arith.constant 0 : index
    %0 = vector.load %arg0[%c0, %c0_0] : memref<8x256xbf16, #tpu.memory_space<vmem>>, vector<8x256xbf16>
    %c0_1 = arith.constant 0 : index
    %c0_2 = arith.constant 0 : index
    %1 = vector.load %arg1[%c0_1, %c0_2] : memref<256x352xbf16, #tpu.memory_space<vmem>>, vector<256x352xbf16>
    %cst = arith.constant dense<0.000000e+00> : vector<8x352xf32>
    %2 = tpu.matmul %0, %1, %cst {dimension_numbers = #tpu.dot_dimension_numbers<[1], [0], [0], [1], [0, 0, 1, 1], [], []>} : vector<8x256xbf16>, vector<256x352xbf16>, vector<8x352xf32> -> vector<8x352xf32>
    %c0_3 = arith.constant 0 : index
    %c0_4 = arith.constant 0 : index
    %3 = vector.load %arg2[%c0_3, %c0_4] : memref<8x1xf32, #tpu.memory_space<vmem>>, vector<8x1xf32>
    %4 = vector.broadcast %3 : vector<8x1xf32> to vector<8x352xf32>
    %5 = arith.addf %2, %4 : vector<8x352xf32>
    %cst_5 = arith.constant dense<0.000000e+00> : vector<8xf32>
    %6 = vector.multi_reduction <add>, %5, %cst_5 [1] : vector<8x352xf32> to vector<8xf32>
    %7 = vector.shape_cast %6 : vector<8xf32> to vector<8x1xf32>
    %cst_6 = arith.constant 3.520000e+02 : f32
    %8 = vector.broadcast %cst_6 : f32 to vector<8x1xf32>
    %9 = arith.divf %7, %8 : vector<8x1xf32>
    %10 = arith.mulf %5, %5 : vector<8x352xf32>
    %cst_7 = arith.constant dense<0.000000e+00> : vector<8xf32>
    %11 = vector.multi_reduction <add>, %10, %cst_7 [1] : vector<8x352xf32> to vector<8xf32>
    %12 = vector.shape_cast %11 : vector<8xf32> to vector<8x1xf32>
    %cst_8 = arith.constant 3.520000e+02 : f32
    %13 = vector.broadcast %cst_8 : f32 to vector<8x1xf32>
    %14 = arith.divf %12, %13 : vector<8x1xf32>
    %15 = arith.mulf %9, %9 : vector<8x1xf32>
    %16 = arith.subf %14, %15 : vector<8x1xf32>
    %cst_9 = arith.constant 9.99999974E-6 : f32
    %17 = vector.broadcast %cst_9 : f32 to vector<8x1xf32>
    %18 = arith.addf %16, %17 : vector<8x1xf32>
    %19 = math.rsqrt %18 : vector<8x1xf32>
    %c0_10 = arith.constant 0 : index
    %c0_11 = arith.constant 0 : index
    %20 = vector.load %arg3[%c0_10, %c0_11] : memref<8x1xf32, #tpu.memory_space<vmem>>, vector<8x1xf32>
    %21 = arith.mulf %20, %19 : vector<8x1xf32>
    %c0_12 = arith.constant 0 : index
    %c0_13 = arith.constant 0 : index
    %22 = vector.load %arg4[%c0_12, %c0_13] : memref<8x1xf32, #tpu.memory_space<vmem>>, vector<8x1xf32>
    %23 = arith.mulf %9, %21 : vector<8x1xf32>
    %24 = arith.subf %22, %23 : vector<8x1xf32>
    %25 = vector.broadcast %21 : vector<8x1xf32> to vector<8x352xf32>
    %26 = arith.mulf %5, %25 : vector<8x352xf32>
    %27 = vector.broadcast %24 : vector<8x1xf32> to vector<8x352xf32>
    %28 = arith.addf %26, %27 : vector<8x352xf32>
    %c0_14 = arith.constant 0 : index
    %c0_15 = arith.constant 0 : index
    %29 = vector.load %arg5[%c0_14, %c0_15] : memref<1x1xf32, #tpu.memory_space<vmem>>, vector<1x1xf32>
    %30 = vector.extract %29[0, 0] : f32 from vector<1x1xf32>
    %cst_16 = arith.constant 0.000000e+00 : f32
    %31 = vector.broadcast %cst_16 : f32 to vector<8x352xf32>
    %32 = arith.cmpf oge, %28, %31 : vector<8x352xf32>
    %33 = vector.broadcast %30 : f32 to vector<8x352xf32>
    %34 = arith.mulf %33, %28 : vector<8x352xf32>
    %35 = arith.select %32, %28, %34 : vector<8x352xi1>, vector<8x352xf32>
    %c0_17 = arith.constant 0 : index
    %c0_18 = arith.constant 0 : index
    %36 = vector.load %arg6[%c0_17, %c0_18] : memref<8x352xf32, #tpu.memory_space<vmem>>, vector<8x352xf32>
    tpu.vector_store %arg6[%c0_17, %c0_18], %35 {strides = array<i32>} : memref<8x352xf32, #tpu.memory_space<vmem>>, vector<8x352xf32>,
    return
  }
}

module attributes {stable_mosaic.version = 11 : i64} {
  func.func @_conv_bn_prelu_kernel(%arg0: memref<4x128xbf16, #tpu.memory_space<vmem>>, %arg1: memref<128x704xbf16, #tpu.memory_space<vmem>>, %arg2: memref<4x1xf32, #tpu.memory_space<vmem>>, %arg3: memref<4x1xf32, #tpu.memory_space<vmem>>, %arg4: memref<4x1xf32, #tpu.memory_space<vmem>>, %arg5: memref<1x1xf32, #tpu.memory_space<vmem>>, %arg6: memref<4x704xf32, #tpu.memory_space<vmem>>) attributes {dimension_semantics = [], scalar_prefetch = 0 : i64, scratch_operands = 0 : i64, tpu.core_type = #tpu.core_type<tc>} {
    %c0 = arith.constant 0 : index
    %c0_0 = arith.constant 0 : index
    %0 = vector.load %arg0[%c0, %c0_0] : memref<4x128xbf16, #tpu.memory_space<vmem>>, vector<4x128xbf16>
    %c0_1 = arith.constant 0 : index
    %c0_2 = arith.constant 0 : index
    %1 = vector.load %arg1[%c0_1, %c0_2] : memref<128x704xbf16, #tpu.memory_space<vmem>>, vector<128x704xbf16>
    %cst = arith.constant dense<0.000000e+00> : vector<4x704xf32>
    %2 = tpu.matmul %0, %1, %cst {dimension_numbers = #tpu.dot_dimension_numbers<[1], [0], [0], [1], [0, 0, 1, 1], [], []>} : vector<4x128xbf16>, vector<128x704xbf16>, vector<4x704xf32> -> vector<4x704xf32>
    %c0_3 = arith.constant 0 : index
    %c0_4 = arith.constant 0 : index
    %3 = vector.load %arg2[%c0_3, %c0_4] : memref<4x1xf32, #tpu.memory_space<vmem>>, vector<4x1xf32>
    %4 = vector.broadcast %3 : vector<4x1xf32> to vector<4x704xf32>
    %5 = arith.addf %2, %4 : vector<4x704xf32>
    %cst_5 = arith.constant dense<0.000000e+00> : vector<4xf32>
    %6 = vector.multi_reduction <add>, %5, %cst_5 [1] : vector<4x704xf32> to vector<4xf32>
    %7 = vector.shape_cast %6 : vector<4xf32> to vector<4x1xf32>
    %cst_6 = arith.constant 7.040000e+02 : f32
    %8 = vector.broadcast %cst_6 : f32 to vector<4x1xf32>
    %9 = arith.divf %7, %8 : vector<4x1xf32>
    %10 = arith.mulf %5, %5 : vector<4x704xf32>
    %cst_7 = arith.constant dense<0.000000e+00> : vector<4xf32>
    %11 = vector.multi_reduction <add>, %10, %cst_7 [1] : vector<4x704xf32> to vector<4xf32>
    %12 = vector.shape_cast %11 : vector<4xf32> to vector<4x1xf32>
    %cst_8 = arith.constant 7.040000e+02 : f32
    %13 = vector.broadcast %cst_8 : f32 to vector<4x1xf32>
    %14 = arith.divf %12, %13 : vector<4x1xf32>
    %15 = arith.mulf %9, %9 : vector<4x1xf32>
    %16 = arith.subf %14, %15 : vector<4x1xf32>
    %cst_9 = arith.constant 9.99999974E-6 : f32
    %17 = vector.broadcast %cst_9 : f32 to vector<4x1xf32>
    %18 = arith.addf %16, %17 : vector<4x1xf32>
    %19 = math.rsqrt %18 : vector<4x1xf32>
    %c0_10 = arith.constant 0 : index
    %c0_11 = arith.constant 0 : index
    %20 = vector.load %arg3[%c0_10, %c0_11] : memref<4x1xf32, #tpu.memory_space<vmem>>, vector<4x1xf32>
    %21 = arith.mulf %20, %19 : vector<4x1xf32>
    %c0_12 = arith.constant 0 : index
    %c0_13 = arith.constant 0 : index
    %22 = vector.load %arg4[%c0_12, %c0_13] : memref<4x1xf32, #tpu.memory_space<vmem>>, vector<4x1xf32>
    %23 = arith.mulf %9, %21 : vector<4x1xf32>
    %24 = arith.subf %22, %23 : vector<4x1xf32>
    %25 = vector.broadcast %21 : vector<4x1xf32> to vector<4x704xf32>
    %26 = arith.mulf %5, %25 : vector<4x704xf32>
    %27 = vector.broadcast %24 : vector<4x1xf32> to vector<4x704xf32>
    %28 = arith.addf %26, %27 : vector<4x704xf32>
    %c0_14 = arith.constant 0 : index
    %c0_15 = arith.constant 0 : index
    %29 = vector.load %arg5[%c0_14, %c0_15] : memref<1x1xf32, #tpu.memory_space<vmem>>, vector<1x1xf32>
    %30 = vector.extract %29[0, 0] : f32 from vector<1x1xf32>
    %cst_16 = arith.constant 0.000000e+00 : f32
    %31 = vector.broadcast %cst_16 : f32 to vector<4x704xf32>
    %32 = arith.cmpf oge, %28, %31 : vector<4x704xf32>
    %33 = vector.broadcast %30 : f32 to vector<4x704xf32>
    %34 = arith.mulf %33, %28 : vector<4x704xf32>
    %35 = arith.select %32, %28, %34 : vector<4x704xi1>, vector<4x704xf32>
    %c0_17 = arith.constant 0 : index
    %c0_18 = arith.constant 0 : index
    %36 = vector.load %arg6[%c0_17, %c0_18] : memref<4x704xf32, #tpu.memory_space<vmem>>, vector<4x704xf32>
    tpu.vector_store %arg6[%c0_17, %c0_18], %35 {strides = array<i32>} : memref<4x704xf32, #tpu.memory_space<vmem>>, vector<4x704xf32>,
    return
  }
}

module attributes {stable_mosaic.version = 11 : i64} {
  func.func @_conv_bias_kernel(%arg0: memref<1x64xbf16, #tpu.memory_space<vmem>>, %arg1: memref<64x1408xbf16, #tpu.memory_space<vmem>>, %arg2: memref<1x1xf32, #tpu.memory_space<vmem>>, %arg3: memref<1x1408xf32, #tpu.memory_space<vmem>>) attributes {dimension_semantics = [], scalar_prefetch = 0 : i64, scratch_operands = 0 : i64, tpu.core_type = #tpu.core_type<tc>} {
    %c0 = arith.constant 0 : index
    %c0_0 = arith.constant 0 : index
    %0 = vector.load %arg0[%c0, %c0_0] : memref<1x64xbf16, #tpu.memory_space<vmem>>, vector<1x64xbf16>
    %c0_1 = arith.constant 0 : index
    %c0_2 = arith.constant 0 : index
    %1 = vector.load %arg1[%c0_1, %c0_2] : memref<64x1408xbf16, #tpu.memory_space<vmem>>, vector<64x1408xbf16>
    %cst = arith.constant dense<0.000000e+00> : vector<1x1408xf32>
    %2 = tpu.matmul %0, %1, %cst {dimension_numbers = #tpu.dot_dimension_numbers<[1], [0], [0], [1], [0, 0, 1, 1], [], []>} : vector<1x64xbf16>, vector<64x1408xbf16>, vector<1x1408xf32> -> vector<1x1408xf32>
    %c0_3 = arith.constant 0 : index
    %c0_4 = arith.constant 0 : index
    %3 = vector.load %arg2[%c0_3, %c0_4] : memref<1x1xf32, #tpu.memory_space<vmem>>, vector<1x1xf32>
    %4 = vector.broadcast %3 : vector<1x1xf32> to vector<1x1408xf32>
    %5 = arith.addf %2, %4 : vector<1x1408xf32>
    %c0_5 = arith.constant 0 : index
    %c0_6 = arith.constant 0 : index
    %6 = vector.load %arg3[%c0_5, %c0_6] : memref<1x1408xf32, #tpu.memory_space<vmem>>, vector<1x1408xf32>
    tpu.vector_store %arg3[%c0_5, %c0_6], %5 {strides = array<i32>} : memref<1x1408xf32, #tpu.memory_space<vmem>>, vector<1x1408xf32>,
    return
  }
}

module attributes {stable_mosaic.version = 11 : i64} {
  func.func @_istdct_kernel(%arg0: memref<22x64xf32, #tpu.memory_space<vmem>>, %arg1: memref<64x64xf32, #tpu.memory_space<vmem>>, %arg2: memref<1x160xf32, #tpu.memory_space<vmem>>, %arg3: memref<2x160xf32, #tpu.memory_space<vmem>>, %arg4: memref<2x224xf32, #tpu.memory_space<vmem>>) attributes {dimension_semantics = [], scalar_prefetch = 0 : i64, scratch_operands = 1 : i64, tpu.core_type = #tpu.core_type<tc>} {
    %c0 = arith.constant 0 : index
    %c0_0 = arith.constant 0 : index
    %0 = vector.load %arg0[%c0, %c0_0] : memref<22x64xf32, #tpu.memory_space<vmem>>, vector<22x64xf32>
    %c0_1 = arith.constant 0 : index
    %c0_2 = arith.constant 0 : index
    %1 = vector.load %arg1[%c0_1, %c0_2] : memref<64x64xf32, #tpu.memory_space<vmem>>, vector<64x64xf32>
    %cst = arith.constant dense<0.000000e+00> : vector<22x64xf32>
    %2 = tpu.matmul %0, %1, %cst {dimension_numbers = #tpu.dot_dimension_numbers<[1], [0], [0], [1], [0, 0, 1, 1], [], []>} : vector<22x64xf32>, vector<64x64xf32>, vector<22x64xf32> -> vector<22x64xf32>
    %cst_3 = arith.constant 0.000000e+00 : f32
    %3 = vector.broadcast %cst_3 : f32 to vector<2x224xf32>
    %c0_4 = arith.constant 0 : index
    %c0_5 = arith.constant 0 : index
    %4 = vector.load %arg4[%c0_4, %c0_5] : memref<2x224xf32, #tpu.memory_space<vmem>>, vector<2x224xf32>
    tpu.vector_store %arg4[%c0_4, %c0_5], %3 {strides = array<i32>} : memref<2x224xf32, #tpu.memory_space<vmem>>, vector<2x224xf32>,
    %c0_6 = arith.constant 0 : index
    %c0_7 = arith.constant 0 : index
    %5 = vector.load %arg4[%c0_6, %c0_7] : memref<2x224xf32, #tpu.memory_space<vmem>>, vector<2x64xf32>
    %6 = vector.extract_strided_slice %2 {offsets = [0, 0], sizes = [2, 64], strides = [1, 1]} : vector<22x64xf32> to vector<2x64xf32>
    %7 = arith.addf %5, %6 : vector<2x64xf32>
    %c0_8 = arith.constant 0 : index
    %c0_9 = arith.constant 0 : index
    %8 = vector.load %arg4[%c0_8, %c0_9] : memref<2x224xf32, #tpu.memory_space<vmem>>, vector<2x64xf32>
    tpu.vector_store %arg4[%c0_8, %c0_9], %7 {strides = array<i32>} : memref<2x224xf32, #tpu.memory_space<vmem>>, vector<2x64xf32>,
    %c0_10 = arith.constant 0 : index
    %c16 = arith.constant 16 : index
    %9 = vector.load %arg4[%c0_10, %c16] : memref<2x224xf32, #tpu.memory_space<vmem>>, vector<2x64xf32>
    %10 = vector.extract_strided_slice %2 {offsets = [2, 0], sizes = [2, 64], strides = [1, 1]} : vector<22x64xf32> to vector<2x64xf32>
    %11 = arith.addf %9, %10 : vector<2x64xf32>
    %c0_11 = arith.constant 0 : index
    %c16_12 = arith.constant 16 : index
    %12 = vector.load %arg4[%c0_11, %c16_12] : memref<2x224xf32, #tpu.memory_space<vmem>>, vector<2x64xf32>
    tpu.vector_store %arg4[%c0_11, %c16_12], %11 {strides = array<i32>} : memref<2x224xf32, #tpu.memory_space<vmem>>, vector<2x64xf32>,
    %c0_13 = arith.constant 0 : index
    %c32 = arith.constant 32 : index
    %13 = vector.load %arg4[%c0_13, %c32] : memref<2x224xf32, #tpu.memory_space<vmem>>, vector<2x64xf32>
    %14 = vector.extract_strided_slice %2 {offsets = [4, 0], sizes = [2, 64], strides = [1, 1]} : vector<22x64xf32> to vector<2x64xf32>
    %15 = arith.addf %13, %14 : vector<2x64xf32>
    %c0_14 = arith.constant 0 : index
    %c32_15 = arith.constant 32 : index
    %16 = vector.load %arg4[%c0_14, %c32_15] : memref<2x224xf32, #tpu.memory_space<vmem>>, vector<2x64xf32>
    tpu.vector_store %arg4[%c0_14, %c32_15], %15 {strides = array<i32>} : memref<2x224xf32, #tpu.memory_space<vmem>>, vector<2x64xf32>,
    %c0_16 = arith.constant 0 : index
    %c48 = arith.constant 48 : index
    %17 = vector.load %arg4[%c0_16, %c48] : memref<2x224xf32, #tpu.memory_space<vmem>>, vector<2x64xf32>
    %18 = vector.extract_strided_slice %2 {offsets = [6, 0], sizes = [2, 64], strides = [1, 1]} : vector<22x64xf32> to vector<2x64xf32>
    %19 = arith.addf %17, %18 : vector<2x64xf32>
    %c0_17 = arith.constant 0 : index
    %c48_18 = arith.constant 48 : index
    %20 = vector.load %arg4[%c0_17, %c48_18] : memref<2x224xf32, #tpu.memory_space<vmem>>, vector<2x64xf32>
    tpu.vector_store %arg4[%c0_17, %c48_18], %19 {strides = array<i32>} : memref<2x224xf32, #tpu.memory_space<vmem>>, vector<2x64xf32>,
    %c0_19 = arith.constant 0 : index
    %c64 = arith.constant 64 : index
    %21 = vector.load %arg4[%c0_19, %c64] : memref<2x224xf32, #tpu.memory_space<vmem>>, vector<2x64xf32>
    %22 = vector.extract_strided_slice %2 {offsets = [8, 0], sizes = [2, 64], strides = [1, 1]} : vector<22x64xf32> to vector<2x64xf32>
    %23 = arith.addf %21, %22 : vector<2x64xf32>
    %c0_20 = arith.constant 0 : index
    %c64_21 = arith.constant 64 : index
    %24 = vector.load %arg4[%c0_20, %c64_21] : memref<2x224xf32, #tpu.memory_space<vmem>>, vector<2x64xf32>
    tpu.vector_store %arg4[%c0_20, %c64_21], %23 {strides = array<i32>} : memref<2x224xf32, #tpu.memory_space<vmem>>, vector<2x64xf32>,
    %c0_22 = arith.constant 0 : index
    %c80 = arith.constant 80 : index
    %25 = vector.load %arg4[%c0_22, %c80] : memref<2x224xf32, #tpu.memory_space<vmem>>, vector<2x64xf32>
    %26 = vector.extract_strided_slice %2 {offsets = [10, 0], sizes = [2, 64], strides = [1, 1]} : vector<22x64xf32> to vector<2x64xf32>
    %27 = arith.addf %25, %26 : vector<2x64xf32>
    %c0_23 = arith.constant 0 : index
    %c80_24 = arith.constant 80 : index
    %28 = vector.load %arg4[%c0_23, %c80_24] : memref<2x224xf32, #tpu.memory_space<vmem>>, vector<2x64xf32>
    tpu.vector_store %arg4[%c0_23, %c80_24], %27 {strides = array<i32>} : memref<2x224xf32, #tpu.memory_space<vmem>>, vector<2x64xf32>,
    %c0_25 = arith.constant 0 : index
    %c96 = arith.constant 96 : index
    %29 = vector.load %arg4[%c0_25, %c96] : memref<2x224xf32, #tpu.memory_space<vmem>>, vector<2x64xf32>
    %30 = vector.extract_strided_slice %2 {offsets = [12, 0], sizes = [2, 64], strides = [1, 1]} : vector<22x64xf32> to vector<2x64xf32>
    %31 = arith.addf %29, %30 : vector<2x64xf32>
    %c0_26 = arith.constant 0 : index
    %c96_27 = arith.constant 96 : index
    %32 = vector.load %arg4[%c0_26, %c96_27] : memref<2x224xf32, #tpu.memory_space<vmem>>, vector<2x64xf32>
    tpu.vector_store %arg4[%c0_26, %c96_27], %31 {strides = array<i32>} : memref<2x224xf32, #tpu.memory_space<vmem>>, vector<2x64xf32>,
    %c0_28 = arith.constant 0 : index
    %c112 = arith.constant 112 : index
    %33 = vector.load %arg4[%c0_28, %c112] : memref<2x224xf32, #tpu.memory_space<vmem>>, vector<2x64xf32>
    %34 = vector.extract_strided_slice %2 {offsets = [14, 0], sizes = [2, 64], strides = [1, 1]} : vector<22x64xf32> to vector<2x64xf32>
    %35 = arith.addf %33, %34 : vector<2x64xf32>
    %c0_29 = arith.constant 0 : index
    %c112_30 = arith.constant 112 : index
    %36 = vector.load %arg4[%c0_29, %c112_30] : memref<2x224xf32, #tpu.memory_space<vmem>>, vector<2x64xf32>
    tpu.vector_store %arg4[%c0_29, %c112_30], %35 {strides = array<i32>} : memref<2x224xf32, #tpu.memory_space<vmem>>, vector<2x64xf32>,
    %c0_31 = arith.constant 0 : index
    %c128 = arith.constant 128 : index
    %37 = vector.load %arg4[%c0_31, %c128] : memref<2x224xf32, #tpu.memory_space<vmem>>, vector<2x64xf32>
    %38 = vector.extract_strided_slice %2 {offsets = [16, 0], sizes = [2, 64], strides = [1, 1]} : vector<22x64xf32> to vector<2x64xf32>
    %39 = arith.addf %37, %38 : vector<2x64xf32>
    %c0_32 = arith.constant 0 : index
    %c128_33 = arith.constant 128 : index
    %40 = vector.load %arg4[%c0_32, %c128_33] : memref<2x224xf32, #tpu.memory_space<vmem>>, vector<2x64xf32>
    tpu.vector_store %arg4[%c0_32, %c128_33], %39 {strides = array<i32>} : memref<2x224xf32, #tpu.memory_space<vmem>>, vector<2x64xf32>,
    %c0_34 = arith.constant 0 : index
    %c144 = arith.constant 144 : index
    %41 = vector.load %arg4[%c0_34, %c144] : memref<2x224xf32, #tpu.memory_space<vmem>>, vector<2x64xf32>
    %42 = vector.extract_strided_slice %2 {offsets = [18, 0], sizes = [2, 64], strides = [1, 1]} : vector<22x64xf32> to vector<2x64xf32>
    %43 = arith.addf %41, %42 : vector<2x64xf32>
    %c0_35 = arith.constant 0 : index
    %c144_36 = arith.constant 144 : index
    %44 = vector.load %arg4[%c0_35, %c144_36] : memref<2x224xf32, #tpu.memory_space<vmem>>, vector<2x64xf32>
    tpu.vector_store %arg4[%c0_35, %c144_36], %43 {strides = array<i32>} : memref<2x224xf32, #tpu.memory_space<vmem>>, vector<2x64xf32>,
    %c0_37 = arith.constant 0 : index
    %c160 = arith.constant 160 : index
    %45 = vector.load %arg4[%c0_37, %c160] : memref<2x224xf32, #tpu.memory_space<vmem>>, vector<2x64xf32>
    %46 = vector.extract_strided_slice %2 {offsets = [20, 0], sizes = [2, 64], strides = [1, 1]} : vector<22x64xf32> to vector<2x64xf32>
    %47 = arith.addf %45, %46 : vector<2x64xf32>
    %c0_38 = arith.constant 0 : index
    %c160_39 = arith.constant 160 : index
    %48 = vector.load %arg4[%c0_38, %c160_39] : memref<2x224xf32, #tpu.memory_space<vmem>>, vector<2x64xf32>
    tpu.vector_store %arg4[%c0_38, %c160_39], %47 {strides = array<i32>} : memref<2x224xf32, #tpu.memory_space<vmem>>, vector<2x64xf32>,
    %c0_40 = arith.constant 0 : index
    %c32_41 = arith.constant 32 : index
    %49 = vector.load %arg4[%c0_40, %c32_41] : memref<2x224xf32, #tpu.memory_space<vmem>>, vector<2x160xf32>
    %c0_42 = arith.constant 0 : index
    %c0_43 = arith.constant 0 : index
    %50 = vector.load %arg2[%c0_42, %c0_43] : memref<1x160xf32, #tpu.memory_space<vmem>>, vector<1x160xf32>
    %51 = vector.broadcast %50 : vector<1x160xf32> to vector<2x160xf32>
    %52 = arith.mulf %49, %51 : vector<2x160xf32>
    %c0_44 = arith.constant 0 : index
    %c0_45 = arith.constant 0 : index
    %53 = vector.load %arg3[%c0_44, %c0_45] : memref<2x160xf32, #tpu.memory_space<vmem>>, vector<2x160xf32>
    tpu.vector_store %arg3[%c0_44, %c0_45], %52 {strides = array<i32>} : memref<2x160xf32, #tpu.memory_space<vmem>>, vector<2x160xf32>,
    return
  }
}

</mosaic_0001>

<llo_original>
// kernel: dctcrn_forward.12
$region0: #{dctcrn_forward.12}
  #allocation0 [shape = 'u32[]', space=smem, size = 0x4, offset = 0x4, fixed_abs, tag = 'smem constant byte address 0x4 - core index']
  #allocation1 [shape = 'u32[144,128]{1,0:T(1,128)}', space=vmem, size = 0x12000, scoped, tag = 'internal scratch']
  %s0 = inlined_call_operand.vmem [shape: f32[44,64], index: 0, kind: input, shape index: {}]
  %s1 = inlined_call_operand.vmem [shape: f32[64,64], index: 1, kind: input, shape index: {}]
  %s2 = inlined_call_operand.vmem [shape: f32[44,64], index: 2, kind: output, shape index: {}]
  %s3 = sld [smem:[#allocation0]]
  $region18: #{dctcrn_forward.12} parent=0
    _
  %s5 = ssub.s32 1, %s3
  %s6 = scalar_select 0, %s5, %s3
  // Predicated region
  $region2: #{dctcrn_forward.12} parent=0 // pred_check
    _
  $region3: #{dctcrn_forward.12} parent=0 // pred_check_branch
    %8 = sbr.rel (0) target = $region5
  $region4: #{dctcrn_forward.12} parent=0 // pred_region
    _
  $region5: #{dctcrn_forward.12} parent=0 // pred_fallthru
    _
  // Predicated region
  $region6: #{dctcrn_forward.12} parent=0 // pred_check
    _
  $region7: #{dctcrn_forward.12} parent=0 // pred_check_branch
    %10 = sbr.rel (0) target = $region9
  $region8: #{dctcrn_forward.12} parent=0 // pred_region
    _
  $region9: #{dctcrn_forward.12} parent=0 // pred_fallthru
    _
  %v11 = vld [vmem:[%s0] sm:$0xff]
  %v12 = vld [vmem:[%s0 + $0x8] sm:$0xff]
  %v13 = vld [vmem:[%s0 + $0x10] sm:$0xff]
  %v14 = vld [vmem:[%s0 + $0x18] sm:$0xff]
  %v15 = vld [vmem:[%s0 + $0x20] sm:$0xff]
  %v16 = vld [vmem:[%s0 + $0x28] sm:$0xf]
  %v17 = vld [vmem:[%s1] sm:$0xff]
  %v18 = vld [vmem:[%s1 + $0x8] sm:$0xff]
  %v19 = vld [vmem:[%s1 + $0x10] sm:$0xff]
  %v20 = vld [vmem:[%s1 + $0x18] sm:$0xff]
  %v21 = vld [vmem:[%s1 + $0x20] sm:$0xff]
  %v22 = vld [vmem:[%s1 + $0x28] sm:$0xff]
  %v23 = vld [vmem:[%s1 + $0x30] sm:$0xff]
  %v24 = vld [vmem:[%s1 + $0x38] sm:$0xff]
  %vm25 = vcmask 523264
  %v27 = vsel %vm25, %v11, 0
  %v30 = vsel %vm25, %v12, 0
  %v33 = vsel %vm25, %v13, 0
  %v36 = vsel %vm25, %v14, 0
  %v39 = vsel %vm25, %v15, 0
  %v42 = vsel %vm25, %v16, 0
  %44 = vmatprep.subr.mxu0 0.0
  %45 = vmatpush1.msra.mxu0 %v17
  %46 = vmatprep.subr.mxu0 0.0
  %47 = vmatpush1.msra.mxu0 %v18
  %48 = vmatprep.subr.mxu0 0.0
  %49 = vmatpush1.msra.mxu0 %v19
  %50 = vmatprep.subr.mxu0 0.0
  %51 = vmatpush1.msra.mxu0 %v20
  %52 = vmatprep.subr.mxu0 0.0
  %53 = vmatpush1.msra.mxu0 %v21
  %54 = vmatprep.subr.mxu0 0.0
  %55 = vmatpush1.msra.mxu0 %v22
  %56 = vmatprep.subr.mxu0 0.0
  %57 = vmatpush1.msra.mxu0 %v23
  %58 = vmatprep.subr.mxu0 0.0
  %59 = vmatpush1.msra.mxu0 %v24
  %60 = vmatprep.subr.mxu0 0.0
  %61 = vmatpush1.msra.mxu0 0.0
  %62 = vmatprep.subr.mxu0 0.0
  %63 = vmatpush1.msra.mxu0 0.0
  %64 = vmatprep.subr.mxu0 0.0
  %65 = vmatpush1.msra.mxu0 0.0
  %66 = vmatprep.subr.mxu0 0.0
  %67 = vmatpush1.msra.mxu0 0.0
  %68 = vmatprep.subr.mxu0 0.0
  %69 = vmatpush1.msra.mxu0 0.0
  %70 = vmatprep.subr.mxu0 0.0
  %71 = vmatpush1.msra.mxu0 0.0
  %72 = vmatprep.subr.mxu0 0.0
  %73 = vmatpush1.msra.mxu0 0.0
  %74 = vmatprep.subr.mxu0 0.0
  %75 = vmatpush1.msra.mxu0 0.0
  %76 = vmatprep.subr.mxu0 0.0
  %77 = vmatpush1.msra.mxu0 0.0
  %78 = vmatprep.subr.mxu0 0.0
  %79 = vmatpush1.msra.mxu0 0.0
  %80 = vmatprep.subr.mxu0 0.0
  %81 = vmatpush1.msra.mxu0 0.0
  %82 = vmatprep.subr.mxu0 0.0
  %83 = vmatpush1.msra.mxu0 0.0
  %84 = vmatprep.subr.mxu0 0.0
  %85 = vmatpush1.msra.mxu0 0.0
  %86 = vmatprep.subr.mxu0 0.0
  %87 = vmatpush1.msra.mxu0 0.0
  %88 = vmatprep.subr.mxu0 0.0
  %89 = vmatpush1.msra.mxu0 0.0
  %90 = vmatprep.subr.mxu0 0.0
  %91 = vmatpush1.msra.mxu0 0.0
  %92 = vmatprep.subr.mxu0 0.0
  %93 = vmatpush1.msra.mxu0 0.0
  %94 = vmatprep.subr.mxu0 0.0
  %95 = vmatpush1.msra.mxu0 0.0
  %96 = vmatprep.subr.mxu0 0.0
  %97 = vmatpush1.msra.mxu0 0.0
  %98 = vmatprep.subr.mxu0 0.0
  %99 = vmatpush1.msra.mxu0 0.0
  %100 = vmatprep.subr.mxu0 0.0
  %101 = vmatpush1.msra.mxu0 0.0
  %102 = vmatprep.subr.mxu0 0.0
  %103 = vmatpush1.msra.mxu0 0.0
  %104 = vmatprep.subr.mxu0 0.0
  %105 = vmatpush1.msra.mxu0 0.0
  %106 = vmatprep.subr.mxu0 0.0
  %107 = vmatpush1.msra.mxu0 0.0
  %108 = vmatprep.mubr.f32.mxu0 0.0
  %109 = vmatmul.mubr.f32.gmra.mrb[0].mxu0 %v27
  %v110 = vpop.f32.mrb[0].mxu0
  %v111 = vadd.f32 0.0, %v110
  %v112 = vpop.f32.mrb[0].mxu0
  %113 = vmatprep.mubr.f32.mxu0 0.0
  %114 = vmatmul.mubr.f32.gmra.mrb[0].mxu0 %v30
  %v115 = vpop.f32.mrb[0].mxu0
  %v116 = vadd.f32 0.0, %v115
  %v117 = vpop.f32.mrb[0].mxu0
  %118 = vmatprep.mubr.f32.mxu0 0.0
  %119 = vmatmul.mubr.f32.gmra.mrb[0].mxu0 %v33
  %v120 = vpop.f32.mrb[0].mxu0
  %v121 = vadd.f32 0.0, %v120
  %v122 = vpop.f32.mrb[0].mxu0
  %123 = vmatprep.mubr.f32.mxu0 0.0
  %124 = vmatmul.mubr.f32.gmra.mrb[0].mxu0 %v36
  %v125 = vpop.f32.mrb[0].mxu0
  %v126 = vadd.f32 0.0, %v125
  %v127 = vpop.f32.mrb[0].mxu0
  %128 = vmatprep.mubr.f32.mxu0 0.0
  %129 = vmatmul.mubr.f32.gmra.mrb[0].mxu0 %v39
  %v130 = vpop.f32.mrb[0].mxu0
  %v131 = vadd.f32 0.0, %v130
  %v132 = vpop.f32.mrb[0].mxu0
  %133 = vmatprep.mubr.f32.mxu0 0.0
  %134 = vmatmul.mubr.f32.gmra.mrb[0].mxu0 %v42
  %v135 = vpop.f32.mrb[0].mxu0
  %v136 = vadd.f32 0.0, %v135
  %v137 = vpop.f32.mrb[0].mxu0
  %138 = vdwg.mxu0
  %139 = vst.msk [vmem:[%s2] sm:$0xff] %vm25, %v111
  %140 = vst.msk [vmem:[%s2 + $0x8] sm:$0xff] %vm25, %v116
  %141 = vst.msk [vmem:[%s2 + $0x10] sm:$0xff] %vm25, %v121
  %142 = vst.msk [vmem:[%s2 + $0x18] sm:$0xff] %vm25, %v126
  %143 = vst.msk [vmem:[%s2 + $0x20] sm:$0xff] %vm25, %v131
  %vm144 = vcmask 519168
  %145 = vst.msk [vmem:[%s2 + $0x28] sm:$0xf] %vm144, %v136
  // Predicated region
  $region10: #{dctcrn_forward.12} parent=0 // pred_check
    _
  $region11: #{dctcrn_forward.12} parent=0 // pred_check_branch
    %147 = sbr.rel (0) target = $region13
  $region12: #{dctcrn_forward.12} parent=0 // pred_region
    _
  $region13: #{dctcrn_forward.12} parent=0 // pred_fallthru
    _
  // Predicated region
  $region14: #{dctcrn_forward.12} parent=0 // pred_check
    _
  $region15: #{dctcrn_forward.12} parent=0 // pred_check_branch
    %149 = sbr.rel (0) target = $region17
  $region16: #{dctcrn_forward.12} parent=0 // pred_region
    _
  $region17: #{dctcrn_forward.12} parent=0 // pred_fallthru
    _

// kernel: dctcrn_forward.13
$region0: #{dctcrn_forward.13}
  #allocation0 [shape = 'u32[]', space=smem, size = 0x4, offset = 0x4, fixed_abs, tag = 'smem constant byte address 0x4 - core index']
  #allocation1 [shape = 'u32[144,128]{1,0:T(1,128)}', space=vmem, size = 0x12000, scoped, tag = 'internal scratch']
  #allocation2 [shape = 'f32[1,1]{1,0:T(1,128)S(1)}', space=vmem, size = 0x200, scoped, tag = 'scoped memory for dctcrn_forward.13']
  %s0 = inlined_call_operand.vmem [shape: bf16[4,20], index: 0, kind: input, shape index: {}]
  %s1 = inlined_call_operand.vmem [shape: bf16[20,704], index: 1, kind: input, shape index: {}]
  %s2 = inlined_call_operand.vmem [shape: f32[4,1], index: 2, kind: input, shape index: {}]
  %s3 = inlined_call_operand.vmem [shape: f32[4,1], index: 3, kind: input, shape index: {}]
  %s4 = inlined_call_operand.vmem [shape: f32[4,1], index: 4, kind: input, shape index: {}]
  %s5 = inlined_call_operand.<no memory space> [shape: f32[1,1], index: 5, kind: input, shape index: {}]
  %s6 = inlined_call_operand.vmem [shape: f32[4,704], index: 6, kind: output, shape index: {}]
  %s7 = sld [smem:[#allocation0]]
  $region34: #{dctcrn_forward.13} parent=0
    _
  %s9 = ssub.s32 1, %s7
  %s10 = scalar_select 0, %s9, %s7
  %v11 = vstv %s5
  %12 = vst [vmem:[#allocation2] sm:$0x1] %v11
  // Predicated region
  $region2: #{dctcrn_forward.13} parent=0 // pred_check
    _
  $region3: #{dctcrn_forward.13} parent=0 // pred_check_branch
    %14 = sbr.rel (0) target = $region5
  $region4: #{dctcrn_forward.13} parent=0 // pred_region
    _
  $region5: #{dctcrn_forward.13} parent=0 // pred_fallthru
    _
  // Predicated region
  $region6: #{dctcrn_forward.13} parent=0 // pred_check
    _
  $region7: #{dctcrn_forward.13} parent=0 // pred_check_branch
    %16 = sbr.rel (0) target = $region9
  $region8: #{dctcrn_forward.13} parent=0 // pred_region
    _
  $region9: #{dctcrn_forward.13} parent=0 // pred_fallthru
    _
  // Predicated region
  $region10: #{dctcrn_forward.13} parent=0 // pred_check
    _
  $region11: #{dctcrn_forward.13} parent=0 // pred_check_branch
    %18 = sbr.rel (0) target = $region13
  $region12: #{dctcrn_forward.13} parent=0 // pred_region
    _
  $region13: #{dctcrn_forward.13} parent=0 // pred_fallthru
    _
  // Predicated region
  $region14: #{dctcrn_forward.13} parent=0 // pred_check
    _
  $region15: #{dctcrn_forward.13} parent=0 // pred_check_branch
    %20 = sbr.rel (0) target = $region17
  $region16: #{dctcrn_forward.13} parent=0 // pred_region
    _
  $region17: #{dctcrn_forward.13} parent=0 // pred_fallthru
    _
  // Predicated region
  $region18: #{dctcrn_forward.13} parent=0 // pred_check
    _
  $region19: #{dctcrn_forward.13} parent=0 // pred_check_branch
    %22 = sbr.rel (0) target = $region21
  $region20: #{dctcrn_forward.13} parent=0 // pred_region
    _
  $region21: #{dctcrn_forward.13} parent=0 // pred_fallthru
    _
  // Predicated region
  $region22: #{dctcrn_forward.13} parent=0 // pred_check
    _
  $region23: #{dctcrn_forward.13} parent=0 // pred_check_branch
    %24 = sbr.rel (0) target = $region25
  $region24: #{dctcrn_forward.13} parent=0 // pred_region
    _
  $region25: #{dctcrn_forward.13} parent=0 // pred_fallthru
    _
  %v26 = vld [vmem:[%s0] sm:$0x3]
  %v27 = vld [vmem:[%s1] sm:$0xff]
  %v28 = vld [vmem:[%s1 + $0x8] sm:$0xff]
  %v29 = vld [vmem:[%s1 + $0x10] sm:$0xff]
  %v30 = vld [vmem:[%s1 + $0x18] sm:$0xff]
  %v31 = vld [vmem:[%s1 + $0x20] sm:$0xff]
  %v32 = vld [vmem:[%s1 + $0x28] sm:$0xff]
  %v33 = vld [vmem:[%s1 + $0x30] sm:$0x33]
  %v34 = vld [vmem:[%s1 + $0x38] sm:$0x33]
  %v35 = vld [vmem:[%s1 + $0x40] sm:$0x33]
  %v36 = vld [vmem:[%s2] sm:$0xf]
  %38 = vset.pattern.permute.xlu0 0
  %39 = vperm.xlu0 %38, %v36
  %v40 = vpop.permute.xlu0 %39
  %v51 = vunpack.c.l.b16 %v27
  %v52 = vunpack.c.h.b16 %v27
  %v53 = vunpack.c.l.b16 %v28
  %v54 = vunpack.c.h.b16 %v28
  %v55 = vunpack.c.l.b16 %v29
  %v56 = vunpack.c.h.b16 %v29
  %v57 = vunpack.c.l.b16 %v30
  %v58 = vunpack.c.h.b16 %v30
  %v59 = vunpack.c.l.b16 %v31
  %v60 = vunpack.c.h.b16 %v31
  %v61 = vunpack.c.l.b16 %v32
  %v62 = vunpack.c.h.b16 %v32
  %v63 = vunpack.c.l.b16 %v33
  %v64 = vunpack.c.h.b16 %v33
  %v65 = vunpack.c.l.b16 %v34
  %v66 = vunpack.c.h.b16 %v34
  %v67 = vunpack.c.l.b16 %v35
  %v68 = vunpack.c.h.b16 %v35
  %v69 = vpack.c.b16 %v57, %v51
  %v70 = vpack.c.b16 %v58, %v52
  %v71 = vpack.c.b16 %v59, %v53
  %v72 = vpack.c.b16 %v60, %v54
  %v73 = vpack.c.b16 %v61, %v55
  %v74 = vpack.c.b16 %v62, %v56
  %v75 = vpack.c.b16 %v63, %v63
  %v76 = vpack.c.b16 %v64, %v64
  %v77 = vpack.c.b16 %v65, %v65
  %v78 = vpack.c.b16 %v66, %v66
  %v79 = vpack.c.b16 %v67, %v67
  %v80 = vpack.c.b16 %v68, %v68
  %vm87 = vcmask 162816
  %v89 = vsel %vm87, %v26, 0
  %vm91 = vcmask 1041408
  %v93 = vsel %vm91, %v75, 0
  %v96 = vsel %vm91, %v76, 0
  %v99 = vsel %vm91, %v77, 0
  %v102 = vsel %vm91, %v78, 0
  %v105 = vsel %vm91, %v79, 0
  %v108 = vsel %vm91, %v80, 0
  %110 = vmatprep.subr.bf16.mxu0 %v70
  %111 = vmatpush1.bf16.msra.mxu0 %v69
  %112 = vmatprep.subr.bf16.mxu0 %v96
  %113 = vmatpush1.bf16.msra.mxu0 %v93
  %114 = vmatprep.subr.bf16.mxu0 0
  %115 = vmatpush1.bf16.msra.mxu0 0
  %116 = vmatprep.subr.bf16.mxu0 0
  %117 = vmatpush1.bf16.msra.mxu0 0
  %118 = vmatprep.subr.bf16.mxu0 0
  %119 = vmatpush1.bf16.msra.mxu0 0
  %120 = vmatprep.subr.bf16.mxu0 0
  %121 = vmatpush1.bf16.msra.mxu0 0
  %122 = vmatprep.subr.bf16.mxu0 0
  %123 = vmatpush1.bf16.msra.mxu0 0
  %124 = vmatprep.subr.bf16.mxu0 0
  %125 = vmatpush1.bf16.msra.mxu0 0
  %126 = vmatprep.subr.bf16.mxu0 0
  %127 = vmatpush1.bf16.msra.mxu0 0
  %128 = vmatprep.subr.bf16.mxu0 0
  %129 = vmatpush1.bf16.msra.mxu0 0
  %130 = vmatprep.subr.bf16.mxu0 0
  %131 = vmatpush1.bf16.msra.mxu0 0
  %132 = vmatprep.subr.bf16.mxu0 0
  %133 = vmatpush1.bf16.msra.mxu0 0
  %134 = vmatprep.subr.bf16.mxu0 0
  %135 = vmatpush1.bf16.msra.mxu0 0
  %136 = vmatprep.subr.bf16.mxu0 0
  %137 = vmatpush1.bf16.msra.mxu0 0
  %138 = vmatprep.subr.bf16.mxu0 0
  %139 = vmatpush1.bf16.msra.mxu0 0
  %140 = vmatprep.subr.bf16.mxu0 0
  %141 = vmatpush1.bf16.msra.mxu0 0
  %142 = vmatprep.mubr.bf16.mxu0 0
  %143 = vmatmul.mubr.bf16.gmra.mrb[0].mxu0 %v89
  %v144 = vpop.f32.mrb[0].mxu0
  %v145 = vadd.f32 %v40, %v144
  %v146 = vpop.f32.mrb[0].mxu0
  %v147 = vadd.f32 %v40, %v146
  %v148 = vpop.f32.mrb[0].mxu0
  %v149 = vpop.f32.mrb[0].mxu0
  %150 = vdwg.mxu0
  %151 = vmatprep.subr.bf16.mxu0 %v72
  %152 = vmatpush1.bf16.msra.mxu0 %v71
  %153 = vmatprep.subr.bf16.mxu0 %v102
  %154 = vmatpush1.bf16.msra.mxu0 %v99
  %155 = vmatprep.subr.bf16.mxu0 0
  %156 = vmatpush1.bf16.msra.mxu0 0
  %157 = vmatprep.subr.bf16.mxu0 0
  %158 = vmatpush1.bf16.msra.mxu0 0
  %159 = vmatprep.subr.bf16.mxu0 0
  %160 = vmatpush1.bf16.msra.mxu0 0
  %161 = vmatprep.subr.bf16.mxu0 0
  %162 = vmatpush1.bf16.msra.mxu0 0
  %163 = vmatprep.subr.bf16.mxu0 0
  %164 = vmatpush1.bf16.msra.mxu0 0
  %165 = vmatprep.subr.bf16.mxu0 0
  %166 = vmatpush1.bf16.msra.mxu0 0
  %167 = vmatprep.subr.bf16.mxu0 0
  %168 = vmatpush1.bf16.msra.mxu0 0
  %169 = vmatprep.subr.bf16.mxu0 0
  %170 = vmatpush1.bf16.msra.mxu0 0
  %171 = vmatprep.subr.bf16.mxu0 0
  %172 = vmatpush1.bf16.msra.mxu0 0
  %173 = vmatprep.subr.bf16.mxu0 0
  %174 = vmatpush1.bf16.msra.mxu0 0
  %175 = vmatprep.subr.bf16.mxu0 0
  %176 = vmatpush1.bf16.msra.mxu0 0
  %177 = vmatprep.subr.bf16.mxu0 0
  %178 = vmatpush1.bf16.msra.mxu0 0
  %179 = vmatprep.subr.bf16.mxu0 0
  %180 = vmatpush1.bf16.msra.mxu0 0
  %181 = vmatprep.subr.bf16.mxu0 0
  %182 = vmatpush1.bf16.msra.mxu0 0
  %183 = vmatprep.mubr.bf16.mxu0 0
  %184 = vmatmul.mubr.bf16.gmra.mrb[0].mxu0 %v89
  %v185 = vpop.f32.mrb[0].mxu0
  %v186 = vadd.f32 %v40, %v185
  %v187 = vpop.f32.mrb[0].mxu0
  %v188 = vadd.f32 %v40, %v187
  %v189 = vpop.f32.mrb[0].mxu0
  %v190 = vpop.f32.mrb[0].mxu0
  %191 = vdwg.mxu0
  %192 = vmatprep.subr.bf16.mxu0 %v74
  %193 = vmatpush1.bf16.msra.mxu0 %v73
  %194 = vmatprep.subr.bf16.mxu0 %v108
  %195 = vmatpush1.bf16.msra.mxu0 %v105
  %196 = vmatprep.subr.bf16.mxu0 0
  %197 = vmatpush1.bf16.msra.mxu0 0
  %198 = vmatprep.subr.bf16.mxu0 0
  %199 = vmatpush1.bf16.msra.mxu0 0
  %200 = vmatprep.subr.bf16.mxu0 0
  %201 = vmatpush1.bf16.msra.mxu0 0
  %202 = vmatprep.subr.bf16.mxu0 0
  %203 = vmatpush1.bf16.msra.mxu0 0
  %204 = vmatprep.subr.bf16.mxu0 0
  %205 = vmatpush1.bf16.msra.mxu0 0
  %206 = vmatprep.subr.bf16.mxu0 0
  %207 = vmatpush1.bf16.msra.mxu0 0
  %208 = vmatprep.subr.bf16.mxu0 0
  %209 = vmatpush1.bf16.msra.mxu0 0
  %210 = vmatprep.subr.bf16.mxu0 0
  %211 = vmatpush1.bf16.msra.mxu0 0
  %212 = vmatprep.subr.bf16.mxu0 0
  %213 = vmatpush1.bf16.msra.mxu0 0
  %214 = vmatprep.subr.bf16.mxu0 0
  %215 = vmatpush1.bf16.msra.mxu0 0
  %216 = vmatprep.subr.bf16.mxu0 0
  %217 = vmatpush1.bf16.msra.mxu0 0
  %218 = vmatprep.subr.bf16.mxu0 0
  %219 = vmatpush1.bf16.msra.mxu0 0
  %220 = vmatprep.subr.bf16.mxu0 0
  %221 = vmatpush1.bf16.msra.mxu0 0
  %222 = vmatprep.subr.bf16.mxu0 0
  %223 = vmatpush1.bf16.msra.mxu0 0
  %224 = vmatprep.mubr.bf16.mxu0 0
  %225 = vmatmul.mubr.bf16.gmra.mrb[0].mxu0 %v89
  %v226 = vpop.f32.mrb[0].mxu0
  %v227 = vadd.f32 %v40, %v226
  %v228 = vpop.f32.mrb[0].mxu0
  %v229 = vadd.f32 %v40, %v228
  %v230 = vpop.f32.mrb[0].mxu0
  %v231 = vpop.f32.mrb[0].mxu0
  %232 = vdwg.mxu0
  %vm233 = vcmask 1043456
  %v234 = vsel %vm233, %v145, 0.0
  %v235 = vsel %vm233, %v147, 0.0
  %v236 = vadd.f32 %v234, %v235
  %v237 = vsel %vm233, %v186, 0.0
  %v238 = vadd.f32 %v236, %v237
  %v239 = vsel %vm233, %v188, 0.0
  %v240 = vadd.f32 %v238, %v239
  %v241 = vsel %vm233, %v227, 0.0
  %v242 = vadd.f32 %v240, %v241
  %vm243 = vcmask 519168
  %v244 = vsel %vm243, %v229, 0.0
  %v245 = vadd.f32 %v242, %v244
  %246 = vadd.xlane.f32.xlu0 %v245
  %v247 = vpop.xlane.xlu0 %246
  %v248 = vrcp.pop 704.0
  %v249 = vmul.f32 %v247, %v248
  %v250 = vmul.f32 %v145, %v145
  %v251 = vmul.f32 %v147, %v147
  %v252 = vmul.f32 %v186, %v186
  %v253 = vmul.f32 %v188, %v188
  %v254 = vmul.f32 %v227, %v227
  %v255 = vmul.f32 %v229, %v229
  %v256 = vsel %vm233, %v250, 0.0
  %v257 = vsel %vm233, %v251, 0.0
  %v258 = vadd.f32 %v256, %v257
  %v259 = vsel %vm233, %v252, 0.0
  %v260 = vadd.f32 %v258, %v259
  %v261 = vsel %vm233, %v253, 0.0
  %v262 = vadd.f32 %v260, %v261
  %v263 = vsel %vm233, %v254, 0.0
  %v264 = vadd.f32 %v262, %v263
  %v265 = vsel %vm243, %v255, 0.0
  %v266 = vadd.f32 %v264, %v265
  %267 = vadd.xlane.f32.xlu0 %v266
  %v268 = vpop.xlane.xlu0 %267
  %v269 = vmul.f32 %v268, %v248
  %v270 = vmul.f32 %v249, %v249
  %v271 = vsub.f32 %v269, %v270
  %v272 = vadd.f32 %v271, 1e-05
  %v273 = vrsqrt.pop %v272
  %v274 = vld [vmem:[%s3] sm:$0xf]
  %v275 = vmul.f32 %v274, %v273
  %v276 = vld [vmem:[%s4] sm:$0xf]
  %v277 = vmul.f32 %v249, %v275
  %v278 = vsub.f32 %v276, %v277
  %280 = vset.pattern.permute.xlu0 0
  %281 = vperm.xlu0 %280, %v275
  %v282 = vpop.permute.xlu0 %281
  %v284 = vmul.f32 %v145, %v282
  %v285 = vmul.f32 %v147, %v282
  %v286 = vmul.f32 %v186, %v282
  %v287 = vmul.f32 %v188, %v282
  %v288 = vmul.f32 %v227, %v282
  %v289 = vmul.f32 %v229, %v282
  %291 = vset.pattern.permute.xlu0 0
  %292 = vperm.xlu0 %291, %v278
  %v293 = vpop.permute.xlu0 %292
  %v295 = vadd.f32 %v284, %v293
  %v296 = vadd.f32 %v285, %v293
  %v297 = vadd.f32 %v286, %v293
  %v298 = vadd.f32 %v287, %v293
  %v299 = vadd.f32 %v288, %v293
  %v300 = vadd.f32 %v289, %v293
  %v301 = vld [vmem:[#allocation2] sm:$0x1]
  %s302 = vtos %v301
  %vm303 = vcmp.ge.f32.partialorder %v295, 0.0
  %vm304 = vcmp.ge.f32.partialorder %v296, 0.0
  %vm305 = vcmp.ge.f32.partialorder %v297, 0.0
  %vm306 = vcmp.ge.f32.partialorder %v298, 0.0
  %vm307 = vcmp.ge.f32.partialorder %v299, 0.0
  %vm308 = vcmp.ge.f32.partialorder %v300, 0.0
  %v309 = vstv %s302
  %v310 = vmul.f32 %v309, %v295
  %v311 = vmul.f32 %v309, %v296
  %v312 = vmul.f32 %v309, %v297
  %v313 = vmul.f32 %v309, %v298
  %v314 = vmul.f32 %v309, %v299
  %v315 = vmul.f32 %v309, %v300
  %v316 = vsel %vm303, %v295, %v310
  %v317 = vsel %vm304, %v296, %v311
  %v318 = vsel %vm305, %v297, %v312
  %v319 = vsel %vm306, %v298, %v313
  %v320 = vsel %vm307, %v299, %v314
  %v321 = vsel %vm308, %v300, %v315
  %v328 = vcombine.low %v316, %v317
  %v329 = vcombine.low %v318, %v319
  %v330 = vcombine.low %v320, %v321
  %334 = vst [vmem:[%s6] sm:$0xff] %v328
  %335 = vst [vmem:[%s6 + $0x8] sm:$0xff] %v329
  %vm336 = vcmask 523268
  %vm337 = vmor %vm336, %vm233
  %338 = vst.msk [vmem:[%s6 + $0x10] sm:$0xff] %vm337, %v330
  // Predicated region
  $region26: #{dctcrn_forward.13} parent=0 // pred_check
    _
  $region27: #{dctcrn_forward.13} parent=0 // pred_check_branch
    %340 = sbr.rel (0) target = $region29
  $region28: #{dctcrn_forward.13} parent=0 // pred_region
    _
  $region29: #{dctcrn_forward.13} parent=0 // pred_fallthru
    _
  // Predicated region
  $region30: #{dctcrn_forward.13} parent=0 // pred_check
    _
  $region31: #{dctcrn_forward.13} parent=0 // pred_check_branch
    %342 = sbr.rel (0) target = $region33
  $region32: #{dctcrn_forward.13} parent=0 // pred_region
    _
  $region33: #{dctcrn_forward.13} parent=0 // pred_fallthru
    _

// kernel: dctcrn_forward.14
$region0: #{dctcrn_forward.14}
  #allocation0 [shape = 'u32[]', space=smem, size = 0x4, offset = 0x4, fixed_abs, tag = 'smem constant byte address 0x4 - core index']
  #allocation1 [shape = 'u32[144,128]{1,0:T(1,128)}', space=vmem, size = 0x12000, scoped, tag = 'internal scratch']
  #allocation2 [shape = 'f32[1,1]{1,0:T(1,128)S(1)}', space=vmem, size = 0x200, scoped, tag = 'scoped memory for dctcrn_forward.14']
  %s0 = inlined_call_operand.vmem [shape: bf16[8,40], index: 0, kind: input, shape index: {}]
  %s1 = inlined_call_operand.vmem [shape: bf16[40,352], index: 1, kind: input, shape index: {}]
  %s2 = inlined_call_operand.vmem [shape: f32[8,1], index: 2, kind: input, shape index: {}]
  %s3 = inlined_call_operand.vmem [shape: f32[8,1], index: 3, kind: input, shape index: {}]
  %s4 = inlined_call_operand.vmem [shape: f32[8,1], index: 4, kind: input, shape index: {}]
  %s5 = inlined_call_operand.<no memory space> [shape: f32[1,1], index: 5, kind: input, shape index: {}]
  %s6 = inlined_call_operand.vmem [shape: f32[8,352], index: 6, kind: output, shape index: {}]
  %s7 = sld [smem:[#allocation0]]
  $region34: #{dctcrn_forward.14} parent=0
    _
  %s9 = ssub.s32 1, %s7
  %s10 = scalar_select 0, %s9, %s7
  %v11 = vstv %s5
  %12 = vst [vmem:[#allocation2] sm:$0x1] %v11
  // Predicated region
  $region2: #{dctcrn_forward.14} parent=0 // pred_check
    _
  $region3: #{dctcrn_forward.14} parent=0 // pred_check_branch
    %14 = sbr.rel (0) target = $region5
  $region4: #{dctcrn_forward.14} parent=0 // pred_region
    _
  $region5: #{dctcrn_forward.14} parent=0 // pred_fallthru
    _
  // Predicated region
  $region6: #{dctcrn_forward.14} parent=0 // pred_check
    _
  $region7: #{dctcrn_forward.14} parent=0 // pred_check_branch
    %16 = sbr.rel (0) target = $region9
  $region8: #{dctcrn_forward.14} parent=0 // pred_region
    _
  $region9: #{dctcrn_forward.14} parent=0 // pred_fallthru
    _
  // Predicated region
  $region10: #{dctcrn_forward.14} parent=0 // pred_check
    _
  $region11: #{dctcrn_forward.14} parent=0 // pred_check_branch
    %18 = sbr.rel (0) target = $region13
  $region12: #{dctcrn_forward.14} parent=0 // pred_region
    _
  $region13: #{dctcrn_forward.14} parent=0 // pred_fallthru
    _
  // Predicated region
  $region14: #{dctcrn_forward.14} parent=0 // pred_check
    _
  $region15: #{dctcrn_forward.14} parent=0 // pred_check_branch
    %20 = sbr.rel (0) target = $region17
  $region16: #{dctcrn_forward.14} parent=0 // pred_region
    _
  $region17: #{dctcrn_forward.14} parent=0 // pred_fallthru
    _
  // Predicated region
  $region18: #{dctcrn_forward.14} parent=0 // pred_check
    _
  $region19: #{dctcrn_forward.14} parent=0 // pred_check_branch
    %22 = sbr.rel (0) target = $region21
  $region20: #{dctcrn_forward.14} parent=0 // pred_region
    _
  $region21: #{dctcrn_forward.14} parent=0 // pred_fallthru
    _
  // Predicated region
  $region22: #{dctcrn_forward.14} parent=0 // pred_check
    _
  $region23: #{dctcrn_forward.14} parent=0 // pred_check_branch
    %24 = sbr.rel (0) target = $region25
  $region24: #{dctcrn_forward.14} parent=0 // pred_region
    _
  $region25: #{dctcrn_forward.14} parent=0 // pred_fallthru
    _
  %v26 = vld [vmem:[%s0] sm:$0xf]
  %v27 = vld [vmem:[%s1] sm:$0xff]
  %v28 = vld [vmem:[%s1 + $0x8] sm:$0xf]
  %v29 = vld [vmem:[%s1 + $0xc] sm:$0xff]
  %v30 = vld [vmem:[%s1 + $0x14] sm:$0xf]
  %v31 = vld [vmem:[%s1 + $0x18] sm:$0xff]
  %v32 = vld [vmem:[%s1 + $0x20] sm:$0xf]
  %v33 = vld [vmem:[%s1 + $0x24] sm:$0xff]
  %v34 = vld [vmem:[%s1 + $0x2c] sm:$0xf]
  %v35 = vld [vmem:[%s1 + $0x30] sm:$0xff]
  %v36 = vld [vmem:[%s1 + $0x38] sm:$0xf]
  %v37 = vld [vmem:[%s2] sm:$0xff]
  %39 = vset.pattern.permute.xlu0 0
  %40 = vperm.xlu0 %39, %v37
  %v41 = vpop.permute.xlu0 %40
  %v53 = vunpack.c.l.b16 %v27
  %v54 = vunpack.c.h.b16 %v27
  %v55 = vunpack.c.l.b16 %v28
  %v56 = vunpack.c.l.b16 %v29
  %v57 = vunpack.c.h.b16 %v29
  %v58 = vunpack.c.l.b16 %v30
  %v59 = vunpack.c.l.b16 %v31
  %v60 = vunpack.c.h.b16 %v31
  %v61 = vunpack.c.l.b16 %v32
  %v62 = vunpack.c.l.b16 %v33
  %v63 = vunpack.c.h.b16 %v33
  %v64 = vunpack.c.l.b16 %v34
  %v65 = vunpack.c.l.b16 %v35
  %v66 = vunpack.c.h.b16 %v35
  %v67 = vunpack.c.l.b16 %v36
  %v68 = vpack.c.b16 %v56, %v53
  %v69 = vpack.c.b16 %v57, %v54
  %v70 = vpack.c.b16 %v58, %v55
  %v71 = vpack.c.b16 %v62, %v59
  %v72 = vpack.c.b16 %v63, %v60
  %v73 = vpack.c.b16 %v64, %v61
  %v74 = vpack.c.b16 %v65, %v65
  %v75 = vpack.c.b16 %v66, %v66
  %v76 = vpack.c.b16 %v67, %v67
  %vm83 = vcmask 326656
  %v85 = vsel %vm83, %v26, 0
  %vm87 = vcmask 1043456
  %v89 = vsel %vm87, %v74, 0
  %v92 = vsel %vm87, %v75, 0
  %v95 = vsel %vm87, %v76, 0
  %97 = vmatprep.subr.bf16.mxu0 %v69
  %98 = vmatpush1.bf16.msra.mxu0 %v68
  %99 = vmatprep.subr.bf16.mxu0 %v72
  %100 = vmatpush1.bf16.msra.mxu0 %v71
  %101 = vmatprep.subr.bf16.mxu0 %v92
  %102 = vmatpush1.bf16.msra.mxu0 %v89
  %103 = vmatprep.subr.bf16.mxu0 0
  %104 = vmatpush1.bf16.msra.mxu0 0
  %105 = vmatprep.subr.bf16.mxu0 0
  %106 = vmatpush1.bf16.msra.mxu0 0
  %107 = vmatprep.subr.bf16.mxu0 0
  %108 = vmatpush1.bf16.msra.mxu0 0
  %109 = vmatprep.subr.bf16.mxu0 0
  %110 = vmatpush1.bf16.msra.mxu0 0
  %111 = vmatprep.subr.bf16.mxu0 0
  %112 = vmatpush1.bf16.msra.mxu0 0
  %113 = vmatprep.subr.bf16.mxu0 0
  %114 = vmatpush1.bf16.msra.mxu0 0
  %115 = vmatprep.subr.bf16.mxu0 0
  %116 = vmatpush1.bf16.msra.mxu0 0
  %117 = vmatprep.subr.bf16.mxu0 0
  %118 = vmatpush1.bf16.msra.mxu0 0
  %119 = vmatprep.subr.bf16.mxu0 0
  %120 = vmatpush1.bf16.msra.mxu0 0
  %121 = vmatprep.subr.bf16.mxu0 0
  %122 = vmatpush1.bf16.msra.mxu0 0
  %123 = vmatprep.subr.bf16.mxu0 0
  %124 = vmatpush1.bf16.msra.mxu0 0
  %125 = vmatprep.subr.bf16.mxu0 0
  %126 = vmatpush1.bf16.msra.mxu0 0
  %127 = vmatprep.subr.bf16.mxu0 0
  %128 = vmatpush1.bf16.msra.mxu0 0
  %129 = vmatprep.mubr.bf16.mxu0 0
  %130 = vmatmul.mubr.bf16.gmra.mrb[0].mxu0 %v85
  %v131 = vpop.f32.mrb[0].mxu0
  %v132 = vadd.f32 %v41, %v131
  %v133 = vpop.f32.mrb[0].mxu0
  %v134 = vadd.f32 %v41, %v133
  %v135 = vpop.f32.mrb[0].mxu0
  %v136 = vpop.f32.mrb[0].mxu0
  %137 = vdwg.mxu0
  %138 = vmatprep.subr.bf16.mxu0 0
  %139 = vmatpush1.bf16.msra.mxu0 %v70
  %140 = vmatprep.subr.bf16.mxu0 0
  %141 = vmatpush1.bf16.msra.mxu0 %v73
  %142 = vmatprep.subr.bf16.mxu0 0
  %143 = vmatpush1.bf16.msra.mxu0 %v95
  %144 = vmatprep.subr.bf16.mxu0 0
  %145 = vmatpush1.bf16.msra.mxu0 0
  %146 = vmatprep.subr.bf16.mxu0 0
  %147 = vmatpush1.bf16.msra.mxu0 0
  %148 = vmatprep.subr.bf16.mxu0 0
  %149 = vmatpush1.bf16.msra.mxu0 0
  %150 = vmatprep.subr.bf16.mxu0 0
  %151 = vmatpush1.bf16.msra.mxu0 0
  %152 = vmatprep.subr.bf16.mxu0 0
  %153 = vmatpush1.bf16.msra.mxu0 0
  %154 = vmatprep.subr.bf16.mxu0 0
  %155 = vmatpush1.bf16.msra.mxu0 0
  %156 = vmatprep.subr.bf16.mxu0 0
  %157 = vmatpush1.bf16.msra.mxu0 0
  %158 = vmatprep.subr.bf16.mxu0 0
  %159 = vmatpush1.bf16.msra.mxu0 0
  %160 = vmatprep.subr.bf16.mxu0 0
  %161 = vmatpush1.bf16.msra.mxu0 0
  %162 = vmatprep.subr.bf16.mxu0 0
  %163 = vmatpush1.bf16.msra.mxu0 0
  %164 = vmatprep.subr.bf16.mxu0 0
  %165 = vmatpush1.bf16.msra.mxu0 0
  %166 = vmatprep.subr.bf16.mxu0 0
  %167 = vmatpush1.bf16.msra.mxu0 0
  %168 = vmatprep.subr.bf16.mxu0 0
  %169 = vmatpush1.bf16.msra.mxu0 0
  %170 = vmatprep.mubr.bf16.mxu0 0
  %171 = vmatmul.mubr.bf16.gmra.mrb[0].mxu0 %v85
  %v172 = vpop.f32.mrb[0].mxu0
  %v173 = vadd.f32 %v41, %v172
  %v174 = vpop.f32.mrb[0].mxu0
  %v175 = vpop.f32.mrb[0].mxu0
  %v176 = vpop.f32.mrb[0].mxu0
  %177 = vdwg.mxu0
  %v178 = vadd.f32 %v132, %v134
  %vm179 = vcmask 785408
  %v180 = vsel %vm179, %v173, 0.0
  %v181 = vadd.f32 %v178, %v180
  %182 = vadd.xlane.f32.xlu0 %v181
  %v183 = vpop.xlane.xlu0 %182
  %v184 = vrcp.pop 352.0
  %v185 = vmul.f32 %v183, %v184
  %v186 = vmul.f32 %v132, %v132
  %v187 = vmul.f32 %v134, %v134
  %v188 = vmul.f32 %v173, %v173
  %v189 = vadd.f32 %v186, %v187
  %v190 = vsel %vm179, %v188, 0.0
  %v191 = vadd.f32 %v189, %v190
  %192 = vadd.xlane.f32.xlu0 %v191
  %v193 = vpop.xlane.xlu0 %192
  %v194 = vmul.f32 %v193, %v184
  %v195 = vmul.f32 %v185, %v185
  %v196 = vsub.f32 %v194, %v195
  %v197 = vadd.f32 %v196, 1e-05
  %v198 = vrsqrt.pop %v197
  %v199 = vld [vmem:[%s3] sm:$0xff]
  %v200 = vmul.f32 %v199, %v198
  %v201 = vld [vmem:[%s4] sm:$0xff]
  %v202 = vmul.f32 %v185, %v200
  %v203 = vsub.f32 %v201, %v202
  %205 = vset.pattern.permute.xlu0 0
  %206 = vperm.xlu0 %205, %v200
  %v207 = vpop.permute.xlu0 %206
  %v209 = vmul.f32 %v132, %v207
  %v210 = vmul.f32 %v134, %v207
  %v211 = vmul.f32 %v173, %v207
  %213 = vset.pattern.permute.xlu0 0
  %214 = vperm.xlu0 %213, %v203
  %v215 = vpop.permute.xlu0 %214
  %v217 = vadd.f32 %v209, %v215
  %v218 = vadd.f32 %v210, %v215
  %v219 = vadd.f32 %v211, %v215
  %v220 = vld [vmem:[#allocation2] sm:$0x1]
  %s221 = vtos %v220
  %vm222 = vcmp.ge.f32.partialorder %v217, 0.0
  %vm223 = vcmp.ge.f32.partialorder %v218, 0.0
  %vm224 = vcmp.ge.f32.partialorder %v219, 0.0
  %v225 = vstv %s221
  %v226 = vmul.f32 %v225, %v217
  %v227 = vmul.f32 %v225, %v218
  %v228 = vmul.f32 %v225, %v219
  %v229 = vsel %vm222, %v217, %v226
  %v230 = vsel %vm223, %v218, %v227
  %v231 = vsel %vm224, %v219, %v228
  %232 = vst [vmem:[%s6] sm:$0xff] %v229
  %233 = vst [vmem:[%s6 + $0x8] sm:$0xff] %v230
  %234 = vst.msk [vmem:[%s6 + $0x10] sm:$0xff] %vm179, %v231
  // Predicated region
  $region26: #{dctcrn_forward.14} parent=0 // pred_check
    _
  $region27: #{dctcrn_forward.14} parent=0 // pred_check_branch
    %236 = sbr.rel (0) target = $region29
  $region28: #{dctcrn_forward.14} parent=0 // pred_region
    _
  $region29: #{dctcrn_forward.14} parent=0 // pred_fallthru
    _
  // Predicated region
  $region30: #{dctcrn_forward.14} parent=0 // pred_check
    _
  $region31: #{dctcrn_forward.14} parent=0 // pred_check_branch
    %238 = sbr.rel (0) target = $region33
  $region32: #{dctcrn_forward.14} parent=0 // pred_region
    _
  $region33: #{dctcrn_forward.14} parent=0 // pred_fallthru
    _

// kernel: dctcrn_forward.15
$region0: #{dctcrn_forward.15}
  #allocation0 [shape = 'u32[]', space=smem, size = 0x4, offset = 0x4, fixed_abs, tag = 'smem constant byte address 0x4 - core index']
  #allocation1 [shape = 'u32[144,128]{1,0:T(1,128)}', space=vmem, size = 0x12000, scoped, tag = 'internal scratch']
  #allocation2 [shape = 'f32[1,1]{1,0:T(1,128)S(1)}', space=vmem, size = 0x200, scoped, tag = 'scoped memory for dctcrn_forward.15']
  %s0 = inlined_call_operand.vmem [shape: bf16[16,80], index: 0, kind: input, shape index: {}]
  %s1 = inlined_call_operand.vmem [shape: bf16[80,176], index: 1, kind: input, shape index: {}]
  %s2 = inlined_call_operand.vmem [shape: f32[16,1], index: 2, kind: input, shape index: {}]
  %s3 = inlined_call_operand.vmem [shape: f32[16,1], index: 3, kind: input, shape index: {}]
  %s4 = inlined_call_operand.vmem [shape: f32[16,1], index: 4, kind: input, shape index: {}]
  %s5 = inlined_call_operand.<no memory space> [shape: f32[1,1], index: 5, kind: input, shape index: {}]
  %s6 = inlined_call_operand.vmem [shape: f32[16,176], index: 6, kind: output, shape index: {}]
  %s7 = sld [smem:[#allocation0]]
  $region34: #{dctcrn_forward.15} parent=0
    _
  %s9 = ssub.s32 1, %s7
  %s10 = scalar_select 0, %s9, %s7
  %v11 = vstv %s5
  %12 = vst [vmem:[#allocation2] sm:$0x1] %v11
  // Predicated region
  $region2: #{dctcrn_forward.15} parent=0 // pred_check
    _
  $region3: #{dctcrn_forward.15} parent=0 // pred_check_branch
    %14 = sbr.rel (0) target = $region5
  $region4: #{dctcrn_forward.15} parent=0 // pred_region
    _
  $region5: #{dctcrn_forward.15} parent=0 // pred_fallthru
    _
  // Predicated region
  $region6: #{dctcrn_forward.15} parent=0 // pred_check
    _
  $region7: #{dctcrn_forward.15} parent=0 // pred_check_branch
    %16 = sbr.rel (0) target = $region9
  $region8: #{dctcrn_forward.15} parent=0 // pred_region
    _
  $region9: #{dctcrn_forward.15} parent=0 // pred_fallthru
    _
  // Predicated region
  $region10: #{dctcrn_forward.15} parent=0 // pred_check
    _
  $region11: #{dctcrn_forward.15} parent=0 // pred_check_branch
    %18 = sbr.rel (0) target = $region13
  $region12: #{dctcrn_forward.15} parent=0 // pred_region
    _
  $region13: #{dctcrn_forward.15} parent=0 // pred_fallthru
    _
  // Predicated region
  $region14: #{dctcrn_forward.15} parent=0 // pred_check
    _
  $region15: #{dctcrn_forward.15} parent=0 // pred_check_branch
    %20 = sbr.rel (0) target = $region17
  $region16: #{dctcrn_forward.15} parent=0 // pred_region
    _
  $region17: #{dctcrn_forward.15} parent=0 // pred_fallthru
    _
  // Predicated region
  $region18: #{dctcrn_forward.15} parent=0 // pred_check
    _
  $region19: #{dctcrn_forward.15} parent=0 // pred_check_branch
    %22 = sbr.rel (0) target = $region21
  $region20: #{dctcrn_forward.15} parent=0 // pred_region
    _
  $region21: #{dctcrn_forward.15} parent=0 // pred_fallthru
    _
  // Predicated region
  $region22: #{dctcrn_forward.15} parent=0 // pred_check
    _
  $region23: #{dctcrn_forward.15} parent=0 // pred_check_branch
    %24 = sbr.rel (0) target = $region25
  $region24: #{dctcrn_forward.15} parent=0 // pred_region
    _
  $region25: #{dctcrn_forward.15} parent=0 // pred_fallthru
    _
  %v26 = vld [vmem:[%s0] sm:$0xf]
  %v27 = vld [vmem:[%s0 + $0x4] sm:$0xf]
  %v28 = vld [vmem:[%s1] sm:$0xff]
  %v29 = vld [vmem:[%s1 + $0x8] sm:$0xff]
  %v30 = vld [vmem:[%s1 + $0x10] sm:$0xff]
  %v31 = vld [vmem:[%s1 + $0x18] sm:$0xff]
  %v32 = vld [vmem:[%s1 + $0x20] sm:$0xff]
  %v33 = vld [vmem:[%s1 + $0x28] sm:$0xff]
  %v34 = vld [vmem:[%s1 + $0x30] sm:$0xff]
  %v35 = vld [vmem:[%s1 + $0x38] sm:$0xff]
  %v36 = vld [vmem:[%s1 + $0x40] sm:$0xff]
  %v37 = vld [vmem:[%s1 + $0x48] sm:$0xff]
  %v38 = vld [vmem:[%s2] sm:$0xff]
  %v39 = vld [vmem:[%s2 + $0x8] sm:$0xff]
  %41 = vset.pattern.permute.xlu0 0
  %42 = vperm.xlu0 %41, %v38
  %v43 = vpop.permute.xlu0 %42
  %46 = vset.pattern.permute.xlu0 0
  %47 = vperm.xlu0 %46, %v39
  %v48 = vpop.permute.xlu0 %47
  %v52 = vunpack.c.l.b16 %v26
  %v53 = vunpack.c.l.b16 %v27
  %v54 = vpack.c.b16 %v53, %v52
  %v65 = vunpack.c.l.b16 %v28
  %v66 = vunpack.c.h.b16 %v28
  %v67 = vunpack.c.l.b16 %v29
  %v68 = vunpack.c.h.b16 %v29
  %v69 = vunpack.c.l.b16 %v30
  %v70 = vunpack.c.h.b16 %v30
  %v71 = vunpack.c.l.b16 %v31
  %v72 = vunpack.c.h.b16 %v31
  %v73 = vunpack.c.l.b16 %v32
  %v74 = vunpack.c.h.b16 %v32
  %v75 = vunpack.c.l.b16 %v33
  %v76 = vunpack.c.h.b16 %v33
  %v77 = vunpack.c.l.b16 %v34
  %v78 = vunpack.c.h.b16 %v34
  %v79 = vunpack.c.l.b16 %v35
  %v80 = vunpack.c.h.b16 %v35
  %v81 = vunpack.c.l.b16 %v36
  %v82 = vunpack.c.h.b16 %v36
  %v83 = vunpack.c.l.b16 %v37
  %v84 = vunpack.c.h.b16 %v37
  %v85 = vpack.c.b16 %v67, %v65
  %v86 = vpack.c.b16 %v68, %v66
  %v87 = vpack.c.b16 %v71, %v69
  %v88 = vpack.c.b16 %v72, %v70
  %v89 = vpack.c.b16 %v75, %v73
  %v90 = vpack.c.b16 %v76, %v74
  %v91 = vpack.c.b16 %v79, %v77
  %v92 = vpack.c.b16 %v80, %v78
  %v93 = vpack.c.b16 %v83, %v81
  %v94 = vpack.c.b16 %v84, %v82
  %vm105 = vcmask 654336
  %v107 = vsel %vm105, %v54, 0
  %109 = vmatprep.subr.bf16.mxu0 %v86
  %110 = vmatpush1.bf16.msra.mxu0 %v85
  %111 = vmatprep.subr.bf16.mxu0 %v88
  %112 = vmatpush1.bf16.msra.mxu0 %v87
  %113 = vmatprep.subr.bf16.mxu0 %v90
  %114 = vmatpush1.bf16.msra.mxu0 %v89
  %115 = vmatprep.subr.bf16.mxu0 %v92
  %116 = vmatpush1.bf16.msra.mxu0 %v91
  %117 = vmatprep.subr.bf16.mxu0 %v94
  %118 = vmatpush1.bf16.msra.mxu0 %v93
  %119 = vmatprep.subr.bf16.mxu0 0
  %120 = vmatpush1.bf16.msra.mxu0 0
  %121 = vmatprep.subr.bf16.mxu0 0
  %122 = vmatpush1.bf16.msra.mxu0 0
  %123 = vmatprep.subr.bf16.mxu0 0
  %124 = vmatpush1.bf16.msra.mxu0 0
  %125 = vmatprep.subr.bf16.mxu0 0
  %126 = vmatpush1.bf16.msra.mxu0 0
  %127 = vmatprep.subr.bf16.mxu0 0
  %128 = vmatpush1.bf16.msra.mxu0 0
  %129 = vmatprep.subr.bf16.mxu0 0
  %130 = vmatpush1.bf16.msra.mxu0 0
  %131 = vmatprep.subr.bf16.mxu0 0
  %132 = vmatpush1.bf16.msra.mxu0 0
  %133 = vmatprep.subr.bf16.mxu0 0
  %134 = vmatpush1.bf16.msra.mxu0 0
  %135 = vmatprep.subr.bf16.mxu0 0
  %136 = vmatpush1.bf16.msra.mxu0 0
  %137 = vmatprep.subr.bf16.mxu0 0
  %138 = vmatpush1.bf16.msra.mxu0 0
  %139 = vmatprep.subr.bf16.mxu0 0
  %140 = vmatpush1.bf16.msra.mxu0 0
  %141 = vmatprep.mubr.bf16.mxu0 0
  %142 = vmatmul.mubr.bf16.gmra.mrb[0].mxu0 %v107
  %v143 = vpop.f32.mrb[0].mxu0
  %v144 = vadd.f32 %v43, %v143
  %v145 = vpop.f32.mrb[0].mxu0
  %v146 = vadd.f32 %v43, %v145
  %v147 = vpop.f32.mrb[0].mxu0
  %v148 = vadd.f32 %v48, %v147
  %v149 = vpop.f32.mrb[0].mxu0
  %v150 = vadd.f32 %v48, %v149
  %151 = vdwg.mxu0
  %vm152 = vcmask 392192
  %v153 = vsel %vm152, %v146, 0.0
  %v154 = vadd.f32 %v144, %v153
  %155 = vadd.xlane.f32.xlu0 %v154
  %v156 = vpop.xlane.xlu0 %155
  %v157 = vsel %vm152, %v150, 0.0
  %v158 = vadd.f32 %v148, %v157
  %159 = vadd.xlane.f32.xlu0 %v158
  %v160 = vpop.xlane.xlu0 %159
  %v161 = vrcp.pop 176.0
  %v162 = vmul.f32 %v156, %v161
  %v163 = vmul.f32 %v160, %v161
  %v164 = vmul.f32 %v144, %v144
  %v165 = vmul.f32 %v146, %v146
  %v166 = vmul.f32 %v148, %v148
  %v167 = vmul.f32 %v150, %v150
  %v168 = vsel %vm152, %v165, 0.0
  %v169 = vadd.f32 %v164, %v168
  %170 = vadd.xlane.f32.xlu0 %v169
  %v171 = vpop.xlane.xlu0 %170
  %v172 = vsel %vm152, %v167, 0.0
  %v173 = vadd.f32 %v166, %v172
  %174 = vadd.xlane.f32.xlu0 %v173
  %v175 = vpop.xlane.xlu0 %174
  %v176 = vmul.f32 %v171, %v161
  %v177 = vmul.f32 %v175, %v161
  %v178 = vmul.f32 %v162, %v162
  %v179 = vmul.f32 %v163, %v163
  %v180 = vsub.f32 %v176, %v178
  %v181 = vsub.f32 %v177, %v179
  %v182 = vadd.f32 %v180, 1e-05
  %v183 = vadd.f32 %v181, 1e-05
  %v184 = vrsqrt.pop %v182
  %v185 = vrsqrt.pop %v183
  %v186 = vld [vmem:[%s3] sm:$0xff]
  %v187 = vld [vmem:[%s3 + $0x8] sm:$0xff]
  %v188 = vmul.f32 %v186, %v184
  %v189 = vmul.f32 %v187, %v185
  %v190 = vld [vmem:[%s4] sm:$0xff]
  %v191 = vld [vmem:[%s4 + $0x8] sm:$0xff]
  %v192 = vmul.f32 %v162, %v188
  %v193 = vmul.f32 %v163, %v189
  %v194 = vsub.f32 %v190, %v192
  %v195 = vsub.f32 %v191, %v193
  %197 = vset.pattern.permute.xlu0 0
  %198 = vperm.xlu0 %197, %v188
  %v199 = vpop.permute.xlu0 %198
  %202 = vset.pattern.permute.xlu0 0
  %203 = vperm.xlu0 %202, %v189
  %v204 = vpop.permute.xlu0 %203
  %v206 = vmul.f32 %v144, %v199
  %v207 = vmul.f32 %v146, %v199
  %v208 = vmul.f32 %v148, %v204
  %v209 = vmul.f32 %v150, %v204
  %211 = vset.pattern.permute.xlu0 0
  %212 = vperm.xlu0 %211, %v194
  %v213 = vpop.permute.xlu0 %212
  %216 = vset.pattern.permute.xlu0 0
  %217 = vperm.xlu0 %216, %v195
  %v218 = vpop.permute.xlu0 %217
  %v220 = vadd.f32 %v206, %v213
  %v221 = vadd.f32 %v207, %v213
  %v222 = vadd.f32 %v208, %v218
  %v223 = vadd.f32 %v209, %v218
  %v224 = vld [vmem:[#allocation2] sm:$0x1]
  %s225 = vtos %v224
  %vm226 = vcmp.ge.f32.partialorder %v220, 0.0
  %vm227 = vcmp.ge.f32.partialorder %v221, 0.0
  %vm228 = vcmp.ge.f32.partialorder %v222, 0.0
  %vm229 = vcmp.ge.f32.partialorder %v223, 0.0
  %v230 = vstv %s225
  %v231 = vmul.f32 %v230, %v220
  %v232 = vmul.f32 %v230, %v221
  %v233 = vmul.f32 %v230, %v222
  %v234 = vmul.f32 %v230, %v223
  %v235 = vsel %vm226, %v220, %v231
  %v236 = vsel %vm227, %v221, %v232
  %v237 = vsel %vm228, %v222, %v233
  %v238 = vsel %vm229, %v223, %v234
  %239 = vst [vmem:[%s6] sm:$0xff] %v235
  %240 = vst.msk [vmem:[%s6 + $0x8] sm:$0xff] %vm152, %v236
  %241 = vst [vmem:[%s6 + $0x10] sm:$0xff] %v237
  %242 = vst.msk [vmem:[%s6 + $0x18] sm:$0xff] %vm152, %v238
  // Predicated region
  $region26: #{dctcrn_forward.15} parent=0 // pred_check
    _
  $region27: #{dctcrn_forward.15} parent=0 // pred_check_branch
    %244 = sbr.rel (0) target = $region29
  $region28: #{dctcrn_forward.15} parent=0 // pred_region
    _
  $region29: #{dctcrn_forward.15} parent=0 // pred_fallthru
    _
  // Predicated region
  $region30: #{dctcrn_forward.15} parent=0 // pred_check
    _
  $region31: #{dctcrn_forward.15} parent=0 // pred_check_branch
    %246 = sbr.rel (0) target = $region33
  $region32: #{dctcrn_forward.15} parent=0 // pred_region
    _
  $region33: #{dctcrn_forward.15} parent=0 // pred_fallthru
    _

// kernel: dctcrn_forward.16
$region0: #{dctcrn_forward.16}
  #allocation0 [shape = 'u32[]', space=smem, size = 0x4, offset = 0x4, fixed_abs, tag = 'smem constant byte address 0x4 - core index']
  #allocation1 [shape = 'u32[144,128]{1,0:T(1,128)}', space=vmem, size = 0x12000, scoped, tag = 'internal scratch']
  #allocation2 [shape = 'f32[22,16]{1,0:T(8,128)}', space=vmem, size = 0x3000, scoped, tag = 'scratch operand']
  %s0 = inlined_call_operand.vmem [shape: f32[22,128], index: 0, kind: input, shape index: {}]
  %s1 = inlined_call_operand.vmem [shape: f32[128,64], index: 1, kind: input, shape index: {}]
  %s2 = inlined_call_operand.vmem [shape: f32[16,64], index: 2, kind: input, shape index: {}]
  %s3 = inlined_call_operand.vmem [shape: f32[1,64], index: 3, kind: input, shape index: {}]
  %s4 = inlined_call_operand.vmem [shape: f32[16,64], index: 4, kind: input, shape index: {}]
  %s5 = inlined_call_operand.vmem [shape: f32[16,64], index: 5, kind: input, shape index: {}]
  %s6 = inlined_call_operand.vmem [shape: f32[1,64], index: 6, kind: input, shape index: {}]
  %s7 = inlined_call_operand.vmem [shape: f32[16,128], index: 7, kind: input, shape index: {}]
  %s8 = inlined_call_operand.vmem [shape: f32[1,128], index: 8, kind: input, shape index: {}]
  %s9 = inlined_call_operand.vmem [shape: f32[22,128], index: 9, kind: output, shape index: {}]
  %s10 = sld [smem:[#allocation0]]
  $region46: #{dctcrn_forward.16} parent=0
    _
  %s12 = ssub.s32 1, %s10
  %s13 = scalar_select 0, %s12, %s10
  // Predicated region
  $region2: #{dctcrn_forward.16} parent=0 // pred_check
    _
  $region3: #{dctcrn_forward.16} parent=0 // pred_check_branch
    %15 = sbr.rel (0) target = $region5
  $region4: #{dctcrn_forward.16} parent=0 // pred_region
    _
  $region5: #{dctcrn_forward.16} parent=0 // pred_fallthru
    _
  // Predicated region
  $region6: #{dctcrn_forward.16} parent=0 // pred_check
    _
  $region7: #{dctcrn_forward.16} parent=0 // pred_check_branch
    %17 = sbr.rel (0) target = $region9
  $region8: #{dctcrn_forward.16} parent=0 // pred_region
    _
  $region9: #{dctcrn_forward.16} parent=0 // pred_fallthru
    _
  // Predicated region
  $region10: #{dctcrn_forward.16} parent=0 // pred_check
    _
  $region11: #{dctcrn_forward.16} parent=0 // pred_check_branch
    %19 = sbr.rel (0) target = $region13
  $region12: #{dctcrn_forward.16} parent=0 // pred_region
    _
  $region13: #{dctcrn_forward.16} parent=0 // pred_fallthru
    _
  // Predicated region
  $region14: #{dctcrn_forward.16} parent=0 // pred_check
    _
  $region15: #{dctcrn_forward.16} parent=0 // pred_check_branch
    %21 = sbr.rel (0) target = $region17
  $region16: #{dctcrn_forward.16} parent=0 // pred_region
    _
  $region17: #{dctcrn_forward.16} parent=0 // pred_fallthru
    _
  // Predicated region
  $region18: #{dctcrn_forward.16} parent=0 // pred_check
    _
  $region19: #{dctcrn_forward.16} parent=0 // pred_check_branch
    %23 = sbr.rel (0) target = $region21
  $region20: #{dctcrn_forward.16} parent=0 // pred_region
    _
  $region21: #{dctcrn_forward.16} parent=0 // pred_fallthru
    _
  // Predicated region
  $region22: #{dctcrn_forward.16} parent=0 // pred_check
    _
  $region23: #{dctcrn_forward.16} parent=0 // pred_check_branch
    %25 = sbr.rel (0) target = $region25
  $region24: #{dctcrn_forward.16} parent=0 // pred_region
    _
  $region25: #{dctcrn_forward.16} parent=0 // pred_fallthru
    _
  // Predicated region
  $region26: #{dctcrn_forward.16} parent=0 // pred_check
    _
  $region27: #{dctcrn_forward.16} parent=0 // pred_check_branch
    %27 = sbr.rel (0) target = $region29
  $region28: #{dctcrn_forward.16} parent=0 // pred_region
    _
  $region29: #{dctcrn_forward.16} parent=0 // pred_fallthru
    _
  // Predicated region
  $region30: #{dctcrn_forward.16} parent=0 // pred_check
    _
  $region31: #{dctcrn_forward.16} parent=0 // pred_check_branch
    %29 = sbr.rel (0) target = $region33
  $region32: #{dctcrn_forward.16} parent=0 // pred_region
    _
  $region33: #{dctcrn_forward.16} parent=0 // pred_fallthru
    _
  // Predicated region
  $region34: #{dctcrn_forward.16} parent=0 // pred_check
    _
  $region35: #{dctcrn_forward.16} parent=0 // pred_check_branch
    %31 = sbr.rel (0) target = $region37
  $region36: #{dctcrn_forward.16} parent=0 // pred_region
    _
  $region37: #{dctcrn_forward.16} parent=0 // pred_fallthru
    _
  %v32 = vld [vmem:[%s0] sm:$0xff]
  %v33 = vld [vmem:[%s0 + $0x8] sm:$0xff]
  %v34 = vld [vmem:[%s0 + $0x10] sm:$0x3f]
  %v35 = vld [vmem:[%s1] sm:$0xff]
  %v36 = vld [vmem:[%s1 + $0x8] sm:$0xff]
  %v37 = vld [vmem:[%s1 + $0x10] sm:$0xff]
  %v38 = vld [vmem:[%s1 + $0x18] sm:$0xff]
  %v39 = vld [vmem:[%s1 + $0x20] sm:$0xff]
  %v40 = vld [vmem:[%s1 + $0x28] sm:$0xff]
  %v41 = vld [vmem:[%s1 + $0x30] sm:$0xff]
  %v42 = vld [vmem:[%s1 + $0x38] sm:$0xff]
  %v43 = vld [vmem:[%s1 + $0x40] sm:$0xff]
  %v44 = vld [vmem:[%s1 + $0x48] sm:$0xff]
  %v45 = vld [vmem:[%s1 + $0x50] sm:$0xff]
  %v46 = vld [vmem:[%s1 + $0x58] sm:$0xff]
  %v47 = vld [vmem:[%s1 + $0x60] sm:$0xff]
  %v48 = vld [vmem:[%s1 + $0x68] sm:$0xff]
  %v49 = vld [vmem:[%s1 + $0x70] sm:$0xff]
  %v50 = vld [vmem:[%s1 + $0x78] sm:$0xff]
  %v51 = vld [vmem:[%s3] sm:$0x1]
  %v53 = vlaneseq
  %v54 = vshrl.u32 %v53, 7
  %v55 = vsub.s32 0, %v54
  %v56 = vrot.slane %v51, %v55
  %58 = vmatprep.subr.mxu0 0.0
  %59 = vmatpush1.msra.mxu0 %v35
  %60 = vmatprep.subr.mxu0 0.0
  %61 = vmatpush1.msra.mxu0 %v36
  %62 = vmatprep.subr.mxu0 0.0
  %63 = vmatpush1.msra.mxu0 %v37
  %64 = vmatprep.subr.mxu0 0.0
  %65 = vmatpush1.msra.mxu0 %v38
  %66 = vmatprep.subr.mxu0 0.0
  %67 = vmatpush1.msra.mxu0 %v39
  %68 = vmatprep.subr.mxu0 0.0
  %69 = vmatpush1.msra.mxu0 %v40
  %70 = vmatprep.subr.mxu0 0.0
  %71 = vmatpush1.msra.mxu0 %v41
  %72 = vmatprep.subr.mxu0 0.0
  %73 = vmatpush1.msra.mxu0 %v42
  %74 = vmatprep.subr.mxu0 0.0
  %75 = vmatpush1.msra.mxu0 %v43
  %76 = vmatprep.subr.mxu0 0.0
  %77 = vmatpush1.msra.mxu0 %v44
  %78 = vmatprep.subr.mxu0 0.0
  %79 = vmatpush1.msra.mxu0 %v45
  %80 = vmatprep.subr.mxu0 0.0
  %81 = vmatpush1.msra.mxu0 %v46
  %82 = vmatprep.subr.mxu0 0.0
  %83 = vmatpush1.msra.mxu0 %v47
  %84 = vmatprep.subr.mxu0 0.0
  %85 = vmatpush1.msra.mxu0 %v48
  %86 = vmatprep.subr.mxu0 0.0
  %87 = vmatpush1.msra.mxu0 %v49
  %88 = vmatprep.subr.mxu0 0.0
  %89 = vmatpush1.msra.mxu0 %v50
  %90 = vmatprep.subr.mxu0 0.0
  %91 = vmatpush1.msra.mxu0 0.0
  %92 = vmatprep.subr.mxu0 0.0
  %93 = vmatpush1.msra.mxu0 0.0
  %94 = vmatprep.subr.mxu0 0.0
  %95 = vmatpush1.msra.mxu0 0.0
  %96 = vmatprep.subr.mxu0 0.0
  %97 = vmatpush1.msra.mxu0 0.0
  %98 = vmatprep.subr.mxu0 0.0
  %99 = vmatpush1.msra.mxu0 0.0
  %100 = vmatprep.subr.mxu0 0.0
  %101 = vmatpush1.msra.mxu0 0.0
  %102 = vmatprep.subr.mxu0 0.0
  %103 = vmatpush1.msra.mxu0 0.0
  %104 = vmatprep.subr.mxu0 0.0
  %105 = vmatpush1.msra.mxu0 0.0
  %106 = vmatprep.subr.mxu0 0.0
  %107 = vmatpush1.msra.mxu0 0.0
  %108 = vmatprep.subr.mxu0 0.0
  %109 = vmatpush1.msra.mxu0 0.0
  %110 = vmatprep.subr.mxu0 0.0
  %111 = vmatpush1.msra.mxu0 0.0
  %112 = vmatprep.subr.mxu0 0.0
  %113 = vmatpush1.msra.mxu0 0.0
  %114 = vmatprep.subr.mxu0 0.0
  %115 = vmatpush1.msra.mxu0 0.0
  %116 = vmatprep.subr.mxu0 0.0
  %117 = vmatpush1.msra.mxu0 0.0
  %118 = vmatprep.subr.mxu0 0.0
  %119 = vmatpush1.msra.mxu0 0.0
  %120 = vmatprep.subr.mxu0 0.0
  %121 = vmatpush1.msra.mxu0 0.0
  %122 = vmatprep.mubr.f32.mxu0 0.0
  %123 = vmatmul.mubr.f32.gmra.mrb[0].mxu0 %v32
  %v124 = vpop.f32.mrb[0].mxu0
  %v125 = vadd.f32 %v56, %v124
  %v126 = vpop.f32.mrb[0].mxu0
  %127 = vmatprep.mubr.f32.mxu0 0.0
  %128 = vmatmul.mubr.f32.gmra.mrb[0].mxu0 %v33
  %v129 = vpop.f32.mrb[0].mxu0
  %v130 = vadd.f32 %v56, %v129
  %v131 = vpop.f32.mrb[0].mxu0
  %132 = vmatprep.mubr.f32.mxu0 0.0
  %133 = vmatmul.mubr.f32.gmra.mrb[0].mxu0 %v34
  %v134 = vpop.f32.mrb[0].mxu0
  %v135 = vadd.f32 %v56, %v134
  %v136 = vpop.f32.mrb[0].mxu0
  %137 = vdwg.mxu0
  %v138 = vld [vmem:[%s2] sm:$0xff]
  %v139 = vld [vmem:[%s2 + $0x8] sm:$0xff]
  %v140 = vld [vmem:[%s4] sm:$0xff]
  %v141 = vld [vmem:[%s4 + $0x8] sm:$0xff]
  %v142 = vld [vmem:[%s5] sm:$0xff]
  %v143 = vld [vmem:[%s5 + $0x8] sm:$0xff]
  %v144 = vld [vmem:[%s6] sm:$0x1]
  %vm145 = vcmask 130048
  %v147 = vsel %vm145, 0.0, 0
  %149 = vmatprep.subr.mxu0 0.0
  %150 = vmatpush1.msra.mxu0 %v138
  %151 = vmatprep.subr.mxu0 0.0
  %152 = vmatpush1.msra.mxu0 %v139
  %153 = vmatprep.subr.mxu0 0.0
  %154 = vmatpush1.msra.mxu0 0.0
  %155 = vmatprep.subr.mxu0 0.0
  %156 = vmatpush1.msra.mxu0 0.0
  %157 = vmatprep.subr.mxu0 0.0
  %158 = vmatpush1.msra.mxu0 0.0
  %159 = vmatprep.subr.mxu0 0.0
  %160 = vmatpush1.msra.mxu0 0.0
  %161 = vmatprep.subr.mxu0 0.0
  %162 = vmatpush1.msra.mxu0 0.0
  %163 = vmatprep.subr.mxu0 0.0
  %164 = vmatpush1.msra.mxu0 0.0
  %165 = vmatprep.subr.mxu0 0.0
  %166 = vmatpush1.msra.mxu0 0.0
  %167 = vmatprep.subr.mxu0 0.0
  %168 = vmatpush1.msra.mxu0 0.0
  %169 = vmatprep.subr.mxu0 0.0
  %170 = vmatpush1.msra.mxu0 0.0
  %171 = vmatprep.subr.mxu0 0.0
  %172 = vmatpush1.msra.mxu0 0.0
  %173 = vmatprep.subr.mxu0 0.0
  %174 = vmatpush1.msra.mxu0 0.0
  %175 = vmatprep.subr.mxu0 0.0
  %176 = vmatpush1.msra.mxu0 0.0
  %177 = vmatprep.subr.mxu0 0.0
  %178 = vmatpush1.msra.mxu0 0.0
  %179 = vmatprep.subr.mxu0 0.0
  %180 = vmatpush1.msra.mxu0 0.0
  %181 = vmatprep.subr.mxu0 0.0
  %182 = vmatpush1.msra.mxu0 0.0
  %183 = vmatprep.subr.mxu0 0.0
  %184 = vmatpush1.msra.mxu0 0.0
  %185 = vmatprep.subr.mxu0 0.0
  %186 = vmatpush1.msra.mxu0 0.0
  %187 = vmatprep.subr.mxu0 0.0
  %188 = vmatpush1.msra.mxu0 0.0
  %189 = vmatprep.subr.mxu0 0.0
  %190 = vmatpush1.msra.mxu0 0.0
  %191 = vmatprep.subr.mxu0 0.0
  %192 = vmatpush1.msra.mxu0 0.0
  %193 = vmatprep.subr.mxu0 0.0
  %194 = vmatpush1.msra.mxu0 0.0
  %195 = vmatprep.subr.mxu0 0.0
  %196 = vmatpush1.msra.mxu0 0.0
  %197 = vmatprep.subr.mxu0 0.0
  %198 = vmatpush1.msra.mxu0 0.0
  %199 = vmatprep.subr.mxu0 0.0
  %200 = vmatpush1.msra.mxu0 0.0
  %201 = vmatprep.subr.mxu0 0.0
  %202 = vmatpush1.msra.mxu0 0.0
  %203 = vmatprep.subr.mxu0 0.0
  %204 = vmatpush1.msra.mxu0 0.0
  %205 = vmatprep.subr.mxu0 0.0
  %206 = vmatpush1.msra.mxu0 0.0
  %207 = vmatprep.subr.mxu0 0.0
  %208 = vmatpush1.msra.mxu0 0.0
  %209 = vmatprep.subr.mxu0 0.0
  %210 = vmatpush1.msra.mxu0 0.0
  %211 = vmatprep.subr.mxu0 0.0
  %212 = vmatpush1.msra.mxu0 0.0
  %213 = vmatprep.mubr.f32.mxu0 0.0
  %214 = vmatmul.mubr.f32.gmra.mrb[0].mxu0 %v147
  %v215 = vpop.f32.mrb[0].mxu0
  %v216 = vadd.f32 0.0, %v215
  %v217 = vpop.f32.mrb[0].mxu0
  %218 = vdwg.mxu0
  %v219 = vadd.f32 %v125, %v216
  %v220 = vxor.u32 %v219, 2147483648
  %v221 = vmul.f32 %v220, 1.442695
  %v222 = vpow.pop %v221
  %v223 = vadd.f32 %v222, 1.0
  %v224 = vrcp.pop %v223
  %v225 = vmul.f32 1.0, %v224
  %v226 = vtanh.pop %v219
  %v227 = vmul.f32 %v225, 0.0
  %229 = vrot.lane.b32.xlu0 %v226, 96
  %v230 = vpop.permute.xlu0 %229
  %v232 = vmul.f32 %v225, %v230
  %234 = vrot.lane.b32.xlu0 %v232, 16
  %v235 = vpop.permute.xlu0 %234
  %v237 = vadd.f32 %v227, %v235
  %v238 = vtanh.pop %v237
  %240 = vrot.lane.b32.xlu0 %v238, 32
  %v241 = vpop.permute.xlu0 %240
  %v243 = vmul.f32 %v225, %v241
  %v245 = vlaneseq
  %v246 = vshrl.u32 %v245, 7
  %v247 = vsub.s32 0, %v246
  %v248 = vrot.slane %v144, %v247
  %251 = vrot.lane.b32.xlu0 %v243, 80
  %v252 = vpop.permute.xlu0 %251
  %v253 = vsel %vm145, %v252, 0
  %255 = vmatprep.subr.mxu0 0.0
  %256 = vmatpush1.msra.mxu0 %v140
  %257 = vmatprep.subr.mxu0 0.0
  %258 = vmatpush1.msra.mxu0 %v141
  %259 = vmatprep.subr.mxu0 0.0
  %260 = vmatpush1.msra.mxu0 0.0
  %261 = vmatprep.subr.mxu0 0.0
  %262 = vmatpush1.msra.mxu0 0.0
  %263 = vmatprep.subr.mxu0 0.0
  %264 = vmatpush1.msra.mxu0 0.0
  %265 = vmatprep.subr.mxu0 0.0
  %266 = vmatpush1.msra.mxu0 0.0
  %267 = vmatprep.subr.mxu0 0.0
  %268 = vmatpush1.msra.mxu0 0.0
  %269 = vmatprep.subr.mxu0 0.0
  %270 = vmatpush1.msra.mxu0 0.0
  %271 = vmatprep.subr.mxu0 0.0
  %272 = vmatpush1.msra.mxu0 0.0
  %273 = vmatprep.subr.mxu0 0.0
  %274 = vmatpush1.msra.mxu0 0.0
  %275 = vmatprep.subr.mxu0 0.0
  %276 = vmatpush1.msra.mxu0 0.0
  %277 = vmatprep.subr.mxu0 0.0
  %278 = vmatpush1.msra.mxu0 0.0
  %279 = vmatprep.subr.mxu0 0.0
  %280 = vmatpush1.msra.mxu0 0.0
  %281 = vmatprep.subr.mxu0 0.0
  %282 = vmatpush1.msra.mxu0 0.0
  %283 = vmatprep.subr.mxu0 0.0
  %284 = vmatpush1.msra.mxu0 0.0
  %285 = vmatprep.subr.mxu0 0.0
  %286 = vmatpush1.msra.mxu0 0.0
  %287 = vmatprep.subr.mxu0 0.0
  %288 = vmatpush1.msra.mxu0 0.0
  %289 = vmatprep.subr.mxu0 0.0
  %290 = vmatpush1.msra.mxu0 0.0
  %291 = vmatprep.subr.mxu0 0.0
  %292 = vmatpush1.msra.mxu0 0.0
  %293 = vmatprep.subr.mxu0 0.0
  %294 = vmatpush1.msra.mxu0 0.0
  %295 = vmatprep.subr.mxu0 0.0
  %296 = vmatpush1.msra.mxu0 0.0
  %297 = vmatprep.subr.mxu0 0.0
  %298 = vmatpush1.msra.mxu0 0.0
  %299 = vmatprep.subr.mxu0 0.0
  %300 = vmatpush1.msra.mxu0 0.0
  %301 = vmatprep.subr.mxu0 0.0
  %302 = vmatpush1.msra.mxu0 0.0
  %303 = vmatprep.subr.mxu0 0.0
  %304 = vmatpush1.msra.mxu0 0.0
  %305 = vmatprep.subr.mxu0 0.0
  %306 = vmatpush1.msra.mxu0 0.0
  %307 = vmatprep.subr.mxu0 0.0
  %308 = vmatpush1.msra.mxu0 0.0
  %309 = vmatprep.subr.mxu0 0.0
  %310 = vmatpush1.msra.mxu0 0.0
  %311 = vmatprep.subr.mxu0 0.0
  %312 = vmatpush1.msra.mxu0 0.0
  %313 = vmatprep.subr.mxu0 0.0
  %314 = vmatpush1.msra.mxu0 0.0
  %315 = vmatprep.subr.mxu0 0.0
  %316 = vmatpush1.msra.mxu0 0.0
  %317 = vmatprep.subr.mxu0 0.0
  %318 = vmatpush1.msra.mxu0 0.0
  %319 = vmatprep.mubr.f32.mxu0 0.0
  %320 = vmatmul.mubr.f32.gmra.mrb[0].mxu0 %v253
  %v321 = vpop.f32.mrb[0].mxu0
  %v322 = vadd.f32 %v248, %v321
  %v323 = vpop.f32.mrb[0].mxu0
  %324 = vdwg.mxu0
  %325 = vmatprep.subr.mxu0 0.0
  %326 = vmatpush1.msra.mxu0 %v142
  %327 = vmatprep.subr.mxu0 0.0
  %328 = vmatpush1.msra.mxu0 %v143
  %329 = vmatprep.subr.mxu0 0.0
  %330 = vmatpush1.msra.mxu0 0.0
  %331 = vmatprep.subr.mxu0 0.0
  %332 = vmatpush1.msra.mxu0 0.0
  %333 = vmatprep.subr.mxu0 0.0
  %334 = vmatpush1.msra.mxu0 0.0
  %335 = vmatprep.subr.mxu0 0.0
  %336 = vmatpush1.msra.mxu0 0.0
  %337 = vmatprep.subr.mxu0 0.0
  %338 = vmatpush1.msra.mxu0 0.0
  %339 = vmatprep.subr.mxu0 0.0
  %340 = vmatpush1.msra.mxu0 0.0
  %341 = vmatprep.subr.mxu0 0.0
  %342 = vmatpush1.msra.mxu0 0.0
  %343 = vmatprep.subr.mxu0 0.0
  %344 = vmatpush1.msra.mxu0 0.0
  %345 = vmatprep.subr.mxu0 0.0
  %346 = vmatpush1.msra.mxu0 0.0
  %347 = vmatprep.subr.mxu0 0.0
  %348 = vmatpush1.msra.mxu0 0.0
  %349 = vmatprep.subr.mxu0 0.0
  %350 = vmatpush1.msra.mxu0 0.0
  %351 = vmatprep.subr.mxu0 0.0
  %352 = vmatpush1.msra.mxu0 0.0
  %353 = vmatprep.subr.mxu0 0.0
  %354 = vmatpush1.msra.mxu0 0.0
  %355 = vmatprep.subr.mxu0 0.0
  %356 = vmatpush1.msra.mxu0 0.0
  %357 = vmatprep.subr.mxu0 0.0
  %358 = vmatpush1.msra.mxu0 0.0
  %359 = vmatprep.subr.mxu0 0.0
  %360 = vmatpush1.msra.mxu0 0.0
  %361 = vmatprep.subr.mxu0 0.0
  %362 = vmatpush1.msra.mxu0 0.0
  %363 = vmatprep.subr.mxu0 0.0
  %364 = vmatpush1.msra.mxu0 0.0
  %365 = vmatprep.subr.mxu0 0.0
  %366 = vmatpush1.msra.mxu0 0.0
  %367 = vmatprep.subr.mxu0 0.0
  %368 = vmatpush1.msra.mxu0 0.0
  %369 = vmatprep.subr.mxu0 0.0
  %370 = vmatpush1.msra.mxu0 0.0
  %371 = vmatprep.subr.mxu0 0.0
  %372 = vmatpush1.msra.mxu0 0.0
  %373 = vmatprep.subr.mxu0 0.0
  %374 = vmatpush1.msra.mxu0 0.0
  %375 = vmatprep.subr.mxu0 0.0
  %376 = vmatpush1.msra.mxu0 0.0
  %377 = vmatprep.subr.mxu0 0.0
  %378 = vmatpush1.msra.mxu0 0.0
  %379 = vmatprep.subr.mxu0 0.0
  %380 = vmatpush1.msra.mxu0 0.0
  %381 = vmatprep.subr.mxu0 0.0
  %382 = vmatpush1.msra.mxu0 0.0
  %383 = vmatprep.subr.mxu0 0.0
  %384 = vmatpush1.msra.mxu0 0.0
  %385 = vmatprep.subr.mxu0 0.0
  %386 = vmatpush1.msra.mxu0 0.0
  %387 = vmatprep.subr.mxu0 0.0
  %388 = vmatpush1.msra.mxu0 0.0
  %389 = vmatprep.mubr.f32.mxu0 0.0
  %390 = vmatmul.mubr.f32.gmra.mrb[0].mxu0 %v147
  %v391 = vpop.f32.mrb[0].mxu0
  %v392 = vadd.f32 0.0, %v391
  %v393 = vpop.f32.mrb[0].mxu0
  %394 = vdwg.mxu0
  %v395 = vadd.f32 %v322, %v392
  %v396 = vxor.u32 %v395, 2147483648
  %v397 = vmul.f32 %v396, 1.442695
  %v398 = vpow.pop %v397
  %v399 = vadd.f32 %v398, 1.0
  %v400 = vrcp.pop %v399
  %v401 = vmul.f32 1.0, %v400
  %v402 = vtanh.pop %v395
  %v403 = vmul.f32 %v401, 0.0
  %405 = vrot.lane.b32.xlu0 %v402, 96
  %v406 = vpop.permute.xlu0 %405
  %v408 = vmul.f32 %v401, %v406
  %410 = vrot.lane.b32.xlu0 %v408, 16
  %v411 = vpop.permute.xlu0 %410
  %v413 = vadd.f32 %v403, %v411
  %v414 = vtanh.pop %v413
  %416 = vrot.lane.b32.xlu0 %v414, 32
  %v417 = vpop.permute.xlu0 %416
  %v419 = vmul.f32 %v401, %v417
  %421 = vrot.lane.b32.xlu0 %v419, 80
  %v422 = vpop.permute.xlu0 %421
  %vm424 = vcmask 123904
  %425 = vst.msk [vmem:[#allocation2] sm:$0x3] %vm424, %v422
  %426 = vmatprep.subr.mxu0 0.0
  %427 = vmatpush1.msra.mxu0 %v138
  %428 = vmatprep.subr.mxu0 0.0
  %429 = vmatpush1.msra.mxu0 %v139
  %430 = vmatprep.subr.mxu0 0.0
  %431 = vmatpush1.msra.mxu0 0.0
  %432 = vmatprep.subr.mxu0 0.0
  %433 = vmatpush1.msra.mxu0 0.0
  %434 = vmatprep.subr.mxu0 0.0
  %435 = vmatpush1.msra.mxu0 0.0
  %436 = vmatprep.subr.mxu0 0.0
  %437 = vmatpush1.msra.mxu0 0.0
  %438 = vmatprep.subr.mxu0 0.0
  %439 = vmatpush1.msra.mxu0 0.0
  %440 = vmatprep.subr.mxu0 0.0
  %441 = vmatpush1.msra.mxu0 0.0
  %442 = vmatprep.subr.mxu0 0.0
  %443 = vmatpush1.msra.mxu0 0.0
  %444 = vmatprep.subr.mxu0 0.0
  %445 = vmatpush1.msra.mxu0 0.0
  %446 = vmatprep.subr.mxu0 0.0
  %447 = vmatpush1.msra.mxu0 0.0
  %448 = vmatprep.subr.mxu0 0.0
  %449 = vmatpush1.msra.mxu0 0.0
  %450 = vmatprep.subr.mxu0 0.0
  %451 = vmatpush1.msra.mxu0 0.0
  %452 = vmatprep.subr.mxu0 0.0
  %453 = vmatpush1.msra.mxu0 0.0
  %454 = vmatprep.subr.mxu0 0.0
  %455 = vmatpush1.msra.mxu0 0.0
  %456 = vmatprep.subr.mxu0 0.0
  %457 = vmatpush1.msra.mxu0 0.0
  %458 = vmatprep.subr.mxu0 0.0
  %459 = vmatpush1.msra.mxu0 0.0
  %460 = vmatprep.subr.mxu0 0.0
  %461 = vmatpush1.msra.mxu0 0.0
  %462 = vmatprep.subr.mxu0 0.0
  %463 = vmatpush1.msra.mxu0 0.0
  %464 = vmatprep.subr.mxu0 0.0
  %465 = vmatpush1.msra.mxu0 0.0
  %466 = vmatprep.subr.mxu0 0.0
  %467 = vmatpush1.msra.mxu0 0.0
  %468 = vmatprep.subr.mxu0 0.0
  %469 = vmatpush1.msra.mxu0 0.0
  %470 = vmatprep.subr.mxu0 0.0
  %471 = vmatpush1.msra.mxu0 0.0
  %472 = vmatprep.subr.mxu0 0.0
  %473 = vmatpush1.msra.mxu0 0.0
  %474 = vmatprep.subr.mxu0 0.0
  %475 = vmatpush1.msra.mxu0 0.0
  %476 = vmatprep.subr.mxu0 0.0
  %477 = vmatpush1.msra.mxu0 0.0
  %478 = vmatprep.subr.mxu0 0.0
  %479 = vmatpush1.msra.mxu0 0.0
  %480 = vmatprep.subr.mxu0 0.0
  %481 = vmatpush1.msra.mxu0 0.0
  %482 = vmatprep.subr.mxu0 0.0
  %483 = vmatpush1.msra.mxu0 0.0
  %484 = vmatprep.subr.mxu0 0.0
  %485 = vmatpush1.msra.mxu0 0.0
  %486 = vmatprep.subr.mxu0 0.0
  %487 = vmatpush1.msra.mxu0 0.0
  %488 = vmatprep.subr.mxu0 0.0
  %489 = vmatpush1.msra.mxu0 0.0
  %490 = vmatprep.mubr.f32.mxu0 0.0
  %491 = vmatmul.mubr.f32.gmra.mrb[0].mxu0 %v253
  %v492 = vpop.f32.mrb[0].mxu0
  %v493 = vadd.f32 0.0, %v492
  %v494 = vpop.f32.mrb[0].mxu0
  %495 = vdwg.mxu0
  %v497 = vrot.slane %v493, 6
  %v499 = vadd.f32 %v125, %v497
  %v500 = vxor.u32 %v499, 2147483648
  %v501 = vmul.f32 %v500, 1.442695
  %v502 = vpow.pop %v501
  %v503 = vadd.f32 %v502, 1.0
  %v504 = vrcp.pop %v503
  %v505 = vmul.f32 1.0, %v504
  %v506 = vtanh.pop %v499
  %v508 = vrot.slane %v237, 6
  %v510 = vmul.f32 %v505, %v508
  %512 = vrot.lane.b32.xlu0 %v506, 96
  %v513 = vpop.permute.xlu0 %512
  %v515 = vmul.f32 %v505, %v513
  %517 = vrot.lane.b32.xlu0 %v515, 16
  %v518 = vpop.permute.xlu0 %517
  %v520 = vadd.f32 %v510, %v518
  %v521 = vtanh.pop %v520
  %523 = vrot.lane.b32.xlu0 %v521, 32
  %v524 = vpop.permute.xlu0 %523
  %v526 = vmul.f32 %v505, %v524
  %v528 = vrot.slane %v526, 2
  %529 = vrot.lane.b32.xlu0 %v528, 80
  %v530 = vpop.permute.xlu0 %529
  %v531 = vsel %vm145, %v530, 0
  %533 = vmatprep.subr.mxu0 0.0
  %534 = vmatpush1.msra.mxu0 %v140
  %535 = vmatprep.subr.mxu0 0.0
  %536 = vmatpush1.msra.mxu0 %v141
  %537 = vmatprep.subr.mxu0 0.0
  %538 = vmatpush1.msra.mxu0 0.0
  %539 = vmatprep.subr.mxu0 0.0
  %540 = vmatpush1.msra.mxu0 0.0
  %541 = vmatprep.subr.mxu0 0.0
  %542 = vmatpush1.msra.mxu0 0.0
  %543 = vmatprep.subr.mxu0 0.0
  %544 = vmatpush1.msra.mxu0 0.0
  %545 = vmatprep.subr.mxu0 0.0
  %546 = vmatpush1.msra.mxu0 0.0
  %547 = vmatprep.subr.mxu0 0.0
  %548 = vmatpush1.msra.mxu0 0.0
  %549 = vmatprep.subr.mxu0 0.0
  %550 = vmatpush1.msra.mxu0 0.0
  %551 = vmatprep.subr.mxu0 0.0
  %552 = vmatpush1.msra.mxu0 0.0
  %553 = vmatprep.subr.mxu0 0.0
  %554 = vmatpush1.msra.mxu0 0.0
  %555 = vmatprep.subr.mxu0 0.0
  %556 = vmatpush1.msra.mxu0 0.0
  %557 = vmatprep.subr.mxu0 0.0
  %558 = vmatpush1.msra.mxu0 0.0
  %559 = vmatprep.subr.mxu0 0.0
  %560 = vmatpush1.msra.mxu0 0.0
  %561 = vmatprep.subr.mxu0 0.0
  %562 = vmatpush1.msra.mxu0 0.0
  %563 = vmatprep.subr.mxu0 0.0
  %564 = vmatpush1.msra.mxu0 0.0
  %565 = vmatprep.subr.mxu0 0.0
  %566 = vmatpush1.msra.mxu0 0.0
  %567 = vmatprep.subr.mxu0 0.0
  %568 = vmatpush1.msra.mxu0 0.0
  %569 = vmatprep.subr.mxu0 0.0
  %570 = vmatpush1.msra.mxu0 0.0
  %571 = vmatprep.subr.mxu0 0.0
  %572 = vmatpush1.msra.mxu0 0.0
  %573 = vmatprep.subr.mxu0 0.0
  %574 = vmatpush1.msra.mxu0 0.0
  %575 = vmatprep.subr.mxu0 0.0
  %576 = vmatpush1.msra.mxu0 0.0
  %577 = vmatprep.subr.mxu0 0.0
  %578 = vmatpush1.msra.mxu0 0.0
  %579 = vmatprep.subr.mxu0 0.0
  %580 = vmatpush1.msra.mxu0 0.0
  %581 = vmatprep.subr.mxu0 0.0
  %582 = vmatpush1.msra.mxu0 0.0
  %583 = vmatprep.subr.mxu0 0.0
  %584 = vmatpush1.msra.mxu0 0.0
  %585 = vmatprep.subr.mxu0 0.0
  %586 = vmatpush1.msra.mxu0 0.0
  %587 = vmatprep.subr.mxu0 0.0
  %588 = vmatpush1.msra.mxu0 0.0
  %589 = vmatprep.subr.mxu0 0.0
  %590 = vmatpush1.msra.mxu0 0.0
  %591 = vmatprep.subr.mxu0 0.0
  %592 = vmatpush1.msra.mxu0 0.0
  %593 = vmatprep.subr.mxu0 0.0
  %594 = vmatpush1.msra.mxu0 0.0
  %595 = vmatprep.subr.mxu0 0.0
  %596 = vmatpush1.msra.mxu0 0.0
  %597 = vmatprep.mubr.f32.mxu0 0.0
  %598 = vmatmul.mubr.f32.gmra.mrb[0].mxu0 %v531
  %v599 = vpop.f32.mrb[0].mxu0
  %v600 = vadd.f32 %v248, %v599
  %v601 = vpop.f32.mrb[0].mxu0
  %602 = vdwg.mxu0
  %v603 = vsel %vm145, %v422, 0
  %605 = vmatprep.subr.mxu0 0.0
  %606 = vmatpush1.msra.mxu0 %v142
  %607 = vmatprep.subr.mxu0 0.0
  %608 = vmatpush1.msra.mxu0 %v143
  %609 = vmatprep.subr.mxu0 0.0
  %610 = vmatpush1.msra.mxu0 0.0
  %611 = vmatprep.subr.mxu0 0.0
  %612 = vmatpush1.msra.mxu0 0.0
  %613 = vmatprep.subr.mxu0 0.0
  %614 = vmatpush1.msra.mxu0 0.0
  %615 = vmatprep.subr.mxu0 0.0
  %616 = vmatpush1.msra.mxu0 0.0
  %617 = vmatprep.subr.mxu0 0.0
  %618 = vmatpush1.msra.mxu0 0.0
  %619 = vmatprep.subr.mxu0 0.0
  %620 = vmatpush1.msra.mxu0 0.0
  %621 = vmatprep.subr.mxu0 0.0
  %622 = vmatpush1.msra.mxu0 0.0
  %623 = vmatprep.subr.mxu0 0.0
  %624 = vmatpush1.msra.mxu0 0.0
  %625 = vmatprep.subr.mxu0 0.0
  %626 = vmatpush1.msra.mxu0 0.0
  %627 = vmatprep.subr.mxu0 0.0
  %628 = vmatpush1.msra.mxu0 0.0
  %629 = vmatprep.subr.mxu0 0.0
  %630 = vmatpush1.msra.mxu0 0.0
  %631 = vmatprep.subr.mxu0 0.0
  %632 = vmatpush1.msra.mxu0 0.0
  %633 = vmatprep.subr.mxu0 0.0
  %634 = vmatpush1.msra.mxu0 0.0
  %635 = vmatprep.subr.mxu0 0.0
  %636 = vmatpush1.msra.mxu0 0.0
  %637 = vmatprep.subr.mxu0 0.0
  %638 = vmatpush1.msra.mxu0 0.0
  %639 = vmatprep.subr.mxu0 0.0
  %640 = vmatpush1.msra.mxu0 0.0
  %641 = vmatprep.subr.mxu0 0.0
  %642 = vmatpush1.msra.mxu0 0.0
  %643 = vmatprep.subr.mxu0 0.0
  %644 = vmatpush1.msra.mxu0 0.0
  %645 = vmatprep.subr.mxu0 0.0
  %646 = vmatpush1.msra.mxu0 0.0
  %647 = vmatprep.subr.mxu0 0.0
  %648 = vmatpush1.msra.mxu0 0.0
  %649 = vmatprep.subr.mxu0 0.0
  %650 = vmatpush1.msra.mxu0 0.0
  %651 = vmatprep.subr.mxu0 0.0
  %652 = vmatpush1.msra.mxu0 0.0
  %653 = vmatprep.subr.mxu0 0.0
  %654 = vmatpush1.msra.mxu0 0.0
  %655 = vmatprep.subr.mxu0 0.0
  %656 = vmatpush1.msra.mxu0 0.0
  %657 = vmatprep.subr.mxu0 0.0
  %658 = vmatpush1.msra.mxu0 0.0
  %659 = vmatprep.subr.mxu0 0.0
  %660 = vmatpush1.msra.mxu0 0.0
  %661 = vmatprep.subr.mxu0 0.0
  %662 = vmatpush1.msra.mxu0 0.0
  %663 = vmatprep.subr.mxu0 0.0
  %664 = vmatpush1.msra.mxu0 0.0
  %665 = vmatprep.subr.mxu0 0.0
  %666 = vmatpush1.msra.mxu0 0.0
  %667 = vmatprep.subr.mxu0 0.0
  %668 = vmatpush1.msra.mxu0 0.0
  %669 = vmatprep.mubr.f32.mxu0 0.0
  %670 = vmatmul.mubr.f32.gmra.mrb[0].mxu0 %v603
  %v671 = vpop.f32.mrb[0].mxu0
  %v672 = vadd.f32 0.0, %v671
  %v673 = vpop.f32.mrb[0].mxu0
  %674 = vdwg.mxu0
  %v675 = vadd.f32 %v600, %v672
  %v676 = vxor.u32 %v675, 2147483648
  %v677 = vmul.f32 %v676, 1.442695
  %v678 = vpow.pop %v677
  %v679 = vadd.f32 %v678, 1.0
  %v680 = vrcp.pop %v679
  %v681 = vmul.f32 1.0, %v680
  %v682 = vtanh.pop %v675
  %v683 = vmul.f32 %v681, %v413
  %685 = vrot.lane.b32.xlu0 %v682, 96
  %v686 = vpop.permute.xlu0 %685
  %v688 = vmul.f32 %v681, %v686
  %690 = vrot.lane.b32.xlu0 %v688, 16
  %v691 = vpop.permute.xlu0 %690
  %v693 = vadd.f32 %v683, %v691
  %v694 = vtanh.pop %v693
  %696 = vrot.lane.b32.xlu0 %v694, 32
  %v697 = vpop.permute.xlu0 %696
  %v699 = vmul.f32 %v681, %v697
  %701 = vrot.lane.b32.xlu0 %v699, 80
  %v702 = vpop.permute.xlu0 %701
  %704 = vst.msk [vmem:[#allocation2 + $0x2] sm:$0x3] %vm424, %v702
  %705 = vmatprep.subr.mxu0 0.0
  %706 = vmatpush1.msra.mxu0 %v138
  %707 = vmatprep.subr.mxu0 0.0
  %708 = vmatpush1.msra.mxu0 %v139
  %709 = vmatprep.subr.mxu0 0.0
  %710 = vmatpush1.msra.mxu0 0.0
  %711 = vmatprep.subr.mxu0 0.0
  %712 = vmatpush1.msra.mxu0 0.0
  %713 = vmatprep.subr.mxu0 0.0
  %714 = vmatpush1.msra.mxu0 0.0
  %715 = vmatprep.subr.mxu0 0.0
  %716 = vmatpush1.msra.mxu0 0.0
  %717 = vmatprep.subr.mxu0 0.0
  %718 = vmatpush1.msra.mxu0 0.0
  %719 = vmatprep.subr.mxu0 0.0
  %720 = vmatpush1.msra.mxu0 0.0
  %721 = vmatprep.subr.mxu0 0.0
  %722 = vmatpush1.msra.mxu0 0.0
  %723 = vmatprep.subr.mxu0 0.0
  %724 = vmatpush1.msra.mxu0 0.0
  %725 = vmatprep.subr.mxu0 0.0
  %726 = vmatpush1.msra.mxu0 0.0
  %727 = vmatprep.subr.mxu0 0.0
  %728 = vmatpush1.msra.mxu0 0.0
  %729 = vmatprep.subr.mxu0 0.0
  %730 = vmatpush1.msra.mxu0 0.0
  %731 = vmatprep.subr.mxu0 0.0
  %732 = vmatpush1.msra.mxu0 0.0
  %733 = vmatprep.subr.mxu0 0.0
  %734 = vmatpush1.msra.mxu0 0.0
  %735 = vmatprep.subr.mxu0 0.0
  %736 = vmatpush1.msra.mxu0 0.0
  %737 = vmatprep.subr.mxu0 0.0
  %738 = vmatpush1.msra.mxu0 0.0
  %739 = vmatprep.subr.mxu0 0.0
  %740 = vmatpush1.msra.mxu0 0.0
  %741 = vmatprep.subr.mxu0 0.0
  %742 = vmatpush1.msra.mxu0 0.0
  %743 = vmatprep.subr.mxu0 0.0
  %744 = vmatpush1.msra.mxu0 0.0
  %745 = vmatprep.subr.mxu0 0.0
  %746 = vmatpush1.msra.mxu0 0.0
  %747 = vmatprep.subr.mxu0 0.0
  %748 = vmatpush1.msra.mxu0 0.0
  %749 = vmatprep.subr.mxu0 0.0
  %750 = vmatpush1.msra.mxu0 0.0
  %751 = vmatprep.subr.mxu0 0.0
  %752 = vmatpush1.msra.mxu0 0.0
  %753 = vmatprep.subr.mxu0 0.0
  %754 = vmatpush1.msra.mxu0 0.0
  %755 = vmatprep.subr.mxu0 0.0
  %756 = vmatpush1.msra.mxu0 0.0
  %757 = vmatprep.subr.mxu0 0.0
  %758 = vmatpush1.msra.mxu0 0.0
  %759 = vmatprep.subr.mxu0 0.0
  %760 = vmatpush1.msra.mxu0 0.0
  %761 = vmatprep.subr.mxu0 0.0
  %762 = vmatpush1.msra.mxu0 0.0
  %763 = vmatprep.subr.mxu0 0.0
  %764 = vmatpush1.msra.mxu0 0.0
  %765 = vmatprep.subr.mxu0 0.0
  %766 = vmatpush1.msra.mxu0 0.0
  %767 = vmatprep.subr.mxu0 0.0
  %768 = vmatpush1.msra.mxu0 0.0
  %769 = vmatprep.mubr.f32.mxu0 0.0
  %770 = vmatmul.mubr.f32.gmra.mrb[0].mxu0 %v531
  %v771 = vpop.f32.mrb[0].mxu0
  %v772 = vadd.f32 0.0, %v771
  %v773 = vpop.f32.mrb[0].mxu0
  %774 = vdwg.mxu0
  %v776 = vrot.slane %v772, 4
  %v778 = vadd.f32 %v125, %v776
  %v779 = vxor.u32 %v778, 2147483648
  %v780 = vmul.f32 %v779, 1.442695
  %v781 = vpow.pop %v780
  %v782 = vadd.f32 %v781, 1.0
  %v783 = vrcp.pop %v782
  %v784 = vmul.f32 1.0, %v783
  %v785 = vtanh.pop %v778
  %v787 = vrot.slane %v520, 6
  %v789 = vmul.f32 %v784, %v787
  %791 = vrot.lane.b32.xlu0 %v785, 96
  %v792 = vpop.permute.xlu0 %791
  %v794 = vmul.f32 %v784, %v792
  %796 = vrot.lane.b32.xlu0 %v794, 16
  %v797 = vpop.permute.xlu0 %796
  %v799 = vadd.f32 %v789, %v797
  %v800 = vtanh.pop %v799
  %802 = vrot.lane.b32.xlu0 %v800, 32
  %v803 = vpop.permute.xlu0 %802
  %v805 = vmul.f32 %v784, %v803
  %v807 = vrot.slane %v805, 4
  %808 = vrot.lane.b32.xlu0 %v807, 80
  %v809 = vpop.permute.xlu0 %808
  %v810 = vsel %vm145, %v809, 0
  %812 = vmatprep.subr.mxu0 0.0
  %813 = vmatpush1.msra.mxu0 %v140
  %814 = vmatprep.subr.mxu0 0.0
  %815 = vmatpush1.msra.mxu0 %v141
  %816 = vmatprep.subr.mxu0 0.0
  %817 = vmatpush1.msra.mxu0 0.0
  %818 = vmatprep.subr.mxu0 0.0
  %819 = vmatpush1.msra.mxu0 0.0
  %820 = vmatprep.subr.mxu0 0.0
  %821 = vmatpush1.msra.mxu0 0.0
  %822 = vmatprep.subr.mxu0 0.0
  %823 = vmatpush1.msra.mxu0 0.0
  %824 = vmatprep.subr.mxu0 0.0
  %825 = vmatpush1.msra.mxu0 0.0
  %826 = vmatprep.subr.mxu0 0.0
  %827 = vmatpush1.msra.mxu0 0.0
  %828 = vmatprep.subr.mxu0 0.0
  %829 = vmatpush1.msra.mxu0 0.0
  %830 = vmatprep.subr.mxu0 0.0
  %831 = vmatpush1.msra.mxu0 0.0
  %832 = vmatprep.subr.mxu0 0.0
  %833 = vmatpush1.msra.mxu0 0.0
  %834 = vmatprep.subr.mxu0 0.0
  %835 = vmatpush1.msra.mxu0 0.0
  %836 = vmatprep.subr.mxu0 0.0
  %837 = vmatpush1.msra.mxu0 0.0
  %838 = vmatprep.subr.mxu0 0.0
  %839 = vmatpush1.msra.mxu0 0.0
  %840 = vmatprep.subr.mxu0 0.0
  %841 = vmatpush1.msra.mxu0 0.0
  %842 = vmatprep.subr.mxu0 0.0
  %843 = vmatpush1.msra.mxu0 0.0
  %844 = vmatprep.subr.mxu0 0.0
  %845 = vmatpush1.msra.mxu0 0.0
  %846 = vmatprep.subr.mxu0 0.0
  %847 = vmatpush1.msra.mxu0 0.0
  %848 = vmatprep.subr.mxu0 0.0
  %849 = vmatpush1.msra.mxu0 0.0
  %850 = vmatprep.subr.mxu0 0.0
  %851 = vmatpush1.msra.mxu0 0.0
  %852 = vmatprep.subr.mxu0 0.0
  %853 = vmatpush1.msra.mxu0 0.0
  %854 = vmatprep.subr.mxu0 0.0
  %855 = vmatpush1.msra.mxu0 0.0
  %856 = vmatprep.subr.mxu0 0.0
  %857 = vmatpush1.msra.mxu0 0.0
  %858 = vmatprep.subr.mxu0 0.0
  %859 = vmatpush1.msra.mxu0 0.0
  %860 = vmatprep.subr.mxu0 0.0
  %861 = vmatpush1.msra.mxu0 0.0
  %862 = vmatprep.subr.mxu0 0.0
  %863 = vmatpush1.msra.mxu0 0.0
  %864 = vmatprep.subr.mxu0 0.0
  %865 = vmatpush1.msra.mxu0 0.0
  %866 = vmatprep.subr.mxu0 0.0
  %867 = vmatpush1.msra.mxu0 0.0
  %868 = vmatprep.subr.mxu0 0.0
  %869 = vmatpush1.msra.mxu0 0.0
  %870 = vmatprep.subr.mxu0 0.0
  %871 = vmatpush1.msra.mxu0 0.0
  %872 = vmatprep.subr.mxu0 0.0
  %873 = vmatpush1.msra.mxu0 0.0
  %874 = vmatprep.subr.mxu0 0.0
  %875 = vmatpush1.msra.mxu0 0.0
  %876 = vmatprep.mubr.f32.mxu0 0.0
  %877 = vmatmul.mubr.f32.gmra.mrb[0].mxu0 %v810
  %v878 = vpop.f32.mrb[0].mxu0
  %v879 = vadd.f32 %v248, %v878
  %v880 = vpop.f32.mrb[0].mxu0
  %881 = vdwg.mxu0
  %v882 = vsel %vm145, %v702, 0
  %884 = vmatprep.subr.mxu0 0.0
  %885 = vmatpush1.msra.mxu0 %v142
  %886 = vmatprep.subr.mxu0 0.0
  %887 = vmatpush1.msra.mxu0 %v143
  %888 = vmatprep.subr.mxu0 0.0
  %889 = vmatpush1.msra.mxu0 0.0
  %890 = vmatprep.subr.mxu0 0.0
  %891 = vmatpush1.msra.mxu0 0.0
  %892 = vmatprep.subr.mxu0 0.0
  %893 = vmatpush1.msra.mxu0 0.0
  %894 = vmatprep.subr.mxu0 0.0
  %895 = vmatpush1.msra.mxu0 0.0
  %896 = vmatprep.subr.mxu0 0.0
  %897 = vmatpush1.msra.mxu0 0.0
  %898 = vmatprep.subr.mxu0 0.0
  %899 = vmatpush1.msra.mxu0 0.0
  %900 = vmatprep.subr.mxu0 0.0
  %901 = vmatpush1.msra.mxu0 0.0
  %902 = vmatprep.subr.mxu0 0.0
  %903 = vmatpush1.msra.mxu0 0.0
  %904 = vmatprep.subr.mxu0 0.0
  %905 = vmatpush1.msra.mxu0 0.0
  %906 = vmatprep.subr.mxu0 0.0
  %907 = vmatpush1.msra.mxu0 0.0
  %908 = vmatprep.subr.mxu0 0.0
  %909 = vmatpush1.msra.mxu0 0.0
  %910 = vmatprep.subr.mxu0 0.0
  %911 = vmatpush1.msra.mxu0 0.0
  %912 = vmatprep.subr.mxu0 0.0
  %913 = vmatpush1.msra.mxu0 0.0
  %914 = vmatprep.subr.mxu0 0.0
  %915 = vmatpush1.msra.mxu0 0.0
  %916 = vmatprep.subr.mxu0 0.0
  %917 = vmatpush1.msra.mxu0 0.0
  %918 = vmatprep.subr.mxu0 0.0
  %919 = vmatpush1.msra.mxu0 0.0
  %920 = vmatprep.subr.mxu0 0.0
  %921 = vmatpush1.msra.mxu0 0.0
  %922 = vmatprep.subr.mxu0 0.0
  %923 = vmatpush1.msra.mxu0 0.0
  %924 = vmatprep.subr.mxu0 0.0
  %925 = vmatpush1.msra.mxu0 0.0
  %926 = vmatprep.subr.mxu0 0.0
  %927 = vmatpush1.msra.mxu0 0.0
  %928 = vmatprep.subr.mxu0 0.0
  %929 = vmatpush1.msra.mxu0 0.0
  %930 = vmatprep.subr.mxu0 0.0
  %931 = vmatpush1.msra.mxu0 0.0
  %932 = vmatprep.subr.mxu0 0.0
  %933 = vmatpush1.msra.mxu0 0.0
  %934 = vmatprep.subr.mxu0 0.0
  %935 = vmatpush1.msra.mxu0 0.0
  %936 = vmatprep.subr.mxu0 0.0
  %937 = vmatpush1.msra.mxu0 0.0
  %938 = vmatprep.subr.mxu0 0.0
  %939 = vmatpush1.msra.mxu0 0.0
  %940 = vmatprep.subr.mxu0 0.0
  %941 = vmatpush1.msra.mxu0 0.0
  %942 = vmatprep.subr.mxu0 0.0
  %943 = vmatpush1.msra.mxu0 0.0
  %944 = vmatprep.subr.mxu0 0.0
  %945 = vmatpush1.msra.mxu0 0.0
  %946 = vmatprep.subr.mxu0 0.0
  %947 = vmatpush1.msra.mxu0 0.0
  %948 = vmatprep.mubr.f32.mxu0 0.0
  %949 = vmatmul.mubr.f32.gmra.mrb[0].mxu0 %v882
  %v950 = vpop.f32.mrb[0].mxu0
  %v951 = vadd.f32 0.0, %v950
  %v952 = vpop.f32.mrb[0].mxu0
  %953 = vdwg.mxu0
  %v954 = vadd.f32 %v879, %v951
  %v955 = vxor.u32 %v954, 2147483648
  %v956 = vmul.f32 %v955, 1.442695
  %v957 = vpow.pop %v956
  %v958 = vadd.f32 %v957, 1.0
  %v959 = vrcp.pop %v958
  %v960 = vmul.f32 1.0, %v959
  %v961 = vtanh.pop %v954
  %v962 = vmul.f32 %v960, %v693
  %964 = vrot.lane.b32.xlu0 %v961, 96
  %v965 = vpop.permute.xlu0 %964
  %v967 = vmul.f32 %v960, %v965
  %969 = vrot.lane.b32.xlu0 %v967, 16
  %v970 = vpop.permute.xlu0 %969
  %v972 = vadd.f32 %v962, %v970
  %v973 = vtanh.pop %v972
  %975 = vrot.lane.b32.xlu0 %v973, 32
  %v976 = vpop.permute.xlu0 %975
  %v978 = vmul.f32 %v960, %v976
  %980 = vrot.lane.b32.xlu0 %v978, 80
  %v981 = vpop.permute.xlu0 %980
  %983 = vst.msk [vmem:[#allocation2 + $0x4] sm:$0x3] %vm424, %v981
  %984 = vmatprep.subr.mxu0 0.0
  %985 = vmatpush1.msra.mxu0 %v138
  %986 = vmatprep.subr.mxu0 0.0
  %987 = vmatpush1.msra.mxu0 %v139
  %988 = vmatprep.subr.mxu0 0.0
  %989 = vmatpush1.msra.mxu0 0.0
  %990 = vmatprep.subr.mxu0 0.0
  %991 = vmatpush1.msra.mxu0 0.0
  %992 = vmatprep.subr.mxu0 0.0
  %993 = vmatpush1.msra.mxu0 0.0
  %994 = vmatprep.subr.mxu0 0.0
  %995 = vmatpush1.msra.mxu0 0.0
  %996 = vmatprep.subr.mxu0 0.0
  %997 = vmatpush1.msra.mxu0 0.0
  %998 = vmatprep.subr.mxu0 0.0
  %999 = vmatpush1.msra.mxu0 0.0
  %1000 = vmatprep.subr.mxu0 0.0
  %1001 = vmatpush1.msra.mxu0 0.0
  %1002 = vmatprep.subr.mxu0 0.0
  %1003 = vmatpush1.msra.mxu0 0.0
  %1004 = vmatprep.subr.mxu0 0.0
  %1005 = vmatpush1.msra.mxu0 0.0
  %1006 = vmatprep.subr.mxu0 0.0
  %1007 = vmatpush1.msra.mxu0 0.0
  %1008 = vmatprep.subr.mxu0 0.0
  %1009 = vmatpush1.msra.mxu0 0.0
  %1010 = vmatprep.subr.mxu0 0.0
  %1011 = vmatpush1.msra.mxu0 0.0
  %1012 = vmatprep.subr.mxu0 0.0
  %1013 = vmatpush1.msra.mxu0 0.0
  %1014 = vmatprep.subr.mxu0 0.0
  %1015 = vmatpush1.msra.mxu0 0.0
  %1016 = vmatprep.subr.mxu0 0.0
  %1017 = vmatpush1.msra.mxu0 0.0
  %1018 = vmatprep.subr.mxu0 0.0
  %1019 = vmatpush1.msra.mxu0 0.0
  %1020 = vmatprep.subr.mxu0 0.0
  %1021 = vmatpush1.msra.mxu0 0.0
  %1022 = vmatprep.subr.mxu0 0.0
  %1023 = vmatpush1.msra.mxu0 0.0
  %1024 = vmatprep.subr.mxu0 0.0
  %1025 = vmatpush1.msra.mxu0 0.0
  %1026 = vmatprep.subr.mxu0 0.0
  %1027 = vmatpush1.msra.mxu0 0.0
  %1028 = vmatprep.subr.mxu0 0.0
  %1029 = vmatpush1.msra.mxu0 0.0
  %1030 = vmatprep.subr.mxu0 0.0
  %1031 = vmatpush1.msra.mxu0 0.0
  %1032 = vmatprep.subr.mxu0 0.0
  %1033 = vmatpush1.msra.mxu0 0.0
  %1034 = vmatprep.subr.mxu0 0.0
  %1035 = vmatpush1.msra.mxu0 0.0
  %1036 = vmatprep.subr.mxu0 0.0
  %1037 = vmatpush1.msra.mxu0 0.0
  %1038 = vmatprep.subr.mxu0 0.0
  %1039 = vmatpush1.msra.mxu0 0.0
  %1040 = vmatprep.subr.mxu0 0.0
  %1041 = vmatpush1.msra.mxu0 0.0
  %1042 = vmatprep.subr.mxu0 0.0
  %1043 = vmatpush1.msra.mxu0 0.0
  %1044 = vmatprep.subr.mxu0 0.0
  %1045 = vmatpush1.msra.mxu0 0.0
  %1046 = vmatprep.subr.mxu0 0.0
  %1047 = vmatpush1.msra.mxu0 0.0
  %1048 = vmatprep.mubr.f32.mxu0 0.0
  %1049 = vmatmul.mubr.f32.gmra.mrb[0].mxu0 %v810
  %v1050 = vpop.f32.mrb[0].mxu0
  %v1051 = vadd.f32 0.0, %v1050
  %v1052 = vpop.f32.mrb[0].mxu0
  %1053 = vdwg.mxu0
  %v1055 = vrot.slane %v1051, 2
  %v1057 = vadd.f32 %v125, %v1055
  %v1058 = vxor.u32 %v1057, 2147483648
  %v1059 = vmul.f32 %v1058, 1.442695
  %v1060 = vpow.pop %v1059
  %v1061 = vadd.f32 %v1060, 1.0
  %v1062 = vrcp.pop %v1061
  %v1063 = vmul.f32 1.0, %v1062
  %v1064 = vtanh.pop %v1057
  %v1066 = vrot.slane %v799, 6
  %v1068 = vmul.f32 %v1063, %v1066
  %1070 = vrot.lane.b32.xlu0 %v1064, 96
  %v1071 = vpop.permute.xlu0 %1070
  %v1073 = vmul.f32 %v1063, %v1071
  %1075 = vrot.lane.b32.xlu0 %v1073, 16
  %v1076 = vpop.permute.xlu0 %1075
  %v1078 = vadd.f32 %v1068, %v1076
  %v1079 = vtanh.pop %v1078
  %1081 = vrot.lane.b32.xlu0 %v1079, 32
  %v1082 = vpop.permute.xlu0 %1081
  %v1084 = vmul.f32 %v1063, %v1082
  %v1086 = vrot.slane %v1084, 6
  %1087 = vrot.lane.b32.xlu0 %v1086, 80
  %v1088 = vpop.permute.xlu0 %1087
  %v1089 = vsel %vm145, %v1088, 0
  %1091 = vmatprep.subr.mxu0 0.0
  %1092 = vmatpush1.msra.mxu0 %v140
  %1093 = vmatprep.subr.mxu0 0.0
  %1094 = vmatpush1.msra.mxu0 %v141
  %1095 = vmatprep.subr.mxu0 0.0
  %1096 = vmatpush1.msra.mxu0 0.0
  %1097 = vmatprep.subr.mxu0 0.0
  %1098 = vmatpush1.msra.mxu0 0.0
  %1099 = vmatprep.subr.mxu0 0.0
  %1100 = vmatpush1.msra.mxu0 0.0
  %1101 = vmatprep.subr.mxu0 0.0
  %1102 = vmatpush1.msra.mxu0 0.0
  %1103 = vmatprep.subr.mxu0 0.0
  %1104 = vmatpush1.msra.mxu0 0.0
  %1105 = vmatprep.subr.mxu0 0.0
  %1106 = vmatpush1.msra.mxu0 0.0
  %1107 = vmatprep.subr.mxu0 0.0
  %1108 = vmatpush1.msra.mxu0 0.0
  %1109 = vmatprep.subr.mxu0 0.0
  %1110 = vmatpush1.msra.mxu0 0.0
  %1111 = vmatprep.subr.mxu0 0.0
  %1112 = vmatpush1.msra.mxu0 0.0
  %1113 = vmatprep.subr.mxu0 0.0
  %1114 = vmatpush1.msra.mxu0 0.0
  %1115 = vmatprep.subr.mxu0 0.0
  %1116 = vmatpush1.msra.mxu0 0.0
  %1117 = vmatprep.subr.mxu0 0.0
  %1118 = vmatpush1.msra.mxu0 0.0
  %1119 = vmatprep.subr.mxu0 0.0
  %1120 = vmatpush1.msra.mxu0 0.0
  %1121 = vmatprep.subr.mxu0 0.0
  %1122 = vmatpush1.msra.mxu0 0.0
  %1123 = vmatprep.subr.mxu0 0.0
  %1124 = vmatpush1.msra.mxu0 0.0
  %1125 = vmatprep.subr.mxu0 0.0
  %1126 = vmatpush1.msra.mxu0 0.0
  %1127 = vmatprep.subr.mxu0 0.0
  %1128 = vmatpush1.msra.mxu0 0.0
  %1129 = vmatprep.subr.mxu0 0.0
  %1130 = vmatpush1.msra.mxu0 0.0
  %1131 = vmatprep.subr.mxu0 0.0
  %1132 = vmatpush1.msra.mxu0 0.0
  %1133 = vmatprep.subr.mxu0 0.0
  %1134 = vmatpush1.msra.mxu0 0.0
  %1135 = vmatprep.subr.mxu0 0.0
  %1136 = vmatpush1.msra.mxu0 0.0
  %1137 = vmatprep.subr.mxu0 0.0
  %1138 = vmatpush1.msra.mxu0 0.0
  %1139 = vmatprep.subr.mxu0 0.0
  %1140 = vmatpush1.msra.mxu0 0.0
  %1141 = vmatprep.subr.mxu0 0.0
  %1142 = vmatpush1.msra.mxu0 0.0
  %1143 = vmatprep.subr.mxu0 0.0
  %1144 = vmatpush1.msra.mxu0 0.0
  %1145 = vmatprep.subr.mxu0 0.0
  %1146 = vmatpush1.msra.mxu0 0.0
  %1147 = vmatprep.subr.mxu0 0.0
  %1148 = vmatpush1.msra.mxu0 0.0
  %1149 = vmatprep.subr.mxu0 0.0
  %1150 = vmatpush1.msra.mxu0 0.0
  %1151 = vmatprep.subr.mxu0 0.0
  %1152 = vmatpush1.msra.mxu0 0.0
  %1153 = vmatprep.subr.mxu0 0.0
  %1154 = vmatpush1.msra.mxu0 0.0
  %1155 = vmatprep.mubr.f32.mxu0 0.0
  %1156 = vmatmul.mubr.f32.gmra.mrb[0].mxu0 %v1089
  %v1157 = vpop.f32.mrb[0].mxu0
  %v1158 = vadd.f32 %v248, %v1157
  %v1159 = vpop.f32.mrb[0].mxu0
  %1160 = vdwg.mxu0
  %v1161 = vsel %vm145, %v981, 0
  %1163 = vmatprep.subr.mxu0 0.0
  %1164 = vmatpush1.msra.mxu0 %v142
  %1165 = vmatprep.subr.mxu0 0.0
  %1166 = vmatpush1.msra.mxu0 %v143
  %1167 = vmatprep.subr.mxu0 0.0
  %1168 = vmatpush1.msra.mxu0 0.0
  %1169 = vmatprep.subr.mxu0 0.0
  %1170 = vmatpush1.msra.mxu0 0.0
  %1171 = vmatprep.subr.mxu0 0.0
  %1172 = vmatpush1.msra.mxu0 0.0
  %1173 = vmatprep.subr.mxu0 0.0
  %1174 = vmatpush1.msra.mxu0 0.0
  %1175 = vmatprep.subr.mxu0 0.0
  %1176 = vmatpush1.msra.mxu0 0.0
  %1177 = vmatprep.subr.mxu0 0.0
  %1178 = vmatpush1.msra.mxu0 0.0
  %1179 = vmatprep.subr.mxu0 0.0
  %1180 = vmatpush1.msra.mxu0 0.0
  %1181 = vmatprep.subr.mxu0 0.0
  %1182 = vmatpush1.msra.mxu0 0.0
  %1183 = vmatprep.subr.mxu0 0.0
  %1184 = vmatpush1.msra.mxu0 0.0
  %1185 = vmatprep.subr.mxu0 0.0
  %1186 = vmatpush1.msra.mxu0 0.0
  %1187 = vmatprep.subr.mxu0 0.0
  %1188 = vmatpush1.msra.mxu0 0.0
  %1189 = vmatprep.subr.mxu0 0.0
  %1190 = vmatpush1.msra.mxu0 0.0
  %1191 = vmatprep.subr.mxu0 0.0
  %1192 = vmatpush1.msra.mxu0 0.0
  %1193 = vmatprep.subr.mxu0 0.0
  %1194 = vmatpush1.msra.mxu0 0.0
  %1195 = vmatprep.subr.mxu0 0.0
  %1196 = vmatpush1.msra.mxu0 0.0
  %1197 = vmatprep.subr.mxu0 0.0
  %1198 = vmatpush1.msra.mxu0 0.0
  %1199 = vmatprep.subr.mxu0 0.0
  %1200 = vmatpush1.msra.mxu0 0.0
  %1201 = vmatprep.subr.mxu0 0.0
  %1202 = vmatpush1.msra.mxu0 0.0
  %1203 = vmatprep.subr.mxu0 0.0
  %1204 = vmatpush1.msra.mxu0 0.0
  %1205 = vmatprep.subr.mxu0 0.0
  %1206 = vmatpush1.msra.mxu0 0.0
  %1207 = vmatprep.subr.mxu0 0.0
  %1208 = vmatpush1.msra.mxu0 0.0
  %1209 = vmatprep.subr.mxu0 0.0
  %1210 = vmatpush1.msra.mxu0 0.0
  %1211 = vmatprep.subr.mxu0 0.0
  %1212 = vmatpush1.msra.mxu0 0.0
  %1213 = vmatprep.subr.mxu0 0.0
  %1214 = vmatpush1.msra.mxu0 0.0
  %1215 = vmatprep.subr.mxu0 0.0
  %1216 = vmatpush1.msra.mxu0 0.0
  %1217 = vmatprep.subr.mxu0 0.0
  %1218 = vmatpush1.msra.mxu0 0.0
  %1219 = vmatprep.subr.mxu0 0.0
  %1220 = vmatpush1.msra.mxu0 0.0
  %1221 = vmatprep.subr.mxu0 0.0
  %1222 = vmatpush1.msra.mxu0 0.0
  %1223 = vmatprep.subr.mxu0 0.0
  %1224 = vmatpush1.msra.mxu0 0.0
  %1225 = vmatprep.subr.mxu0 0.0
  %1226 = vmatpush1.msra.mxu0 0.0
  %1227 = vmatprep.mubr.f32.mxu0 0.0
  %1228 = vmatmul.mubr.f32.gmra.mrb[0].mxu0 %v1161
  %v1229 = vpop.f32.mrb[0].mxu0
  %v1230 = vadd.f32 0.0, %v1229
  %v1231 = vpop.f32.mrb[0].mxu0
  %1232 = vdwg.mxu0
  %v1233 = vadd.f32 %v1158, %v1230
  %v1234 = vxor.u32 %v1233, 2147483648
  %v1235 = vmul.f32 %v1234, 1.442695
  %v1236 = vpow.pop %v1235
  %v1237 = vadd.f32 %v1236, 1.0
  %v1238 = vrcp.pop %v1237
  %v1239 = vmul.f32 1.0, %v1238
  %v1240 = vtanh.pop %v1233
  %v1241 = vmul.f32 %v1239, %v972
  %1243 = vrot.lane.b32.xlu0 %v1240, 96
  %v1244 = vpop.permute.xlu0 %1243
  %v1246 = vmul.f32 %v1239, %v1244
  %1248 = vrot.lane.b32.xlu0 %v1246, 16
  %v1249 = vpop.permute.xlu0 %1248
  %v1251 = vadd.f32 %v1241, %v1249
  %v1252 = vtanh.pop %v1251
  %1254 = vrot.lane.b32.xlu0 %v1252, 32
  %v1255 = vpop.permute.xlu0 %1254
  %v1257 = vmul.f32 %v1239, %v1255
  %1259 = vrot.lane.b32.xlu0 %v1257, 80
  %v1260 = vpop.permute.xlu0 %1259
  %1262 = vst.msk [vmem:[#allocation2 + $0x6] sm:$0x3] %vm424, %v1260
  %1263 = vmatprep.subr.mxu0 0.0
  %1264 = vmatpush1.msra.mxu0 %v138
  %1265 = vmatprep.subr.mxu0 0.0
  %1266 = vmatpush1.msra.mxu0 %v139
  %1267 = vmatprep.subr.mxu0 0.0
  %1268 = vmatpush1.msra.mxu0 0.0
  %1269 = vmatprep.subr.mxu0 0.0
  %1270 = vmatpush1.msra.mxu0 0.0
  %1271 = vmatprep.subr.mxu0 0.0
  %1272 = vmatpush1.msra.mxu0 0.0
  %1273 = vmatprep.subr.mxu0 0.0
  %1274 = vmatpush1.msra.mxu0 0.0
  %1275 = vmatprep.subr.mxu0 0.0
  %1276 = vmatpush1.msra.mxu0 0.0
  %1277 = vmatprep.subr.mxu0 0.0
  %1278 = vmatpush1.msra.mxu0 0.0
  %1279 = vmatprep.subr.mxu0 0.0
  %1280 = vmatpush1.msra.mxu0 0.0
  %1281 = vmatprep.subr.mxu0 0.0
  %1282 = vmatpush1.msra.mxu0 0.0
  %1283 = vmatprep.subr.mxu0 0.0
  %1284 = vmatpush1.msra.mxu0 0.0
  %1285 = vmatprep.subr.mxu0 0.0
  %1286 = vmatpush1.msra.mxu0 0.0
  %1287 = vmatprep.subr.mxu0 0.0
  %1288 = vmatpush1.msra.mxu0 0.0
  %1289 = vmatprep.subr.mxu0 0.0
  %1290 = vmatpush1.msra.mxu0 0.0
  %1291 = vmatprep.subr.mxu0 0.0
  %1292 = vmatpush1.msra.mxu0 0.0
  %1293 = vmatprep.subr.mxu0 0.0
  %1294 = vmatpush1.msra.mxu0 0.0
  %1295 = vmatprep.subr.mxu0 0.0
  %1296 = vmatpush1.msra.mxu0 0.0
  %1297 = vmatprep.subr.mxu0 0.0
  %1298 = vmatpush1.msra.mxu0 0.0
  %1299 = vmatprep.subr.mxu0 0.0
  %1300 = vmatpush1.msra.mxu0 0.0
  %1301 = vmatprep.subr.mxu0 0.0
  %1302 = vmatpush1.msra.mxu0 0.0
  %1303 = vmatprep.subr.mxu0 0.0
  %1304 = vmatpush1.msra.mxu0 0.0
  %1305 = vmatprep.subr.mxu0 0.0
  %1306 = vmatpush1.msra.mxu0 0.0
  %1307 = vmatprep.subr.mxu0 0.0
  %1308 = vmatpush1.msra.mxu0 0.0
  %1309 = vmatprep.subr.mxu0 0.0
  %1310 = vmatpush1.msra.mxu0 0.0
  %1311 = vmatprep.subr.mxu0 0.0
  %1312 = vmatpush1.msra.mxu0 0.0
  %1313 = vmatprep.subr.mxu0 0.0
  %1314 = vmatpush1.msra.mxu0 0.0
  %1315 = vmatprep.subr.mxu0 0.0
  %1316 = vmatpush1.msra.mxu0 0.0
  %1317 = vmatprep.subr.mxu0 0.0
  %1318 = vmatpush1.msra.mxu0 0.0
  %1319 = vmatprep.subr.mxu0 0.0
  %1320 = vmatpush1.msra.mxu0 0.0
  %1321 = vmatprep.subr.mxu0 0.0
  %1322 = vmatpush1.msra.mxu0 0.0
  %1323 = vmatprep.subr.mxu0 0.0
  %1324 = vmatpush1.msra.mxu0 0.0
  %1325 = vmatprep.subr.mxu0 0.0
  %1326 = vmatpush1.msra.mxu0 0.0
  %1327 = vmatprep.mubr.f32.mxu0 0.0
  %1328 = vmatmul.mubr.f32.gmra.mrb[0].mxu0 %v1089
  %v1329 = vpop.f32.mrb[0].mxu0
  %v1330 = vadd.f32 0.0, %v1329
  %v1331 = vpop.f32.mrb[0].mxu0
  %1332 = vdwg.mxu0
  %v1333 = vadd.f32 %v130, %v1330
  %v1334 = vxor.u32 %v1333, 2147483648
  %v1335 = vmul.f32 %v1334, 1.442695
  %v1336 = vpow.pop %v1335
  %v1337 = vadd.f32 %v1336, 1.0
  %v1338 = vrcp.pop %v1337
  %v1339 = vmul.f32 1.0, %v1338
  %v1340 = vtanh.pop %v1333
  %v1342 = vrot.slane %v1078, 6
  %v1344 = vmul.f32 %v1339, %v1342
  %1346 = vrot.lane.b32.xlu0 %v1340, 96
  %v1347 = vpop.permute.xlu0 %1346
  %v1349 = vmul.f32 %v1339, %v1347
  %1351 = vrot.lane.b32.xlu0 %v1349, 16
  %v1352 = vpop.permute.xlu0 %1351
  %v1354 = vadd.f32 %v1344, %v1352
  %v1355 = vtanh.pop %v1354
  %1357 = vrot.lane.b32.xlu0 %v1355, 32
  %v1358 = vpop.permute.xlu0 %1357
  %v1360 = vmul.f32 %v1339, %v1358
  %1362 = vrot.lane.b32.xlu0 %v1360, 80
  %v1363 = vpop.permute.xlu0 %1362
  %v1364 = vsel %vm145, %v1363, 0
  %1366 = vmatprep.subr.mxu0 0.0
  %1367 = vmatpush1.msra.mxu0 %v140
  %1368 = vmatprep.subr.mxu0 0.0
  %1369 = vmatpush1.msra.mxu0 %v141
  %1370 = vmatprep.subr.mxu0 0.0
  %1371 = vmatpush1.msra.mxu0 0.0
  %1372 = vmatprep.subr.mxu0 0.0
  %1373 = vmatpush1.msra.mxu0 0.0
  %1374 = vmatprep.subr.mxu0 0.0
  %1375 = vmatpush1.msra.mxu0 0.0
  %1376 = vmatprep.subr.mxu0 0.0
  %1377 = vmatpush1.msra.mxu0 0.0
  %1378 = vmatprep.subr.mxu0 0.0
  %1379 = vmatpush1.msra.mxu0 0.0
  %1380 = vmatprep.subr.mxu0 0.0
  %1381 = vmatpush1.msra.mxu0 0.0
  %1382 = vmatprep.subr.mxu0 0.0
  %1383 = vmatpush1.msra.mxu0 0.0
  %1384 = vmatprep.subr.mxu0 0.0
  %1385 = vmatpush1.msra.mxu0 0.0
  %1386 = vmatprep.subr.mxu0 0.0
  %1387 = vmatpush1.msra.mxu0 0.0
  %1388 = vmatprep.subr.mxu0 0.0
  %1389 = vmatpush1.msra.mxu0 0.0
  %1390 = vmatprep.subr.mxu0 0.0
  %1391 = vmatpush1.msra.mxu0 0.0
  %1392 = vmatprep.subr.mxu0 0.0
  %1393 = vmatpush1.msra.mxu0 0.0
  %1394 = vmatprep.subr.mxu0 0.0
  %1395 = vmatpush1.msra.mxu0 0.0
  %1396 = vmatprep.subr.mxu0 0.0
  %1397 = vmatpush1.msra.mxu0 0.0
  %1398 = vmatprep.subr.mxu0 0.0
  %1399 = vmatpush1.msra.mxu0 0.0
  %1400 = vmatprep.subr.mxu0 0.0
  %1401 = vmatpush1.msra.mxu0 0.0
  %1402 = vmatprep.subr.mxu0 0.0
  %1403 = vmatpush1.msra.mxu0 0.0
  %1404 = vmatprep.subr.mxu0 0.0
  %1405 = vmatpush1.msra.mxu0 0.0
  %1406 = vmatprep.subr.mxu0 0.0
  %1407 = vmatpush1.msra.mxu0 0.0
  %1408 = vmatprep.subr.mxu0 0.0
  %1409 = vmatpush1.msra.mxu0 0.0
  %1410 = vmatprep.subr.mxu0 0.0
  %1411 = vmatpush1.msra.mxu0 0.0
  %1412 = vmatprep.subr.mxu0 0.0
  %1413 = vmatpush1.msra.mxu0 0.0
  %1414 = vmatprep.subr.mxu0 0.0
  %1415 = vmatpush1.msra.mxu0 0.0
  %1416 = vmatprep.subr.mxu0 0.0
  %1417 = vmatpush1.msra.mxu0 0.0
  %1418 = vmatprep.subr.mxu0 0.0
  %1419 = vmatpush1.msra.mxu0 0.0
  %1420 = vmatprep.subr.mxu0 0.0
  %1421 = vmatpush1.msra.mxu0 0.0
  %1422 = vmatprep.subr.mxu0 0.0
  %1423 = vmatpush1.msra.mxu0 0.0
  %1424 = vmatprep.subr.mxu0 0.0
  %1425 = vmatpush1.msra.mxu0 0.0
  %1426 = vmatprep.subr.mxu0 0.0
  %1427 = vmatpush1.msra.mxu0 0.0
  %1428 = vmatprep.subr.mxu0 0.0
  %1429 = vmatpush1.msra.mxu0 0.0
  %1430 = vmatprep.mubr.f32.mxu0 0.0
  %1431 = vmatmul.mubr.f32.gmra.mrb[0].mxu0 %v1364
  %v1432 = vpop.f32.mrb[0].mxu0
  %v1433 = vadd.f32 %v248, %v1432
  %v1434 = vpop.f32.mrb[0].mxu0
  %1435 = vdwg.mxu0
  %v1436 = vsel %vm145, %v1260, 0
  %1438 = vmatprep.subr.mxu0 0.0
  %1439 = vmatpush1.msra.mxu0 %v142
  %1440 = vmatprep.subr.mxu0 0.0
  %1441 = vmatpush1.msra.mxu0 %v143
  %1442 = vmatprep.subr.mxu0 0.0
  %1443 = vmatpush1.msra.mxu0 0.0
  %1444 = vmatprep.subr.mxu0 0.0
  %1445 = vmatpush1.msra.mxu0 0.0
  %1446 = vmatprep.subr.mxu0 0.0
  %1447 = vmatpush1.msra.mxu0 0.0
  %1448 = vmatprep.subr.mxu0 0.0
  %1449 = vmatpush1.msra.mxu0 0.0
  %1450 = vmatprep.subr.mxu0 0.0
  %1451 = vmatpush1.msra.mxu0 0.0
  %1452 = vmatprep.subr.mxu0 0.0
  %1453 = vmatpush1.msra.mxu0 0.0
  %1454 = vmatprep.subr.mxu0 0.0
  %1455 = vmatpush1.msra.mxu0 0.0
  %1456 = vmatprep.subr.mxu0 0.0
  %1457 = vmatpush1.msra.mxu0 0.0
  %1458 = vmatprep.subr.mxu0 0.0
  %1459 = vmatpush1.msra.mxu0 0.0
  %1460 = vmatprep.subr.mxu0 0.0
  %1461 = vmatpush1.msra.mxu0 0.0
  %1462 = vmatprep.subr.mxu0 0.0
  %1463 = vmatpush1.msra.mxu0 0.0
  %1464 = vmatprep.subr.mxu0 0.0
  %1465 = vmatpush1.msra.mxu0 0.0
  %1466 = vmatprep.subr.mxu0 0.0
  %1467 = vmatpush1.msra.mxu0 0.0
  %1468 = vmatprep.subr.mxu0 0.0
  %1469 = vmatpush1.msra.mxu0 0.0
  %1470 = vmatprep.subr.mxu0 0.0
  %1471 = vmatpush1.msra.mxu0 0.0
  %1472 = vmatprep.subr.mxu0 0.0
  %1473 = vmatpush1.msra.mxu0 0.0
  %1474 = vmatprep.subr.mxu0 0.0
  %1475 = vmatpush1.msra.mxu0 0.0
  %1476 = vmatprep.subr.mxu0 0.0
  %1477 = vmatpush1.msra.mxu0 0.0
  %1478 = vmatprep.subr.mxu0 0.0
  %1479 = vmatpush1.msra.mxu0 0.0
  %1480 = vmatprep.subr.mxu0 0.0
  %1481 = vmatpush1.msra.mxu0 0.0
  %1482 = vmatprep.subr.mxu0 0.0
  %1483 = vmatpush1.msra.mxu0 0.0
  %1484 = vmatprep.subr.mxu0 0.0
  %1485 = vmatpush1.msra.mxu0 0.0
  %1486 = vmatprep.subr.mxu0 0.0
  %1487 = vmatpush1.msra.mxu0 0.0
  %1488 = vmatprep.subr.mxu0 0.0
  %1489 = vmatpush1.msra.mxu0 0.0
  %1490 = vmatprep.subr.mxu0 0.0
  %1491 = vmatpush1.msra.mxu0 0.0
  %1492 = vmatprep.subr.mxu0 0.0
  %1493 = vmatpush1.msra.mxu0 0.0
  %1494 = vmatprep.subr.mxu0 0.0
  %1495 = vmatpush1.msra.mxu0 0.0
  %1496 = vmatprep.subr.mxu0 0.0
  %1497 = vmatpush1.msra.mxu0 0.0
  %1498 = vmatprep.subr.mxu0 0.0
  %1499 = vmatpush1.msra.mxu0 0.0
  %1500 = vmatprep.subr.mxu0 0.0
  %1501 = vmatpush1.msra.mxu0 0.0
  %1502 = vmatprep.mubr.f32.mxu0 0.0
  %1503 = vmatmul.mubr.f32.gmra.mrb[0].mxu0 %v1436
  %v1504 = vpop.f32.mrb[0].mxu0
  %v1505 = vadd.f32 0.0, %v1504
  %v1506 = vpop.f32.mrb[0].mxu0
  %1507 = vdwg.mxu0
  %v1508 = vadd.f32 %v1433, %v1505
  %v1509 = vxor.u32 %v1508, 2147483648
  %v1510 = vmul.f32 %v1509, 1.442695
  %v1511 = vpow.pop %v1510
  %v1512 = vadd.f32 %v1511, 1.0
  %v1513 = vrcp.pop %v1512
  %v1514 = vmul.f32 1.0, %v1513
  %v1515 = vtanh.pop %v1508
  %v1516 = vmul.f32 %v1514, %v1251
  %1518 = vrot.lane.b32.xlu0 %v1515, 96
  %v1519 = vpop.permute.xlu0 %1518
  %v1521 = vmul.f32 %v1514, %v1519
  %1523 = vrot.lane.b32.xlu0 %v1521, 16
  %v1524 = vpop.permute.xlu0 %1523
  %v1526 = vadd.f32 %v1516, %v1524
  %v1527 = vtanh.pop %v1526
  %1529 = vrot.lane.b32.xlu0 %v1527, 32
  %v1530 = vpop.permute.xlu0 %1529
  %v1532 = vmul.f32 %v1514, %v1530
  %1534 = vrot.lane.b32.xlu0 %v1532, 80
  %v1535 = vpop.permute.xlu0 %1534
  %1537 = vst.msk [vmem:[#allocation2 + $0x8] sm:$0x3] %vm424, %v1535
  %1538 = vmatprep.subr.mxu0 0.0
  %1539 = vmatpush1.msra.mxu0 %v138
  %1540 = vmatprep.subr.mxu0 0.0
  %1541 = vmatpush1.msra.mxu0 %v139
  %1542 = vmatprep.subr.mxu0 0.0
  %1543 = vmatpush1.msra.mxu0 0.0
  %1544 = vmatprep.subr.mxu0 0.0
  %1545 = vmatpush1.msra.mxu0 0.0
  %1546 = vmatprep.subr.mxu0 0.0
  %1547 = vmatpush1.msra.mxu0 0.0
  %1548 = vmatprep.subr.mxu0 0.0
  %1549 = vmatpush1.msra.mxu0 0.0
  %1550 = vmatprep.subr.mxu0 0.0
  %1551 = vmatpush1.msra.mxu0 0.0
  %1552 = vmatprep.subr.mxu0 0.0
  %1553 = vmatpush1.msra.mxu0 0.0
  %1554 = vmatprep.subr.mxu0 0.0
  %1555 = vmatpush1.msra.mxu0 0.0
  %1556 = vmatprep.subr.mxu0 0.0
  %1557 = vmatpush1.msra.mxu0 0.0
  %1558 = vmatprep.subr.mxu0 0.0
  %1559 = vmatpush1.msra.mxu0 0.0
  %1560 = vmatprep.subr.mxu0 0.0
  %1561 = vmatpush1.msra.mxu0 0.0
  %1562 = vmatprep.subr.mxu0 0.0
  %1563 = vmatpush1.msra.mxu0 0.0
  %1564 = vmatprep.subr.mxu0 0.0
  %1565 = vmatpush1.msra.mxu0 0.0
  %1566 = vmatprep.subr.mxu0 0.0
  %1567 = vmatpush1.msra.mxu0 0.0
  %1568 = vmatprep.subr.mxu0 0.0
  %1569 = vmatpush1.msra.mxu0 0.0
  %1570 = vmatprep.subr.mxu0 0.0
  %1571 = vmatpush1.msra.mxu0 0.0
  %1572 = vmatprep.subr.mxu0 0.0
  %1573 = vmatpush1.msra.mxu0 0.0
  %1574 = vmatprep.subr.mxu0 0.0
  %1575 = vmatpush1.msra.mxu0 0.0
  %1576 = vmatprep.subr.mxu0 0.0
  %1577 = vmatpush1.msra.mxu0 0.0
  %1578 = vmatprep.subr.mxu0 0.0
  %1579 = vmatpush1.msra.mxu0 0.0
  %1580 = vmatprep.subr.mxu0 0.0
  %1581 = vmatpush1.msra.mxu0 0.0
  %1582 = vmatprep.subr.mxu0 0.0
  %1583 = vmatpush1.msra.mxu0 0.0
  %1584 = vmatprep.subr.mxu0 0.0
  %1585 = vmatpush1.msra.mxu0 0.0
  %1586 = vmatprep.subr.mxu0 0.0
  %1587 = vmatpush1.msra.mxu0 0.0
  %1588 = vmatprep.subr.mxu0 0.0
  %1589 = vmatpush1.msra.mxu0 0.0
  %1590 = vmatprep.subr.mxu0 0.0
  %1591 = vmatpush1.msra.mxu0 0.0
  %1592 = vmatprep.subr.mxu0 0.0
  %1593 = vmatpush1.msra.mxu0 0.0
  %1594 = vmatprep.subr.mxu0 0.0
  %1595 = vmatpush1.msra.mxu0 0.0
  %1596 = vmatprep.subr.mxu0 0.0
  %1597 = vmatpush1.msra.mxu0 0.0
  %1598 = vmatprep.subr.mxu0 0.0
  %1599 = vmatpush1.msra.mxu0 0.0
  %1600 = vmatprep.subr.mxu0 0.0
  %1601 = vmatpush1.msra.mxu0 0.0
  %1602 = vmatprep.mubr.f32.mxu0 0.0
  %1603 = vmatmul.mubr.f32.gmra.mrb[0].mxu0 %v1364
  %v1604 = vpop.f32.mrb[0].mxu0
  %v1605 = vadd.f32 0.0, %v1604
  %v1606 = vpop.f32.mrb[0].mxu0
  %1607 = vdwg.mxu0
  %v1609 = vrot.slane %v1605, 6
  %v1611 = vadd.f32 %v130, %v1609
  %v1612 = vxor.u32 %v1611, 2147483648
  %v1613 = vmul.f32 %v1612, 1.442695
  %v1614 = vpow.pop %v1613
  %v1615 = vadd.f32 %v1614, 1.0
  %v1616 = vrcp.pop %v1615
  %v1617 = vmul.f32 1.0, %v1616
  %v1618 = vtanh.pop %v1611
  %v1620 = vrot.slane %v1354, 6
  %v1622 = vmul.f32 %v1617, %v1620
  %1624 = vrot.lane.b32.xlu0 %v1618, 96
  %v1625 = vpop.permute.xlu0 %1624
  %v1627 = vmul.f32 %v1617, %v1625
  %1629 = vrot.lane.b32.xlu0 %v1627, 16
  %v1630 = vpop.permute.xlu0 %1629
  %v1632 = vadd.f32 %v1622, %v1630
  %v1633 = vtanh.pop %v1632
  %1635 = vrot.lane.b32.xlu0 %v1633, 32
  %v1636 = vpop.permute.xlu0 %1635
  %v1638 = vmul.f32 %v1617, %v1636
  %v1640 = vrot.slane %v1638, 2
  %1641 = vrot.lane.b32.xlu0 %v1640, 80
  %v1642 = vpop.permute.xlu0 %1641
  %v1643 = vsel %vm145, %v1642, 0
  %1645 = vmatprep.subr.mxu0 0.0
  %1646 = vmatpush1.msra.mxu0 %v140
  %1647 = vmatprep.subr.mxu0 0.0
  %1648 = vmatpush1.msra.mxu0 %v141
  %1649 = vmatprep.subr.mxu0 0.0
  %1650 = vmatpush1.msra.mxu0 0.0
  %1651 = vmatprep.subr.mxu0 0.0
  %1652 = vmatpush1.msra.mxu0 0.0
  %1653 = vmatprep.subr.mxu0 0.0
  %1654 = vmatpush1.msra.mxu0 0.0
  %1655 = vmatprep.subr.mxu0 0.0
  %1656 = vmatpush1.msra.mxu0 0.0
  %1657 = vmatprep.subr.mxu0 0.0
  %1658 = vmatpush1.msra.mxu0 0.0
  %1659 = vmatprep.subr.mxu0 0.0
  %1660 = vmatpush1.msra.mxu0 0.0
  %1661 = vmatprep.subr.mxu0 0.0
  %1662 = vmatpush1.msra.mxu0 0.0
  %1663 = vmatprep.subr.mxu0 0.0
  %1664 = vmatpush1.msra.mxu0 0.0
  %1665 = vmatprep.subr.mxu0 0.0
  %1666 = vmatpush1.msra.mxu0 0.0
  %1667 = vmatprep.subr.mxu0 0.0
  %1668 = vmatpush1.msra.mxu0 0.0
  %1669 = vmatprep.subr.mxu0 0.0
  %1670 = vmatpush1.msra.mxu0 0.0
  %1671 = vmatprep.subr.mxu0 0.0
  %1672 = vmatpush1.msra.mxu0 0.0
  %1673 = vmatprep.subr.mxu0 0.0
  %1674 = vmatpush1.msra.mxu0 0.0
  %1675 = vmatprep.subr.mxu0 0.0
  %1676 = vmatpush1.msra.mxu0 0.0
  %1677 = vmatprep.subr.mxu0 0.0
  %1678 = vmatpush1.msra.mxu0 0.0
  %1679 = vmatprep.subr.mxu0 0.0
  %1680 = vmatpush1.msra.mxu0 0.0
  %1681 = vmatprep.subr.mxu0 0.0
  %1682 = vmatpush1.msra.mxu0 0.0
  %1683 = vmatprep.subr.mxu0 0.0
  %1684 = vmatpush1.msra.mxu0 0.0
  %1685 = vmatprep.subr.mxu0 0.0
  %1686 = vmatpush1.msra.mxu0 0.0
  %1687 = vmatprep.subr.mxu0 0.0
  %1688 = vmatpush1.msra.mxu0 0.0
  %1689 = vmatprep.subr.mxu0 0.0
  %1690 = vmatpush1.msra.mxu0 0.0
  %1691 = vmatprep.subr.mxu0 0.0
  %1692 = vmatpush1.msra.mxu0 0.0
  %1693 = vmatprep.subr.mxu0 0.0
  %1694 = vmatpush1.msra.mxu0 0.0
  %1695 = vmatprep.subr.mxu0 0.0
  %1696 = vmatpush1.msra.mxu0 0.0
  %1697 = vmatprep.subr.mxu0 0.0
  %1698 = vmatpush1.msra.mxu0 0.0
  %1699 = vmatprep.subr.mxu0 0.0
  %1700 = vmatpush1.msra.mxu0 0.0
  %1701 = vmatprep.subr.mxu0 0.0
  %1702 = vmatpush1.msra.mxu0 0.0
  %1703 = vmatprep.subr.mxu0 0.0
  %1704 = vmatpush1.msra.mxu0 0.0
  %1705 = vmatprep.subr.mxu0 0.0
  %1706 = vmatpush1.msra.mxu0 0.0
  %1707 = vmatprep.subr.mxu0 0.0
  %1708 = vmatpush1.msra.mxu0 0.0
  %1709 = vmatprep.mubr.f32.mxu0 0.0
  %1710 = vmatmul.mubr.f32.gmra.mrb[0].mxu0 %v1643
  %v1711 = vpop.f32.mrb[0].mxu0
  %v1712 = vadd.f32 %v248, %v1711
  %v1713 = vpop.f32.mrb[0].mxu0
  %1714 = vdwg.mxu0
  %v1715 = vsel %vm145, %v1535, 0
  %1717 = vmatprep.subr.mxu0 0.0
  %1718 = vmatpush1.msra.mxu0 %v142
  %1719 = vmatprep.subr.mxu0 0.0
  %1720 = vmatpush1.msra.mxu0 %v143
  %1721 = vmatprep.subr.mxu0 0.0
  %1722 = vmatpush1.msra.mxu0 0.0
  %1723 = vmatprep.subr.mxu0 0.0
  %1724 = vmatpush1.msra.mxu0 0.0
  %1725 = vmatprep.subr.mxu0 0.0
  %1726 = vmatpush1.msra.mxu0 0.0
  %1727 = vmatprep.subr.mxu0 0.0
  %1728 = vmatpush1.msra.mxu0 0.0
  %1729 = vmatprep.subr.mxu0 0.0
  %1730 = vmatpush1.msra.mxu0 0.0
  %1731 = vmatprep.subr.mxu0 0.0
  %1732 = vmatpush1.msra.mxu0 0.0
  %1733 = vmatprep.subr.mxu0 0.0
  %1734 = vmatpush1.msra.mxu0 0.0
  %1735 = vmatprep.subr.mxu0 0.0
  %1736 = vmatpush1.msra.mxu0 0.0
  %1737 = vmatprep.subr.mxu0 0.0
  %1738 = vmatpush1.msra.mxu0 0.0
  %1739 = vmatprep.subr.mxu0 0.0
  %1740 = vmatpush1.msra.mxu0 0.0
  %1741 = vmatprep.subr.mxu0 0.0
  %1742 = vmatpush1.msra.mxu0 0.0
  %1743 = vmatprep.subr.mxu0 0.0
  %1744 = vmatpush1.msra.mxu0 0.0
  %1745 = vmatprep.subr.mxu0 0.0
  %1746 = vmatpush1.msra.mxu0 0.0
  %1747 = vmatprep.subr.mxu0 0.0
  %1748 = vmatpush1.msra.mxu0 0.0
  %1749 = vmatprep.subr.mxu0 0.0
  %1750 = vmatpush1.msra.mxu0 0.0
  %1751 = vmatprep.subr.mxu0 0.0
  %1752 = vmatpush1.msra.mxu0 0.0
  %1753 = vmatprep.subr.mxu0 0.0
  %1754 = vmatpush1.msra.mxu0 0.0
  %1755 = vmatprep.subr.mxu0 0.0
  %1756 = vmatpush1.msra.mxu0 0.0
  %1757 = vmatprep.subr.mxu0 0.0
  %1758 = vmatpush1.msra.mxu0 0.0
  %1759 = vmatprep.subr.mxu0 0.0
  %1760 = vmatpush1.msra.mxu0 0.0
  %1761 = vmatprep.subr.mxu0 0.0
  %1762 = vmatpush1.msra.mxu0 0.0
  %1763 = vmatprep.subr.mxu0 0.0
  %1764 = vmatpush1.msra.mxu0 0.0
  %1765 = vmatprep.subr.mxu0 0.0
  %1766 = vmatpush1.msra.mxu0 0.0
  %1767 = vmatprep.subr.mxu0 0.0
  %1768 = vmatpush1.msra.mxu0 0.0
  %1769 = vmatprep.subr.mxu0 0.0
  %1770 = vmatpush1.msra.mxu0 0.0
  %1771 = vmatprep.subr.mxu0 0.0
  %1772 = vmatpush1.msra.mxu0 0.0
  %1773 = vmatprep.subr.mxu0 0.0
  %1774 = vmatpush1.msra.mxu0 0.0
  %1775 = vmatprep.subr.mxu0 0.0
  %1776 = vmatpush1.msra.mxu0 0.0
  %1777 = vmatprep.subr.mxu0 0.0
  %1778 = vmatpush1.msra.mxu0 0.0
  %1779 = vmatprep.subr.mxu0 0.0
  %1780 = vmatpush1.msra.mxu0 0.0
  %1781 = vmatprep.mubr.f32.mxu0 0.0
  %1782 = vmatmul.mubr.f32.gmra.mrb[0].mxu0 %v1715
  %v1783 = vpop.f32.mrb[0].mxu0
  %v1784 = vadd.f32 0.0, %v1783
  %v1785 = vpop.f32.mrb[0].mxu0
  %1786 = vdwg.mxu0
  %v1787 = vadd.f32 %v1712, %v1784
  %v1788 = vxor.u32 %v1787, 2147483648
  %v1789 = vmul.f32 %v1788, 1.442695
  %v1790 = vpow.pop %v1789
  %v1791 = vadd.f32 %v1790, 1.0
  %v1792 = vrcp.pop %v1791
  %v1793 = vmul.f32 1.0, %v1792
  %v1794 = vtanh.pop %v1787
  %v1795 = vmul.f32 %v1793, %v1526
  %1797 = vrot.lane.b32.xlu0 %v1794, 96
  %v1798 = vpop.permute.xlu0 %1797
  %v1800 = vmul.f32 %v1793, %v1798
  %1802 = vrot.lane.b32.xlu0 %v1800, 16
  %v1803 = vpop.permute.xlu0 %1802
  %v1805 = vadd.f32 %v1795, %v1803
  %v1806 = vtanh.pop %v1805
  %1808 = vrot.lane.b32.xlu0 %v1806, 32
  %v1809 = vpop.permute.xlu0 %1808
  %v1811 = vmul.f32 %v1793, %v1809
  %1813 = vrot.lane.b32.xlu0 %v1811, 80
  %v1814 = vpop.permute.xlu0 %1813
  %1816 = vst.msk [vmem:[#allocation2 + $0xa] sm:$0x3] %vm424, %v1814
  %1817 = vmatprep.subr.mxu0 0.0
  %1818 = vmatpush1.msra.mxu0 %v138
  %1819 = vmatprep.subr.mxu0 0.0
  %1820 = vmatpush1.msra.mxu0 %v139
  %1821 = vmatprep.subr.mxu0 0.0
  %1822 = vmatpush1.msra.mxu0 0.0
  %1823 = vmatprep.subr.mxu0 0.0
  %1824 = vmatpush1.msra.mxu0 0.0
  %1825 = vmatprep.subr.mxu0 0.0
  %1826 = vmatpush1.msra.mxu0 0.0
  %1827 = vmatprep.subr.mxu0 0.0
  %1828 = vmatpush1.msra.mxu0 0.0
  %1829 = vmatprep.subr.mxu0 0.0
  %1830 = vmatpush1.msra.mxu0 0.0
  %1831 = vmatprep.subr.mxu0 0.0
  %1832 = vmatpush1.msra.mxu0 0.0
  %1833 = vmatprep.subr.mxu0 0.0
  %1834 = vmatpush1.msra.mxu0 0.0
  %1835 = vmatprep.subr.mxu0 0.0
  %1836 = vmatpush1.msra.mxu0 0.0
  %1837 = vmatprep.subr.mxu0 0.0
  %1838 = vmatpush1.msra.mxu0 0.0
  %1839 = vmatprep.subr.mxu0 0.0
  %1840 = vmatpush1.msra.mxu0 0.0
  %1841 = vmatprep.subr.mxu0 0.0
  %1842 = vmatpush1.msra.mxu0 0.0
  %1843 = vmatprep.subr.mxu0 0.0
  %1844 = vmatpush1.msra.mxu0 0.0
  %1845 = vmatprep.subr.mxu0 0.0
  %1846 = vmatpush1.msra.mxu0 0.0
  %1847 = vmatprep.subr.mxu0 0.0
  %1848 = vmatpush1.msra.mxu0 0.0
  %1849 = vmatprep.subr.mxu0 0.0
  %1850 = vmatpush1.msra.mxu0 0.0
  %1851 = vmatprep.subr.mxu0 0.0
  %1852 = vmatpush1.msra.mxu0 0.0
  %1853 = vmatprep.subr.mxu0 0.0
  %1854 = vmatpush1.msra.mxu0 0.0
  %1855 = vmatprep.subr.mxu0 0.0
  %1856 = vmatpush1.msra.mxu0 0.0
  %1857 = vmatprep.subr.mxu0 0.0
  %1858 = vmatpush1.msra.mxu0 0.0
  %1859 = vmatprep.subr.mxu0 0.0
  %1860 = vmatpush1.msra.mxu0 0.0
  %1861 = vmatprep.subr.mxu0 0.0
  %1862 = vmatpush1.msra.mxu0 0.0
  %1863 = vmatprep.subr.mxu0 0.0
  %1864 = vmatpush1.msra.mxu0 0.0
  %1865 = vmatprep.subr.mxu0 0.0
  %1866 = vmatpush1.msra.mxu0 0.0
  %1867 = vmatprep.subr.mxu0 0.0
  %1868 = vmatpush1.msra.mxu0 0.0
  %1869 = vmatprep.subr.mxu0 0.0
  %1870 = vmatpush1.msra.mxu0 0.0
  %1871 = vmatprep.subr.mxu0 0.0
  %1872 = vmatpush1.msra.mxu0 0.0
  %1873 = vmatprep.subr.mxu0 0.0
  %1874 = vmatpush1.msra.mxu0 0.0
  %1875 = vmatprep.subr.mxu0 0.0
  %1876 = vmatpush1.msra.mxu0 0.0
  %1877 = vmatprep.subr.mxu0 0.0
  %1878 = vmatpush1.msra.mxu0 0.0
  %1879 = vmatprep.subr.mxu0 0.0
  %1880 = vmatpush1.msra.mxu0 0.0
  %1881 = vmatprep.mubr.f32.mxu0 0.0
  %1882 = vmatmul.mubr.f32.gmra.mrb[0].mxu0 %v1643
  %v1883 = vpop.f32.mrb[0].mxu0
  %v1884 = vadd.f32 0.0, %v1883
  %v1885 = vpop.f32.mrb[0].mxu0
  %1886 = vdwg.mxu0
  %v1888 = vrot.slane %v1884, 4
  %v1890 = vadd.f32 %v130, %v1888
  %v1891 = vxor.u32 %v1890, 2147483648
  %v1892 = vmul.f32 %v1891, 1.442695
  %v1893 = vpow.pop %v1892
  %v1894 = vadd.f32 %v1893, 1.0
  %v1895 = vrcp.pop %v1894
  %v1896 = vmul.f32 1.0, %v1895
  %v1897 = vtanh.pop %v1890
  %v1899 = vrot.slane %v1632, 6
  %v1901 = vmul.f32 %v1896, %v1899
  %1903 = vrot.lane.b32.xlu0 %v1897, 96
  %v1904 = vpop.permute.xlu0 %1903
  %v1906 = vmul.f32 %v1896, %v1904
  %1908 = vrot.lane.b32.xlu0 %v1906, 16
  %v1909 = vpop.permute.xlu0 %1908
  %v1911 = vadd.f32 %v1901, %v1909
  %v1912 = vtanh.pop %v1911
  %1914 = vrot.lane.b32.xlu0 %v1912, 32
  %v1915 = vpop.permute.xlu0 %1914
  %v1917 = vmul.f32 %v1896, %v1915
  %v1919 = vrot.slane %v1917, 4
  %1920 = vrot.lane.b32.xlu0 %v1919, 80
  %v1921 = vpop.permute.xlu0 %1920
  %v1922 = vsel %vm145, %v1921, 0
  %1924 = vmatprep.subr.mxu0 0.0
  %1925 = vmatpush1.msra.mxu0 %v140
  %1926 = vmatprep.subr.mxu0 0.0
  %1927 = vmatpush1.msra.mxu0 %v141
  %1928 = vmatprep.subr.mxu0 0.0
  %1929 = vmatpush1.msra.mxu0 0.0
  %1930 = vmatprep.subr.mxu0 0.0
  %1931 = vmatpush1.msra.mxu0 0.0
  %1932 = vmatprep.subr.mxu0 0.0
  %1933 = vmatpush1.msra.mxu0 0.0
  %1934 = vmatprep.subr.mxu0 0.0
  %1935 = vmatpush1.msra.mxu0 0.0
  %1936 = vmatprep.subr.mxu0 0.0
  %1937 = vmatpush1.msra.mxu0 0.0
  %1938 = vmatprep.subr.mxu0 0.0
  %1939 = vmatpush1.msra.mxu0 0.0
  %1940 = vmatprep.subr.mxu0 0.0
  %1941 = vmatpush1.msra.mxu0 0.0
  %1942 = vmatprep.subr.mxu0 0.0
  %1943 = vmatpush1.msra.mxu0 0.0
  %1944 = vmatprep.subr.mxu0 0.0
  %1945 = vmatpush1.msra.mxu0 0.0
  %1946 = vmatprep.subr.mxu0 0.0
  %1947 = vmatpush1.msra.mxu0 0.0
  %1948 = vmatprep.subr.mxu0 0.0
  %1949 = vmatpush1.msra.mxu0 0.0
  %1950 = vmatprep.subr.mxu0 0.0
  %1951 = vmatpush1.msra.mxu0 0.0
  %1952 = vmatprep.subr.mxu0 0.0
  %1953 = vmatpush1.msra.mxu0 0.0
  %1954 = vmatprep.subr.mxu0 0.0
  %1955 = vmatpush1.msra.mxu0 0.0
  %1956 = vmatprep.subr.mxu0 0.0
  %1957 = vmatpush1.msra.mxu0 0.0
  %1958 = vmatprep.subr.mxu0 0.0
  %1959 = vmatpush1.msra.mxu0 0.0
  %1960 = vmatprep.subr.mxu0 0.0
  %1961 = vmatpush1.msra.mxu0 0.0
  %1962 = vmatprep.subr.mxu0 0.0
  %1963 = vmatpush1.msra.mxu0 0.0
  %1964 = vmatprep.subr.mxu0 0.0
  %1965 = vmatpush1.msra.mxu0 0.0
  %1966 = vmatprep.subr.mxu0 0.0
  %1967 = vmatpush1.msra.mxu0 0.0
  %1968 = vmatprep.subr.mxu0 0.0
  %1969 = vmatpush1.msra.mxu0 0.0
  %1970 = vmatprep.subr.mxu0 0.0
  %1971 = vmatpush1.msra.mxu0 0.0
  %1972 = vmatprep.subr.mxu0 0.0
  %1973 = vmatpush1.msra.mxu0 0.0
  %1974 = vmatprep.subr.mxu0 0.0
  %1975 = vmatpush1.msra.mxu0 0.0
  %1976 = vmatprep.subr.mxu0 0.0
  %1977 = vmatpush1.msra.mxu0 0.0
  %1978 = vmatprep.subr.mxu0 0.0
  %1979 = vmatpush1.msra.mxu0 0.0
  %1980 = vmatprep.subr.mxu0 0.0
  %1981 = vmatpush1.msra.mxu0 0.0
  %1982 = vmatprep.subr.mxu0 0.0
  %1983 = vmatpush1.msra.mxu0 0.0
  %1984 = vmatprep.subr.mxu0 0.0
  %1985 = vmatpush1.msra.mxu0 0.0
  %1986 = vmatprep.subr.mxu0 0.0
  %1987 = vmatpush1.msra.mxu0 0.0
  %1988 = vmatprep.mubr.f32.mxu0 0.0
  %1989 = vmatmul.mubr.f32.gmra.mrb[0].mxu0 %v1922
  %v1990 = vpop.f32.mrb[0].mxu0
  %v1991 = vadd.f32 %v248, %v1990
  %v1992 = vpop.f32.mrb[0].mxu0
  %1993 = vdwg.mxu0
  %v1994 = vsel %vm145, %v1814, 0
  %1996 = vmatprep.subr.mxu0 0.0
  %1997 = vmatpush1.msra.mxu0 %v142
  %1998 = vmatprep.subr.mxu0 0.0
  %1999 = vmatpush1.msra.mxu0 %v143
  %2000 = vmatprep.subr.mxu0 0.0
  %2001 = vmatpush1.msra.mxu0 0.0
  %2002 = vmatprep.subr.mxu0 0.0
  %2003 = vmatpush1.msra.mxu0 0.0
  %2004 = vmatprep.subr.mxu0 0.0
  %2005 = vmatpush1.msra.mxu0 0.0
  %2006 = vmatprep.subr.mxu0 0.0
  %2007 = vmatpush1.msra.mxu0 0.0
  %2008 = vmatprep.subr.mxu0 0.0
  %2009 = vmatpush1.msra.mxu0 0.0
  %2010 = vmatprep.subr.mxu0 0.0
  %2011 = vmatpush1.msra.mxu0 0.0
  %2012 = vmatprep.subr.mxu0 0.0
  %2013 = vmatpush1.msra.mxu0 0.0
  %2014 = vmatprep.subr.mxu0 0.0
  %2015 = vmatpush1.msra.mxu0 0.0
  %2016 = vmatprep.subr.mxu0 0.0
  %2017 = vmatpush1.msra.mxu0 0.0
  %2018 = vmatprep.subr.mxu0 0.0
  %2019 = vmatpush1.msra.mxu0 0.0
  %2020 = vmatprep.subr.mxu0 0.0
  %2021 = vmatpush1.msra.mxu0 0.0
  %2022 = vmatprep.subr.mxu0 0.0
  %2023 = vmatpush1.msra.mxu0 0.0
  %2024 = vmatprep.subr.mxu0 0.0
  %2025 = vmatpush1.msra.mxu0 0.0
  %2026 = vmatprep.subr.mxu0 0.0
  %2027 = vmatpush1.msra.mxu0 0.0
  %2028 = vmatprep.subr.mxu0 0.0
  %2029 = vmatpush1.msra.mxu0 0.0
  %2030 = vmatprep.subr.mxu0 0.0
  %2031 = vmatpush1.msra.mxu0 0.0
  %2032 = vmatprep.subr.mxu0 0.0
  %2033 = vmatpush1.msra.mxu0 0.0
  %2034 = vmatprep.subr.mxu0 0.0
  %2035 = vmatpush1.msra.mxu0 0.0
  %2036 = vmatprep.subr.mxu0 0.0
  %2037 = vmatpush1.msra.mxu0 0.0
  %2038 = vmatprep.subr.mxu0 0.0
  %2039 = vmatpush1.msra.mxu0 0.0
  %2040 = vmatprep.subr.mxu0 0.0
  %2041 = vmatpush1.msra.mxu0 0.0
  %2042 = vmatprep.subr.mxu0 0.0
  %2043 = vmatpush1.msra.mxu0 0.0
  %2044 = vmatprep.subr.mxu0 0.0
  %2045 = vmatpush1.msra.mxu0 0.0
  %2046 = vmatprep.subr.mxu0 0.0
  %2047 = vmatpush1.msra.mxu0 0.0
  %2048 = vmatprep.subr.mxu0 0.0
  %2049 = vmatpush1.msra.mxu0 0.0
  %2050 = vmatprep.subr.mxu0 0.0
  %2051 = vmatpush1.msra.mxu0 0.0
  %2052 = vmatprep.subr.mxu0 0.0
  %2053 = vmatpush1.msra.mxu0 0.0
  %2054 = vmatprep.subr.mxu0 0.0
  %2055 = vmatpush1.msra.mxu0 0.0
  %2056 = vmatprep.subr.mxu0 0.0
  %2057 = vmatpush1.msra.mxu0 0.0
  %2058 = vmatprep.subr.mxu0 0.0
  %2059 = vmatpush1.msra.mxu0 0.0
  %2060 = vmatprep.mubr.f32.mxu0 0.0
  %2061 = vmatmul.mubr.f32.gmra.mrb[0].mxu0 %v1994
  %v2062 = vpop.f32.mrb[0].mxu0
  %v2063 = vadd.f32 0.0, %v2062
  %v2064 = vpop.f32.mrb[0].mxu0
  %2065 = vdwg.mxu0
  %v2066 = vadd.f32 %v1991, %v2063
  %v2067 = vxor.u32 %v2066, 2147483648
  %v2068 = vmul.f32 %v2067, 1.442695
  %v2069 = vpow.pop %v2068
  %v2070 = vadd.f32 %v2069, 1.0
  %v2071 = vrcp.pop %v2070
  %v2072 = vmul.f32 1.0, %v2071
  %v2073 = vtanh.pop %v2066
  %v2074 = vmul.f32 %v2072, %v1805
  %2076 = vrot.lane.b32.xlu0 %v2073, 96
  %v2077 = vpop.permute.xlu0 %2076
  %v2079 = vmul.f32 %v2072, %v2077
  %2081 = vrot.lane.b32.xlu0 %v2079, 16
  %v2082 = vpop.permute.xlu0 %2081
  %v2084 = vadd.f32 %v2074, %v2082
  %v2085 = vtanh.pop %v2084
  %2087 = vrot.lane.b32.xlu0 %v2085, 32
  %v2088 = vpop.permute.xlu0 %2087
  %v2090 = vmul.f32 %v2072, %v2088
  %2092 = vrot.lane.b32.xlu0 %v2090, 80
  %v2093 = vpop.permute.xlu0 %2092
  %2095 = vst.msk [vmem:[#allocation2 + $0xc] sm:$0x3] %vm424, %v2093
  %2096 = vmatprep.subr.mxu0 0.0
  %2097 = vmatpush1.msra.mxu0 %v138
  %2098 = vmatprep.subr.mxu0 0.0
  %2099 = vmatpush1.msra.mxu0 %v139
  %2100 = vmatprep.subr.mxu0 0.0
  %2101 = vmatpush1.msra.mxu0 0.0
  %2102 = vmatprep.subr.mxu0 0.0
  %2103 = vmatpush1.msra.mxu0 0.0
  %2104 = vmatprep.subr.mxu0 0.0
  %2105 = vmatpush1.msra.mxu0 0.0
  %2106 = vmatprep.subr.mxu0 0.0
  %2107 = vmatpush1.msra.mxu0 0.0
  %2108 = vmatprep.subr.mxu0 0.0
  %2109 = vmatpush1.msra.mxu0 0.0
  %2110 = vmatprep.subr.mxu0 0.0
  %2111 = vmatpush1.msra.mxu0 0.0
  %2112 = vmatprep.subr.mxu0 0.0
  %2113 = vmatpush1.msra.mxu0 0.0
  %2114 = vmatprep.subr.mxu0 0.0
  %2115 = vmatpush1.msra.mxu0 0.0
  %2116 = vmatprep.subr.mxu0 0.0
  %2117 = vmatpush1.msra.mxu0 0.0
  %2118 = vmatprep.subr.mxu0 0.0
  %2119 = vmatpush1.msra.mxu0 0.0
  %2120 = vmatprep.subr.mxu0 0.0
  %2121 = vmatpush1.msra.mxu0 0.0
  %2122 = vmatprep.subr.mxu0 0.0
  %2123 = vmatpush1.msra.mxu0 0.0
  %2124 = vmatprep.subr.mxu0 0.0
  %2125 = vmatpush1.msra.mxu0 0.0
  %2126 = vmatprep.subr.mxu0 0.0
  %2127 = vmatpush1.msra.mxu0 0.0
  %2128 = vmatprep.subr.mxu0 0.0
  %2129 = vmatpush1.msra.mxu0 0.0
  %2130 = vmatprep.subr.mxu0 0.0
  %2131 = vmatpush1.msra.mxu0 0.0
  %2132 = vmatprep.subr.mxu0 0.0
  %2133 = vmatpush1.msra.mxu0 0.0
  %2134 = vmatprep.subr.mxu0 0.0
  %2135 = vmatpush1.msra.mxu0 0.0
  %2136 = vmatprep.subr.mxu0 0.0
  %2137 = vmatpush1.msra.mxu0 0.0
  %2138 = vmatprep.subr.mxu0 0.0
  %2139 = vmatpush1.msra.mxu0 0.0
  %2140 = vmatprep.subr.mxu0 0.0
  %2141 = vmatpush1.msra.mxu0 0.0
  %2142 = vmatprep.subr.mxu0 0.0
  %2143 = vmatpush1.msra.mxu0 0.0
  %2144 = vmatprep.subr.mxu0 0.0
  %2145 = vmatpush1.msra.mxu0 0.0
  %2146 = vmatprep.subr.mxu0 0.0
  %2147 = vmatpush1.msra.mxu0 0.0
  %2148 = vmatprep.subr.mxu0 0.0
  %2149 = vmatpush1.msra.mxu0 0.0
  %2150 = vmatprep.subr.mxu0 0.0
  %2151 = vmatpush1.msra.mxu0 0.0
  %2152 = vmatprep.subr.mxu0 0.0
  %2153 = vmatpush1.msra.mxu0 0.0
  %2154 = vmatprep.subr.mxu0 0.0
  %2155 = vmatpush1.msra.mxu0 0.0
  %2156 = vmatprep.subr.mxu0 0.0
  %2157 = vmatpush1.msra.mxu0 0.0
  %2158 = vmatprep.subr.mxu0 0.0
  %2159 = vmatpush1.msra.mxu0 0.0
  %2160 = vmatprep.mubr.f32.mxu0 0.0
  %2161 = vmatmul.mubr.f32.gmra.mrb[0].mxu0 %v1922
  %v2162 = vpop.f32.mrb[0].mxu0
  %v2163 = vadd.f32 0.0, %v2162
  %v2164 = vpop.f32.mrb[0].mxu0
  %2165 = vdwg.mxu0
  %v2167 = vrot.slane %v2163, 2
  %v2169 = vadd.f32 %v130, %v2167
  %v2170 = vxor.u32 %v2169, 2147483648
  %v2171 = vmul.f32 %v2170, 1.442695
  %v2172 = vpow.pop %v2171
  %v2173 = vadd.f32 %v2172, 1.0
  %v2174 = vrcp.pop %v2173
  %v2175 = vmul.f32 1.0, %v2174
  %v2176 = vtanh.pop %v2169
  %v2178 = vrot.slane %v1911, 6
  %v2180 = vmul.f32 %v2175, %v2178
  %2182 = vrot.lane.b32.xlu0 %v2176, 96
  %v2183 = vpop.permute.xlu0 %2182
  %v2185 = vmul.f32 %v2175, %v2183
  %2187 = vrot.lane.b32.xlu0 %v2185, 16
  %v2188 = vpop.permute.xlu0 %2187
  %v2190 = vadd.f32 %v2180, %v2188
  %v2191 = vtanh.pop %v2190
  %2193 = vrot.lane.b32.xlu0 %v2191, 32
  %v2194 = vpop.permute.xlu0 %2193
  %v2196 = vmul.f32 %v2175, %v2194
  %v2198 = vrot.slane %v2196, 6
  %2199 = vrot.lane.b32.xlu0 %v2198, 80
  %v2200 = vpop.permute.xlu0 %2199
  %v2201 = vsel %vm145, %v2200, 0
  %2203 = vmatprep.subr.mxu0 0.0
  %2204 = vmatpush1.msra.mxu0 %v140
  %2205 = vmatprep.subr.mxu0 0.0
  %2206 = vmatpush1.msra.mxu0 %v141
  %2207 = vmatprep.subr.mxu0 0.0
  %2208 = vmatpush1.msra.mxu0 0.0
  %2209 = vmatprep.subr.mxu0 0.0
  %2210 = vmatpush1.msra.mxu0 0.0
  %2211 = vmatprep.subr.mxu0 0.0
  %2212 = vmatpush1.msra.mxu0 0.0
  %2213 = vmatprep.subr.mxu0 0.0
  %2214 = vmatpush1.msra.mxu0 0.0
  %2215 = vmatprep.subr.mxu0 0.0
  %2216 = vmatpush1.msra.mxu0 0.0
  %2217 = vmatprep.subr.mxu0 0.0
  %2218 = vmatpush1.msra.mxu0 0.0
  %2219 = vmatprep.subr.mxu0 0.0
  %2220 = vmatpush1.msra.mxu0 0.0
  %2221 = vmatprep.subr.mxu0 0.0
  %2222 = vmatpush1.msra.mxu0 0.0
  %2223 = vmatprep.subr.mxu0 0.0
  %2224 = vmatpush1.msra.mxu0 0.0
  %2225 = vmatprep.subr.mxu0 0.0
  %2226 = vmatpush1.msra.mxu0 0.0
  %2227 = vmatprep.subr.mxu0 0.0
  %2228 = vmatpush1.msra.mxu0 0.0
  %2229 = vmatprep.subr.mxu0 0.0
  %2230 = vmatpush1.msra.mxu0 0.0
  %2231 = vmatprep.subr.mxu0 0.0
  %2232 = vmatpush1.msra.mxu0 0.0
  %2233 = vmatprep.subr.mxu0 0.0
  %2234 = vmatpush1.msra.mxu0 0.0
  %2235 = vmatprep.subr.mxu0 0.0
  %2236 = vmatpush1.msra.mxu0 0.0
  %2237 = vmatprep.subr.mxu0 0.0
  %2238 = vmatpush1.msra.mxu0 0.0
  %2239 = vmatprep.subr.mxu0 0.0
  %2240 = vmatpush1.msra.mxu0 0.0
  %2241 = vmatprep.subr.mxu0 0.0
  %2242 = vmatpush1.msra.mxu0 0.0
  %2243 = vmatprep.subr.mxu0 0.0
  %2244 = vmatpush1.msra.mxu0 0.0
  %2245 = vmatprep.subr.mxu0 0.0
  %2246 = vmatpush1.msra.mxu0 0.0
  %2247 = vmatprep.subr.mxu0 0.0
  %2248 = vmatpush1.msra.mxu0 0.0
  %2249 = vmatprep.subr.mxu0 0.0
  %2250 = vmatpush1.msra.mxu0 0.0
  %2251 = vmatprep.subr.mxu0 0.0
  %2252 = vmatpush1.msra.mxu0 0.0
  %2253 = vmatprep.subr.mxu0 0.0
  %2254 = vmatpush1.msra.mxu0 0.0
  %2255 = vmatprep.subr.mxu0 0.0
  %2256 = vmatpush1.msra.mxu0 0.0
  %2257 = vmatprep.subr.mxu0 0.0
  %2258 = vmatpush1.msra.mxu0 0.0
  %2259 = vmatprep.subr.mxu0 0.0
  %2260 = vmatpush1.msra.mxu0 0.0
  %2261 = vmatprep.subr.mxu0 0.0
  %2262 = vmatpush1.msra.mxu0 0.0
  %2263 = vmatprep.subr.mxu0 0.0
  %2264 = vmatpush1.msra.mxu0 0.0
  %2265 = vmatprep.subr.mxu0 0.0
  %2266 = vmatpush1.msra.mxu0 0.0
  %2267 = vmatprep.mubr.f32.mxu0 0.0
  %2268 = vmatmul.mubr.f32.gmra.mrb[0].mxu0 %v2201
  %v2269 = vpop.f32.mrb[0].mxu0
  %v2270 = vadd.f32 %v248, %v2269
  %v2271 = vpop.f32.mrb[0].mxu0
  %2272 = vdwg.mxu0
  %v2273 = vsel %vm145, %v2093, 0
  %2275 = vmatprep.subr.mxu0 0.0
  %2276 = vmatpush1.msra.mxu0 %v142
  %2277 = vmatprep.subr.mxu0 0.0
  %2278 = vmatpush1.msra.mxu0 %v143
  %2279 = vmatprep.subr.mxu0 0.0
  %2280 = vmatpush1.msra.mxu0 0.0
  %2281 = vmatprep.subr.mxu0 0.0
  %2282 = vmatpush1.msra.mxu0 0.0
  %2283 = vmatprep.subr.mxu0 0.0
  %2284 = vmatpush1.msra.mxu0 0.0
  %2285 = vmatprep.subr.mxu0 0.0
  %2286 = vmatpush1.msra.mxu0 0.0
  %2287 = vmatprep.subr.mxu0 0.0
  %2288 = vmatpush1.msra.mxu0 0.0
  %2289 = vmatprep.subr.mxu0 0.0
  %2290 = vmatpush1.msra.mxu0 0.0
  %2291 = vmatprep.subr.mxu0 0.0
  %2292 = vmatpush1.msra.mxu0 0.0
  %2293 = vmatprep.subr.mxu0 0.0
  %2294 = vmatpush1.msra.mxu0 0.0
  %2295 = vmatprep.subr.mxu0 0.0
  %2296 = vmatpush1.msra.mxu0 0.0
  %2297 = vmatprep.subr.mxu0 0.0
  %2298 = vmatpush1.msra.mxu0 0.0
  %2299 = vmatprep.subr.mxu0 0.0
  %2300 = vmatpush1.msra.mxu0 0.0
  %2301 = vmatprep.subr.mxu0 0.0
  %2302 = vmatpush1.msra.mxu0 0.0
  %2303 = vmatprep.subr.mxu0 0.0
  %2304 = vmatpush1.msra.mxu0 0.0
  %2305 = vmatprep.subr.mxu0 0.0
  %2306 = vmatpush1.msra.mxu0 0.0
  %2307 = vmatprep.subr.mxu0 0.0
  %2308 = vmatpush1.msra.mxu0 0.0
  %2309 = vmatprep.subr.mxu0 0.0
  %2310 = vmatpush1.msra.mxu0 0.0
  %2311 = vmatprep.subr.mxu0 0.0
  %2312 = vmatpush1.msra.mxu0 0.0
  %2313 = vmatprep.subr.mxu0 0.0
  %2314 = vmatpush1.msra.mxu0 0.0
  %2315 = vmatprep.subr.mxu0 0.0
  %2316 = vmatpush1.msra.mxu0 0.0
  %2317 = vmatprep.subr.mxu0 0.0
  %2318 = vmatpush1.msra.mxu0 0.0
  %2319 = vmatprep.subr.mxu0 0.0
  %2320 = vmatpush1.msra.mxu0 0.0
  %2321 = vmatprep.subr.mxu0 0.0
  %2322 = vmatpush1.msra.mxu0 0.0
  %2323 = vmatprep.subr.mxu0 0.0
  %2324 = vmatpush1.msra.mxu0 0.0
  %2325 = vmatprep.subr.mxu0 0.0
  %2326 = vmatpush1.msra.mxu0 0.0
  %2327 = vmatprep.subr.mxu0 0.0
  %2328 = vmatpush1.msra.mxu0 0.0
  %2329 = vmatprep.subr.mxu0 0.0
  %2330 = vmatpush1.msra.mxu0 0.0
  %2331 = vmatprep.subr.mxu0 0.0
  %2332 = vmatpush1.msra.mxu0 0.0
  %2333 = vmatprep.subr.mxu0 0.0
  %2334 = vmatpush1.msra.mxu0 0.0
  %2335 = vmatprep.subr.mxu0 0.0
  %2336 = vmatpush1.msra.mxu0 0.0
  %2337 = vmatprep.subr.mxu0 0.0
  %2338 = vmatpush1.msra.mxu0 0.0
  %2339 = vmatprep.mubr.f32.mxu0 0.0
  %2340 = vmatmul.mubr.f32.gmra.mrb[0].mxu0 %v2273
  %v2341 = vpop.f32.mrb[0].mxu0
  %v2342 = vadd.f32 0.0, %v2341
  %v2343 = vpop.f32.mrb[0].mxu0
  %2344 = vdwg.mxu0
  %v2345 = vadd.f32 %v2270, %v2342
  %v2346 = vxor.u32 %v2345, 2147483648
  %v2347 = vmul.f32 %v2346, 1.442695
  %v2348 = vpow.pop %v2347
  %v2349 = vadd.f32 %v2348, 1.0
  %v2350 = vrcp.pop %v2349
  %v2351 = vmul.f32 1.0, %v2350
  %v2352 = vtanh.pop %v2345
  %v2353 = vmul.f32 %v2351, %v2084
  %2355 = vrot.lane.b32.xlu0 %v2352, 96
  %v2356 = vpop.permute.xlu0 %2355
  %v2358 = vmul.f32 %v2351, %v2356
  %2360 = vrot.lane.b32.xlu0 %v2358, 16
  %v2361 = vpop.permute.xlu0 %2360
  %v2363 = vadd.f32 %v2353, %v2361
  %v2364 = vtanh.pop %v2363
  %2366 = vrot.lane.b32.xlu0 %v2364, 32
  %v2367 = vpop.permute.xlu0 %2366
  %v2369 = vmul.f32 %v2351, %v2367
  %2371 = vrot.lane.b32.xlu0 %v2369, 80
  %v2372 = vpop.permute.xlu0 %2371
  %2374 = vst.msk [vmem:[#allocation2 + $0xe] sm:$0x3] %vm424, %v2372
  %2375 = vmatprep.subr.mxu0 0.0
  %2376 = vmatpush1.msra.mxu0 %v138
  %2377 = vmatprep.subr.mxu0 0.0
  %2378 = vmatpush1.msra.mxu0 %v139
  %2379 = vmatprep.subr.mxu0 0.0
  %2380 = vmatpush1.msra.mxu0 0.0
  %2381 = vmatprep.subr.mxu0 0.0
  %2382 = vmatpush1.msra.mxu0 0.0
  %2383 = vmatprep.subr.mxu0 0.0
  %2384 = vmatpush1.msra.mxu0 0.0
  %2385 = vmatprep.subr.mxu0 0.0
  %2386 = vmatpush1.msra.mxu0 0.0
  %2387 = vmatprep.subr.mxu0 0.0
  %2388 = vmatpush1.msra.mxu0 0.0
  %2389 = vmatprep.subr.mxu0 0.0
  %2390 = vmatpush1.msra.mxu0 0.0
  %2391 = vmatprep.subr.mxu0 0.0
  %2392 = vmatpush1.msra.mxu0 0.0
  %2393 = vmatprep.subr.mxu0 0.0
  %2394 = vmatpush1.msra.mxu0 0.0
  %2395 = vmatprep.subr.mxu0 0.0
  %2396 = vmatpush1.msra.mxu0 0.0
  %2397 = vmatprep.subr.mxu0 0.0
  %2398 = vmatpush1.msra.mxu0 0.0
  %2399 = vmatprep.subr.mxu0 0.0
  %2400 = vmatpush1.msra.mxu0 0.0
  %2401 = vmatprep.subr.mxu0 0.0
  %2402 = vmatpush1.msra.mxu0 0.0
  %2403 = vmatprep.subr.mxu0 0.0
  %2404 = vmatpush1.msra.mxu0 0.0
  %2405 = vmatprep.subr.mxu0 0.0
  %2406 = vmatpush1.msra.mxu0 0.0
  %2407 = vmatprep.subr.mxu0 0.0
  %2408 = vmatpush1.msra.mxu0 0.0
  %2409 = vmatprep.subr.mxu0 0.0
  %2410 = vmatpush1.msra.mxu0 0.0
  %2411 = vmatprep.subr.mxu0 0.0
  %2412 = vmatpush1.msra.mxu0 0.0
  %2413 = vmatprep.subr.mxu0 0.0
  %2414 = vmatpush1.msra.mxu0 0.0
  %2415 = vmatprep.subr.mxu0 0.0
  %2416 = vmatpush1.msra.mxu0 0.0
  %2417 = vmatprep.subr.mxu0 0.0
  %2418 = vmatpush1.msra.mxu0 0.0
  %2419 = vmatprep.subr.mxu0 0.0
  %2420 = vmatpush1.msra.mxu0 0.0
  %2421 = vmatprep.subr.mxu0 0.0
  %2422 = vmatpush1.msra.mxu0 0.0
  %2423 = vmatprep.subr.mxu0 0.0
  %2424 = vmatpush1.msra.mxu0 0.0
  %2425 = vmatprep.subr.mxu0 0.0
  %2426 = vmatpush1.msra.mxu0 0.0
  %2427 = vmatprep.subr.mxu0 0.0
  %2428 = vmatpush1.msra.mxu0 0.0
  %2429 = vmatprep.subr.mxu0 0.0
  %2430 = vmatpush1.msra.mxu0 0.0
  %2431 = vmatprep.subr.mxu0 0.0
  %2432 = vmatpush1.msra.mxu0 0.0
  %2433 = vmatprep.subr.mxu0 0.0
  %2434 = vmatpush1.msra.mxu0 0.0
  %2435 = vmatprep.subr.mxu0 0.0
  %2436 = vmatpush1.msra.mxu0 0.0
  %2437 = vmatprep.subr.mxu0 0.0
  %2438 = vmatpush1.msra.mxu0 0.0
  %2439 = vmatprep.mubr.f32.mxu0 0.0
  %2440 = vmatmul.mubr.f32.gmra.mrb[0].mxu0 %v2201
  %v2441 = vpop.f32.mrb[0].mxu0
  %v2442 = vadd.f32 0.0, %v2441
  %v2443 = vpop.f32.mrb[0].mxu0
  %2444 = vdwg.mxu0
  %v2445 = vadd.f32 %v135, %v2442
  %v2446 = vxor.u32 %v2445, 2147483648
  %v2447 = vmul.f32 %v2446, 1.442695
  %v2448 = vpow.pop %v2447
  %v2449 = vadd.f32 %v2448, 1.0
  %v2450 = vrcp.pop %v2449
  %v2451 = vmul.f32 1.0, %v2450
  %v2452 = vtanh.pop %v2445
  %v2454 = vrot.slane %v2190, 6
  %v2456 = vmul.f32 %v2451, %v2454
  %2458 = vrot.lane.b32.xlu0 %v2452, 96
  %v2459 = vpop.permute.xlu0 %2458
  %v2461 = vmul.f32 %v2451, %v2459
  %2463 = vrot.lane.b32.xlu0 %v2461, 16
  %v2464 = vpop.permute.xlu0 %2463
  %v2466 = vadd.f32 %v2456, %v2464
  %v2467 = vtanh.pop %v2466
  %2469 = vrot.lane.b32.xlu0 %v2467, 32
  %v2470 = vpop.permute.xlu0 %2469
  %v2472 = vmul.f32 %v2451, %v2470
  %2474 = vrot.lane.b32.xlu0 %v2472, 80
  %v2475 = vpop.permute.xlu0 %2474
  %v2476 = vsel %vm145, %v2475, 0
  %2478 = vmatprep.subr.mxu0 0.0
  %2479 = vmatpush1.msra.mxu0 %v140
  %2480 = vmatprep.subr.mxu0 0.0
  %2481 = vmatpush1.msra.mxu0 %v141
  %2482 = vmatprep.subr.mxu0 0.0
  %2483 = vmatpush1.msra.mxu0 0.0
  %2484 = vmatprep.subr.mxu0 0.0
  %2485 = vmatpush1.msra.mxu0 0.0
  %2486 = vmatprep.subr.mxu0 0.0
  %2487 = vmatpush1.msra.mxu0 0.0
  %2488 = vmatprep.subr.mxu0 0.0
  %2489 = vmatpush1.msra.mxu0 0.0
  %2490 = vmatprep.subr.mxu0 0.0
  %2491 = vmatpush1.msra.mxu0 0.0
  %2492 = vmatprep.subr.mxu0 0.0
  %2493 = vmatpush1.msra.mxu0 0.0
  %2494 = vmatprep.subr.mxu0 0.0
  %2495 = vmatpush1.msra.mxu0 0.0
  %2496 = vmatprep.subr.mxu0 0.0
  %2497 = vmatpush1.msra.mxu0 0.0
  %2498 = vmatprep.subr.mxu0 0.0
  %2499 = vmatpush1.msra.mxu0 0.0
  %2500 = vmatprep.subr.mxu0 0.0
  %2501 = vmatpush1.msra.mxu0 0.0
  %2502 = vmatprep.subr.mxu0 0.0
  %2503 = vmatpush1.msra.mxu0 0.0
  %2504 = vmatprep.subr.mxu0 0.0
  %2505 = vmatpush1.msra.mxu0 0.0
  %2506 = vmatprep.subr.mxu0 0.0
  %2507 = vmatpush1.msra.mxu0 0.0
  %2508 = vmatprep.subr.mxu0 0.0
  %2509 = vmatpush1.msra.mxu0 0.0
  %2510 = vmatprep.subr.mxu0 0.0
  %2511 = vmatpush1.msra.mxu0 0.0
  %2512 = vmatprep.subr.mxu0 0.0
  %2513 = vmatpush1.msra.mxu0 0.0
  %2514 = vmatprep.subr.mxu0 0.0
  %2515 = vmatpush1.msra.mxu0 0.0
  %2516 = vmatprep.subr.mxu0 0.0
  %2517 = vmatpush1.msra.mxu0 0.0
  %2518 = vmatprep.subr.mxu0 0.0
  %2519 = vmatpush1.msra.mxu0 0.0
  %2520 = vmatprep.subr.mxu0 0.0
  %2521 = vmatpush1.msra.mxu0 0.0
  %2522 = vmatprep.subr.mxu0 0.0
  %2523 = vmatpush1.msra.mxu0 0.0
  %2524 = vmatprep.subr.mxu0 0.0
  %2525 = vmatpush1.msra.mxu0 0.0
  %2526 = vmatprep.subr.mxu0 0.0
  %2527 = vmatpush1.msra.mxu0 0.0
  %2528 = vmatprep.subr.mxu0 0.0
  %2529 = vmatpush1.msra.mxu0 0.0
  %2530 = vmatprep.subr.mxu0 0.0
  %2531 = vmatpush1.msra.mxu0 0.0
  %2532 = vmatprep.subr.mxu0 0.0
  %2533 = vmatpush1.msra.mxu0 0.0
  %2534 = vmatprep.subr.mxu0 0.0
  %2535 = vmatpush1.msra.mxu0 0.0
  %2536 = vmatprep.subr.mxu0 0.0
  %2537 = vmatpush1.msra.mxu0 0.0
  %2538 = vmatprep.subr.mxu0 0.0
  %2539 = vmatpush1.msra.mxu0 0.0
  %2540 = vmatprep.subr.mxu0 0.0
  %2541 = vmatpush1.msra.mxu0 0.0
  %2542 = vmatprep.mubr.f32.mxu0 0.0
  %2543 = vmatmul.mubr.f32.gmra.mrb[0].mxu0 %v2476
  %v2544 = vpop.f32.mrb[0].mxu0
  %v2545 = vadd.f32 %v248, %v2544
  %v2546 = vpop.f32.mrb[0].mxu0
  %2547 = vdwg.mxu0
  %v2548 = vsel %vm145, %v2372, 0
  %2550 = vmatprep.subr.mxu0 0.0
  %2551 = vmatpush1.msra.mxu0 %v142
  %2552 = vmatprep.subr.mxu0 0.0
  %2553 = vmatpush1.msra.mxu0 %v143
  %2554 = vmatprep.subr.mxu0 0.0
  %2555 = vmatpush1.msra.mxu0 0.0
  %2556 = vmatprep.subr.mxu0 0.0
  %2557 = vmatpush1.msra.mxu0 0.0
  %2558 = vmatprep.subr.mxu0 0.0
  %2559 = vmatpush1.msra.mxu0 0.0
  %2560 = vmatprep.subr.mxu0 0.0
  %2561 = vmatpush1.msra.mxu0 0.0
  %2562 = vmatprep.subr.mxu0 0.0
  %2563 = vmatpush1.msra.mxu0 0.0
  %2564 = vmatprep.subr.mxu0 0.0
  %2565 = vmatpush1.msra.mxu0 0.0
  %2566 = vmatprep.subr.mxu0 0.0
  %2567 = vmatpush1.msra.mxu0 0.0
  %2568 = vmatprep.subr.mxu0 0.0
  %2569 = vmatpush1.msra.mxu0 0.0
  %2570 = vmatprep.subr.mxu0 0.0
  %2571 = vmatpush1.msra.mxu0 0.0
  %2572 = vmatprep.subr.mxu0 0.0
  %2573 = vmatpush1.msra.mxu0 0.0
  %2574 = vmatprep.subr.mxu0 0.0
  %2575 = vmatpush1.msra.mxu0 0.0
  %2576 = vmatprep.subr.mxu0 0.0
  %2577 = vmatpush1.msra.mxu0 0.0
  %2578 = vmatprep.subr.mxu0 0.0
  %2579 = vmatpush1.msra.mxu0 0.0
  %2580 = vmatprep.subr.mxu0 0.0
  %2581 = vmatpush1.msra.mxu0 0.0
  %2582 = vmatprep.subr.mxu0 0.0
  %2583 = vmatpush1.msra.mxu0 0.0
  %2584 = vmatprep.subr.mxu0 0.0
  %2585 = vmatpush1.msra.mxu0 0.0
  %2586 = vmatprep.subr.mxu0 0.0
  %2587 = vmatpush1.msra.mxu0 0.0
  %2588 = vmatprep.subr.mxu0 0.0
  %2589 = vmatpush1.msra.mxu0 0.0
  %2590 = vmatprep.subr.mxu0 0.0
  %2591 = vmatpush1.msra.mxu0 0.0
  %2592 = vmatprep.subr.mxu0 0.0
  %2593 = vmatpush1.msra.mxu0 0.0
  %2594 = vmatprep.subr.mxu0 0.0
  %2595 = vmatpush1.msra.mxu0 0.0
  %2596 = vmatprep.subr.mxu0 0.0
  %2597 = vmatpush1.msra.mxu0 0.0
  %2598 = vmatprep.subr.mxu0 0.0
  %2599 = vmatpush1.msra.mxu0 0.0
  %2600 = vmatprep.subr.mxu0 0.0
  %2601 = vmatpush1.msra.mxu0 0.0
  %2602 = vmatprep.subr.mxu0 0.0
  %2603 = vmatpush1.msra.mxu0 0.0
  %2604 = vmatprep.subr.mxu0 0.0
  %2605 = vmatpush1.msra.mxu0 0.0
  %2606 = vmatprep.subr.mxu0 0.0
  %2607 = vmatpush1.msra.mxu0 0.0
  %2608 = vmatprep.subr.mxu0 0.0
  %2609 = vmatpush1.msra.mxu0 0.0
  %2610 = vmatprep.subr.mxu0 0.0
  %2611 = vmatpush1.msra.mxu0 0.0
  %2612 = vmatprep.subr.mxu0 0.0
  %2613 = vmatpush1.msra.mxu0 0.0
  %2614 = vmatprep.mubr.f32.mxu0 0.0
  %2615 = vmatmul.mubr.f32.gmra.mrb[0].mxu0 %v2548
  %v2616 = vpop.f32.mrb[0].mxu0
  %v2617 = vadd.f32 0.0, %v2616
  %v2618 = vpop.f32.mrb[0].mxu0
  %2619 = vdwg.mxu0
  %v2620 = vadd.f32 %v2545, %v2617
  %v2621 = vxor.u32 %v2620, 2147483648
  %v2622 = vmul.f32 %v2621, 1.442695
  %v2623 = vpow.pop %v2622
  %v2624 = vadd.f32 %v2623, 1.0
  %v2625 = vrcp.pop %v2624
  %v2626 = vmul.f32 1.0, %v2625
  %v2627 = vtanh.pop %v2620
  %v2628 = vmul.f32 %v2626, %v2363
  %2630 = vrot.lane.b32.xlu0 %v2627, 96
  %v2631 = vpop.permute.xlu0 %2630
  %v2633 = vmul.f32 %v2626, %v2631
  %2635 = vrot.lane.b32.xlu0 %v2633, 16
  %v2636 = vpop.permute.xlu0 %2635
  %v2638 = vadd.f32 %v2628, %v2636
  %v2639 = vtanh.pop %v2638
  %2641 = vrot.lane.b32.xlu0 %v2639, 32
  %v2642 = vpop.permute.xlu0 %2641
  %v2644 = vmul.f32 %v2626, %v2642
  %2646 = vrot.lane.b32.xlu0 %v2644, 80
  %v2647 = vpop.permute.xlu0 %2646
  %2649 = vst.msk [vmem:[#allocation2 + $0x10] sm:$0x3] %vm424, %v2647
  %2650 = vmatprep.subr.mxu0 0.0
  %2651 = vmatpush1.msra.mxu0 %v138
  %2652 = vmatprep.subr.mxu0 0.0
  %2653 = vmatpush1.msra.mxu0 %v139
  %2654 = vmatprep.subr.mxu0 0.0
  %2655 = vmatpush1.msra.mxu0 0.0
  %2656 = vmatprep.subr.mxu0 0.0
  %2657 = vmatpush1.msra.mxu0 0.0
  %2658 = vmatprep.subr.mxu0 0.0
  %2659 = vmatpush1.msra.mxu0 0.0
  %2660 = vmatprep.subr.mxu0 0.0
  %2661 = vmatpush1.msra.mxu0 0.0
  %2662 = vmatprep.subr.mxu0 0.0
  %2663 = vmatpush1.msra.mxu0 0.0
  %2664 = vmatprep.subr.mxu0 0.0
  %2665 = vmatpush1.msra.mxu0 0.0
  %2666 = vmatprep.subr.mxu0 0.0
  %2667 = vmatpush1.msra.mxu0 0.0
  %2668 = vmatprep.subr.mxu0 0.0
  %2669 = vmatpush1.msra.mxu0 0.0
  %2670 = vmatprep.subr.mxu0 0.0
  %2671 = vmatpush1.msra.mxu0 0.0
  %2672 = vmatprep.subr.mxu0 0.0
  %2673 = vmatpush1.msra.mxu0 0.0
  %2674 = vmatprep.subr.mxu0 0.0
  %2675 = vmatpush1.msra.mxu0 0.0
  %2676 = vmatprep.subr.mxu0 0.0
  %2677 = vmatpush1.msra.mxu0 0.0
  %2678 = vmatprep.subr.mxu0 0.0
  %2679 = vmatpush1.msra.mxu0 0.0
  %2680 = vmatprep.subr.mxu0 0.0
  %2681 = vmatpush1.msra.mxu0 0.0
  %2682 = vmatprep.subr.mxu0 0.0
  %2683 = vmatpush1.msra.mxu0 0.0
  %2684 = vmatprep.subr.mxu0 0.0
  %2685 = vmatpush1.msra.mxu0 0.0
  %2686 = vmatprep.subr.mxu0 0.0
  %2687 = vmatpush1.msra.mxu0 0.0
  %2688 = vmatprep.subr.mxu0 0.0
  %2689 = vmatpush1.msra.mxu0 0.0
  %2690 = vmatprep.subr.mxu0 0.0
  %2691 = vmatpush1.msra.mxu0 0.0
  %2692 = vmatprep.subr.mxu0 0.0
  %2693 = vmatpush1.msra.mxu0 0.0
  %2694 = vmatprep.subr.mxu0 0.0
  %2695 = vmatpush1.msra.mxu0 0.0
  %2696 = vmatprep.subr.mxu0 0.0
  %2697 = vmatpush1.msra.mxu0 0.0
  %2698 = vmatprep.subr.mxu0 0.0
  %2699 = vmatpush1.msra.mxu0 0.0
  %2700 = vmatprep.subr.mxu0 0.0
  %2701 = vmatpush1.msra.mxu0 0.0
  %2702 = vmatprep.subr.mxu0 0.0
  %2703 = vmatpush1.msra.mxu0 0.0
  %2704 = vmatprep.subr.mxu0 0.0
  %2705 = vmatpush1.msra.mxu0 0.0
  %2706 = vmatprep.subr.mxu0 0.0
  %2707 = vmatpush1.msra.mxu0 0.0
  %2708 = vmatprep.subr.mxu0 0.0
  %2709 = vmatpush1.msra.mxu0 0.0
  %2710 = vmatprep.subr.mxu0 0.0
  %2711 = vmatpush1.msra.mxu0 0.0
  %2712 = vmatprep.subr.mxu0 0.0
  %2713 = vmatpush1.msra.mxu0 0.0
  %2714 = vmatprep.mubr.f32.mxu0 0.0
  %2715 = vmatmul.mubr.f32.gmra.mrb[0].mxu0 %v2476
  %v2716 = vpop.f32.mrb[0].mxu0
  %v2717 = vadd.f32 0.0, %v2716
  %v2718 = vpop.f32.mrb[0].mxu0
  %2719 = vdwg.mxu0
  %v2721 = vrot.slane %v2717, 6
  %v2723 = vadd.f32 %v135, %v2721
  %v2724 = vxor.u32 %v2723, 2147483648
  %v2725 = vmul.f32 %v2724, 1.442695
  %v2726 = vpow.pop %v2725
  %v2727 = vadd.f32 %v2726, 1.0
  %v2728 = vrcp.pop %v2727
  %v2729 = vmul.f32 1.0, %v2728
  %v2730 = vtanh.pop %v2723
  %v2732 = vrot.slane %v2466, 6
  %v2734 = vmul.f32 %v2729, %v2732
  %2736 = vrot.lane.b32.xlu0 %v2730, 96
  %v2737 = vpop.permute.xlu0 %2736
  %v2739 = vmul.f32 %v2729, %v2737
  %2741 = vrot.lane.b32.xlu0 %v2739, 16
  %v2742 = vpop.permute.xlu0 %2741
  %v2744 = vadd.f32 %v2734, %v2742
  %v2745 = vtanh.pop %v2744
  %2747 = vrot.lane.b32.xlu0 %v2745, 32
  %v2748 = vpop.permute.xlu0 %2747
  %v2750 = vmul.f32 %v2729, %v2748
  %v2752 = vrot.slane %v2750, 2
  %2753 = vrot.lane.b32.xlu0 %v2752, 80
  %v2754 = vpop.permute.xlu0 %2753
  %v2755 = vsel %vm145, %v2754, 0
  %2757 = vmatprep.subr.mxu0 0.0
  %2758 = vmatpush1.msra.mxu0 %v140
  %2759 = vmatprep.subr.mxu0 0.0
  %2760 = vmatpush1.msra.mxu0 %v141
  %2761 = vmatprep.subr.mxu0 0.0
  %2762 = vmatpush1.msra.mxu0 0.0
  %2763 = vmatprep.subr.mxu0 0.0
  %2764 = vmatpush1.msra.mxu0 0.0
  %2765 = vmatprep.subr.mxu0 0.0
  %2766 = vmatpush1.msra.mxu0 0.0
  %2767 = vmatprep.subr.mxu0 0.0
  %2768 = vmatpush1.msra.mxu0 0.0
  %2769 = vmatprep.subr.mxu0 0.0
  %2770 = vmatpush1.msra.mxu0 0.0
  %2771 = vmatprep.subr.mxu0 0.0
  %2772 = vmatpush1.msra.mxu0 0.0
  %2773 = vmatprep.subr.mxu0 0.0
  %2774 = vmatpush1.msra.mxu0 0.0
  %2775 = vmatprep.subr.mxu0 0.0
  %2776 = vmatpush1.msra.mxu0 0.0
  %2777 = vmatprep.subr.mxu0 0.0
  %2778 = vmatpush1.msra.mxu0 0.0
  %2779 = vmatprep.subr.mxu0 0.0
  %2780 = vmatpush1.msra.mxu0 0.0
  %2781 = vmatprep.subr.mxu0 0.0
  %2782 = vmatpush1.msra.mxu0 0.0
  %2783 = vmatprep.subr.mxu0 0.0
  %2784 = vmatpush1.msra.mxu0 0.0
  %2785 = vmatprep.subr.mxu0 0.0
  %2786 = vmatpush1.msra.mxu0 0.0
  %2787 = vmatprep.subr.mxu0 0.0
  %2788 = vmatpush1.msra.mxu0 0.0
  %2789 = vmatprep.subr.mxu0 0.0
  %2790 = vmatpush1.msra.mxu0 0.0
  %2791 = vmatprep.subr.mxu0 0.0
  %2792 = vmatpush1.msra.mxu0 0.0
  %2793 = vmatprep.subr.mxu0 0.0
  %2794 = vmatpush1.msra.mxu0 0.0
  %2795 = vmatprep.subr.mxu0 0.0
  %2796 = vmatpush1.msra.mxu0 0.0
  %2797 = vmatprep.subr.mxu0 0.0
  %2798 = vmatpush1.msra.mxu0 0.0
  %2799 = vmatprep.subr.mxu0 0.0
  %2800 = vmatpush1.msra.mxu0 0.0
  %2801 = vmatprep.subr.mxu0 0.0
  %2802 = vmatpush1.msra.mxu0 0.0
  %2803 = vmatprep.subr.mxu0 0.0
  %2804 = vmatpush1.msra.mxu0 0.0
  %2805 = vmatprep.subr.mxu0 0.0
  %2806 = vmatpush1.msra.mxu0 0.0
  %2807 = vmatprep.subr.mxu0 0.0
  %2808 = vmatpush1.msra.mxu0 0.0
  %2809 = vmatprep.subr.mxu0 0.0
  %2810 = vmatpush1.msra.mxu0 0.0
  %2811 = vmatprep.subr.mxu0 0.0
  %2812 = vmatpush1.msra.mxu0 0.0
  %2813 = vmatprep.subr.mxu0 0.0
  %2814 = vmatpush1.msra.mxu0 0.0
  %2815 = vmatprep.subr.mxu0 0.0
  %2816 = vmatpush1.msra.mxu0 0.0
  %2817 = vmatprep.subr.mxu0 0.0
  %2818 = vmatpush1.msra.mxu0 0.0
  %2819 = vmatprep.subr.mxu0 0.0
  %2820 = vmatpush1.msra.mxu0 0.0
  %2821 = vmatprep.mubr.f32.mxu0 0.0
  %2822 = vmatmul.mubr.f32.gmra.mrb[0].mxu0 %v2755
  %v2823 = vpop.f32.mrb[0].mxu0
  %v2824 = vadd.f32 %v248, %v2823
  %v2825 = vpop.f32.mrb[0].mxu0
  %2826 = vdwg.mxu0
  %v2827 = vsel %vm145, %v2647, 0
  %2829 = vmatprep.subr.mxu0 0.0
  %2830 = vmatpush1.msra.mxu0 %v142
  %2831 = vmatprep.subr.mxu0 0.0
  %2832 = vmatpush1.msra.mxu0 %v143
  %2833 = vmatprep.subr.mxu0 0.0
  %2834 = vmatpush1.msra.mxu0 0.0
  %2835 = vmatprep.subr.mxu0 0.0
  %2836 = vmatpush1.msra.mxu0 0.0
  %2837 = vmatprep.subr.mxu0 0.0
  %2838 = vmatpush1.msra.mxu0 0.0
  %2839 = vmatprep.subr.mxu0 0.0
  %2840 = vmatpush1.msra.mxu0 0.0
  %2841 = vmatprep.subr.mxu0 0.0
  %2842 = vmatpush1.msra.mxu0 0.0
  %2843 = vmatprep.subr.mxu0 0.0
  %2844 = vmatpush1.msra.mxu0 0.0
  %2845 = vmatprep.subr.mxu0 0.0
  %2846 = vmatpush1.msra.mxu0 0.0
  %2847 = vmatprep.subr.mxu0 0.0
  %2848 = vmatpush1.msra.mxu0 0.0
  %2849 = vmatprep.subr.mxu0 0.0
  %2850 = vmatpush1.msra.mxu0 0.0
  %2851 = vmatprep.subr.mxu0 0.0
  %2852 = vmatpush1.msra.mxu0 0.0
  %2853 = vmatprep.subr.mxu0 0.0
  %2854 = vmatpush1.msra.mxu0 0.0
  %2855 = vmatprep.subr.mxu0 0.0
  %2856 = vmatpush1.msra.mxu0 0.0
  %2857 = vmatprep.subr.mxu0 0.0
  %2858 = vmatpush1.msra.mxu0 0.0
  %2859 = vmatprep.subr.mxu0 0.0
  %2860 = vmatpush1.msra.mxu0 0.0
  %2861 = vmatprep.subr.mxu0 0.0
  %2862 = vmatpush1.msra.mxu0 0.0
  %2863 = vmatprep.subr.mxu0 0.0
  %2864 = vmatpush1.msra.mxu0 0.0
  %2865 = vmatprep.subr.mxu0 0.0
  %2866 = vmatpush1.msra.mxu0 0.0
  %2867 = vmatprep.subr.mxu0 0.0
  %2868 = vmatpush1.msra.mxu0 0.0
  %2869 = vmatprep.subr.mxu0 0.0
  %2870 = vmatpush1.msra.mxu0 0.0
  %2871 = vmatprep.subr.mxu0 0.0
  %2872 = vmatpush1.msra.mxu0 0.0
  %2873 = vmatprep.subr.mxu0 0.0
  %2874 = vmatpush1.msra.mxu0 0.0
  %2875 = vmatprep.subr.mxu0 0.0
  %2876 = vmatpush1.msra.mxu0 0.0
  %2877 = vmatprep.subr.mxu0 0.0
  %2878 = vmatpush1.msra.mxu0 0.0
  %2879 = vmatprep.subr.mxu0 0.0
  %2880 = vmatpush1.msra.mxu0 0.0
  %2881 = vmatprep.subr.mxu0 0.0
  %2882 = vmatpush1.msra.mxu0 0.0
  %2883 = vmatprep.subr.mxu0 0.0
  %2884 = vmatpush1.msra.mxu0 0.0
  %2885 = vmatprep.subr.mxu0 0.0
  %2886 = vmatpush1.msra.mxu0 0.0
  %2887 = vmatprep.subr.mxu0 0.0
  %2888 = vmatpush1.msra.mxu0 0.0
  %2889 = vmatprep.subr.mxu0 0.0
  %2890 = vmatpush1.msra.mxu0 0.0
  %2891 = vmatprep.subr.mxu0 0.0
  %2892 = vmatpush1.msra.mxu0 0.0
  %2893 = vmatprep.mubr.f32.mxu0 0.0
  %2894 = vmatmul.mubr.f32.gmra.mrb[0].mxu0 %v2827
  %v2895 = vpop.f32.mrb[0].mxu0
  %v2896 = vadd.f32 0.0, %v2895
  %v2897 = vpop.f32.mrb[0].mxu0
  %2898 = vdwg.mxu0
  %v2899 = vadd.f32 %v2824, %v2896
  %v2900 = vxor.u32 %v2899, 2147483648
  %v2901 = vmul.f32 %v2900, 1.442695
  %v2902 = vpow.pop %v2901
  %v2903 = vadd.f32 %v2902, 1.0
  %v2904 = vrcp.pop %v2903
  %v2905 = vmul.f32 1.0, %v2904
  %v2906 = vtanh.pop %v2899
  %v2907 = vmul.f32 %v2905, %v2638
  %2909 = vrot.lane.b32.xlu0 %v2906, 96
  %v2910 = vpop.permute.xlu0 %2909
  %v2912 = vmul.f32 %v2905, %v2910
  %2914 = vrot.lane.b32.xlu0 %v2912, 16
  %v2915 = vpop.permute.xlu0 %2914
  %v2917 = vadd.f32 %v2907, %v2915
  %v2918 = vtanh.pop %v2917
  %2920 = vrot.lane.b32.xlu0 %v2918, 32
  %v2921 = vpop.permute.xlu0 %2920
  %v2923 = vmul.f32 %v2905, %v2921
  %2925 = vrot.lane.b32.xlu0 %v2923, 80
  %v2926 = vpop.permute.xlu0 %2925
  %2928 = vst.msk [vmem:[#allocation2 + $0x12] sm:$0x3] %vm424, %v2926
  %2929 = vmatprep.subr.mxu0 0.0
  %2930 = vmatpush1.msra.mxu0 %v138
  %2931 = vmatprep.subr.mxu0 0.0
  %2932 = vmatpush1.msra.mxu0 %v139
  %2933 = vmatprep.subr.mxu0 0.0
  %2934 = vmatpush1.msra.mxu0 0.0
  %2935 = vmatprep.subr.mxu0 0.0
  %2936 = vmatpush1.msra.mxu0 0.0
  %2937 = vmatprep.subr.mxu0 0.0
  %2938 = vmatpush1.msra.mxu0 0.0
  %2939 = vmatprep.subr.mxu0 0.0
  %2940 = vmatpush1.msra.mxu0 0.0
  %2941 = vmatprep.subr.mxu0 0.0
  %2942 = vmatpush1.msra.mxu0 0.0
  %2943 = vmatprep.subr.mxu0 0.0
  %2944 = vmatpush1.msra.mxu0 0.0
  %2945 = vmatprep.subr.mxu0 0.0
  %2946 = vmatpush1.msra.mxu0 0.0
  %2947 = vmatprep.subr.mxu0 0.0
  %2948 = vmatpush1.msra.mxu0 0.0
  %2949 = vmatprep.subr.mxu0 0.0
  %2950 = vmatpush1.msra.mxu0 0.0
  %2951 = vmatprep.subr.mxu0 0.0
  %2952 = vmatpush1.msra.mxu0 0.0
  %2953 = vmatprep.subr.mxu0 0.0
  %2954 = vmatpush1.msra.mxu0 0.0
  %2955 = vmatprep.subr.mxu0 0.0
  %2956 = vmatpush1.msra.mxu0 0.0
  %2957 = vmatprep.subr.mxu0 0.0
  %2958 = vmatpush1.msra.mxu0 0.0
  %2959 = vmatprep.subr.mxu0 0.0
  %2960 = vmatpush1.msra.mxu0 0.0
  %2961 = vmatprep.subr.mxu0 0.0
  %2962 = vmatpush1.msra.mxu0 0.0
  %2963 = vmatprep.subr.mxu0 0.0
  %2964 = vmatpush1.msra.mxu0 0.0
  %2965 = vmatprep.subr.mxu0 0.0
  %2966 = vmatpush1.msra.mxu0 0.0
  %2967 = vmatprep.subr.mxu0 0.0
  %2968 = vmatpush1.msra.mxu0 0.0
  %2969 = vmatprep.subr.mxu0 0.0
  %2970 = vmatpush1.msra.mxu0 0.0
  %2971 = vmatprep.subr.mxu0 0.0
  %2972 = vmatpush1.msra.mxu0 0.0
  %2973 = vmatprep.subr.mxu0 0.0
  %2974 = vmatpush1.msra.mxu0 0.0
  %2975 = vmatprep.subr.mxu0 0.0
  %2976 = vmatpush1.msra.mxu0 0.0
  %2977 = vmatprep.subr.mxu0 0.0
  %2978 = vmatpush1.msra.mxu0 0.0
  %2979 = vmatprep.subr.mxu0 0.0
  %2980 = vmatpush1.msra.mxu0 0.0
  %2981 = vmatprep.subr.mxu0 0.0
  %2982 = vmatpush1.msra.mxu0 0.0
  %2983 = vmatprep.subr.mxu0 0.0
  %2984 = vmatpush1.msra.mxu0 0.0
  %2985 = vmatprep.subr.mxu0 0.0
  %2986 = vmatpush1.msra.mxu0 0.0
  %2987 = vmatprep.subr.mxu0 0.0
  %2988 = vmatpush1.msra.mxu0 0.0
  %2989 = vmatprep.subr.mxu0 0.0
  %2990 = vmatpush1.msra.mxu0 0.0
  %2991 = vmatprep.subr.mxu0 0.0
  %2992 = vmatpush1.msra.mxu0 0.0
  %2993 = vmatprep.mubr.f32.mxu0 0.0
  %2994 = vmatmul.mubr.f32.gmra.mrb[0].mxu0 %v2755
  %v2995 = vpop.f32.mrb[0].mxu0
  %v2996 = vadd.f32 0.0, %v2995
  %v2997 = vpop.f32.mrb[0].mxu0
  %2998 = vdwg.mxu0
  %v3000 = vrot.slane %v2996, 4
  %v3002 = vadd.f32 %v135, %v3000
  %v3003 = vxor.u32 %v3002, 2147483648
  %v3004 = vmul.f32 %v3003, 1.442695
  %v3005 = vpow.pop %v3004
  %v3006 = vadd.f32 %v3005, 1.0
  %v3007 = vrcp.pop %v3006
  %v3008 = vmul.f32 1.0, %v3007
  %v3009 = vtanh.pop %v3002
  %v3011 = vrot.slane %v2744, 6
  %v3013 = vmul.f32 %v3008, %v3011
  %3015 = vrot.lane.b32.xlu0 %v3009, 96
  %v3016 = vpop.permute.xlu0 %3015
  %v3018 = vmul.f32 %v3008, %v3016
  %3020 = vrot.lane.b32.xlu0 %v3018, 16
  %v3021 = vpop.permute.xlu0 %3020
  %v3023 = vadd.f32 %v3013, %v3021
  %v3024 = vtanh.pop %v3023
  %3026 = vrot.lane.b32.xlu0 %v3024, 32
  %v3027 = vpop.permute.xlu0 %3026
  %v3029 = vmul.f32 %v3008, %v3027
  %v3031 = vrot.slane %v3029, 4
  %3032 = vrot.lane.b32.xlu0 %v3031, 80
  %v3033 = vpop.permute.xlu0 %3032
  %v3034 = vsel %vm145, %v3033, 0
  %3036 = vmatprep.subr.mxu0 0.0
  %3037 = vmatpush1.msra.mxu0 %v140
  %3038 = vmatprep.subr.mxu0 0.0
  %3039 = vmatpush1.msra.mxu0 %v141
  %3040 = vmatprep.subr.mxu0 0.0
  %3041 = vmatpush1.msra.mxu0 0.0
  %3042 = vmatprep.subr.mxu0 0.0
  %3043 = vmatpush1.msra.mxu0 0.0
  %3044 = vmatprep.subr.mxu0 0.0
  %3045 = vmatpush1.msra.mxu0 0.0
  %3046 = vmatprep.subr.mxu0 0.0
  %3047 = vmatpush1.msra.mxu0 0.0
  %3048 = vmatprep.subr.mxu0 0.0
  %3049 = vmatpush1.msra.mxu0 0.0
  %3050 = vmatprep.subr.mxu0 0.0
  %3051 = vmatpush1.msra.mxu0 0.0
  %3052 = vmatprep.subr.mxu0 0.0
  %3053 = vmatpush1.msra.mxu0 0.0
  %3054 = vmatprep.subr.mxu0 0.0
  %3055 = vmatpush1.msra.mxu0 0.0
  %3056 = vmatprep.subr.mxu0 0.0
  %3057 = vmatpush1.msra.mxu0 0.0
  %3058 = vmatprep.subr.mxu0 0.0
  %3059 = vmatpush1.msra.mxu0 0.0
  %3060 = vmatprep.subr.mxu0 0.0
  %3061 = vmatpush1.msra.mxu0 0.0
  %3062 = vmatprep.subr.mxu0 0.0
  %3063 = vmatpush1.msra.mxu0 0.0
  %3064 = vmatprep.subr.mxu0 0.0
  %3065 = vmatpush1.msra.mxu0 0.0
  %3066 = vmatprep.subr.mxu0 0.0
  %3067 = vmatpush1.msra.mxu0 0.0
  %3068 = vmatprep.subr.mxu0 0.0
  %3069 = vmatpush1.msra.mxu0 0.0
  %3070 = vmatprep.subr.mxu0 0.0
  %3071 = vmatpush1.msra.mxu0 0.0
  %3072 = vmatprep.subr.mxu0 0.0
  %3073 = vmatpush1.msra.mxu0 0.0
  %3074 = vmatprep.subr.mxu0 0.0
  %3075 = vmatpush1.msra.mxu0 0.0
  %3076 = vmatprep.subr.mxu0 0.0
  %3077 = vmatpush1.msra.mxu0 0.0
  %3078 = vmatprep.subr.mxu0 0.0
  %3079 = vmatpush1.msra.mxu0 0.0
  %3080 = vmatprep.subr.mxu0 0.0
  %3081 = vmatpush1.msra.mxu0 0.0
  %3082 = vmatprep.subr.mxu0 0.0
  %3083 = vmatpush1.msra.mxu0 0.0
  %3084 = vmatprep.subr.mxu0 0.0
  %3085 = vmatpush1.msra.mxu0 0.0
  %3086 = vmatprep.subr.mxu0 0.0
  %3087 = vmatpush1.msra.mxu0 0.0
  %3088 = vmatprep.subr.mxu0 0.0
  %3089 = vmatpush1.msra.mxu0 0.0
  %3090 = vmatprep.subr.mxu0 0.0
  %3091 = vmatpush1.msra.mxu0 0.0
  %3092 = vmatprep.subr.mxu0 0.0
  %3093 = vmatpush1.msra.mxu0 0.0
  %3094 = vmatprep.subr.mxu0 0.0
  %3095 = vmatpush1.msra.mxu0 0.0
  %3096 = vmatprep.subr.mxu0 0.0
  %3097 = vmatpush1.msra.mxu0 0.0
  %3098 = vmatprep.subr.mxu0 0.0
  %3099 = vmatpush1.msra.mxu0 0.0
  %3100 = vmatprep.mubr.f32.mxu0 0.0
  %3101 = vmatmul.mubr.f32.gmra.mrb[0].mxu0 %v3034
  %v3102 = vpop.f32.mrb[0].mxu0
  %v3103 = vadd.f32 %v248, %v3102
  %v3104 = vpop.f32.mrb[0].mxu0
  %3105 = vdwg.mxu0
  %v3106 = vsel %vm145, %v2926, 0
  %3108 = vmatprep.subr.mxu0 0.0
  %3109 = vmatpush1.msra.mxu0 %v142
  %3110 = vmatprep.subr.mxu0 0.0
  %3111 = vmatpush1.msra.mxu0 %v143
  %3112 = vmatprep.subr.mxu0 0.0
  %3113 = vmatpush1.msra.mxu0 0.0
  %3114 = vmatprep.subr.mxu0 0.0
  %3115 = vmatpush1.msra.mxu0 0.0
  %3116 = vmatprep.subr.mxu0 0.0
  %3117 = vmatpush1.msra.mxu0 0.0
  %3118 = vmatprep.subr.mxu0 0.0
  %3119 = vmatpush1.msra.mxu0 0.0
  %3120 = vmatprep.subr.mxu0 0.0
  %3121 = vmatpush1.msra.mxu0 0.0
  %3122 = vmatprep.subr.mxu0 0.0
  %3123 = vmatpush1.msra.mxu0 0.0
  %3124 = vmatprep.subr.mxu0 0.0
  %3125 = vmatpush1.msra.mxu0 0.0
  %3126 = vmatprep.subr.mxu0 0.0
  %3127 = vmatpush1.msra.mxu0 0.0
  %3128 = vmatprep.subr.mxu0 0.0
  %3129 = vmatpush1.msra.mxu0 0.0
  %3130 = vmatprep.subr.mxu0 0.0
  %3131 = vmatpush1.msra.mxu0 0.0
  %3132 = vmatprep.subr.mxu0 0.0
  %3133 = vmatpush1.msra.mxu0 0.0
  %3134 = vmatprep.subr.mxu0 0.0
  %3135 = vmatpush1.msra.mxu0 0.0
  %3136 = vmatprep.subr.mxu0 0.0
  %3137 = vmatpush1.msra.mxu0 0.0
  %3138 = vmatprep.subr.mxu0 0.0
  %3139 = vmatpush1.msra.mxu0 0.0
  %3140 = vmatprep.subr.mxu0 0.0
  %3141 = vmatpush1.msra.mxu0 0.0
  %3142 = vmatprep.subr.mxu0 0.0
  %3143 = vmatpush1.msra.mxu0 0.0
  %3144 = vmatprep.subr.mxu0 0.0
  %3145 = vmatpush1.msra.mxu0 0.0
  %3146 = vmatprep.subr.mxu0 0.0
  %3147 = vmatpush1.msra.mxu0 0.0
  %3148 = vmatprep.subr.mxu0 0.0
  %3149 = vmatpush1.msra.mxu0 0.0
  %3150 = vmatprep.subr.mxu0 0.0
  %3151 = vmatpush1.msra.mxu0 0.0
  %3152 = vmatprep.subr.mxu0 0.0
  %3153 = vmatpush1.msra.mxu0 0.0
  %3154 = vmatprep.subr.mxu0 0.0
  %3155 = vmatpush1.msra.mxu0 0.0
  %3156 = vmatprep.subr.mxu0 0.0
  %3157 = vmatpush1.msra.mxu0 0.0
  %3158 = vmatprep.subr.mxu0 0.0
  %3159 = vmatpush1.msra.mxu0 0.0
  %3160 = vmatprep.subr.mxu0 0.0
  %3161 = vmatpush1.msra.mxu0 0.0
  %3162 = vmatprep.subr.mxu0 0.0
  %3163 = vmatpush1.msra.mxu0 0.0
  %3164 = vmatprep.subr.mxu0 0.0
  %3165 = vmatpush1.msra.mxu0 0.0
  %3166 = vmatprep.subr.mxu0 0.0
  %3167 = vmatpush1.msra.mxu0 0.0
  %3168 = vmatprep.subr.mxu0 0.0
  %3169 = vmatpush1.msra.mxu0 0.0
  %3170 = vmatprep.subr.mxu0 0.0
  %3171 = vmatpush1.msra.mxu0 0.0
  %3172 = vmatprep.mubr.f32.mxu0 0.0
  %3173 = vmatmul.mubr.f32.gmra.mrb[0].mxu0 %v3106
  %v3174 = vpop.f32.mrb[0].mxu0
  %v3175 = vadd.f32 0.0, %v3174
  %v3176 = vpop.f32.mrb[0].mxu0
  %3177 = vdwg.mxu0
  %v3178 = vadd.f32 %v3103, %v3175
  %v3179 = vxor.u32 %v3178, 2147483648
  %v3180 = vmul.f32 %v3179, 1.442695
  %v3181 = vpow.pop %v3180
  %v3182 = vadd.f32 %v3181, 1.0
  %v3183 = vrcp.pop %v3182
  %v3184 = vmul.f32 1.0, %v3183
  %v3185 = vtanh.pop %v3178
  %v3186 = vmul.f32 %v3184, %v2917
  %3188 = vrot.lane.b32.xlu0 %v3185, 96
  %v3189 = vpop.permute.xlu0 %3188
  %v3191 = vmul.f32 %v3184, %v3189
  %3193 = vrot.lane.b32.xlu0 %v3191, 16
  %v3194 = vpop.permute.xlu0 %3193
  %v3196 = vadd.f32 %v3186, %v3194
  %v3197 = vtanh.pop %v3196
  %3199 = vrot.lane.b32.xlu0 %v3197, 32
  %v3200 = vpop.permute.xlu0 %3199
  %v3202 = vmul.f32 %v3184, %v3200
  %3204 = vrot.lane.b32.xlu0 %v3202, 80
  %v3205 = vpop.permute.xlu0 %3204
  %3207 = vst.msk [vmem:[#allocation2 + $0x14] sm:$0x3] %vm424, %v3205
  %v3208 = vld [vmem:[#allocation2] sm:$0xff]
  %v3209 = vld [vmem:[#allocation2 + $0x8] sm:$0xff]
  %v3210 = vld [vmem:[#allocation2 + $0x10] sm:$0x3f]
  %v3211 = vld [vmem:[%s7] sm:$0xff]
  %v3212 = vld [vmem:[%s7 + $0x8] sm:$0xff]
  %v3213 = vld [vmem:[%s8] sm:$0x1]
  %v3215 = vlaneseq
  %v3216 = vshrl.u32 %v3215, 7
  %v3217 = vsub.s32 0, %v3216
  %v3218 = vrot.slane %v3213, %v3217
  %v3221 = vsel %vm145, %v3208, 0
  %v3224 = vsel %vm145, %v3209, 0
  %v3227 = vsel %vm145, %v3210, 0
  %3229 = vmatprep.subr.mxu0 0.0
  %3230 = vmatpush1.msra.mxu0 %v3211
  %3231 = vmatprep.subr.mxu0 0.0
  %3232 = vmatpush1.msra.mxu0 %v3212
  %3233 = vmatprep.subr.mxu0 0.0
  %3234 = vmatpush1.msra.mxu0 0.0
  %3235 = vmatprep.subr.mxu0 0.0
  %3236 = vmatpush1.msra.mxu0 0.0
  %3237 = vmatprep.subr.mxu0 0.0
  %3238 = vmatpush1.msra.mxu0 0.0
  %3239 = vmatprep.subr.mxu0 0.0
  %3240 = vmatpush1.msra.mxu0 0.0
  %3241 = vmatprep.subr.mxu0 0.0
  %3242 = vmatpush1.msra.mxu0 0.0
  %3243 = vmatprep.subr.mxu0 0.0
  %3244 = vmatpush1.msra.mxu0 0.0
  %3245 = vmatprep.subr.mxu0 0.0
  %3246 = vmatpush1.msra.mxu0 0.0
  %3247 = vmatprep.subr.mxu0 0.0
  %3248 = vmatpush1.msra.mxu0 0.0
  %3249 = vmatprep.subr.mxu0 0.0
  %3250 = vmatpush1.msra.mxu0 0.0
  %3251 = vmatprep.subr.mxu0 0.0
  %3252 = vmatpush1.msra.mxu0 0.0
  %3253 = vmatprep.subr.mxu0 0.0
  %3254 = vmatpush1.msra.mxu0 0.0
  %3255 = vmatprep.subr.mxu0 0.0
  %3256 = vmatpush1.msra.mxu0 0.0
  %3257 = vmatprep.subr.mxu0 0.0
  %3258 = vmatpush1.msra.mxu0 0.0
  %3259 = vmatprep.subr.mxu0 0.0
  %3260 = vmatpush1.msra.mxu0 0.0
  %3261 = vmatprep.subr.mxu0 0.0
  %3262 = vmatpush1.msra.mxu0 0.0
  %3263 = vmatprep.subr.mxu0 0.0
  %3264 = vmatpush1.msra.mxu0 0.0
  %3265 = vmatprep.subr.mxu0 0.0
  %3266 = vmatpush1.msra.mxu0 0.0
  %3267 = vmatprep.subr.mxu0 0.0
  %3268 = vmatpush1.msra.mxu0 0.0
  %3269 = vmatprep.subr.mxu0 0.0
  %3270 = vmatpush1.msra.mxu0 0.0
  %3271 = vmatprep.subr.mxu0 0.0
  %3272 = vmatpush1.msra.mxu0 0.0
  %3273 = vmatprep.subr.mxu0 0.0
  %3274 = vmatpush1.msra.mxu0 0.0
  %3275 = vmatprep.subr.mxu0 0.0
  %3276 = vmatpush1.msra.mxu0 0.0
  %3277 = vmatprep.subr.mxu0 0.0
  %3278 = vmatpush1.msra.mxu0 0.0
  %3279 = vmatprep.subr.mxu0 0.0
  %3280 = vmatpush1.msra.mxu0 0.0
  %3281 = vmatprep.subr.mxu0 0.0
  %3282 = vmatpush1.msra.mxu0 0.0
  %3283 = vmatprep.subr.mxu0 0.0
  %3284 = vmatpush1.msra.mxu0 0.0
  %3285 = vmatprep.subr.mxu0 0.0
  %3286 = vmatpush1.msra.mxu0 0.0
  %3287 = vmatprep.subr.mxu0 0.0
  %3288 = vmatpush1.msra.mxu0 0.0
  %3289 = vmatprep.subr.mxu0 0.0
  %3290 = vmatpush1.msra.mxu0 0.0
  %3291 = vmatprep.subr.mxu0 0.0
  %3292 = vmatpush1.msra.mxu0 0.0
  %3293 = vmatprep.mubr.f32.mxu0 0.0
  %3294 = vmatmul.mubr.f32.gmra.mrb[0].mxu0 %v3221
  %v3295 = vpop.f32.mrb[0].mxu0
  %v3296 = vadd.f32 %v3218, %v3295
  %v3297 = vpop.f32.mrb[0].mxu0
  %3298 = vmatprep.mubr.f32.mxu0 0.0
  %3299 = vmatmul.mubr.f32.gmra.mrb[0].mxu0 %v3224
  %v3300 = vpop.f32.mrb[0].mxu0
  %v3301 = vadd.f32 %v3218, %v3300
  %v3302 = vpop.f32.mrb[0].mxu0
  %3303 = vmatprep.mubr.f32.mxu0 0.0
  %3304 = vmatmul.mubr.f32.gmra.mrb[0].mxu0 %v3227
  %v3305 = vpop.f32.mrb[0].mxu0
  %v3306 = vadd.f32 %v3218, %v3305
  %v3307 = vpop.f32.mrb[0].mxu0
  %3308 = vdwg.mxu0
  %3309 = vst [vmem:[%s9] sm:$0xff] %v3296
  %3310 = vst [vmem:[%s9 + $0x8] sm:$0xff] %v3301
  %3311 = vst [vmem:[%s9 + $0x10] sm:$0x3f] %v3306
  // Predicated region
  $region38: #{dctcrn_forward.16} parent=0 // pred_check
    _
  $region39: #{dctcrn_forward.16} parent=0 // pred_check_branch
    %3313 = sbr.rel (0) target = $region41
  $region40: #{dctcrn_forward.16} parent=0 // pred_region
    _
  $region41: #{dctcrn_forward.16} parent=0 // pred_fallthru
    _
  // Predicated region
  $region42: #{dctcrn_forward.16} parent=0 // pred_check
    _
  $region43: #{dctcrn_forward.16} parent=0 // pred_check_branch
    %3315 = sbr.rel (0) target = $region45
  $region44: #{dctcrn_forward.16} parent=0 // pred_region
    _
  $region45: #{dctcrn_forward.16} parent=0 // pred_fallthru
    _

// kernel: dctcrn_forward.17
$region0: #{dctcrn_forward.17}
  #allocation0 [shape = 'u32[]', space=smem, size = 0x4, offset = 0x4, fixed_abs, tag = 'smem constant byte address 0x4 - core index']
  #allocation1 [shape = 'u32[144,128]{1,0:T(1,128)}', space=vmem, size = 0x12000, scoped, tag = 'internal scratch']
  #allocation2 [shape = 'f32[1,1]{1,0:T(1,128)S(1)}', space=vmem, size = 0x200, scoped, tag = 'scoped memory for dctcrn_forward.17']
  %s0 = inlined_call_operand.vmem [shape: bf16[8,256], index: 0, kind: input, shape index: {}]
  %s1 = inlined_call_operand.vmem [shape: bf16[256,352], index: 1, kind: input, shape index: {}]
  %s2 = inlined_call_operand.vmem [shape: f32[8,1], index: 2, kind: input, shape index: {}]
  %s3 = inlined_call_operand.vmem [shape: f32[8,1], index: 3, kind: input, shape index: {}]
  %s4 = inlined_call_operand.vmem [shape: f32[8,1], index: 4, kind: input, shape index: {}]
  %s5 = inlined_call_operand.<no memory space> [shape: f32[1,1], index: 5, kind: input, shape index: {}]
  %s6 = inlined_call_operand.vmem [shape: f32[8,352], index: 6, kind: output, shape index: {}]
  %s7 = sld [smem:[#allocation0]]
  $region34: #{dctcrn_forward.17} parent=0
    _
  %s9 = ssub.s32 1, %s7
  %s10 = scalar_select 0, %s9, %s7
  %v11 = vstv %s5
  %12 = vst [vmem:[#allocation2] sm:$0x1] %v11
  // Predicated region
  $region2: #{dctcrn_forward.17} parent=0 // pred_check
    _
  $region3: #{dctcrn_forward.17} parent=0 // pred_check_branch
    %14 = sbr.rel (0) target = $region5
  $region4: #{dctcrn_forward.17} parent=0 // pred_region
    _
  $region5: #{dctcrn_forward.17} parent=0 // pred_fallthru
    _
  // Predicated region
  $region6: #{dctcrn_forward.17} parent=0 // pred_check
    _
  $region7: #{dctcrn_forward.17} parent=0 // pred_check_branch
    %16 = sbr.rel (0) target = $region9
  $region8: #{dctcrn_forward.17} parent=0 // pred_region
    _
  $region9: #{dctcrn_forward.17} parent=0 // pred_fallthru
    _
  // Predicated region
  $region10: #{dctcrn_forward.17} parent=0 // pred_check
    _
  $region11: #{dctcrn_forward.17} parent=0 // pred_check_branch
    %18 = sbr.rel (0) target = $region13
  $region12: #{dctcrn_forward.17} parent=0 // pred_region
    _
  $region13: #{dctcrn_forward.17} parent=0 // pred_fallthru
    _
  // Predicated region
  $region14: #{dctcrn_forward.17} parent=0 // pred_check
    _
  $region15: #{dctcrn_forward.17} parent=0 // pred_check_branch
    %20 = sbr.rel (0) target = $region17
  $region16: #{dctcrn_forward.17} parent=0 // pred_region
    _
  $region17: #{dctcrn_forward.17} parent=0 // pred_fallthru
    _
  // Predicated region
  $region18: #{dctcrn_forward.17} parent=0 // pred_check
    _
  $region19: #{dctcrn_forward.17} parent=0 // pred_check_branch
    %22 = sbr.rel (0) target = $region21
  $region20: #{dctcrn_forward.17} parent=0 // pred_region
    _
  $region21: #{dctcrn_forward.17} parent=0 // pred_fallthru
    _
  // Predicated region
  $region22: #{dctcrn_forward.17} parent=0 // pred_check
    _
  $region23: #{dctcrn_forward.17} parent=0 // pred_check_branch
    %24 = sbr.rel (0) target = $region25
  $region24: #{dctcrn_forward.17} parent=0 // pred_region
    _
  $region25: #{dctcrn_forward.17} parent=0 // pred_fallthru
    _
  %v26 = vld [vmem:[%s0] sm:$0xff]
  %v27 = vld [vmem:[%s1] sm:$0xff]
  %v28 = vld [vmem:[%s1 + $0x8] sm:$0xf]
  %v29 = vld [vmem:[%s1 + $0xc] sm:$0xff]
  %v30 = vld [vmem:[%s1 + $0x14] sm:$0xf]
  %v31 = vld [vmem:[%s1 + $0x18] sm:$0xff]
  %v32 = vld [vmem:[%s1 + $0x20] sm:$0xf]
  %v33 = vld [vmem:[%s1 + $0x24] sm:$0xff]
  %v34 = vld [vmem:[%s1 + $0x2c] sm:$0xf]
  %v35 = vld [vmem:[%s1 + $0x30] sm:$0xff]
  %v36 = vld [vmem:[%s1 + $0x38] sm:$0xf]
  %v37 = vld [vmem:[%s1 + $0x3c] sm:$0xff]
  %v38 = vld [vmem:[%s1 + $0x44] sm:$0xf]
  %v39 = vld [vmem:[%s1 + $0x48] sm:$0xff]
  %v40 = vld [vmem:[%s1 + $0x50] sm:$0xf]
  %v41 = vld [vmem:[%s1 + $0x54] sm:$0xff]
  %v42 = vld [vmem:[%s1 + $0x5c] sm:$0xf]
  %v43 = vld [vmem:[%s1 + $0x60] sm:$0xff]
  %v44 = vld [vmem:[%s1 + $0x68] sm:$0xf]
  %v45 = vld [vmem:[%s1 + $0x6c] sm:$0xff]
  %v46 = vld [vmem:[%s1 + $0x74] sm:$0xf]
  %v47 = vld [vmem:[%s1 + $0x78] sm:$0xff]
  %v48 = vld [vmem:[%s1 + $0x80] sm:$0xf]
  %v49 = vld [vmem:[%s1 + $0x84] sm:$0xff]
  %v50 = vld [vmem:[%s1 + $0x8c] sm:$0xf]
  %v51 = vld [vmem:[%s1 + $0x90] sm:$0xff]
  %v52 = vld [vmem:[%s1 + $0x98] sm:$0xf]
  %v53 = vld [vmem:[%s1 + $0x9c] sm:$0xff]
  %v54 = vld [vmem:[%s1 + $0xa4] sm:$0xf]
  %v55 = vld [vmem:[%s1 + $0xa8] sm:$0xff]
  %v56 = vld [vmem:[%s1 + $0xb0] sm:$0xf]
  %v57 = vld [vmem:[%s1 + $0xb4] sm:$0xff]
  %v58 = vld [vmem:[%s1 + $0xbc] sm:$0xf]
  %v59 = vld [vmem:[%s1 + $0xc0] sm:$0xff]
  %v60 = vld [vmem:[%s1 + $0xc8] sm:$0xf]
  %v61 = vld [vmem:[%s1 + $0xcc] sm:$0xff]
  %v62 = vld [vmem:[%s1 + $0xd4] sm:$0xf]
  %v63 = vld [vmem:[%s1 + $0xd8] sm:$0xff]
  %v64 = vld [vmem:[%s1 + $0xe0] sm:$0xf]
  %v65 = vld [vmem:[%s1 + $0xe4] sm:$0xff]
  %v66 = vld [vmem:[%s1 + $0xec] sm:$0xf]
  %v67 = vld [vmem:[%s1 + $0xf0] sm:$0xff]
  %v68 = vld [vmem:[%s1 + $0xf8] sm:$0xf]
  %v69 = vld [vmem:[%s1 + $0xfc] sm:$0xff]
  %v70 = vld [vmem:[%s1 + $0x104] sm:$0xf]
  %v71 = vld [vmem:[%s1 + $0x108] sm:$0xff]
  %v72 = vld [vmem:[%s1 + $0x110] sm:$0xf]
  %v73 = vld [vmem:[%s1 + $0x114] sm:$0xff]
  %v74 = vld [vmem:[%s1 + $0x11c] sm:$0xf]
  %v75 = vld [vmem:[%s1 + $0x120] sm:$0xff]
  %v76 = vld [vmem:[%s1 + $0x128] sm:$0xf]
  %v77 = vld [vmem:[%s1 + $0x12c] sm:$0xff]
  %v78 = vld [vmem:[%s1 + $0x134] sm:$0xf]
  %v79 = vld [vmem:[%s1 + $0x138] sm:$0xff]
  %v80 = vld [vmem:[%s1 + $0x140] sm:$0xf]
  %v81 = vld [vmem:[%s1 + $0x144] sm:$0xff]
  %v82 = vld [vmem:[%s1 + $0x14c] sm:$0xf]
  %v83 = vld [vmem:[%s1 + $0x150] sm:$0xff]
  %v84 = vld [vmem:[%s1 + $0x158] sm:$0xf]
  %v85 = vld [vmem:[%s1 + $0x15c] sm:$0xff]
  %v86 = vld [vmem:[%s1 + $0x164] sm:$0xf]
  %v87 = vld [vmem:[%s1 + $0x168] sm:$0xff]
  %v88 = vld [vmem:[%s1 + $0x170] sm:$0xf]
  %v89 = vld [vmem:[%s1 + $0x174] sm:$0xff]
  %v90 = vld [vmem:[%s1 + $0x17c] sm:$0xf]
  %v91 = vld [vmem:[%s2] sm:$0xff]
  %93 = vset.pattern.permute.xlu0 0
  %94 = vperm.xlu0 %93, %v91
  %v95 = vpop.permute.xlu0 %94
  %v98 = vunpack.c.l.b16 %v26
  %v99 = vunpack.c.h.b16 %v26
  %v100 = vpack.c.b16 %v98, %v98
  %v101 = vpack.c.b16 %v99, %v99
  %v168 = vunpack.c.l.b16 %v27
  %v169 = vunpack.c.h.b16 %v27
  %v170 = vunpack.c.l.b16 %v28
  %v171 = vunpack.c.l.b16 %v29
  %v172 = vunpack.c.h.b16 %v29
  %v173 = vunpack.c.l.b16 %v30
  %v174 = vunpack.c.l.b16 %v31
  %v175 = vunpack.c.h.b16 %v31
  %v176 = vunpack.c.l.b16 %v32
  %v177 = vunpack.c.l.b16 %v33
  %v178 = vunpack.c.h.b16 %v33
  %v179 = vunpack.c.l.b16 %v34
  %v180 = vunpack.c.l.b16 %v35
  %v181 = vunpack.c.h.b16 %v35
  %v182 = vunpack.c.l.b16 %v36
  %v183 = vunpack.c.l.b16 %v37
  %v184 = vunpack.c.h.b16 %v37
  %v185 = vunpack.c.l.b16 %v38
  %v186 = vunpack.c.l.b16 %v39
  %v187 = vunpack.c.h.b16 %v39
  %v188 = vunpack.c.l.b16 %v40
  %v189 = vunpack.c.l.b16 %v41
  %v190 = vunpack.c.h.b16 %v41
  %v191 = vunpack.c.l.b16 %v42
  %v192 = vunpack.c.l.b16 %v43
  %v193 = vunpack.c.h.b16 %v43
  %v194 = vunpack.c.l.b16 %v44
  %v195 = vunpack.c.l.b16 %v45
  %v196 = vunpack.c.h.b16 %v45
  %v197 = vunpack.c.l.b16 %v46
  %v198 = vunpack.c.l.b16 %v47
  %v199 = vunpack.c.h.b16 %v47
  %v200 = vunpack.c.l.b16 %v48
  %v201 = vunpack.c.l.b16 %v49
  %v202 = vunpack.c.h.b16 %v49
  %v203 = vunpack.c.l.b16 %v50
  %v204 = vunpack.c.l.b16 %v51
  %v205 = vunpack.c.h.b16 %v51
  %v206 = vunpack.c.l.b16 %v52
  %v207 = vunpack.c.l.b16 %v53
  %v208 = vunpack.c.h.b16 %v53
  %v209 = vunpack.c.l.b16 %v54
  %v210 = vunpack.c.l.b16 %v55
  %v211 = vunpack.c.h.b16 %v55
  %v212 = vunpack.c.l.b16 %v56
  %v213 = vunpack.c.l.b16 %v57
  %v214 = vunpack.c.h.b16 %v57
  %v215 = vunpack.c.l.b16 %v58
  %v216 = vunpack.c.l.b16 %v59
  %v217 = vunpack.c.h.b16 %v59
  %v218 = vunpack.c.l.b16 %v60
  %v219 = vunpack.c.l.b16 %v61
  %v220 = vunpack.c.h.b16 %v61
  %v221 = vunpack.c.l.b16 %v62
  %v222 = vunpack.c.l.b16 %v63
  %v223 = vunpack.c.h.b16 %v63
  %v224 = vunpack.c.l.b16 %v64
  %v225 = vunpack.c.l.b16 %v65
  %v226 = vunpack.c.h.b16 %v65
  %v227 = vunpack.c.l.b16 %v66
  %v228 = vunpack.c.l.b16 %v67
  %v229 = vunpack.c.h.b16 %v67
  %v230 = vunpack.c.l.b16 %v68
  %v231 = vunpack.c.l.b16 %v69
  %v232 = vunpack.c.h.b16 %v69
  %v233 = vunpack.c.l.b16 %v70
  %v234 = vunpack.c.l.b16 %v71
  %v235 = vunpack.c.h.b16 %v71
  %v236 = vunpack.c.l.b16 %v72
  %v237 = vunpack.c.l.b16 %v73
  %v238 = vunpack.c.h.b16 %v73
  %v239 = vunpack.c.l.b16 %v74
  %v240 = vunpack.c.l.b16 %v75
  %v241 = vunpack.c.h.b16 %v75
  %v242 = vunpack.c.l.b16 %v76
  %v243 = vunpack.c.l.b16 %v77
  %v244 = vunpack.c.h.b16 %v77
  %v245 = vunpack.c.l.b16 %v78
  %v246 = vunpack.c.l.b16 %v79
  %v247 = vunpack.c.h.b16 %v79
  %v248 = vunpack.c.l.b16 %v80
  %v249 = vunpack.c.l.b16 %v81
  %v250 = vunpack.c.h.b16 %v81
  %v251 = vunpack.c.l.b16 %v82
  %v252 = vunpack.c.l.b16 %v83
  %v253 = vunpack.c.h.b16 %v83
  %v254 = vunpack.c.l.b16 %v84
  %v255 = vunpack.c.l.b16 %v85
  %v256 = vunpack.c.h.b16 %v85
  %v257 = vunpack.c.l.b16 %v86
  %v258 = vunpack.c.l.b16 %v87
  %v259 = vunpack.c.h.b16 %v87
  %v260 = vunpack.c.l.b16 %v88
  %v261 = vunpack.c.l.b16 %v89
  %v262 = vunpack.c.h.b16 %v89
  %v263 = vunpack.c.l.b16 %v90
  %v264 = vpack.c.b16 %v171, %v168
  %v265 = vpack.c.b16 %v172, %v169
  %v266 = vpack.c.b16 %v173, %v170
  %v267 = vpack.c.b16 %v177, %v174
  %v268 = vpack.c.b16 %v178, %v175
  %v269 = vpack.c.b16 %v179, %v176
  %v270 = vpack.c.b16 %v183, %v180
  %v271 = vpack.c.b16 %v184, %v181
  %v272 = vpack.c.b16 %v185, %v182
  %v273 = vpack.c.b16 %v189, %v186
  %v274 = vpack.c.b16 %v190, %v187
  %v275 = vpack.c.b16 %v191, %v188
  %v276 = vpack.c.b16 %v195, %v192
  %v277 = vpack.c.b16 %v196, %v193
  %v278 = vpack.c.b16 %v197, %v194
  %v279 = vpack.c.b16 %v201, %v198
  %v280 = vpack.c.b16 %v202, %v199
  %v281 = vpack.c.b16 %v203, %v200
  %v282 = vpack.c.b16 %v207, %v204
  %v283 = vpack.c.b16 %v208, %v205
  %v284 = vpack.c.b16 %v209, %v206
  %v285 = vpack.c.b16 %v213, %v210
  %v286 = vpack.c.b16 %v214, %v211
  %v287 = vpack.c.b16 %v215, %v212
  %v288 = vpack.c.b16 %v219, %v216
  %v289 = vpack.c.b16 %v220, %v217
  %v290 = vpack.c.b16 %v221, %v218
  %v291 = vpack.c.b16 %v225, %v222
  %v292 = vpack.c.b16 %v226, %v223
  %v293 = vpack.c.b16 %v227, %v224
  %v294 = vpack.c.b16 %v231, %v228
  %v295 = vpack.c.b16 %v232, %v229
  %v296 = vpack.c.b16 %v233, %v230
  %v297 = vpack.c.b16 %v237, %v234
  %v298 = vpack.c.b16 %v238, %v235
  %v299 = vpack.c.b16 %v239, %v236
  %v300 = vpack.c.b16 %v243, %v240
  %v301 = vpack.c.b16 %v244, %v241
  %v302 = vpack.c.b16 %v245, %v242
  %v303 = vpack.c.b16 %v249, %v246
  %v304 = vpack.c.b16 %v250, %v247
  %v305 = vpack.c.b16 %v251, %v248
  %v306 = vpack.c.b16 %v255, %v252
  %v307 = vpack.c.b16 %v256, %v253
  %v308 = vpack.c.b16 %v257, %v254
  %v309 = vpack.c.b16 %v261, %v258
  %v310 = vpack.c.b16 %v262, %v259
  %v311 = vpack.c.b16 %v263, %v260
  %360 = vmatprep.subr.bf16.mxu0 %v265
  %361 = vmatpush1.bf16.msra.mxu0 %v264
  %362 = vmatprep.subr.bf16.mxu0 %v268
  %363 = vmatpush1.bf16.msra.mxu0 %v267
  %364 = vmatprep.subr.bf16.mxu0 %v271
  %365 = vmatpush1.bf16.msra.mxu0 %v270
  %366 = vmatprep.subr.bf16.mxu0 %v274
  %367 = vmatpush1.bf16.msra.mxu0 %v273
  %368 = vmatprep.subr.bf16.mxu0 %v277
  %369 = vmatpush1.bf16.msra.mxu0 %v276
  %370 = vmatprep.subr.bf16.mxu0 %v280
  %371 = vmatpush1.bf16.msra.mxu0 %v279
  %372 = vmatprep.subr.bf16.mxu0 %v283
  %373 = vmatpush1.bf16.msra.mxu0 %v282
  %374 = vmatprep.subr.bf16.mxu0 %v286
  %375 = vmatpush1.bf16.msra.mxu0 %v285
  %376 = vmatprep.subr.bf16.mxu0 %v289
  %377 = vmatpush1.bf16.msra.mxu0 %v288
  %378 = vmatprep.subr.bf16.mxu0 %v292
  %379 = vmatpush1.bf16.msra.mxu0 %v291
  %380 = vmatprep.subr.bf16.mxu0 %v295
  %381 = vmatpush1.bf16.msra.mxu0 %v294
  %382 = vmatprep.subr.bf16.mxu0 %v298
  %383 = vmatpush1.bf16.msra.mxu0 %v297
  %384 = vmatprep.subr.bf16.mxu0 %v301
  %385 = vmatpush1.bf16.msra.mxu0 %v300
  %386 = vmatprep.subr.bf16.mxu0 %v304
  %387 = vmatpush1.bf16.msra.mxu0 %v303
  %388 = vmatprep.subr.bf16.mxu0 %v307
  %389 = vmatpush1.bf16.msra.mxu0 %v306
  %390 = vmatprep.subr.bf16.mxu0 %v310
  %391 = vmatpush1.bf16.msra.mxu0 %v309
  %392 = vmatprep.mubr.bf16.mxu0 %v101
  %393 = vmatmul.mubr.bf16.gmra.mrb[0].mxu0 %v100
  %v394 = vpop.f32.mrb[0].mxu0
  %v395 = vadd.f32 %v95, %v394
  %v396 = vpop.f32.mrb[0].mxu0
  %v397 = vadd.f32 %v95, %v396
  %v398 = vpop.f32.mrb[0].mxu0
  %v399 = vpop.f32.mrb[0].mxu0
  %400 = vdwg.mxu0
  %401 = vmatprep.subr.bf16.mxu0 0
  %402 = vmatpush1.bf16.msra.mxu0 %v266
  %403 = vmatprep.subr.bf16.mxu0 0
  %404 = vmatpush1.bf16.msra.mxu0 %v269
  %405 = vmatprep.subr.bf16.mxu0 0
  %406 = vmatpush1.bf16.msra.mxu0 %v272
  %407 = vmatprep.subr.bf16.mxu0 0
  %408 = vmatpush1.bf16.msra.mxu0 %v275
  %409 = vmatprep.subr.bf16.mxu0 0
  %410 = vmatpush1.bf16.msra.mxu0 %v278
  %411 = vmatprep.subr.bf16.mxu0 0
  %412 = vmatpush1.bf16.msra.mxu0 %v281
  %413 = vmatprep.subr.bf16.mxu0 0
  %414 = vmatpush1.bf16.msra.mxu0 %v284
  %415 = vmatprep.subr.bf16.mxu0 0
  %416 = vmatpush1.bf16.msra.mxu0 %v287
  %417 = vmatprep.subr.bf16.mxu0 0
  %418 = vmatpush1.bf16.msra.mxu0 %v290
  %419 = vmatprep.subr.bf16.mxu0 0
  %420 = vmatpush1.bf16.msra.mxu0 %v293
  %421 = vmatprep.subr.bf16.mxu0 0
  %422 = vmatpush1.bf16.msra.mxu0 %v296
  %423 = vmatprep.subr.bf16.mxu0 0
  %424 = vmatpush1.bf16.msra.mxu0 %v299
  %425 = vmatprep.subr.bf16.mxu0 0
  %426 = vmatpush1.bf16.msra.mxu0 %v302
  %427 = vmatprep.subr.bf16.mxu0 0
  %428 = vmatpush1.bf16.msra.mxu0 %v305
  %429 = vmatprep.subr.bf16.mxu0 0
  %430 = vmatpush1.bf16.msra.mxu0 %v308
  %431 = vmatprep.subr.bf16.mxu0 0
  %432 = vmatpush1.bf16.msra.mxu0 %v311
  %433 = vmatprep.mubr.bf16.mxu0 %v101
  %434 = vmatmul.mubr.bf16.gmra.mrb[0].mxu0 %v100
  %v435 = vpop.f32.mrb[0].mxu0
  %v436 = vadd.f32 %v95, %v435
  %v437 = vpop.f32.mrb[0].mxu0
  %v438 = vpop.f32.mrb[0].mxu0
  %v439 = vpop.f32.mrb[0].mxu0
  %440 = vdwg.mxu0
  %v441 = vadd.f32 %v395, %v397
  %vm442 = vcmask 785408
  %v443 = vsel %vm442, %v436, 0.0
  %v444 = vadd.f32 %v441, %v443
  %445 = vadd.xlane.f32.xlu0 %v444
  %v446 = vpop.xlane.xlu0 %445
  %v447 = vrcp.pop 352.0
  %v448 = vmul.f32 %v446, %v447
  %v449 = vmul.f32 %v395, %v395
  %v450 = vmul.f32 %v397, %v397
  %v451 = vmul.f32 %v436, %v436
  %v452 = vadd.f32 %v449, %v450
  %v453 = vsel %vm442, %v451, 0.0
  %v454 = vadd.f32 %v452, %v453
  %455 = vadd.xlane.f32.xlu0 %v454
  %v456 = vpop.xlane.xlu0 %455
  %v457 = vmul.f32 %v456, %v447
  %v458 = vmul.f32 %v448, %v448
  %v459 = vsub.f32 %v457, %v458
  %v460 = vadd.f32 %v459, 1e-05
  %v461 = vrsqrt.pop %v460
  %v462 = vld [vmem:[%s3] sm:$0xff]
  %v463 = vmul.f32 %v462, %v461
  %v464 = vld [vmem:[%s4] sm:$0xff]
  %v465 = vmul.f32 %v448, %v463
  %v466 = vsub.f32 %v464, %v465
  %468 = vset.pattern.permute.xlu0 0
  %469 = vperm.xlu0 %468, %v463
  %v470 = vpop.permute.xlu0 %469
  %v472 = vmul.f32 %v395, %v470
  %v473 = vmul.f32 %v397, %v470
  %v474 = vmul.f32 %v436, %v470
  %476 = vset.pattern.permute.xlu0 0
  %477 = vperm.xlu0 %476, %v466
  %v478 = vpop.permute.xlu0 %477
  %v480 = vadd.f32 %v472, %v478
  %v481 = vadd.f32 %v473, %v478
  %v482 = vadd.f32 %v474, %v478
  %v483 = vld [vmem:[#allocation2] sm:$0x1]
  %s484 = vtos %v483
  %vm485 = vcmp.ge.f32.partialorder %v480, 0.0
  %vm486 = vcmp.ge.f32.partialorder %v481, 0.0
  %vm487 = vcmp.ge.f32.partialorder %v482, 0.0
  %v488 = vstv %s484
  %v489 = vmul.f32 %v488, %v480
  %v490 = vmul.f32 %v488, %v481
  %v491 = vmul.f32 %v488, %v482
  %v492 = vsel %vm485, %v480, %v489
  %v493 = vsel %vm486, %v481, %v490
  %v494 = vsel %vm487, %v482, %v491
  %495 = vst [vmem:[%s6] sm:$0xff] %v492
  %496 = vst [vmem:[%s6 + $0x8] sm:$0xff] %v493
  %497 = vst.msk [vmem:[%s6 + $0x10] sm:$0xff] %vm442, %v494
  // Predicated region
  $region26: #{dctcrn_forward.17} parent=0 // pred_check
    _
  $region27: #{dctcrn_forward.17} parent=0 // pred_check_branch
    %499 = sbr.rel (0) target = $region29
  $region28: #{dctcrn_forward.17} parent=0 // pred_region
    _
  $region29: #{dctcrn_forward.17} parent=0 // pred_fallthru
    _
  // Predicated region
  $region30: #{dctcrn_forward.17} parent=0 // pred_check
    _
  $region31: #{dctcrn_forward.17} parent=0 // pred_check_branch
    %501 = sbr.rel (0) target = $region33
  $region32: #{dctcrn_forward.17} parent=0 // pred_region
    _
  $region33: #{dctcrn_forward.17} parent=0 // pred_fallthru
    _

// kernel: dctcrn_forward.19
$region0: #{dctcrn_forward.19}
  #allocation0 [shape = 'u32[]', space=smem, size = 0x4, offset = 0x4, fixed_abs, tag = 'smem constant byte address 0x4 - core index']
  #allocation1 [shape = 'u32[144,128]{1,0:T(1,128)}', space=vmem, size = 0x12000, scoped, tag = 'internal scratch']
  #allocation2 [shape = 'f32[1,1]{1,0:T(1,128)S(1)}', space=vmem, size = 0x200, scoped, tag = 'scoped memory for dctcrn_forward.19']
  %s0 = inlined_call_operand.vmem [shape: bf16[4,128], index: 0, kind: input, shape index: {}]
  %s1 = inlined_call_operand.vmem [shape: bf16[128,704], index: 1, kind: input, shape index: {}]
  %s2 = inlined_call_operand.vmem [shape: f32[4,1], index: 2, kind: input, shape index: {}]
  %s3 = inlined_call_operand.vmem [shape: f32[4,1], index: 3, kind: input, shape index: {}]
  %s4 = inlined_call_operand.vmem [shape: f32[4,1], index: 4, kind: input, shape index: {}]
  %s5 = inlined_call_operand.<no memory space> [shape: f32[1,1], index: 5, kind: input, shape index: {}]
  %s6 = inlined_call_operand.vmem [shape: f32[4,704], index: 6, kind: output, shape index: {}]
  %s7 = sld [smem:[#allocation0]]
  $region34: #{dctcrn_forward.19} parent=0
    _
  %s9 = ssub.s32 1, %s7
  %s10 = scalar_select 0, %s9, %s7
  %v11 = vstv %s5
  %12 = vst [vmem:[#allocation2] sm:$0x1] %v11
  // Predicated region
  $region2: #{dctcrn_forward.19} parent=0 // pred_check
    _
  $region3: #{dctcrn_forward.19} parent=0 // pred_check_branch
    %14 = sbr.rel (0) target = $region5
  $region4: #{dctcrn_forward.19} parent=0 // pred_region
    _
  $region5: #{dctcrn_forward.19} parent=0 // pred_fallthru
    _
  // Predicated region
  $region6: #{dctcrn_forward.19} parent=0 // pred_check
    _
  $region7: #{dctcrn_forward.19} parent=0 // pred_check_branch
    %16 = sbr.rel (0) target = $region9
  $region8: #{dctcrn_forward.19} parent=0 // pred_region
    _
  $region9: #{dctcrn_forward.19} parent=0 // pred_fallthru
    _
  // Predicated region
  $region10: #{dctcrn_forward.19} parent=0 // pred_check
    _
  $region11: #{dctcrn_forward.19} parent=0 // pred_check_branch
    %18 = sbr.rel (0) target = $region13
  $region12: #{dctcrn_forward.19} parent=0 // pred_region
    _
  $region13: #{dctcrn_forward.19} parent=0 // pred_fallthru
    _
  // Predicated region
  $region14: #{dctcrn_forward.19} parent=0 // pred_check
    _
  $region15: #{dctcrn_forward.19} parent=0 // pred_check_branch
    %20 = sbr.rel (0) target = $region17
  $region16: #{dctcrn_forward.19} parent=0 // pred_region
    _
  $region17: #{dctcrn_forward.19} parent=0 // pred_fallthru
    _
  // Predicated region
  $region18: #{dctcrn_forward.19} parent=0 // pred_check
    _
  $region19: #{dctcrn_forward.19} parent=0 // pred_check_branch
    %22 = sbr.rel (0) target = $region21
  $region20: #{dctcrn_forward.19} parent=0 // pred_region
    _
  $region21: #{dctcrn_forward.19} parent=0 // pred_fallthru
    _
  // Predicated region
  $region22: #{dctcrn_forward.19} parent=0 // pred_check
    _
  $region23: #{dctcrn_forward.19} parent=0 // pred_check_branch
    %24 = sbr.rel (0) target = $region25
  $region24: #{dctcrn_forward.19} parent=0 // pred_region
    _
  $region25: #{dctcrn_forward.19} parent=0 // pred_fallthru
    _
  %v26 = vld [vmem:[%s0] sm:$0x3]
  %v27 = vld [vmem:[%s1] sm:$0xff]
  %v28 = vld [vmem:[%s1 + $0x8] sm:$0xff]
  %v29 = vld [vmem:[%s1 + $0x10] sm:$0xff]
  %v30 = vld [vmem:[%s1 + $0x18] sm:$0xff]
  %v31 = vld [vmem:[%s1 + $0x20] sm:$0xff]
  %v32 = vld [vmem:[%s1 + $0x28] sm:$0xff]
  %v33 = vld [vmem:[%s1 + $0x30] sm:$0xff]
  %v34 = vld [vmem:[%s1 + $0x38] sm:$0xff]
  %v35 = vld [vmem:[%s1 + $0x40] sm:$0xff]
  %v36 = vld [vmem:[%s1 + $0x48] sm:$0xff]
  %v37 = vld [vmem:[%s1 + $0x50] sm:$0xff]
  %v38 = vld [vmem:[%s1 + $0x58] sm:$0xff]
  %v39 = vld [vmem:[%s1 + $0x60] sm:$0xff]
  %v40 = vld [vmem:[%s1 + $0x68] sm:$0xff]
  %v41 = vld [vmem:[%s1 + $0x70] sm:$0xff]
  %v42 = vld [vmem:[%s1 + $0x78] sm:$0xff]
  %v43 = vld [vmem:[%s1 + $0x80] sm:$0xff]
  %v44 = vld [vmem:[%s1 + $0x88] sm:$0xff]
  %v45 = vld [vmem:[%s1 + $0x90] sm:$0xff]
  %v46 = vld [vmem:[%s1 + $0x98] sm:$0xff]
  %v47 = vld [vmem:[%s1 + $0xa0] sm:$0xff]
  %v48 = vld [vmem:[%s1 + $0xa8] sm:$0xff]
  %v49 = vld [vmem:[%s1 + $0xb0] sm:$0xff]
  %v50 = vld [vmem:[%s1 + $0xb8] sm:$0xff]
  %v51 = vld [vmem:[%s1 + $0xc0] sm:$0xff]
  %v52 = vld [vmem:[%s1 + $0xc8] sm:$0xff]
  %v53 = vld [vmem:[%s1 + $0xd0] sm:$0xff]
  %v54 = vld [vmem:[%s1 + $0xd8] sm:$0xff]
  %v55 = vld [vmem:[%s1 + $0xe0] sm:$0xff]
  %v56 = vld [vmem:[%s1 + $0xe8] sm:$0xff]
  %v57 = vld [vmem:[%s1 + $0xf0] sm:$0xff]
  %v58 = vld [vmem:[%s1 + $0xf8] sm:$0xff]
  %v59 = vld [vmem:[%s1 + $0x100] sm:$0xff]
  %v60 = vld [vmem:[%s1 + $0x108] sm:$0xff]
  %v61 = vld [vmem:[%s1 + $0x110] sm:$0xff]
  %v62 = vld [vmem:[%s1 + $0x118] sm:$0xff]
  %v63 = vld [vmem:[%s1 + $0x120] sm:$0xff]
  %v64 = vld [vmem:[%s1 + $0x128] sm:$0xff]
  %v65 = vld [vmem:[%s1 + $0x130] sm:$0xff]
  %v66 = vld [vmem:[%s1 + $0x138] sm:$0xff]
  %v67 = vld [vmem:[%s1 + $0x140] sm:$0xff]
  %v68 = vld [vmem:[%s1 + $0x148] sm:$0xff]
  %v69 = vld [vmem:[%s1 + $0x150] sm:$0xff]
  %v70 = vld [vmem:[%s1 + $0x158] sm:$0xff]
  %v71 = vld [vmem:[%s1 + $0x160] sm:$0xff]
  %v72 = vld [vmem:[%s1 + $0x168] sm:$0xff]
  %v73 = vld [vmem:[%s1 + $0x170] sm:$0xff]
  %v74 = vld [vmem:[%s1 + $0x178] sm:$0xff]
  %v75 = vld [vmem:[%s2] sm:$0xf]
  %77 = vset.pattern.permute.xlu0 0
  %78 = vperm.xlu0 %77, %v75
  %v79 = vpop.permute.xlu0 %78
  %v129 = vunpack.c.l.b16 %v27
  %v130 = vunpack.c.h.b16 %v27
  %v131 = vunpack.c.l.b16 %v28
  %v132 = vunpack.c.h.b16 %v28
  %v133 = vunpack.c.l.b16 %v29
  %v134 = vunpack.c.h.b16 %v29
  %v135 = vunpack.c.l.b16 %v30
  %v136 = vunpack.c.h.b16 %v30
  %v137 = vunpack.c.l.b16 %v31
  %v138 = vunpack.c.h.b16 %v31
  %v139 = vunpack.c.l.b16 %v32
  %v140 = vunpack.c.h.b16 %v32
  %v141 = vunpack.c.l.b16 %v33
  %v142 = vunpack.c.h.b16 %v33
  %v143 = vunpack.c.l.b16 %v34
  %v144 = vunpack.c.h.b16 %v34
  %v145 = vunpack.c.l.b16 %v35
  %v146 = vunpack.c.h.b16 %v35
  %v147 = vunpack.c.l.b16 %v36
  %v148 = vunpack.c.h.b16 %v36
  %v149 = vunpack.c.l.b16 %v37
  %v150 = vunpack.c.h.b16 %v37
  %v151 = vunpack.c.l.b16 %v38
  %v152 = vunpack.c.h.b16 %v38
  %v153 = vunpack.c.l.b16 %v39
  %v154 = vunpack.c.h.b16 %v39
  %v155 = vunpack.c.l.b16 %v40
  %v156 = vunpack.c.h.b16 %v40
  %v157 = vunpack.c.l.b16 %v41
  %v158 = vunpack.c.h.b16 %v41
  %v159 = vunpack.c.l.b16 %v42
  %v160 = vunpack.c.h.b16 %v42
  %v161 = vunpack.c.l.b16 %v43
  %v162 = vunpack.c.h.b16 %v43
  %v163 = vunpack.c.l.b16 %v44
  %v164 = vunpack.c.h.b16 %v44
  %v165 = vunpack.c.l.b16 %v45
  %v166 = vunpack.c.h.b16 %v45
  %v167 = vunpack.c.l.b16 %v46
  %v168 = vunpack.c.h.b16 %v46
  %v169 = vunpack.c.l.b16 %v47
  %v170 = vunpack.c.h.b16 %v47
  %v171 = vunpack.c.l.b16 %v48
  %v172 = vunpack.c.h.b16 %v48
  %v173 = vunpack.c.l.b16 %v49
  %v174 = vunpack.c.h.b16 %v49
  %v175 = vunpack.c.l.b16 %v50
  %v176 = vunpack.c.h.b16 %v50
  %v177 = vunpack.c.l.b16 %v51
  %v178 = vunpack.c.h.b16 %v51
  %v179 = vunpack.c.l.b16 %v52
  %v180 = vunpack.c.h.b16 %v52
  %v181 = vunpack.c.l.b16 %v53
  %v182 = vunpack.c.h.b16 %v53
  %v183 = vunpack.c.l.b16 %v54
  %v184 = vunpack.c.h.b16 %v54
  %v185 = vunpack.c.l.b16 %v55
  %v186 = vunpack.c.h.b16 %v55
  %v187 = vunpack.c.l.b16 %v56
  %v188 = vunpack.c.h.b16 %v56
  %v189 = vunpack.c.l.b16 %v57
  %v190 = vunpack.c.h.b16 %v57
  %v191 = vunpack.c.l.b16 %v58
  %v192 = vunpack.c.h.b16 %v58
  %v193 = vunpack.c.l.b16 %v59
  %v194 = vunpack.c.h.b16 %v59
  %v195 = vunpack.c.l.b16 %v60
  %v196 = vunpack.c.h.b16 %v60
  %v197 = vunpack.c.l.b16 %v61
  %v198 = vunpack.c.h.b16 %v61
  %v199 = vunpack.c.l.b16 %v62
  %v200 = vunpack.c.h.b16 %v62
  %v201 = vunpack.c.l.b16 %v63
  %v202 = vunpack.c.h.b16 %v63
  %v203 = vunpack.c.l.b16 %v64
  %v204 = vunpack.c.h.b16 %v64
  %v205 = vunpack.c.l.b16 %v65
  %v206 = vunpack.c.h.b16 %v65
  %v207 = vunpack.c.l.b16 %v66
  %v208 = vunpack.c.h.b16 %v66
  %v209 = vunpack.c.l.b16 %v67
  %v210 = vunpack.c.h.b16 %v67
  %v211 = vunpack.c.l.b16 %v68
  %v212 = vunpack.c.h.b16 %v68
  %v213 = vunpack.c.l.b16 %v69
  %v214 = vunpack.c.h.b16 %v69
  %v215 = vunpack.c.l.b16 %v70
  %v216 = vunpack.c.h.b16 %v70
  %v217 = vunpack.c.l.b16 %v71
  %v218 = vunpack.c.h.b16 %v71
  %v219 = vunpack.c.l.b16 %v72
  %v220 = vunpack.c.h.b16 %v72
  %v221 = vunpack.c.l.b16 %v73
  %v222 = vunpack.c.h.b16 %v73
  %v223 = vunpack.c.l.b16 %v74
  %v224 = vunpack.c.h.b16 %v74
  %v225 = vpack.c.b16 %v135, %v129
  %v226 = vpack.c.b16 %v136, %v130
  %v227 = vpack.c.b16 %v137, %v131
  %v228 = vpack.c.b16 %v138, %v132
  %v229 = vpack.c.b16 %v139, %v133
  %v230 = vpack.c.b16 %v140, %v134
  %v231 = vpack.c.b16 %v147, %v141
  %v232 = vpack.c.b16 %v148, %v142
  %v233 = vpack.c.b16 %v149, %v143
  %v234 = vpack.c.b16 %v150, %v144
  %v235 = vpack.c.b16 %v151, %v145
  %v236 = vpack.c.b16 %v152, %v146
  %v237 = vpack.c.b16 %v159, %v153
  %v238 = vpack.c.b16 %v160, %v154
  %v239 = vpack.c.b16 %v161, %v155
  %v240 = vpack.c.b16 %v162, %v156
  %v241 = vpack.c.b16 %v163, %v157
  %v242 = vpack.c.b16 %v164, %v158
  %v243 = vpack.c.b16 %v171, %v165
  %v244 = vpack.c.b16 %v172, %v166
  %v245 = vpack.c.b16 %v173, %v167
  %v246 = vpack.c.b16 %v174, %v168
  %v247 = vpack.c.b16 %v175, %v169
  %v248 = vpack.c.b16 %v176, %v170
  %v249 = vpack.c.b16 %v183, %v177
  %v250 = vpack.c.b16 %v184, %v178
  %v251 = vpack.c.b16 %v185, %v179
  %v252 = vpack.c.b16 %v186, %v180
  %v253 = vpack.c.b16 %v187, %v181
  %v254 = vpack.c.b16 %v188, %v182
  %v255 = vpack.c.b16 %v195, %v189
  %v256 = vpack.c.b16 %v196, %v190
  %v257 = vpack.c.b16 %v197, %v191
  %v258 = vpack.c.b16 %v198, %v192
  %v259 = vpack.c.b16 %v199, %v193
  %v260 = vpack.c.b16 %v200, %v194
  %v261 = vpack.c.b16 %v207, %v201
  %v262 = vpack.c.b16 %v208, %v202
  %v263 = vpack.c.b16 %v209, %v203
  %v264 = vpack.c.b16 %v210, %v204
  %v265 = vpack.c.b16 %v211, %v205
  %v266 = vpack.c.b16 %v212, %v206
  %v267 = vpack.c.b16 %v219, %v213
  %v268 = vpack.c.b16 %v220, %v214
  %v269 = vpack.c.b16 %v221, %v215
  %v270 = vpack.c.b16 %v222, %v216
  %v271 = vpack.c.b16 %v223, %v217
  %v272 = vpack.c.b16 %v224, %v218
  %321 = vmatprep.subr.bf16.mxu0 %v226
  %322 = vmatpush1.bf16.msra.mxu0 %v225
  %323 = vmatprep.subr.bf16.mxu0 %v232
  %324 = vmatpush1.bf16.msra.mxu0 %v231
  %325 = vmatprep.subr.bf16.mxu0 %v238
  %326 = vmatpush1.bf16.msra.mxu0 %v237
  %327 = vmatprep.subr.bf16.mxu0 %v244
  %328 = vmatpush1.bf16.msra.mxu0 %v243
  %329 = vmatprep.subr.bf16.mxu0 %v250
  %330 = vmatpush1.bf16.msra.mxu0 %v249
  %331 = vmatprep.subr.bf16.mxu0 %v256
  %332 = vmatpush1.bf16.msra.mxu0 %v255
  %333 = vmatprep.subr.bf16.mxu0 %v262
  %334 = vmatpush1.bf16.msra.mxu0 %v261
  %335 = vmatprep.subr.bf16.mxu0 %v268
  %336 = vmatpush1.bf16.msra.mxu0 %v267
  %337 = vmatprep.subr.bf16.mxu0 0
  %338 = vmatpush1.bf16.msra.mxu0 0
  %339 = vmatprep.subr.bf16.mxu0 0
  %340 = vmatpush1.bf16.msra.mxu0 0
  %341 = vmatprep.subr.bf16.mxu0 0
  %342 = vmatpush1.bf16.msra.mxu0 0
  %343 = vmatprep.subr.bf16.mxu0 0
  %344 = vmatpush1.bf16.msra.mxu0 0
  %345 = vmatprep.subr.bf16.mxu0 0
  %346 = vmatpush1.bf16.msra.mxu0 0
  %347 = vmatprep.subr.bf16.mxu0 0
  %348 = vmatpush1.bf16.msra.mxu0 0
  %349 = vmatprep.subr.bf16.mxu0 0
  %350 = vmatpush1.bf16.msra.mxu0 0
  %351 = vmatprep.subr.bf16.mxu0 0
  %352 = vmatpush1.bf16.msra.mxu0 0
  %353 = vmatprep.mubr.bf16.mxu0 0
  %354 = vmatmul.mubr.bf16.gmra.mrb[0].mxu0 %v26
  %v355 = vpop.f32.mrb[0].mxu0
  %v356 = vadd.f32 %v79, %v355
  %v357 = vpop.f32.mrb[0].mxu0
  %v358 = vadd.f32 %v79, %v357
  %v359 = vpop.f32.mrb[0].mxu0
  %v360 = vpop.f32.mrb[0].mxu0
  %361 = vdwg.mxu0
  %362 = vmatprep.subr.bf16.mxu0 %v228
  %363 = vmatpush1.bf16.msra.mxu0 %v227
  %364 = vmatprep.subr.bf16.mxu0 %v234
  %365 = vmatpush1.bf16.msra.mxu0 %v233
  %366 = vmatprep.subr.bf16.mxu0 %v240
  %367 = vmatpush1.bf16.msra.mxu0 %v239
  %368 = vmatprep.subr.bf16.mxu0 %v246
  %369 = vmatpush1.bf16.msra.mxu0 %v245
  %370 = vmatprep.subr.bf16.mxu0 %v252
  %371 = vmatpush1.bf16.msra.mxu0 %v251
  %372 = vmatprep.subr.bf16.mxu0 %v258
  %373 = vmatpush1.bf16.msra.mxu0 %v257
  %374 = vmatprep.subr.bf16.mxu0 %v264
  %375 = vmatpush1.bf16.msra.mxu0 %v263
  %376 = vmatprep.subr.bf16.mxu0 %v270
  %377 = vmatpush1.bf16.msra.mxu0 %v269
  %378 = vmatprep.subr.bf16.mxu0 0
  %379 = vmatpush1.bf16.msra.mxu0 0
  %380 = vmatprep.subr.bf16.mxu0 0
  %381 = vmatpush1.bf16.msra.mxu0 0
  %382 = vmatprep.subr.bf16.mxu0 0
  %383 = vmatpush1.bf16.msra.mxu0 0
  %384 = vmatprep.subr.bf16.mxu0 0
  %385 = vmatpush1.bf16.msra.mxu0 0
  %386 = vmatprep.subr.bf16.mxu0 0
  %387 = vmatpush1.bf16.msra.mxu0 0
  %388 = vmatprep.subr.bf16.mxu0 0
  %389 = vmatpush1.bf16.msra.mxu0 0
  %390 = vmatprep.subr.bf16.mxu0 0
  %391 = vmatpush1.bf16.msra.mxu0 0
  %392 = vmatprep.subr.bf16.mxu0 0
  %393 = vmatpush1.bf16.msra.mxu0 0
  %394 = vmatprep.mubr.bf16.mxu0 0
  %395 = vmatmul.mubr.bf16.gmra.mrb[0].mxu0 %v26
  %v396 = vpop.f32.mrb[0].mxu0
  %v397 = vadd.f32 %v79, %v396
  %v398 = vpop.f32.mrb[0].mxu0
  %v399 = vadd.f32 %v79, %v398
  %v400 = vpop.f32.mrb[0].mxu0
  %v401 = vpop.f32.mrb[0].mxu0
  %402 = vdwg.mxu0
  %403 = vmatprep.subr.bf16.mxu0 %v230
  %404 = vmatpush1.bf16.msra.mxu0 %v229
  %405 = vmatprep.subr.bf16.mxu0 %v236
  %406 = vmatpush1.bf16.msra.mxu0 %v235
  %407 = vmatprep.subr.bf16.mxu0 %v242
  %408 = vmatpush1.bf16.msra.mxu0 %v241
  %409 = vmatprep.subr.bf16.mxu0 %v248
  %410 = vmatpush1.bf16.msra.mxu0 %v247
  %411 = vmatprep.subr.bf16.mxu0 %v254
  %412 = vmatpush1.bf16.msra.mxu0 %v253
  %413 = vmatprep.subr.bf16.mxu0 %v260
  %414 = vmatpush1.bf16.msra.mxu0 %v259
  %415 = vmatprep.subr.bf16.mxu0 %v266
  %416 = vmatpush1.bf16.msra.mxu0 %v265
  %417 = vmatprep.subr.bf16.mxu0 %v272
  %418 = vmatpush1.bf16.msra.mxu0 %v271
  %419 = vmatprep.subr.bf16.mxu0 0
  %420 = vmatpush1.bf16.msra.mxu0 0
  %421 = vmatprep.subr.bf16.mxu0 0
  %422 = vmatpush1.bf16.msra.mxu0 0
  %423 = vmatprep.subr.bf16.mxu0 0
  %424 = vmatpush1.bf16.msra.mxu0 0
  %425 = vmatprep.subr.bf16.mxu0 0
  %426 = vmatpush1.bf16.msra.mxu0 0
  %427 = vmatprep.subr.bf16.mxu0 0
  %428 = vmatpush1.bf16.msra.mxu0 0
  %429 = vmatprep.subr.bf16.mxu0 0
  %430 = vmatpush1.bf16.msra.mxu0 0
  %431 = vmatprep.subr.bf16.mxu0 0
  %432 = vmatpush1.bf16.msra.mxu0 0
  %433 = vmatprep.subr.bf16.mxu0 0
  %434 = vmatpush1.bf16.msra.mxu0 0
  %435 = vmatprep.mubr.bf16.mxu0 0
  %436 = vmatmul.mubr.bf16.gmra.mrb[0].mxu0 %v26
  %v437 = vpop.f32.mrb[0].mxu0
  %v438 = vadd.f32 %v79, %v437
  %v439 = vpop.f32.mrb[0].mxu0
  %v440 = vadd.f32 %v79, %v439
  %v441 = vpop.f32.mrb[0].mxu0
  %v442 = vpop.f32.mrb[0].mxu0
  %443 = vdwg.mxu0
  %vm444 = vcmask 1043456
  %v445 = vsel %vm444, %v356, 0.0
  %v446 = vsel %vm444, %v358, 0.0
  %v447 = vadd.f32 %v445, %v446
  %v448 = vsel %vm444, %v397, 0.0
  %v449 = vadd.f32 %v447, %v448
  %v450 = vsel %vm444, %v399, 0.0
  %v451 = vadd.f32 %v449, %v450
  %v452 = vsel %vm444, %v438, 0.0
  %v453 = vadd.f32 %v451, %v452
  %vm454 = vcmask 519168
  %v455 = vsel %vm454, %v440, 0.0
  %v456 = vadd.f32 %v453, %v455
  %457 = vadd.xlane.f32.xlu0 %v456
  %v458 = vpop.xlane.xlu0 %457
  %v459 = vrcp.pop 704.0
  %v460 = vmul.f32 %v458, %v459
  %v461 = vmul.f32 %v356, %v356
  %v462 = vmul.f32 %v358, %v358
  %v463 = vmul.f32 %v397, %v397
  %v464 = vmul.f32 %v399, %v399
  %v465 = vmul.f32 %v438, %v438
  %v466 = vmul.f32 %v440, %v440
  %v467 = vsel %vm444, %v461, 0.0
  %v468 = vsel %vm444, %v462, 0.0
  %v469 = vadd.f32 %v467, %v468
  %v470 = vsel %vm444, %v463, 0.0
  %v471 = vadd.f32 %v469, %v470
  %v472 = vsel %vm444, %v464, 0.0
  %v473 = vadd.f32 %v471, %v472
  %v474 = vsel %vm444, %v465, 0.0
  %v475 = vadd.f32 %v473, %v474
  %v476 = vsel %vm454, %v466, 0.0
  %v477 = vadd.f32 %v475, %v476
  %478 = vadd.xlane.f32.xlu0 %v477
  %v479 = vpop.xlane.xlu0 %478
  %v480 = vmul.f32 %v479, %v459
  %v481 = vmul.f32 %v460, %v460
  %v482 = vsub.f32 %v480, %v481
  %v483 = vadd.f32 %v482, 1e-05
  %v484 = vrsqrt.pop %v483
  %v485 = vld [vmem:[%s3] sm:$0xf]
  %v486 = vmul.f32 %v485, %v484
  %v487 = vld [vmem:[%s4] sm:$0xf]
  %v488 = vmul.f32 %v460, %v486
  %v489 = vsub.f32 %v487, %v488
  %491 = vset.pattern.permute.xlu0 0
  %492 = vperm.xlu0 %491, %v486
  %v493 = vpop.permute.xlu0 %492
  %v495 = vmul.f32 %v356, %v493
  %v496 = vmul.f32 %v358, %v493
  %v497 = vmul.f32 %v397, %v493
  %v498 = vmul.f32 %v399, %v493
  %v499 = vmul.f32 %v438, %v493
  %v500 = vmul.f32 %v440, %v493
  %502 = vset.pattern.permute.xlu0 0
  %503 = vperm.xlu0 %502, %v489
  %v504 = vpop.permute.xlu0 %503
  %v506 = vadd.f32 %v495, %v504
  %v507 = vadd.f32 %v496, %v504
  %v508 = vadd.f32 %v497, %v504
  %v509 = vadd.f32 %v498, %v504
  %v510 = vadd.f32 %v499, %v504
  %v511 = vadd.f32 %v500, %v504
  %v512 = vld [vmem:[#allocation2] sm:$0x1]
  %s513 = vtos %v512
  %vm514 = vcmp.ge.f32.partialorder %v506, 0.0
  %vm515 = vcmp.ge.f32.partialorder %v507, 0.0
  %vm516 = vcmp.ge.f32.partialorder %v508, 0.0
  %vm517 = vcmp.ge.f32.partialorder %v509, 0.0
  %vm518 = vcmp.ge.f32.partialorder %v510, 0.0
  %vm519 = vcmp.ge.f32.partialorder %v511, 0.0
  %v520 = vstv %s513
  %v521 = vmul.f32 %v520, %v506
  %v522 = vmul.f32 %v520, %v507
  %v523 = vmul.f32 %v520, %v508
  %v524 = vmul.f32 %v520, %v509
  %v525 = vmul.f32 %v520, %v510
  %v526 = vmul.f32 %v520, %v511
  %v527 = vsel %vm514, %v506, %v521
  %v528 = vsel %vm515, %v507, %v522
  %v529 = vsel %vm516, %v508, %v523
  %v530 = vsel %vm517, %v509, %v524
  %v531 = vsel %vm518, %v510, %v525
  %v532 = vsel %vm519, %v511, %v526
  %v539 = vcombine.low %v527, %v528
  %v540 = vcombine.low %v529, %v530
  %v541 = vcombine.low %v531, %v532
  %545 = vst [vmem:[%s6] sm:$0xff] %v539
  %546 = vst [vmem:[%s6 + $0x8] sm:$0xff] %v540
  %vm547 = vcmask 523268
  %vm548 = vmor %vm547, %vm444
  %549 = vst.msk [vmem:[%s6 + $0x10] sm:$0xff] %vm548, %v541
  // Predicated region
  $region26: #{dctcrn_forward.19} parent=0 // pred_check
    _
  $region27: #{dctcrn_forward.19} parent=0 // pred_check_branch
    %551 = sbr.rel (0) target = $region29
  $region28: #{dctcrn_forward.19} parent=0 // pred_region
    _
  $region29: #{dctcrn_forward.19} parent=0 // pred_fallthru
    _
  // Predicated region
  $region30: #{dctcrn_forward.19} parent=0 // pred_check
    _
  $region31: #{dctcrn_forward.19} parent=0 // pred_check_branch
    %553 = sbr.rel (0) target = $region33
  $region32: #{dctcrn_forward.19} parent=0 // pred_region
    _
  $region33: #{dctcrn_forward.19} parent=0 // pred_fallthru
    _

// kernel: dctcrn_forward.22
$region0: #{dctcrn_forward.22}
  #allocation0 [shape = 'u32[]', space=smem, size = 0x4, offset = 0x4, fixed_abs, tag = 'smem constant byte address 0x4 - core index']
  #allocation1 [shape = 'u32[144,128]{1,0:T(1,128)}', space=vmem, size = 0x12000, scoped, tag = 'internal scratch']
  #allocation2 [shape = 'f32[1,1]{1,0:T(1,128)S(1)}', space=vmem, size = 0x200, scoped, tag = 'scoped memory for dctcrn_forward.22']
  %s0 = inlined_call_operand.vmem [shape: bf16[1,64], index: 0, kind: input, shape index: {}]
  %s1 = inlined_call_operand.vmem [shape: bf16[64,1408], index: 1, kind: input, shape index: {}]
  %s2 = inlined_call_operand.<no memory space> [shape: f32[1,1], index: 2, kind: input, shape index: {}]
  %s3 = inlined_call_operand.vmem [shape: f32[1,1408], index: 3, kind: output, shape index: {}]
  %s4 = sld [smem:[#allocation0]]
  $region22: #{dctcrn_forward.22} parent=0
    _
  %s6 = ssub.s32 1, %s4
  %s7 = scalar_select 0, %s6, %s4
  %v8 = vstv %s2
  %9 = vst [vmem:[#allocation2] sm:$0x1] %v8
  // Predicated region
  $region2: #{dctcrn_forward.22} parent=0 // pred_check
    _
  $region3: #{dctcrn_forward.22} parent=0 // pred_check_branch
    %11 = sbr.rel (0) target = $region5
  $region4: #{dctcrn_forward.22} parent=0 // pred_region
    _
  $region5: #{dctcrn_forward.22} parent=0 // pred_fallthru
    _
  // Predicated region
  $region6: #{dctcrn_forward.22} parent=0 // pred_check
    _
  $region7: #{dctcrn_forward.22} parent=0 // pred_check_branch
    %13 = sbr.rel (0) target = $region9
  $region8: #{dctcrn_forward.22} parent=0 // pred_region
    _
  $region9: #{dctcrn_forward.22} parent=0 // pred_fallthru
    _
  // Predicated region
  $region10: #{dctcrn_forward.22} parent=0 // pred_check
    _
  $region11: #{dctcrn_forward.22} parent=0 // pred_check_branch
    %15 = sbr.rel (0) target = $region13
  $region12: #{dctcrn_forward.22} parent=0 // pred_region
    _
  $region13: #{dctcrn_forward.22} parent=0 // pred_fallthru
    _
  %v17 = vld [vmem:[%s0] sm:$0x1]
  %v18 = vld [vmem:[%s1] sm:$0xff]
  %v19 = vld [vmem:[%s1 + $0x8] sm:$0xff]
  %v20 = vld [vmem:[%s1 + $0x10] sm:$0xff]
  %v21 = vld [vmem:[%s1 + $0x18] sm:$0xff]
  %v22 = vld [vmem:[%s1 + $0x20] sm:$0xff]
  %v23 = vld [vmem:[%s1 + $0x28] sm:$0xf]
  %v24 = vld [vmem:[%s1 + $0x2c] sm:$0xff]
  %v25 = vld [vmem:[%s1 + $0x34] sm:$0xff]
  %v26 = vld [vmem:[%s1 + $0x3c] sm:$0xff]
  %v27 = vld [vmem:[%s1 + $0x44] sm:$0xff]
  %v28 = vld [vmem:[%s1 + $0x4c] sm:$0xff]
  %v29 = vld [vmem:[%s1 + $0x54] sm:$0xf]
  %v30 = vld [vmem:[%s1 + $0x58] sm:$0xff]
  %v31 = vld [vmem:[%s1 + $0x60] sm:$0xff]
  %v32 = vld [vmem:[%s1 + $0x68] sm:$0xff]
  %v33 = vld [vmem:[%s1 + $0x70] sm:$0xff]
  %v34 = vld [vmem:[%s1 + $0x78] sm:$0xff]
  %v35 = vld [vmem:[%s1 + $0x80] sm:$0xf]
  %v36 = vld [vmem:[%s1 + $0x84] sm:$0xff]
  %v37 = vld [vmem:[%s1 + $0x8c] sm:$0xff]
  %v38 = vld [vmem:[%s1 + $0x94] sm:$0xff]
  %v39 = vld [vmem:[%s1 + $0x9c] sm:$0xff]
  %v40 = vld [vmem:[%s1 + $0xa4] sm:$0xff]
  %v41 = vld [vmem:[%s1 + $0xac] sm:$0xf]
  %v42 = vld [vmem:[%s1 + $0xb0] sm:$0xff]
  %v43 = vld [vmem:[%s1 + $0xb8] sm:$0xff]
  %v44 = vld [vmem:[%s1 + $0xc0] sm:$0xff]
  %v45 = vld [vmem:[%s1 + $0xc8] sm:$0xff]
  %v46 = vld [vmem:[%s1 + $0xd0] sm:$0xff]
  %v47 = vld [vmem:[%s1 + $0xd8] sm:$0xf]
  %v48 = vld [vmem:[%s1 + $0xdc] sm:$0xff]
  %v49 = vld [vmem:[%s1 + $0xe4] sm:$0xff]
  %v50 = vld [vmem:[%s1 + $0xec] sm:$0xff]
  %v51 = vld [vmem:[%s1 + $0xf4] sm:$0xff]
  %v52 = vld [vmem:[%s1 + $0xfc] sm:$0xff]
  %v53 = vld [vmem:[%s1 + $0x104] sm:$0xf]
  %v54 = vld [vmem:[%s1 + $0x108] sm:$0xff]
  %v55 = vld [vmem:[%s1 + $0x110] sm:$0xff]
  %v56 = vld [vmem:[%s1 + $0x118] sm:$0xff]
  %v57 = vld [vmem:[%s1 + $0x120] sm:$0xff]
  %v58 = vld [vmem:[%s1 + $0x128] sm:$0xff]
  %v59 = vld [vmem:[%s1 + $0x130] sm:$0xf]
  %v60 = vld [vmem:[%s1 + $0x134] sm:$0xff]
  %v61 = vld [vmem:[%s1 + $0x13c] sm:$0xff]
  %v62 = vld [vmem:[%s1 + $0x144] sm:$0xff]
  %v63 = vld [vmem:[%s1 + $0x14c] sm:$0xff]
  %v64 = vld [vmem:[%s1 + $0x154] sm:$0xff]
  %v65 = vld [vmem:[%s1 + $0x15c] sm:$0xf]
  %v66 = vld [vmem:[#allocation2] sm:$0x1]
  %68 = vset.pattern.permute.xlu0 0
  %69 = vperm.xlu0 %68, %v66
  %v70 = vpop.permute.xlu0 %69
  %v72 = vlaneseq
  %v73 = vshrl.u32 %v72, 7
  %v74 = vsub.s32 0, %v73
  %v75 = vrot.slane %v70, %v74
  %v124 = vunpack.c.l.b16 %v18
  %v125 = vunpack.c.h.b16 %v18
  %v126 = vunpack.c.l.b16 %v19
  %v127 = vunpack.c.h.b16 %v19
  %v128 = vunpack.c.l.b16 %v20
  %v129 = vunpack.c.h.b16 %v20
  %v130 = vunpack.c.l.b16 %v21
  %v131 = vunpack.c.h.b16 %v21
  %v132 = vunpack.c.l.b16 %v22
  %v133 = vunpack.c.h.b16 %v22
  %v134 = vunpack.c.l.b16 %v23
  %v135 = vunpack.c.l.b16 %v24
  %v136 = vunpack.c.h.b16 %v24
  %v137 = vunpack.c.l.b16 %v25
  %v138 = vunpack.c.h.b16 %v25
  %v139 = vunpack.c.l.b16 %v26
  %v140 = vunpack.c.h.b16 %v26
  %v141 = vunpack.c.l.b16 %v27
  %v142 = vunpack.c.h.b16 %v27
  %v143 = vunpack.c.l.b16 %v28
  %v144 = vunpack.c.h.b16 %v28
  %v145 = vunpack.c.l.b16 %v29
  %v146 = vunpack.c.l.b16 %v30
  %v147 = vunpack.c.h.b16 %v30
  %v148 = vunpack.c.l.b16 %v31
  %v149 = vunpack.c.h.b16 %v31
  %v150 = vunpack.c.l.b16 %v32
  %v151 = vunpack.c.h.b16 %v32
  %v152 = vunpack.c.l.b16 %v33
  %v153 = vunpack.c.h.b16 %v33
  %v154 = vunpack.c.l.b16 %v34
  %v155 = vunpack.c.h.b16 %v34
  %v156 = vunpack.c.l.b16 %v35
  %v157 = vunpack.c.l.b16 %v36
  %v158 = vunpack.c.h.b16 %v36
  %v159 = vunpack.c.l.b16 %v37
  %v160 = vunpack.c.h.b16 %v37
  %v161 = vunpack.c.l.b16 %v38
  %v162 = vunpack.c.h.b16 %v38
  %v163 = vunpack.c.l.b16 %v39
  %v164 = vunpack.c.h.b16 %v39
  %v165 = vunpack.c.l.b16 %v40
  %v166 = vunpack.c.h.b16 %v40
  %v167 = vunpack.c.l.b16 %v41
  %v168 = vunpack.c.l.b16 %v42
  %v169 = vunpack.c.h.b16 %v42
  %v170 = vunpack.c.l.b16 %v43
  %v171 = vunpack.c.h.b16 %v43
  %v172 = vunpack.c.l.b16 %v44
  %v173 = vunpack.c.h.b16 %v44
  %v174 = vunpack.c.l.b16 %v45
  %v175 = vunpack.c.h.b16 %v45
  %v176 = vunpack.c.l.b16 %v46
  %v177 = vunpack.c.h.b16 %v46
  %v178 = vunpack.c.l.b16 %v47
  %v179 = vunpack.c.l.b16 %v48
  %v180 = vunpack.c.h.b16 %v48
  %v181 = vunpack.c.l.b16 %v49
  %v182 = vunpack.c.h.b16 %v49
  %v183 = vunpack.c.l.b16 %v50
  %v184 = vunpack.c.h.b16 %v50
  %v185 = vunpack.c.l.b16 %v51
  %v186 = vunpack.c.h.b16 %v51
  %v187 = vunpack.c.l.b16 %v52
  %v188 = vunpack.c.h.b16 %v52
  %v189 = vunpack.c.l.b16 %v53
  %v190 = vunpack.c.l.b16 %v54
  %v191 = vunpack.c.h.b16 %v54
  %v192 = vunpack.c.l.b16 %v55
  %v193 = vunpack.c.h.b16 %v55
  %v194 = vunpack.c.l.b16 %v56
  %v195 = vunpack.c.h.b16 %v56
  %v196 = vunpack.c.l.b16 %v57
  %v197 = vunpack.c.h.b16 %v57
  %v198 = vunpack.c.l.b16 %v58
  %v199 = vunpack.c.h.b16 %v58
  %v200 = vunpack.c.l.b16 %v59
  %v201 = vunpack.c.l.b16 %v60
  %v202 = vunpack.c.h.b16 %v60
  %v203 = vunpack.c.l.b16 %v61
  %v204 = vunpack.c.h.b16 %v61
  %v205 = vunpack.c.l.b16 %v62
  %v206 = vunpack.c.h.b16 %v62
  %v207 = vunpack.c.l.b16 %v63
  %v208 = vunpack.c.h.b16 %v63
  %v209 = vunpack.c.l.b16 %v64
  %v210 = vunpack.c.h.b16 %v64
  %v211 = vunpack.c.l.b16 %v65
  %v212 = vpack.c.b16 %v135, %v124
  %v213 = vpack.c.b16 %v136, %v125
  %v214 = vpack.c.b16 %v137, %v126
  %v215 = vpack.c.b16 %v138, %v127
  %v216 = vpack.c.b16 %v139, %v128
  %v217 = vpack.c.b16 %v140, %v129
  %v218 = vpack.c.b16 %v141, %v130
  %v219 = vpack.c.b16 %v142, %v131
  %v220 = vpack.c.b16 %v143, %v132
  %v221 = vpack.c.b16 %v144, %v133
  %v222 = vpack.c.b16 %v145, %v134
  %v223 = vpack.c.b16 %v157, %v146
  %v224 = vpack.c.b16 %v158, %v147
  %v225 = vpack.c.b16 %v159, %v148
  %v226 = vpack.c.b16 %v160, %v149
  %v227 = vpack.c.b16 %v161, %v150
  %v228 = vpack.c.b16 %v162, %v151
  %v229 = vpack.c.b16 %v163, %v152
  %v230 = vpack.c.b16 %v164, %v153
  %v231 = vpack.c.b16 %v165, %v154
  %v232 = vpack.c.b16 %v166, %v155
  %v233 = vpack.c.b16 %v167, %v156
  %v234 = vpack.c.b16 %v179, %v168
  %v235 = vpack.c.b16 %v180, %v169
  %v236 = vpack.c.b16 %v181, %v170
  %v237 = vpack.c.b16 %v182, %v171
  %v238 = vpack.c.b16 %v183, %v172
  %v239 = vpack.c.b16 %v184, %v173
  %v240 = vpack.c.b16 %v185, %v174
  %v241 = vpack.c.b16 %v186, %v175
  %v242 = vpack.c.b16 %v187, %v176
  %v243 = vpack.c.b16 %v188, %v177
  %v244 = vpack.c.b16 %v189, %v178
  %v245 = vpack.c.b16 %v201, %v190
  %v246 = vpack.c.b16 %v202, %v191
  %v247 = vpack.c.b16 %v203, %v192
  %v248 = vpack.c.b16 %v204, %v193
  %v249 = vpack.c.b16 %v205, %v194
  %v250 = vpack.c.b16 %v206, %v195
  %v251 = vpack.c.b16 %v207, %v196
  %v252 = vpack.c.b16 %v208, %v197
  %v253 = vpack.c.b16 %v209, %v198
  %v254 = vpack.c.b16 %v210, %v199
  %v255 = vpack.c.b16 %v211, %v200
  %vm300 = vcmask 523264
  %v302 = vsel %vm300, %v17, 0
  %304 = vmatprep.subr.bf16.mxu0 %v213
  %305 = vmatpush1.bf16.msra.mxu0 %v212
  %306 = vmatprep.subr.bf16.mxu0 %v224
  %307 = vmatpush1.bf16.msra.mxu0 %v223
  %308 = vmatprep.subr.bf16.mxu0 %v235
  %309 = vmatpush1.bf16.msra.mxu0 %v234
  %310 = vmatprep.subr.bf16.mxu0 %v246
  %311 = vmatpush1.bf16.msra.mxu0 %v245
  %312 = vmatprep.subr.bf16.mxu0 0
  %313 = vmatpush1.bf16.msra.mxu0 0
  %314 = vmatprep.subr.bf16.mxu0 0
  %315 = vmatpush1.bf16.msra.mxu0 0
  %316 = vmatprep.subr.bf16.mxu0 0
  %317 = vmatpush1.bf16.msra.mxu0 0
  %318 = vmatprep.subr.bf16.mxu0 0
  %319 = vmatpush1.bf16.msra.mxu0 0
  %320 = vmatprep.subr.bf16.mxu0 0
  %321 = vmatpush1.bf16.msra.mxu0 0
  %322 = vmatprep.subr.bf16.mxu0 0
  %323 = vmatpush1.bf16.msra.mxu0 0
  %324 = vmatprep.subr.bf16.mxu0 0
  %325 = vmatpush1.bf16.msra.mxu0 0
  %326 = vmatprep.subr.bf16.mxu0 0
  %327 = vmatpush1.bf16.msra.mxu0 0
  %328 = vmatprep.subr.bf16.mxu0 0
  %329 = vmatpush1.bf16.msra.mxu0 0
  %330 = vmatprep.subr.bf16.mxu0 0
  %331 = vmatpush1.bf16.msra.mxu0 0
  %332 = vmatprep.subr.bf16.mxu0 0
  %333 = vmatpush1.bf16.msra.mxu0 0
  %334 = vmatprep.subr.bf16.mxu0 0
  %335 = vmatpush1.bf16.msra.mxu0 0
  %336 = vmatprep.mubr.bf16.mxu0 0
  %337 = vmatmul.mubr.bf16.gmra.mrb[0].mxu0 %v302
  %v338 = vpop.f32.mrb[0].mxu0
  %v339 = vadd.f32 %v75, %v338
  %v340 = vpop.f32.mrb[0].mxu0
  %v341 = vadd.f32 %v75, %v340
  %v342 = vpop.f32.mrb[0].mxu0
  %v343 = vpop.f32.mrb[0].mxu0
  %344 = vdwg.mxu0
  %345 = vmatprep.subr.bf16.mxu0 %v215
  %346 = vmatpush1.bf16.msra.mxu0 %v214
  %347 = vmatprep.subr.bf16.mxu0 %v226
  %348 = vmatpush1.bf16.msra.mxu0 %v225
  %349 = vmatprep.subr.bf16.mxu0 %v237
  %350 = vmatpush1.bf16.msra.mxu0 %v236
  %351 = vmatprep.subr.bf16.mxu0 %v248
  %352 = vmatpush1.bf16.msra.mxu0 %v247
  %353 = vmatprep.subr.bf16.mxu0 0
  %354 = vmatpush1.bf16.msra.mxu0 0
  %355 = vmatprep.subr.bf16.mxu0 0
  %356 = vmatpush1.bf16.msra.mxu0 0
  %357 = vmatprep.subr.bf16.mxu0 0
  %358 = vmatpush1.bf16.msra.mxu0 0
  %359 = vmatprep.subr.bf16.mxu0 0
  %360 = vmatpush1.bf16.msra.mxu0 0
  %361 = vmatprep.subr.bf16.mxu0 0
  %362 = vmatpush1.bf16.msra.mxu0 0
  %363 = vmatprep.subr.bf16.mxu0 0
  %364 = vmatpush1.bf16.msra.mxu0 0
  %365 = vmatprep.subr.bf16.mxu0 0
  %366 = vmatpush1.bf16.msra.mxu0 0
  %367 = vmatprep.subr.bf16.mxu0 0
  %368 = vmatpush1.bf16.msra.mxu0 0
  %369 = vmatprep.subr.bf16.mxu0 0
  %370 = vmatpush1.bf16.msra.mxu0 0
  %371 = vmatprep.subr.bf16.mxu0 0
  %372 = vmatpush1.bf16.msra.mxu0 0
  %373 = vmatprep.subr.bf16.mxu0 0
  %374 = vmatpush1.bf16.msra.mxu0 0
  %375 = vmatprep.subr.bf16.mxu0 0
  %376 = vmatpush1.bf16.msra.mxu0 0
  %377 = vmatprep.mubr.bf16.mxu0 0
  %378 = vmatmul.mubr.bf16.gmra.mrb[0].mxu0 %v302
  %v379 = vpop.f32.mrb[0].mxu0
  %v380 = vadd.f32 %v75, %v379
  %v381 = vpop.f32.mrb[0].mxu0
  %v382 = vadd.f32 %v75, %v381
  %v383 = vpop.f32.mrb[0].mxu0
  %v384 = vpop.f32.mrb[0].mxu0
  %385 = vdwg.mxu0
  %386 = vmatprep.subr.bf16.mxu0 %v217
  %387 = vmatpush1.bf16.msra.mxu0 %v216
  %388 = vmatprep.subr.bf16.mxu0 %v228
  %389 = vmatpush1.bf16.msra.mxu0 %v227
  %390 = vmatprep.subr.bf16.mxu0 %v239
  %391 = vmatpush1.bf16.msra.mxu0 %v238
  %392 = vmatprep.subr.bf16.mxu0 %v250
  %393 = vmatpush1.bf16.msra.mxu0 %v249
  %394 = vmatprep.subr.bf16.mxu0 0
  %395 = vmatpush1.bf16.msra.mxu0 0
  %396 = vmatprep.subr.bf16.mxu0 0
  %397 = vmatpush1.bf16.msra.mxu0 0
  %398 = vmatprep.subr.bf16.mxu0 0
  %399 = vmatpush1.bf16.msra.mxu0 0
  %400 = vmatprep.subr.bf16.mxu0 0
  %401 = vmatpush1.bf16.msra.mxu0 0
  %402 = vmatprep.subr.bf16.mxu0 0
  %403 = vmatpush1.bf16.msra.mxu0 0
  %404 = vmatprep.subr.bf16.mxu0 0
  %405 = vmatpush1.bf16.msra.mxu0 0
  %406 = vmatprep.subr.bf16.mxu0 0
  %407 = vmatpush1.bf16.msra.mxu0 0
  %408 = vmatprep.subr.bf16.mxu0 0
  %409 = vmatpush1.bf16.msra.mxu0 0
  %410 = vmatprep.subr.bf16.mxu0 0
  %411 = vmatpush1.bf16.msra.mxu0 0
  %412 = vmatprep.subr.bf16.mxu0 0
  %413 = vmatpush1.bf16.msra.mxu0 0
  %414 = vmatprep.subr.bf16.mxu0 0
  %415 = vmatpush1.bf16.msra.mxu0 0
  %416 = vmatprep.subr.bf16.mxu0 0
  %417 = vmatpush1.bf16.msra.mxu0 0
  %418 = vmatprep.mubr.bf16.mxu0 0
  %419 = vmatmul.mubr.bf16.gmra.mrb[0].mxu0 %v302
  %v420 = vpop.f32.mrb[0].mxu0
  %v421 = vadd.f32 %v75, %v420
  %v422 = vpop.f32.mrb[0].mxu0
  %v423 = vadd.f32 %v75, %v422
  %v424 = vpop.f32.mrb[0].mxu0
  %v425 = vpop.f32.mrb[0].mxu0
  %426 = vdwg.mxu0
  %427 = vmatprep.subr.bf16.mxu0 %v219
  %428 = vmatpush1.bf16.msra.mxu0 %v218
  %429 = vmatprep.subr.bf16.mxu0 %v230
  %430 = vmatpush1.bf16.msra.mxu0 %v229
  %431 = vmatprep.subr.bf16.mxu0 %v241
  %432 = vmatpush1.bf16.msra.mxu0 %v240
  %433 = vmatprep.subr.bf16.mxu0 %v252
  %434 = vmatpush1.bf16.msra.mxu0 %v251
  %435 = vmatprep.subr.bf16.mxu0 0
  %436 = vmatpush1.bf16.msra.mxu0 0
  %437 = vmatprep.subr.bf16.mxu0 0
  %438 = vmatpush1.bf16.msra.mxu0 0
  %439 = vmatprep.subr.bf16.mxu0 0
  %440 = vmatpush1.bf16.msra.mxu0 0
  %441 = vmatprep.subr.bf16.mxu0 0
  %442 = vmatpush1.bf16.msra.mxu0 0
  %443 = vmatprep.subr.bf16.mxu0 0
  %444 = vmatpush1.bf16.msra.mxu0 0
  %445 = vmatprep.subr.bf16.mxu0 0
  %446 = vmatpush1.bf16.msra.mxu0 0
  %447 = vmatprep.subr.bf16.mxu0 0
  %448 = vmatpush1.bf16.msra.mxu0 0
  %449 = vmatprep.subr.bf16.mxu0 0
  %450 = vmatpush1.bf16.msra.mxu0 0
  %451 = vmatprep.subr.bf16.mxu0 0
  %452 = vmatpush1.bf16.msra.mxu0 0
  %453 = vmatprep.subr.bf16.mxu0 0
  %454 = vmatpush1.bf16.msra.mxu0 0
  %455 = vmatprep.subr.bf16.mxu0 0
  %456 = vmatpush1.bf16.msra.mxu0 0
  %457 = vmatprep.subr.bf16.mxu0 0
  %458 = vmatpush1.bf16.msra.mxu0 0
  %459 = vmatprep.mubr.bf16.mxu0 0
  %460 = vmatmul.mubr.bf16.gmra.mrb[0].mxu0 %v302
  %v461 = vpop.f32.mrb[0].mxu0
  %v462 = vadd.f32 %v75, %v461
  %v463 = vpop.f32.mrb[0].mxu0
  %v464 = vadd.f32 %v75, %v463
  %v465 = vpop.f32.mrb[0].mxu0
  %v466 = vpop.f32.mrb[0].mxu0
  %467 = vdwg.mxu0
  %468 = vmatprep.subr.bf16.mxu0 %v221
  %469 = vmatpush1.bf16.msra.mxu0 %v220
  %470 = vmatprep.subr.bf16.mxu0 %v232
  %471 = vmatpush1.bf16.msra.mxu0 %v231
  %472 = vmatprep.subr.bf16.mxu0 %v243
  %473 = vmatpush1.bf16.msra.mxu0 %v242
  %474 = vmatprep.subr.bf16.mxu0 %v254
  %475 = vmatpush1.bf16.msra.mxu0 %v253
  %476 = vmatprep.subr.bf16.mxu0 0
  %477 = vmatpush1.bf16.msra.mxu0 0
  %478 = vmatprep.subr.bf16.mxu0 0
  %479 = vmatpush1.bf16.msra.mxu0 0
  %480 = vmatprep.subr.bf16.mxu0 0
  %481 = vmatpush1.bf16.msra.mxu0 0
  %482 = vmatprep.subr.bf16.mxu0 0
  %483 = vmatpush1.bf16.msra.mxu0 0
  %484 = vmatprep.subr.bf16.mxu0 0
  %485 = vmatpush1.bf16.msra.mxu0 0
  %486 = vmatprep.subr.bf16.mxu0 0
  %487 = vmatpush1.bf16.msra.mxu0 0
  %488 = vmatprep.subr.bf16.mxu0 0
  %489 = vmatpush1.bf16.msra.mxu0 0
  %490 = vmatprep.subr.bf16.mxu0 0
  %491 = vmatpush1.bf16.msra.mxu0 0
  %492 = vmatprep.subr.bf16.mxu0 0
  %493 = vmatpush1.bf16.msra.mxu0 0
  %494 = vmatprep.subr.bf16.mxu0 0
  %495 = vmatpush1.bf16.msra.mxu0 0
  %496 = vmatprep.subr.bf16.mxu0 0
  %497 = vmatpush1.bf16.msra.mxu0 0
  %498 = vmatprep.subr.bf16.mxu0 0
  %499 = vmatpush1.bf16.msra.mxu0 0
  %500 = vmatprep.mubr.bf16.mxu0 0
  %501 = vmatmul.mubr.bf16.gmra.mrb[0].mxu0 %v302
  %v502 = vpop.f32.mrb[0].mxu0
  %v503 = vadd.f32 %v75, %v502
  %v504 = vpop.f32.mrb[0].mxu0
  %v505 = vadd.f32 %v75, %v504
  %v506 = vpop.f32.mrb[0].mxu0
  %v507 = vpop.f32.mrb[0].mxu0
  %508 = vdwg.mxu0
  %509 = vmatprep.subr.bf16.mxu0 0
  %510 = vmatpush1.bf16.msra.mxu0 %v222
  %511 = vmatprep.subr.bf16.mxu0 0
  %512 = vmatpush1.bf16.msra.mxu0 %v233
  %513 = vmatprep.subr.bf16.mxu0 0
  %514 = vmatpush1.bf16.msra.mxu0 %v244
  %515 = vmatprep.subr.bf16.mxu0 0
  %516 = vmatpush1.bf16.msra.mxu0 %v255
  %517 = vmatprep.subr.bf16.mxu0 0
  %518 = vmatpush1.bf16.msra.mxu0 0
  %519 = vmatprep.subr.bf16.mxu0 0
  %520 = vmatpush1.bf16.msra.mxu0 0
  %521 = vmatprep.subr.bf16.mxu0 0
  %522 = vmatpush1.bf16.msra.mxu0 0
  %523 = vmatprep.subr.bf16.mxu0 0
  %524 = vmatpush1.bf16.msra.mxu0 0
  %525 = vmatprep.subr.bf16.mxu0 0
  %526 = vmatpush1.bf16.msra.mxu0 0
  %527 = vmatprep.subr.bf16.mxu0 0
  %528 = vmatpush1.bf16.msra.mxu0 0
  %529 = vmatprep.subr.bf16.mxu0 0
  %530 = vmatpush1.bf16.msra.mxu0 0
  %531 = vmatprep.subr.bf16.mxu0 0
  %532 = vmatpush1.bf16.msra.mxu0 0
  %533 = vmatprep.subr.bf16.mxu0 0
  %534 = vmatpush1.bf16.msra.mxu0 0
  %535 = vmatprep.subr.bf16.mxu0 0
  %536 = vmatpush1.bf16.msra.mxu0 0
  %537 = vmatprep.subr.bf16.mxu0 0
  %538 = vmatpush1.bf16.msra.mxu0 0
  %539 = vmatprep.subr.bf16.mxu0 0
  %540 = vmatpush1.bf16.msra.mxu0 0
  %541 = vmatprep.mubr.bf16.mxu0 0
  %542 = vmatmul.mubr.bf16.gmra.mrb[0].mxu0 %v302
  %v543 = vpop.f32.mrb[0].mxu0
  %v544 = vadd.f32 %v75, %v543
  %v545 = vpop.f32.mrb[0].mxu0
  %v546 = vpop.f32.mrb[0].mxu0
  %v547 = vpop.f32.mrb[0].mxu0
  %548 = vdwg.mxu0
  %v560 = vcombine.low %v339, %v341
  %v561 = vcombine.low %v380, %v382
  %v562 = vcombine.low %v421, %v423
  %v563 = vcombine.low %v462, %v464
  %v565 = vunpack.c.l.s4 1966171168
  %v566 = vunpack.c.0.s8 %v565
  %v567 = vlaneseq
  %v568 = vshrl.u32 %v567, 7
  %v569 = vsub.s32 %v566, %v568
  %v570 = vrot.slane %v560, %v569
  %v572 = vunpack.c.l.s4 1966171168
  %v573 = vunpack.c.0.s8 %v572
  %v574 = vlaneseq
  %v575 = vshrl.u32 %v574, 7
  %v576 = vsub.s32 %v573, %v575
  %v577 = vrot.slane %v561, %v576
  %v579 = vunpack.c.l.s4 1966171168
  %v580 = vunpack.c.0.s8 %v579
  %v581 = vlaneseq
  %v582 = vshrl.u32 %v581, 7
  %v583 = vsub.s32 %v580, %v582
  %v584 = vrot.slane %v562, %v583
  %v586 = vunpack.c.l.s4 1966171168
  %v587 = vunpack.c.0.s8 %v586
  %v588 = vlaneseq
  %v589 = vshrl.u32 %v588, 7
  %v590 = vsub.s32 %v587, %v589
  %v591 = vrot.slane %v563, %v590
  %v592 = vcombine.low %v570, %v577
  %v593 = vcombine.low %v584, %v591
  %v595 = vunpack.c.l.s4 1966171168
  %v596 = vunpack.c.0.s8 %v595
  %v597 = vlaneseq
  %v598 = vshrl.u32 %v597, 7
  %v599 = vsub.s32 %v596, %v598
  %v600 = vrot.slane %v592, %v599
  %v602 = vunpack.c.l.s4 1966171168
  %v603 = vunpack.c.0.s8 %v602
  %v604 = vlaneseq
  %v605 = vshrl.u32 %v604, 7
  %v606 = vsub.s32 %v603, %v605
  %v607 = vrot.slane %v593, %v606
  %v608 = vcombine.low %v600, %v607
  %v609 = vcombine.low %v503, %v505
  %v611 = vunpack.c.l.s4 1966171168
  %v612 = vunpack.c.0.s8 %v611
  %v613 = vlaneseq
  %v614 = vshrl.u32 %v613, 7
  %v615 = vsub.s32 %v612, %v614
  %v616 = vrot.slane %v609, %v615
  %v618 = vunpack.c.l.s4 1966171168
  %v619 = vunpack.c.0.s8 %v618
  %v620 = vlaneseq
  %v621 = vshrl.u32 %v620, 7
  %v622 = vsub.s32 %v619, %v621
  %v623 = vrot.slane %v544, %v622
  %v624 = vcombine.low %v616, %v623
  %v626 = vunpack.c.l.s4 1966171168
  %v627 = vunpack.c.0.s8 %v626
  %v628 = vlaneseq
  %v629 = vshrl.u32 %v628, 7
  %v630 = vsub.s32 %v627, %v629
  %v631 = vrot.slane %v624, %v630
  %634 = vst [vmem:[%s3] sm:$0xff] %v608
  %v635 = vlaneseq
  %vm636 = vcmp.ge.s32.totalorder %v635, 0
  %vm637 = vcmp.lt.s32.totalorder %v635, 384
  %vm638 = vmand %vm636, %vm637
  %639 = vst.msk [vmem:[%s3 + $0x8] sm:$0x7] %vm638, %v631
  // Predicated region
  $region14: #{dctcrn_forward.22} parent=0 // pred_check
    _
  $region15: #{dctcrn_forward.22} parent=0 // pred_check_branch
    %641 = sbr.rel (0) target = $region17
  $region16: #{dctcrn_forward.22} parent=0 // pred_region
    _
  $region17: #{dctcrn_forward.22} parent=0 // pred_fallthru
    _
  // Predicated region
  $region18: #{dctcrn_forward.22} parent=0 // pred_check
    _
  $region19: #{dctcrn_forward.22} parent=0 // pred_check_branch
    %643 = sbr.rel (0) target = $region21
  $region20: #{dctcrn_forward.22} parent=0 // pred_region
    _
  $region21: #{dctcrn_forward.22} parent=0 // pred_fallthru
    _

// kernel: dctcrn_forward.23
$region0: #{dctcrn_forward.23}
  #allocation0 [shape = 'u32[]', space=smem, size = 0x4, offset = 0x4, fixed_abs, tag = 'smem constant byte address 0x4 - core index']
  #allocation1 [shape = 'u32[144,128]{1,0:T(1,128)}', space=vmem, size = 0x12000, scoped, tag = 'internal scratch']
  #allocation2 [shape = 'f32[2,224]{1,0:T(2,128)}', space=vmem, size = 0x800, scoped, tag = 'scratch operand']
  %s0 = inlined_call_operand.vmem [shape: f32[22,64], index: 0, kind: input, shape index: {}]
  %s1 = inlined_call_operand.vmem [shape: f32[64,64], index: 1, kind: input, shape index: {}]
  %s2 = inlined_call_operand.vmem [shape: f32[1,160], index: 2, kind: input, shape index: {}]
  %s3 = inlined_call_operand.hbm [shape: f32[2,160], index: 3, kind: output, shape index: {}]
  %s4 = sld [smem:[#allocation0]]
  $region22: #{dctcrn_forward.23} parent=0
    _
  %s6 = ssub.s32 1, %s4
  %s7 = scalar_select 0, %s6, %s4
  $region1: #{dctcrn_forward.23} parent=0
    #allocation3 [shape = 'u8[2048]{0}', space=vmem, size = 0x800, scoped, tag = 'output window, operand 0, single buffered']
    #allocation4 [shape = 's32[1]{0}', space=sflag, size = 0x4, scoped, tag = 'scoped memory for dctcrn_forward.23']
    %8 = vsyncpa [#allocation4], 0
    // Predicated region
    $region2: #{dctcrn_forward.23} parent=1 // pred_check
      _
    $region3: #{dctcrn_forward.23} parent=1 // pred_check_branch
      %10 = sbr.rel (0) target = $region5
    $region4: #{dctcrn_forward.23} parent=1 // pred_region
      _
    $region5: #{dctcrn_forward.23} parent=1 // pred_fallthru
      _
    // Predicated region
    $region6: #{dctcrn_forward.23} parent=1 // pred_check
      _
    $region7: #{dctcrn_forward.23} parent=1 // pred_check_branch
      %12 = sbr.rel (0) target = $region9
    $region8: #{dctcrn_forward.23} parent=1 // pred_region
      _
    $region9: #{dctcrn_forward.23} parent=1 // pred_fallthru
      _
    // Predicated region
    $region10: #{dctcrn_forward.23} parent=1 // pred_check
      _
    $region11: #{dctcrn_forward.23} parent=1 // pred_check_branch
      %14 = sbr.rel (0) target = $region13
    $region12: #{dctcrn_forward.23} parent=1 // pred_region
      _
    $region13: #{dctcrn_forward.23} parent=1 // pred_fallthru
      _
    %v15 = vld [vmem:[%s0] sm:$0xff]
    %v16 = vld [vmem:[%s0 + $0x8] sm:$0xff]
    %v17 = vld [vmem:[%s0 + $0x10] sm:$0x3f]
    %v18 = vld [vmem:[%s1] sm:$0xff]
    %v19 = vld [vmem:[%s1 + $0x8] sm:$0xff]
    %v20 = vld [vmem:[%s1 + $0x10] sm:$0xff]
    %v21 = vld [vmem:[%s1 + $0x18] sm:$0xff]
    %v22 = vld [vmem:[%s1 + $0x20] sm:$0xff]
    %v23 = vld [vmem:[%s1 + $0x28] sm:$0xff]
    %v24 = vld [vmem:[%s1 + $0x30] sm:$0xff]
    %v25 = vld [vmem:[%s1 + $0x38] sm:$0xff]
    %vm26 = vcmask 523264
    %v28 = vsel %vm26, %v15, 0
    %v31 = vsel %vm26, %v16, 0
    %v34 = vsel %vm26, %v17, 0
    %36 = vmatprep.subr.mxu0 0.0
    %37 = vmatpush1.msra.mxu0 %v18
    %38 = vmatprep.subr.mxu0 0.0
    %39 = vmatpush1.msra.mxu0 %v19
    %40 = vmatprep.subr.mxu0 0.0
    %41 = vmatpush1.msra.mxu0 %v20
    %42 = vmatprep.subr.mxu0 0.0
    %43 = vmatpush1.msra.mxu0 %v21
    %44 = vmatprep.subr.mxu0 0.0
    %45 = vmatpush1.msra.mxu0 %v22
    %46 = vmatprep.subr.mxu0 0.0
    %47 = vmatpush1.msra.mxu0 %v23
    %48 = vmatprep.subr.mxu0 0.0
    %49 = vmatpush1.msra.mxu0 %v24
    %50 = vmatprep.subr.mxu0 0.0
    %51 = vmatpush1.msra.mxu0 %v25
    %52 = vmatprep.subr.mxu0 0.0
    %53 = vmatpush1.msra.mxu0 0.0
    %54 = vmatprep.subr.mxu0 0.0
    %55 = vmatpush1.msra.mxu0 0.0
    %56 = vmatprep.subr.mxu0 0.0
    %57 = vmatpush1.msra.mxu0 0.0
    %58 = vmatprep.subr.mxu0 0.0
    %59 = vmatpush1.msra.mxu0 0.0
    %60 = vmatprep.subr.mxu0 0.0
    %61 = vmatpush1.msra.mxu0 0.0
    %62 = vmatprep.subr.mxu0 0.0
    %63 = vmatpush1.msra.mxu0 0.0
    %64 = vmatprep.subr.mxu0 0.0
    %65 = vmatpush1.msra.mxu0 0.0
    %66 = vmatprep.subr.mxu0 0.0
    %67 = vmatpush1.msra.mxu0 0.0
    %68 = vmatprep.subr.mxu0 0.0
    %69 = vmatpush1.msra.mxu0 0.0
    %70 = vmatprep.subr.mxu0 0.0
    %71 = vmatpush1.msra.mxu0 0.0
    %72 = vmatprep.subr.mxu0 0.0
    %73 = vmatpush1.msra.mxu0 0.0
    %74 = vmatprep.subr.mxu0 0.0
    %75 = vmatpush1.msra.mxu0 0.0
    %76 = vmatprep.subr.mxu0 0.0
    %77 = vmatpush1.msra.mxu0 0.0
    %78 = vmatprep.subr.mxu0 0.0
    %79 = vmatpush1.msra.mxu0 0.0
    %80 = vmatprep.subr.mxu0 0.0
    %81 = vmatpush1.msra.mxu0 0.0
    %82 = vmatprep.subr.mxu0 0.0
    %83 = vmatpush1.msra.mxu0 0.0
    %84 = vmatprep.subr.mxu0 0.0
    %85 = vmatpush1.msra.mxu0 0.0
    %86 = vmatprep.subr.mxu0 0.0
    %87 = vmatpush1.msra.mxu0 0.0
    %88 = vmatprep.subr.mxu0 0.0
    %89 = vmatpush1.msra.mxu0 0.0
    %90 = vmatprep.subr.mxu0 0.0
    %91 = vmatpush1.msra.mxu0 0.0
    %92 = vmatprep.subr.mxu0 0.0
    %93 = vmatpush1.msra.mxu0 0.0
    %94 = vmatprep.subr.mxu0 0.0
    %95 = vmatpush1.msra.mxu0 0.0
    %96 = vmatprep.subr.mxu0 0.0
    %97 = vmatpush1.msra.mxu0 0.0
    %98 = vmatprep.subr.mxu0 0.0
    %99 = vmatpush1.msra.mxu0 0.0
    %100 = vmatprep.mubr.f32.mxu0 0.0
    %101 = vmatmul.mubr.f32.gmra.mrb[0].mxu0 %v28
    %v102 = vpop.f32.mrb[0].mxu0
    %v103 = vadd.f32 0.0, %v102
    %v104 = vpop.f32.mrb[0].mxu0
    %105 = vmatprep.mubr.f32.mxu0 0.0
    %106 = vmatmul.mubr.f32.gmra.mrb[0].mxu0 %v31
    %v107 = vpop.f32.mrb[0].mxu0
    %v108 = vadd.f32 0.0, %v107
    %v109 = vpop.f32.mrb[0].mxu0
    %110 = vmatprep.mubr.f32.mxu0 0.0
    %111 = vmatmul.mubr.f32.gmra.mrb[0].mxu0 %v34
    %v112 = vpop.f32.mrb[0].mxu0
    %v113 = vadd.f32 0.0, %v112
    %v114 = vpop.f32.mrb[0].mxu0
    %115 = vdwg.mxu0
    %vm116 = vcmask 1041408
    %vm117 = vcmask 781314
    %vm118 = vmor %vm117, %vm116
    %119 = vst.msk [vmem:[#allocation2] sm:$0xf] %vm118, 0.0
    %v120 = vld [vmem:[#allocation2] sm:$0x3]
    %v121 = vadd.f32 %v120, %v103
    %vm122 = vcmask 517120
    %123 = vst.msk [vmem:[#allocation2] sm:$0x3] %vm122, %v121
    %v124 = vld [vmem:[#allocation2] sm:$0x3]
    %v127 = vunpack.c.l.s4 1983009808
    %v128 = vunpack.c.0.s8 %v127
    %v129 = vlaneseq
    %v130 = vshrl.u32 %v129, 7
    %v131 = vsub.s32 %v128, %v130
    %v132 = vrot.slane %v103, %v131
    %v133 = vcombine.high %v132, %v132
    %134 = vrot.lane.b32.xlu0 %v133, 16
    %v135 = vpop.permute.xlu0 %134
    %v137 = vadd.f32 %v124, %v135
    %vm138 = vcmask 648320
    %139 = vst.msk [vmem:[#allocation2] sm:$0x3] %vm138, %v137
    %v140 = vld [vmem:[#allocation2] sm:$0x3]
    %v141 = vcombine.high %v103, %v103
    %v143 = vunpack.c.l.s4 1983009808
    %v144 = vunpack.c.0.s8 %v143
    %v145 = vlaneseq
    %v146 = vshrl.u32 %v145, 7
    %v147 = vsub.s32 %v144, %v146
    %v148 = vrot.slane %v141, %v147
    %149 = vrot.lane.b32.xlu0 %v148, 32
    %v150 = vpop.permute.xlu0 %149
    %v152 = vadd.f32 %v140, %v150
    %vm153 = vcmask 779520
    %154 = vst.msk [vmem:[#allocation2] sm:$0x3] %vm153, %v152
    %v155 = vld [vmem:[#allocation2] sm:$0x3]
    %v156 = vcombine.high %v148, %v148
    %157 = vrot.lane.b32.xlu0 %v156, 48
    %v158 = vpop.permute.xlu0 %157
    %v160 = vadd.f32 %v155, %v158
    %vm161 = vcmask 910720
    %162 = vst.msk [vmem:[#allocation2] sm:$0x3] %vm161, %v160
    %v163 = vld [vmem:[#allocation2] sm:$0x3]
    %v166 = vunpack.c.l.s4 1983009808
    %v167 = vunpack.c.0.s8 %v166
    %v168 = vlaneseq
    %v169 = vshrl.u32 %v168, 7
    %v170 = vsub.s32 %v167, %v169
    %v171 = vrot.slane %v108, %v170
    %172 = vrot.lane.b32.xlu0 %v171, 64
    %v173 = vpop.permute.xlu0 %172
    %v175 = vadd.f32 %v163, %v173
    %vm176 = vcmask 1041920
    %177 = vst.msk [vmem:[#allocation2] sm:$0x3] %vm176, %v175
    %v178 = vld [vmem:[#allocation2] sm:$0xf]
    %v179 = vcombine.high %v171, %v171
    %180 = vrot.lane.b32.xlu0 %v179, 80
    %v181 = vpop.permute.xlu0 %180
    %v182 = vrot.slane %v181, 6
    %vm183 = vcmask 654336
    %v184 = vsel %vm183, %v182, %v181
    %v186 = vadd.f32 %v178, %v184
    %vm187 = vcmask 1042048
    %vm188 = vcmask 125954
    %vm189 = vmor %vm188, %vm187
    %190 = vst.msk [vmem:[#allocation2] sm:$0xf] %vm189, %v186
    %v191 = vld [vmem:[#allocation2] sm:$0xf]
    %v192 = vcombine.high %v108, %v108
    %v194 = vunpack.c.l.s4 1983009808
    %v195 = vunpack.c.0.s8 %v194
    %v196 = vlaneseq
    %v197 = vshrl.u32 %v196, 7
    %v198 = vsub.s32 %v195, %v197
    %v199 = vrot.slane %v192, %v198
    %200 = vrot.lane.b32.xlu0 %v199, 96
    %v201 = vpop.permute.xlu0 %200
    %v202 = vrot.slane %v201, 6
    %vm203 = vcmask 785408
    %v204 = vsel %vm203, %v202, %v201
    %v206 = vadd.f32 %v191, %v204
    %vm207 = vcmask 1042176
    %vm208 = vcmask 257026
    %vm209 = vmor %vm208, %vm207
    %210 = vst.msk [vmem:[#allocation2] sm:$0xf] %vm209, %v206
    %v211 = vld [vmem:[#allocation2] sm:$0xf]
    %v212 = vcombine.high %v199, %v199
    %213 = vrot.lane.b32.xlu0 %v212, 112
    %v214 = vpop.permute.xlu0 %213
    %v215 = vrot.slane %v214, 6
    %vm216 = vcmask 916480
    %v217 = vsel %vm216, %v215, %v214
    %v219 = vadd.f32 %v211, %v217
    %vm220 = vcmask 1042304
    %vm221 = vcmask 388098
    %vm222 = vmor %vm221, %vm220
    %223 = vst.msk [vmem:[#allocation2] sm:$0xf] %vm222, %v219
    %v224 = vld [vmem:[#allocation2 + $0x2] sm:$0x3]
    %v225 = vadd.f32 %v224, %v113
    %226 = vst.msk [vmem:[#allocation2 + $0x2] sm:$0x3] %vm122, %v225
    %v227 = vld [vmem:[#allocation2 + $0x2] sm:$0x3]
    %v230 = vunpack.c.l.s4 1983009808
    %v231 = vunpack.c.0.s8 %v230
    %v232 = vlaneseq
    %v233 = vshrl.u32 %v232, 7
    %v234 = vsub.s32 %v231, %v233
    %v235 = vrot.slane %v113, %v234
    %v236 = vcombine.high %v235, %v235
    %237 = vrot.lane.b32.xlu0 %v236, 16
    %v238 = vpop.permute.xlu0 %237
    %v240 = vadd.f32 %v227, %v238
    %241 = vst.msk [vmem:[#allocation2 + $0x2] sm:$0x3] %vm138, %v240
    %v242 = vld [vmem:[#allocation2 + $0x2] sm:$0x3]
    %v243 = vcombine.high %v113, %v113
    %v245 = vunpack.c.l.s4 1983009808
    %v246 = vunpack.c.0.s8 %v245
    %v247 = vlaneseq
    %v248 = vshrl.u32 %v247, 7
    %v249 = vsub.s32 %v246, %v248
    %v250 = vrot.slane %v243, %v249
    %251 = vrot.lane.b32.xlu0 %v250, 32
    %v252 = vpop.permute.xlu0 %251
    %v254 = vadd.f32 %v242, %v252
    %255 = vst.msk [vmem:[#allocation2 + $0x2] sm:$0x3] %vm153, %v254
    %v256 = vld [vmem:[#allocation2] sm:$0xf]
    %v257 = vld [vmem:[%s2] sm:$0x3]
    %v259 = vlaneseq
    %v260 = vshrl.u32 %v259, 7
    %v261 = vsub.s32 0, %v260
    %v262 = vrot.slane %v257, %v261
    %v263 = vlaneseq
    %v264 = vshrl.u32 %v263, 7
    %v265 = vsub.s32 1, %v264
    %v266 = vrot.slane %v257, %v265
    %v267 = vcombine.low %v262, %v266
    %v269 = vunpack.c.l.s4 1983009808
    %v270 = vunpack.c.0.s8 %v269
    %v271 = vlaneseq
    %v272 = vshrl.u32 %v271, 7
    %v273 = vsub.s32 %v270, %v272
    %v274 = vrot.slane %v267, %v273
    %275 = vrot.lane.b32.xlu0 %v274, 32
    %v276 = vpop.permute.xlu0 %275
    %v277 = vrot.slane %v276, 6
    %vm278 = vcmask 261120
    %v279 = vsel %vm278, %v277, %v276
    %v281 = vmul.f32 %v256, %v279
    %283 = vrot.lane.b32.xlu0 %v281, 96
    %v284 = vpop.permute.xlu0 %283
    %v285 = vrot.slane %v284, 2
    %v286 = vsel %vm203, %v284, %v285
    %vm288 = vmor %vm208, %vm116
    %289 = vst.msk [vmem:[#allocation3] sm:$0xf] %vm288, %v286
    // Predicated region
    $region14: #{dctcrn_forward.23} parent=1 // pred_check
      _
    $region15: #{dctcrn_forward.23} parent=1 // pred_check_branch
      %291 = sbr.rel (0) target = $region17
    $region16: #{dctcrn_forward.23} parent=1 // pred_region
      %s293 = ssub.s32 64, 64
      %294 = vsyncadd [#allocation4], %s293
      %s296 = sshll.u32 [#allocation3], 4
      %s297 = int_to_ptr.vmem [resolvable:$true] %s296
      %299 = dma.vmem_to_hbm [thread:$0]  %s297, 64, %s3, [#allocation4]
    $region17: #{dctcrn_forward.23} parent=1 // pred_fallthru
      _
    // Predicated region
    $region18: #{dctcrn_forward.23} parent=1 // pred_check
      _
    $region19: #{dctcrn_forward.23} parent=1 // pred_check_branch
      %301 = sbr.rel (0) target = $region21
    $region20: #{dctcrn_forward.23} parent=1 // pred_region
      %302 = dma.done [#allocation4], 64
    $region21: #{dctcrn_forward.23} parent=1 // pred_fallthru
      _
    %303 = vsyncpa [#allocation4], 1

</llo_original>
